<compile_context>
chip_gen: v5e
topology: v5e:2x2
jax: 0.10.0
libtpu: 0.0.40
codegen_flags: <defaults>
</compile_context>

<pallas_src>
import functools
import numpy as np
import jax
import jax.numpy as jnp
from jax.experimental import pallas as pl
from jax.experimental.pallas import tpu as pltpu

LRELU_SLOPE = 0.1
ACT_DTYPE = jnp.bfloat16      # HBM storage dtype for activations (f32 accumulate in kernels)
WGT_DTYPE = jnp.bfloat16      # storage dtype for matmul weights
ACCUM_CIN = 128               # use K accumulating dots instead of im2col when C_in >= this


def _tpu_vmem_bytes():
    try:
        info = pltpu.get_tpu_info()
        return int(info.vmem_capacity_bytes)
    except Exception:
        return 64 * 1024 * 1024


_BIG_VMEM = _tpu_vmem_bytes() >= 96 * 1024 * 1024
MAX_TILE = 1024 if _BIG_VMEM else 512          # bigger tiles on 128MiB-VMEM chips (v5e/v6e)
VMEM_LIMIT = (64 if _BIG_VMEM else 32) * 1024 * 1024


def _ceil_div(a, b):
    return -(-a // b)


def _choose_tile(n):
    if n <= MAX_TILE:
        return n, 1
    return MAX_TILE, _ceil_div(n, MAX_TILE)


# ----------------------------------------------------------------------------
# Shared time-tiled pallas_call driver
# ----------------------------------------------------------------------------
def _time_tiled_call(kernel_builder, x, *, pad_l, R, out_len, C_out,
                     weights, tiled_inputs=(), out_dtype=ACT_DTYPE):
    """Run a per-batch, time-tiled kernel over x: (B, C_in, T).

    Output column tau in [0, out_len) reads padded-input columns [tau, tau+R].
    The wrapper left-pads x by `pad_l` zeros and right-pads with zeros.  Per grid
    point (b, t) the kernel sees:
        body block    (C_in, T_tile)   [(C_in, T_tile+R) when a single tile covers all]
        halo block    (C_in, R)        [only when multi-tile and R > 0]
        *weights      full arrays (block-index invariant -> resident in VMEM)
        *tiled_inputs (C_i, T_tile)    blocks aligned with the output tile
        out           (C_out, T_tile)
    """
    B, C_in, T = x.shape
    T_tile, n_t = _choose_tile(out_len)
    single = (n_t == 1)
    T_out_pad = n_t * T_tile

    if single:
        L_need = out_len + R
    else:
        assert R <= T_tile, f"halo {R} larger than tile {T_tile}"
        L_need = T_out_pad + R
        if R > 0:
            L_need = max(L_need, (n_t + 1) * T_tile)

    right = L_need - pad_l - T
    xp = jnp.pad(x, ((0, 0), (0, 0), (pad_l, max(right, 0))))
    if xp.shape[2] > L_need:
        xp = xp[:, :, :L_need]

    body_w = T_tile + R if single else T_tile
    inputs = [xp]
    in_specs = [pl.BlockSpec((None, C_in, body_w), lambda b, t: (b, 0, t))]

    if (not single) and R > 0:
        # halo[b, t] = xp[b, :, (t+1)*T_tile : (t+1)*T_tile + R]
        hs = xp[:, :, T_tile:(n_t + 1) * T_tile]
        hs = hs.reshape(B, C_in, n_t, T_tile)[:, :, :, :R]
        halo = jnp.transpose(hs, (0, 2, 1, 3))            # (B, n_t, C_in, R)
        inputs.append(halo)
        in_specs.append(
            pl.BlockSpec((None, None, C_in, R), lambda b, t: (b, t, 0, 0)))

    for warr in weights:
        inputs.append(warr)
        in_specs.append(
            pl.BlockSpec(warr.shape, lambda b, t, _nd=warr.ndim: (0,) * _nd))

    for arr in tiled_inputs:
        Ct = arr.shape[1]
        pad_t = T_out_pad - arr.shape[2]
        arrp = jnp.pad(arr, ((0, 0), (0, 0), (0, pad_t))) if pad_t > 0 else arr
        inputs.append(arrp)
        in_specs.append(pl.BlockSpec((None, Ct, T_tile), lambda b, t: (b, 0, t)))

    kernel = kernel_builder(T_tile, single)
    out = pl.pallas_call(
        kernel,
        out_shape=jax.ShapeDtypeStruct((B, C_out, T_out_pad), out_dtype),
        grid_spec=pltpu.PrefetchScalarGridSpec(
            num_scalar_prefetch=0,
            grid=(B, n_t),
            in_specs=in_specs,
            out_specs=pl.BlockSpec((None, C_out, T_tile), lambda b, t: (b, 0, t)),
        ),
        compiler_params=pltpu.CompilerParams(
            dimension_semantics=("parallel", "parallel"),
            vmem_limit_bytes=VMEM_LIMIT),
    )(*inputs)
    if T_out_pad != out_len:
        out = out[:, :, :out_len]
    return out


# ----------------------------------------------------------------------------
# Conv1d kernel: bf16 MXU matmuls, f32 accumulation / elementwise
# ----------------------------------------------------------------------------
def _make_conv_kernel(K, dilation, C_in, T_tile, has_halo, has_res,
                      lrelu_slope, out_act):
    use_accum = (K > 1) and (C_in >= ACCUM_CIN)

    def kernel(*refs):
        i = 0
        x_ref = refs[i]; i += 1
        halo_ref = None
        if has_halo:
            halo_ref = refs[i]; i += 1
        w_ref = refs[i]; i += 1
        b_ref = refs[i]; i += 1
        res_ref = None
        if has_res:
            res_ref = refs[i]; i += 1
        o_ref = refs[i]

        x = x_ref[...].astype(jnp.float32)
        if has_halo:
            x = jnp.concatenate([x, halo_ref[...].astype(jnp.float32)], axis=1)
        if lrelu_slope is not None:
            x = jnp.where(x >= 0, x, lrelu_slope * x)

        w = w_ref[...]
        b = b_ref[...]
        if K * C_in == 1:
            acc = w.astype(jnp.float32) * x + b
        else:
            xm = x.astype(w.dtype)                      # bf16 operand -> native MXU rate
            if use_accum:
                # K accumulating matmuls: no (K*C_in, T_tile) im2col temp in VMEM.
                acc = jnp.dot(w[:, 0:C_in], xm[:, 0:T_tile],
                              preferred_element_type=jnp.float32)
                for k in range(1, K):
                    acc = acc + jnp.dot(
                        w[:, k * C_in:(k + 1) * C_in],
                        xm[:, k * dilation:k * dilation + T_tile],
                        preferred_element_type=jnp.float32)
                acc = acc + b
            else:
                taps = [xm[:, k * dilation:k * dilation + T_tile] for k in range(K)]
                xc = jnp.concatenate(taps, axis=0) if K > 1 else taps[0]
                acc = jnp.dot(w, xc, preferred_element_type=jnp.float32) + b
        if has_res:
            acc = acc + res_ref[...].astype(jnp.float32)
        if out_act == "tanh":
            acc = jnp.tanh(acc)
        o_ref[...] = acc.astype(o_ref.dtype)
    return kernel


def conv1d_p(x, wp, b2, *, K, pad_l, out_len, dilation=1, residual=None,
             lrelu_slope=None, out_act=None, out_dtype=ACT_DTYPE):
    """x: (B, C_in, T); wp: (C_out, K*C_in) packed bf16; b2: (C_out, 1) f32."""
    C_in = x.shape[1]
    C_out = wp.shape[0]
    R = (K - 1) * dilation

    def builder(T_tile, single):
        return _make_conv_kernel(K, dilation, C_in, T_tile,
                                 has_halo=(R > 0 and not single),
                                 has_res=(residual is not None),
                                 lrelu_slope=lrelu_slope, out_act=out_act)

    return _time_tiled_call(builder, x, pad_l=pad_l, R=R, out_len=out_len,
                            C_out=C_out, weights=[wp, b2],
                            tiled_inputs=([residual] if residual is not None else []),
                            out_dtype=out_dtype)


# ----------------------------------------------------------------------------
# Fused ResBlock1 kernel (3 x (lrelu, dilated conv, lrelu, conv, residual))
# ----------------------------------------------------------------------------
def _mask_cols(v, t0, off, T_true):
    W = v.shape[1]
    pos = t0 + off + jax.lax.broadcasted_iota(jnp.int32, (1, W), 1)
    return jnp.where((pos >= 0) & (pos < T_true), v, 0.0)


def _make_resblock_kernel(K, dilations, C, T_tile, R, has_halo, has_acc,
                          T_true, scale):
    n_stages = len(dilations)
    use_accum = C >= ACCUM_CIN

    def _conv(y, w, b, dil, width_out):
        ym = y.astype(w.dtype)
        if use_accum:
            acc = jnp.dot(w[:, 0:C], ym[:, 0:width_out],
                          preferred_element_type=jnp.float32)
            for k in range(1, K):
                acc = acc + jnp.dot(w[:, k * C:(k + 1) * C],
                                    ym[:, k * dil:k * dil + width_out],
                                    preferred_element_type=jnp.float32)
        else:
            taps = [ym[:, k * dil:k * dil + width_out] for k in range(K)]
            yc = jnp.concatenate(taps, axis=0) if K > 1 else taps[0]
            acc = jnp.dot(w, yc, preferred_element_type=jnp.float32)
        return acc + b

    def kernel(*refs):
        i = 0
        x_ref = refs[i]; i += 1
        halo_ref = None
        if has_halo:
            halo_ref = refs[i]; i += 1
        w_ref = refs[i]; i += 1
        b_ref = refs[i]; i += 1
        acc_ref = None
        if has_acc:
            acc_ref = refs[i]; i += 1
        o_ref = refs[i]

        t0 = pl.program_id(1) * T_tile
        cur = x_ref[...].astype(jnp.float32)
        if has_halo:
            cur = jnp.concatenate([cur, halo_ref[...].astype(jnp.float32)], axis=1)
        W = T_tile + R
        off = -(R // 2)
        for s in range(n_stages):
            d = dilations[s]
            p1 = (K - 1) * d // 2
            p2 = (K - 1) // 2
            y = jnp.where(cur >= 0, cur, LRELU_SLOPE * cur)
            W1 = W - 2 * p1
            y1 = _conv(y, w_ref[2 * s], b_ref[2 * s], d, W1)
            off1 = off + p1
            y1 = _mask_cols(y1, t0, off1, T_true)           # torch zero-pads c1's output
            y1 = jnp.where(y1 >= 0, y1, LRELU_SLOPE * y1)
            W2 = W1 - 2 * p2
            y2 = _conv(y1, w_ref[2 * s + 1], b_ref[2 * s + 1], 1, W2)
            off2 = off1 + p2
            cur = y2 + cur[:, (p1 + p2):(p1 + p2) + W2]
            cur = _mask_cols(cur, t0, off2, T_true)          # next stage's implicit padding
            W, off = W2, off2
        out = cur                                            # width == T_tile, off == 0
        if has_acc:
            out = out + acc_ref[...].astype(jnp.float32)
        if scale is not None:
            out = out * scale
        o_ref[...] = out.astype(o_ref.dtype)
    return kernel


def resblock_apply(x, prep, K, dilations, acc=None, scale=None):
    B, C, T = x.shape
    H = sum((K - 1) * d // 2 + (K - 1) // 2 for d in dilations)
    R = 2 * H

    def builder(T_tile, single):
        return _make_resblock_kernel(K, tuple(dilations), C, T_tile, R,
                                     has_halo=(R > 0 and not single),
                                     has_acc=(acc is not None),
                                     T_true=T, scale=scale)

    return _time_tiled_call(builder, x, pad_l=H, R=R, out_len=T, C_out=C,
                            weights=[prep["w"], prep["b"]],
                            tiled_inputs=([acc] if acc is not None else []),
                            out_dtype=ACT_DTYPE)


# ----------------------------------------------------------------------------
# Fused sine source + Linear(9,1) + tanh kernel (time on the lane axis).
#  * sin/cos of the fundamental computed in-kernel (EUP slot, free in a mem-bound
#    kernel); harmonics 2..9 by Chebyshev recurrence.
#  * scalar constants in SMEM; uv / noise streams are bf16; output is bf16.
# ----------------------------------------------------------------------------
def _source_kernel(hp_ref, rad_ref, uv_ref, z_ref, o_ref):
    theta = (2.0 * np.pi) * rad_ref[...]                 # (1, T_tile) f32
    s1 = jnp.sin(theta)
    c1 = jnp.cos(theta)
    sp, cp = s1, c1
    spp = jnp.zeros_like(s1)
    cpp = jnp.ones_like(c1)
    acc = hp_ref[0] * sp + hp_ref[9] * cp
    two_c1 = 2.0 * c1
    for hh in range(1, 9):
        sn = two_c1 * sp - spp
        cn = two_c1 * cp - cpp
        spp, cpp = sp, cp
        sp, cp = sn, cn
        acc = acc + hp_ref[hh] * sp + hp_ref[9 + hh] * cp

    uv = uv_ref[...].astype(jnp.float32)
    z = z_ref[...].astype(jnp.float32)
    b = hp_ref[18]
    amp = hp_ref[19]
    nstd = hp_ref[20]
    sig = hp_ref[21]                                     # ||w||_2 of the linear layer
    namp = uv * nstd + (1.0 - uv) * (amp * (1.0 / 3.0))
    y = amp * uv * acc + namp * sig * z + b
    o_ref[...] = jnp.tanh(y).astype(o_ref.dtype)


def _source_call(hp, rad1, uv, z):
    B, _, Lh = rad1.shape
    T_tile, n_t = _choose_tile(Lh)
    Lp = n_t * T_tile

    def padL(a):
        return a if Lp == Lh else jnp.pad(a, ((0, 0), (0, 0), (0, Lp - Lh)))

    def spec_t():
        return pl.BlockSpec((None, 1, T_tile), lambda b, t: (b, 0, t))

    out = pl.pallas_call(
        _source_kernel,
        out_shape=jax.ShapeDtypeStruct((B, 1, Lp), ACT_DTYPE),
        grid_spec=pltpu.PrefetchScalarGridSpec(
            num_scalar_prefetch=0,
            grid=(B, n_t),
            in_specs=[pl.BlockSpec(memory_space=pltpu.MemorySpace.SMEM),
                      spec_t(), spec_t(), spec_t()],
            out_specs=spec_t(),
        ),
        compiler_params=pltpu.CompilerParams(
            dimension_semantics=("parallel", "parallel"),
            vmem_limit_bytes=VMEM_LIMIT),
    )(hp, padL(rad1), padL(uv), padL(z))
    return out if Lp == Lh else out[:, :, :Lh]


def source_module(pp, f0, upp, key, h, sine_amp=0.1, noise_std=0.003,
                  voiced_threshold=0.0):
    B, T = f0.shape
    sr = float(h["sampling_rate"])
    k1, k2 = jax.random.split(key)

    # Phase accumulation (kept in f32 for fidelity).
    f0e = f0[..., None]
    a = jnp.arange(1, upp + 1, dtype=jnp.float32)
    rad = f0e / sr * a                                   # (B, T, upp)
    fmod_in = rad[:, :-1, -1] + 0.5
    rad2 = fmod_in - jnp.trunc(fmod_in) - 0.5
    rad_acc = jnp.cumsum(rad2, axis=1)
    rad_acc = rad_acc - jnp.trunc(rad_acc)
    rad_acc = jnp.pad(rad_acc, ((0, 0), (1, 0)))
    rad1 = (rad + rad_acc[..., None]).reshape(B, 1, T * upp)   # f32
    uv = (f0 > voiced_threshold).astype(jnp.float32)
    uv = jnp.repeat(uv, upp, axis=1).reshape(B, 1, T * upp).astype(ACT_DTYPE)

    # TODO(synk): jax.random streams are not bit-exact with torch.rand/randn; the
    # 9 per-harmonic noise channels are collapsed to their exact distributional
    # equivalent (single N(0,1) scaled by ||w||) since only their linear combination
    # is used downstream.  z could also be generated in-kernel with pltpu.prng_*.
    rand_ini = jax.random.uniform(k1, (9,), dtype=jnp.float32).at[0].set(0.0)
    z = jax.random.normal(k2, (B, 1, T * upp), jnp.float32).astype(ACT_DTYPE)

    w_lin = pp["l_linear"]["w"].reshape(-1)
    b_lin = pp["l_linear"]["b"].reshape(())
    wc = w_lin * jnp.cos(2.0 * np.pi * rand_ini)
    ws = w_lin * jnp.sin(2.0 * np.pi * rand_ini)
    tail = jnp.stack([b_lin,
                      jnp.asarray(sine_amp, jnp.float32),
                      jnp.asarray(noise_std, jnp.float32),
                      jnp.sqrt(jnp.sum(w_lin ** 2))])
    hp = jnp.concatenate([wc, ws, tail]).astype(jnp.float32)   # (22,) SMEM constants
    return _source_call(hp, rad1, uv, z)                       # (B, 1, T*upp) bf16


# ----------------------------------------------------------------------------
# Parameter preprocessing (done once, outside the forward).  Arrays go into `pp`
# (jit-traced); all Python ints / strings go into the static `cfg` structure.
# ----------------------------------------------------------------------------
def _pack_conv_w(w):                        # (C_out, C_in, K) -> (C_out, K*C_in) bf16
    C_out, C_in, K = w.shape
    return jnp.transpose(w, (0, 2, 1)).reshape(C_out, K * C_in).astype(WGT_DTYPE)


def _bias_col(b):
    return b.reshape(-1, 1).astype(jnp.float32)


def _prepare_convT(w, b, *, stride, padding):
    """ConvTranspose1d (torch layout w: (C_in, C_out, K)) -> stacked polyphase conv."""
    C_in, C_out, K = w.shape
    s, p = stride, padding
    phase_w, offs, Js = [], [], []
    for r in range(s):
        rph = (r + p) % s
        a = (r + p) // s
        J = _ceil_div(K - rph, s)
        idx = [rph + (J - 1 - j) * s for j in range(J)]   # flipped taps
        Vr = jnp.transpose(w[:, :, idx], (1, 0, 2))        # (C_out, C_in, J)
        phase_w.append(Vr)
        offs.append(a - (J - 1))
        Js.append(J)
    off_min = min(offs)
    Kp = max(o + J for o, J in zip(offs, Js)) - off_min
    rows = []
    for r in range(s):
        sh = offs[r] - off_min
        Wr = jnp.zeros((C_out, C_in, Kp), w.dtype)
        Wr = Wr.at[:, :, sh:sh + Js[r]].set(phase_w[r])
        rows.append(Wr)
    Wstack = jnp.concatenate(rows, axis=0)                 # (s*C_out, C_in, Kp)
    b_st = jnp.tile(b.reshape(1, -1), (s, 1)).reshape(-1, 1).astype(jnp.float32)
    arrs = dict(wp=_pack_conv_w(Wstack), b=b_st)
    cfg = dict(K=int(Kp), pad_l=int(max(0, -off_min)), crop=int(max(0, off_min)),
               stride=int(s), C_out=int(C_out), K_orig=int(K), padding=int(p))
    return arrs, cfg


def _prepare_noise_conv(w, b, stride):
    """Strided Conv1d(1, C, K=2s, stride=s, pad=(s+1)//2) -> stride-1 conv over phases."""
    C_out, _, K = w.shape
    if stride == 1:
        return (dict(wp=_pack_conv_w(w), b=_bias_col(b)),
                dict(kind="plain", K=int(K), pad_l=0, stride=1))
    s = stride
    p = (s + 1) // 2
    jlo = (0 - p) // s
    jhi = (K - 1 - p) // s
    Kp = jhi - jlo + 1
    W0 = w[:, 0, :]                                        # (C_out, K)
    kidx = p + (jlo + np.arange(Kp))[None, :] * s + np.arange(s)[:, None]  # (s, Kp)
    valid = (kidx >= 0) & (kidx < K)
    kcl = np.clip(kidx, 0, K - 1)
    Wp = W0[:, kcl] * jnp.asarray(valid, W0.dtype)[None]   # (C_out, s, Kp)
    return (dict(wp=_pack_conv_w(Wp), b=_bias_col(b)),
            dict(kind="phase", K=int(Kp), pad_l=int(-jlo), stride=int(s)))


def _prepare_resblock(rb):
    ws, bs = [], []
    for c1, c2 in zip(rb["c1"], rb["c2"]):
        ws.append(_pack_conv_w(c1["w"])); bs.append(_bias_col(c1["b"]))
        ws.append(_pack_conv_w(c2["w"])); bs.append(_bias_col(c2["b"]))
    return dict(w=jnp.stack(ws, 0), b=jnp.stack(bs, 0))


def prepare_params(params, h):
    ur, uk = h["upsample_rates"], h["upsample_kernel_sizes"]
    pp = {"l_linear": {"w": jnp.asarray(params["l_linear"]["w"], jnp.float32),
                       "b": jnp.asarray(params["l_linear"]["b"], jnp.float32)}}
    cfg = {}
    pp["conv_pre"] = dict(wp=_pack_conv_w(params["conv_pre"]["w"]),
                          b=_bias_col(params["conv_pre"]["b"]))
    cfg["conv_pre"] = dict(K=7, pad_l=3)
    pp["cond"] = dict(wp=_pack_conv_w(params["cond"]["w"]),
                      b=_bias_col(params["cond"]["b"]))
    cfg["cond"] = dict(K=1, pad_l=0)
    pp["ups"], cfg["ups"] = [], []
    pp["noise_convs"], cfg["noise_convs"] = [], []
    for i, (u, k) in enumerate(zip(ur, uk)):
        a, c = _prepare_convT(params["ups"][i]["w"], params["ups"][i]["b"],
                              stride=u, padding=(k - u + 1) // 2)
        pp["ups"].append(a); cfg["ups"].append(c)
        s_f0 = int(np.prod(ur[i + 1:])) if i + 1 < len(ur) else 1
        a, c = _prepare_noise_conv(params["noise_convs"][i]["w"],
                                   params["noise_convs"][i]["b"], s_f0)
        pp["noise_convs"].append(a); cfg["noise_convs"].append(c)
    pp["resblocks"] = [_prepare_resblock(rb) for rb in params["resblocks"]]
    pp["conv_post"] = dict(wp=_pack_conv_w(params["conv_post"]["w"]),
                           b=_bias_col(params["conv_post"]["b"]))
    cfg["conv_post"] = dict(K=7, pad_l=3)
    return pp, cfg


# ----------------------------------------------------------------------------
# Layer wrappers
# ----------------------------------------------------------------------------
def conv_transpose_fused(x, arrs, c, lrelu_slope):
    B, C_in, T = x.shape
    s, C_out = c["stride"], c["C_out"]
    T_out = (T - 1) * s - 2 * c["padding"] + c["K_orig"]
    Q = _ceil_div(T_out, s)
    xe = x[:, :, c["crop"]:] if c["crop"] else x
    y = conv1d_p(xe, arrs["wp"], arrs["b"], K=c["K"], pad_l=c["pad_l"],
                 out_len=Q, lrelu_slope=lrelu_slope)       # (B, s*C_out, Q)
    # TODO(synk): fuse this polyphase interleave into the kernel's output stores
    # (in-VMEM lane interleave) to save one HBM round trip per upsample stage.
    y = y.reshape(B, s, C_out, Q)
    y = jnp.transpose(y, (0, 2, 3, 1)).reshape(B, C_out, Q * s)
    return y[:, :, :T_out]


def noise_conv_apply(har, arrs, c, residual):
    B, _, Lh = har.shape
    if c["kind"] == "plain":
        return conv1d_p(har, arrs["wp"], arrs["b"], K=c["K"], pad_l=0,
                        out_len=Lh, residual=residual)
    s = c["stride"]
    M = Lh // s
    # TODO(synk): fold this phase split into the conv kernel via strided lane reads
    # (pl.ds(..., stride=s)) to avoid a full-length HBM transpose of `har`.
    harP = jnp.transpose(har.reshape(B, M, s), (0, 2, 1))  # (B, s, M)
    return conv1d_p(harP, arrs["wp"], arrs["b"], K=c["K"], pad_l=c["pad_l"],
                    out_len=M, residual=residual)


# ----------------------------------------------------------------------------
# Generator forward
# ----------------------------------------------------------------------------
def generator_forward(pp, x, f0, g, noise_key, *, h, cfg):
    upp = int(np.prod(h["upsample_rates"]))
    num_kernels = len(h["resblock_kernel_sizes"])
    T = x.shape[2]

    x = x.astype(ACT_DTYPE)
    g = g.astype(ACT_DTYPE)

    har = source_module(pp, f0, upp, noise_key, h)         # (B, 1, T*upp) bf16

    cond = conv1d_p(g, pp["cond"]["wp"], pp["cond"]["b"],
                    K=cfg["cond"]["K"], pad_l=cfg["cond"]["pad_l"], out_len=T)
    xx = conv1d_p(x, pp["conv_pre"]["wp"], pp["conv_pre"]["b"],
                  K=cfg["conv_pre"]["K"], pad_l=cfg["conv_pre"]["pad_l"],
                  out_len=T, residual=cond)

    for i in range(len(h["upsample_rates"])):
        xx = conv_transpose_fused(xx, pp["ups"][i], cfg["ups"][i], LRELU_SLOPE)
        xx = noise_conv_apply(har, pp["noise_convs"][i], cfg["noise_convs"][i],
                              residual=xx)
        xs = None
        for j in range(num_kernels):
            prep = pp["resblocks"][i * num_kernels + j]
            K = h["resblock_kernel_sizes"][j]
            d = h["resblock_dilation_sizes"][j]
            last = (j == num_kernels - 1)
            xs = resblock_apply(xx, prep, K, d, acc=xs,
                                scale=(1.0 / num_kernels) if last else None)
        xx = xs

    out = conv1d_p(xx, pp["conv_post"]["wp"], pp["conv_post"]["b"],
                   K=cfg["conv_post"]["K"], pad_l=cfg["conv_post"]["pad_l"],
                   out_len=xx.shape[2], lrelu_slope=0.01, out_act="tanh",
                   out_dtype=jnp.float32)
    return out


# ----------------------------------------------------------------------------
# Deterministic synthetic parameters (shapes from the torch __init__)
# ----------------------------------------------------------------------------
def _init_conv(key, c_out, c_in, k):
    kw, kb = jax.random.split(key)
    return {"w": 0.1 * jax.random.normal(kw, (c_out, c_in, k), jnp.float32),
            "b": 0.01 * jax.random.normal(kb, (c_out,), jnp.float32)}


def _init_convT(key, c_in, c_out, k):
    kw, kb = jax.random.split(key)
    return {"w": 0.1 * jax.random.normal(kw, (c_in, c_out, k), jnp.float32),
            "b": 0.01 * jax.random.normal(kb, (c_out,), jnp.float32)}


def init_generator_params(key, h):
    keys = list(jax.random.split(key, 256))
    ki = iter(range(256))
    nxt = lambda: keys[next(ki)]

    uic = h["upsample_initial_channel"]
    ur, uk = h["upsample_rates"], h["upsample_kernel_sizes"]
    rks, rds = h["resblock_kernel_sizes"], h["resblock_dilation_sizes"]

    params = {}
    kw, kb = jax.random.split(nxt())
    params["l_linear"] = {"w": 0.1 * jax.random.normal(kw, (9, 1), jnp.float32),
                          "b": 0.01 * jax.random.normal(kb, (1,), jnp.float32)}
    params["conv_pre"] = _init_conv(nxt(), uic, h["inter_channels"], 7)
    params["cond"] = _init_conv(nxt(), uic, h["gin_channels"], 1)

    params["ups"], params["noise_convs"] = [], []
    for i, (u, k) in enumerate(zip(ur, uk)):
        c_prev = uic // (2 ** i)
        c_cur = uic // (2 ** (i + 1))
        params["ups"].append(_init_convT(nxt(), c_prev, c_cur, k))
        if i + 1 < len(ur):
            s_f0 = int(np.prod(ur[i + 1:]))
            params["noise_convs"].append(_init_conv(nxt(), c_cur, 1, s_f0 * 2))
        else:
            params["noise_convs"].append(_init_conv(nxt(), c_cur, 1, 1))

    params["resblocks"] = []
    ch = uic
    for i in range(len(ur)):
        ch = uic // (2 ** (i + 1))
        for (k, d) in zip(rks, rds):
            rb = {"c1": [_init_conv(nxt(), ch, ch, k) for _ in d],
                  "c2": [_init_conv(nxt(), ch, ch, k) for _ in d]}
            params["resblocks"].append(rb)
    params["conv_post"] = _init_conv(nxt(), 1, ch, 7)
    return params


# ----------------------------------------------------------------------------
if __name__ == "__main__":
    h = dict(
        resblock="1",
        resblock_kernel_sizes=[3, 5],
        resblock_dilation_sizes=[[1, 3, 5], [1, 3, 5]],
        upsample_rates=[2, 2],
        upsample_kernel_sizes=[4, 4],
        upsample_initial_channel=16,
        inter_channels=8,
        gin_channels=4,
        sampling_rate=16000,
    )

    root = jax.random.PRNGKey(0)
    k_params, k_x, k_f0, k_g, k_noise = jax.random.split(root, 5)

    params = init_generator_params(k_params, h)
    pp, cfg = prepare_params(params, h)

    B, T = 2, 8
    x = jax.random.normal(k_x, (B, h["inter_channels"], T), jnp.float32)
    f0 = jax.random.uniform(k_f0, (B, T), jnp.float32, 100.0, 400.0)
    f0 = f0.at[:, -2:].set(0.0)  # some unvoiced frames
    g = jax.random.normal(k_g, (B, h["gin_channels"], T), jnp.float32)

    fwd = jax.jit(functools.partial(generator_forward, h=h, cfg=cfg))
    out = fwd(pp, x, f0, g, k_noise)
    out = jax.block_until_ready(out)

    upp = int(np.prod(h["upsample_rates"]))
    assert out.shape == (B, 1, T * upp), out.shape
    assert bool(jnp.all(jnp.isfinite(out)))
    print("KERNEL_OK")
</pallas_src>

<mosaic_0001>
module attributes {stable_mosaic.version = 11 : i64} {
  func.func @_source_kernel(%arg0: i32, %arg1: i32, %arg2: memref<22xf32, #tpu.memory_space<smem>>, %arg3: memref<1x1x32xf32, #tpu.memory_space<vmem>>, %arg4: memref<1x1x32xbf16, #tpu.memory_space<vmem>>, %arg5: memref<1x1x32xbf16, #tpu.memory_space<vmem>>, %arg6: memref<1x1x32xbf16, #tpu.memory_space<vmem>>) attributes {dimension_semantics = [#tpu.dimension_semantics<parallel>, #tpu.dimension_semantics<parallel>], iteration_bounds = array<i64: 2, 1>, scalar_prefetch = 0 : i64, scratch_operands = 0 : i64, tpu.core_type = #tpu.core_type<tc>, window_params = [{transform_indices = @transform_0, window_bounds = array<i64: 22>}, {transform_indices = @transform_1, window_bounds = array<i64: 1, 1, 32>}, {transform_indices = @transform_2, window_bounds = array<i64: 1, 1, 32>}, {transform_indices = @transform_3, window_bounds = array<i64: 1, 1, 32>}, {transform_indices = @transform_4, window_bounds = array<i64: 1, 1, 32>}]} {
    %c0 = arith.constant 0 : index
    %c0_0 = arith.constant 0 : index
    %c0_1 = arith.constant 0 : index
    %0 = vector.load %arg3[%c0, %c0_0, %c0_1] : memref<1x1x32xf32, #tpu.memory_space<vmem>>, vector<1x1x32xf32>
    %1 = vector.shape_cast %0 : vector<1x1x32xf32> to vector<1x32xf32>
    %cst = arith.constant 6.28318548 : f32
    %2 = vector.broadcast %cst : f32 to vector<1x32xf32>
    %3 = arith.mulf %2, %1 : vector<1x32xf32>
    %4 = math.sin %3 : vector<1x32xf32>
    %5 = math.cos %3 : vector<1x32xf32>
    %cst_2 = arith.constant 0.000000e+00 : f32
    %6 = vector.broadcast %cst_2 : f32 to vector<1x32xf32>
    %cst_3 = arith.constant 1.000000e+00 : f32
    %7 = vector.broadcast %cst_3 : f32 to vector<1x32xf32>
    %c0_4 = arith.constant 0 : index
    %8 = memref.load %arg2[%c0_4] : memref<22xf32, #tpu.memory_space<smem>>
    %9 = vector.broadcast %8 : f32 to vector<1x32xf32>
    %10 = arith.mulf %9, %4 : vector<1x32xf32>
    %c9 = arith.constant 9 : index
    %11 = memref.load %arg2[%c9] : memref<22xf32, #tpu.memory_space<smem>>
    %12 = vector.broadcast %11 : f32 to vector<1x32xf32>
    %13 = arith.mulf %12, %5 : vector<1x32xf32>
    %14 = arith.addf %10, %13 : vector<1x32xf32>
    %cst_5 = arith.constant 2.000000e+00 : f32
    %15 = vector.broadcast %cst_5 : f32 to vector<1x32xf32>
    %16 = arith.mulf %15, %5 : vector<1x32xf32>
    %17 = arith.mulf %16, %4 : vector<1x32xf32>
    %18 = arith.subf %17, %6 : vector<1x32xf32>
    %19 = arith.mulf %16, %5 : vector<1x32xf32>
    %20 = arith.subf %19, %7 : vector<1x32xf32>
    %c1 = arith.constant 1 : index
    %21 = memref.load %arg2[%c1] : memref<22xf32, #tpu.memory_space<smem>>
    %22 = vector.broadcast %21 : f32 to vector<1x32xf32>
    %23 = arith.mulf %22, %18 : vector<1x32xf32>
    %24 = arith.addf %14, %23 : vector<1x32xf32>
    %c10 = arith.constant 10 : index
    %25 = memref.load %arg2[%c10] : memref<22xf32, #tpu.memory_space<smem>>
    %26 = vector.broadcast %25 : f32 to vector<1x32xf32>
    %27 = arith.mulf %26, %20 : vector<1x32xf32>
    %28 = arith.addf %24, %27 : vector<1x32xf32>
    %29 = arith.mulf %16, %18 : vector<1x32xf32>
    %30 = arith.subf %29, %4 : vector<1x32xf32>
    %31 = arith.mulf %16, %20 : vector<1x32xf32>
    %32 = arith.subf %31, %5 : vector<1x32xf32>
    %c2 = arith.constant 2 : index
    %33 = memref.load %arg2[%c2] : memref<22xf32, #tpu.memory_space<smem>>
    %34 = vector.broadcast %33 : f32 to vector<1x32xf32>
    %35 = arith.mulf %34, %30 : vector<1x32xf32>
    %36 = arith.addf %28, %35 : vector<1x32xf32>
    %c11 = arith.constant 11 : index
    %37 = memref.load %arg2[%c11] : memref<22xf32, #tpu.memory_space<smem>>
    %38 = vector.broadcast %37 : f32 to vector<1x32xf32>
    %39 = arith.mulf %38, %32 : vector<1x32xf32>
    %40 = arith.addf %36, %39 : vector<1x32xf32>
    %41 = arith.mulf %16, %30 : vector<1x32xf32>
    %42 = arith.subf %41, %18 : vector<1x32xf32>
    %43 = arith.mulf %16, %32 : vector<1x32xf32>
    %44 = arith.subf %43, %20 : vector<1x32xf32>
    %c3 = arith.constant 3 : index
    %45 = memref.load %arg2[%c3] : memref<22xf32, #tpu.memory_space<smem>>
    %46 = vector.broadcast %45 : f32 to vector<1x32xf32>
    %47 = arith.mulf %46, %42 : vector<1x32xf32>
    %48 = arith.addf %40, %47 : vector<1x32xf32>
    %c12 = arith.constant 12 : index
    %49 = memref.load %arg2[%c12] : memref<22xf32, #tpu.memory_space<smem>>
    %50 = vector.broadcast %49 : f32 to vector<1x32xf32>
    %51 = arith.mulf %50, %44 : vector<1x32xf32>
    %52 = arith.addf %48, %51 : vector<1x32xf32>
    %53 = arith.mulf %16, %42 : vector<1x32xf32>
    %54 = arith.subf %53, %30 : vector<1x32xf32>
    %55 = arith.mulf %16, %44 : vector<1x32xf32>
    %56 = arith.subf %55, %32 : vector<1x32xf32>
    %c4 = arith.constant 4 : index
    %57 = memref.load %arg2[%c4] : memref<22xf32, #tpu.memory_space<smem>>
    %58 = vector.broadcast %57 : f32 to vector<1x32xf32>
    %59 = arith.mulf %58, %54 : vector<1x32xf32>
    %60 = arith.addf %52, %59 : vector<1x32xf32>
    %c13 = arith.constant 13 : index
    %61 = memref.load %arg2[%c13] : memref<22xf32, #tpu.memory_space<smem>>
    %62 = vector.broadcast %61 : f32 to vector<1x32xf32>
    %63 = arith.mulf %62, %56 : vector<1x32xf32>
    %64 = arith.addf %60, %63 : vector<1x32xf32>
    %65 = arith.mulf %16, %54 : vector<1x32xf32>
    %66 = arith.subf %65, %42 : vector<1x32xf32>
    %67 = arith.mulf %16, %56 : vector<1x32xf32>
    %68 = arith.subf %67, %44 : vector<1x32xf32>
    %c5 = arith.constant 5 : index
    %69 = memref.load %arg2[%c5] : memref<22xf32, #tpu.memory_space<smem>>
    %70 = vector.broadcast %69 : f32 to vector<1x32xf32>
    %71 = arith.mulf %70, %66 : vector<1x32xf32>
    %72 = arith.addf %64, %71 : vector<1x32xf32>
    %c14 = arith.constant 14 : index
    %73 = memref.load %arg2[%c14] : memref<22xf32, #tpu.memory_space<smem>>
    %74 = vector.broadcast %73 : f32 to vector<1x32xf32>
    %75 = arith.mulf %74, %68 : vector<1x32xf32>
    %76 = arith.addf %72, %75 : vector<1x32xf32>
    %77 = arith.mulf %16, %66 : vector<1x32xf32>
    %78 = arith.subf %77, %54 : vector<1x32xf32>
    %79 = arith.mulf %16, %68 : vector<1x32xf32>
    %80 = arith.subf %79, %56 : vector<1x32xf32>
    %c6 = arith.constant 6 : index
    %81 = memref.load %arg2[%c6] : memref<22xf32, #tpu.memory_space<smem>>
    %82 = vector.broadcast %81 : f32 to vector<1x32xf32>
    %83 = arith.mulf %82, %78 : vector<1x32xf32>
    %84 = arith.addf %76, %83 : vector<1x32xf32>
    %c15 = arith.constant 15 : index
    %85 = memref.load %arg2[%c15] : memref<22xf32, #tpu.memory_space<smem>>
    %86 = vector.broadcast %85 : f32 to vector<1x32xf32>
    %87 = arith.mulf %86, %80 : vector<1x32xf32>
    %88 = arith.addf %84, %87 : vector<1x32xf32>
    %89 = arith.mulf %16, %78 : vector<1x32xf32>
    %90 = arith.subf %89, %66 : vector<1x32xf32>
    %91 = arith.mulf %16, %80 : vector<1x32xf32>
    %92 = arith.subf %91, %68 : vector<1x32xf32>
    %c7 = arith.constant 7 : index
    %93 = memref.load %arg2[%c7] : memref<22xf32, #tpu.memory_space<smem>>
    %94 = vector.broadcast %93 : f32 to vector<1x32xf32>
    %95 = arith.mulf %94, %90 : vector<1x32xf32>
    %96 = arith.addf %88, %95 : vector<1x32xf32>
    %c16 = arith.constant 16 : index
    %97 = memref.load %arg2[%c16] : memref<22xf32, #tpu.memory_space<smem>>
    %98 = vector.broadcast %97 : f32 to vector<1x32xf32>
    %99 = arith.mulf %98, %92 : vector<1x32xf32>
    %100 = arith.addf %96, %99 : vector<1x32xf32>
    %101 = arith.mulf %16, %90 : vector<1x32xf32>
    %102 = arith.subf %101, %78 : vector<1x32xf32>
    %103 = arith.mulf %16, %92 : vector<1x32xf32>
    %104 = arith.subf %103, %80 : vector<1x32xf32>
    %c8 = arith.constant 8 : index
    %105 = memref.load %arg2[%c8] : memref<22xf32, #tpu.memory_space<smem>>
    %106 = vector.broadcast %105 : f32 to vector<1x32xf32>
    %107 = arith.mulf %106, %102 : vector<1x32xf32>
    %108 = arith.addf %100, %107 : vector<1x32xf32>
    %c17 = arith.constant 17 : index
    %109 = memref.load %arg2[%c17] : memref<22xf32, #tpu.memory_space<smem>>
    %110 = vector.broadcast %109 : f32 to vector<1x32xf32>
    %111 = arith.mulf %110, %104 : vector<1x32xf32>
    %112 = arith.addf %108, %111 : vector<1x32xf32>
    %c0_6 = arith.constant 0 : index
    %c0_7 = arith.constant 0 : index
    %c0_8 = arith.constant 0 : index
    %113 = vector.load %arg4[%c0_6, %c0_7, %c0_8] : memref<1x1x32xbf16, #tpu.memory_space<vmem>>, vector<1x1x32xbf16>
    %114 = vector.shape_cast %113 : vector<1x1x32xbf16> to vector<1x32xbf16>
    %115 = arith.extf %114 : vector<1x32xbf16> to vector<1x32xf32>
    %c0_9 = arith.constant 0 : index
    %c0_10 = arith.constant 0 : index
    %c0_11 = arith.constant 0 : index
    %116 = vector.load %arg5[%c0_9, %c0_10, %c0_11] : memref<1x1x32xbf16, #tpu.memory_space<vmem>>, vector<1x1x32xbf16>
    %117 = vector.shape_cast %116 : vector<1x1x32xbf16> to vector<1x32xbf16>
    %118 = arith.extf %117 : vector<1x32xbf16> to vector<1x32xf32>
    %c18 = arith.constant 18 : index
    %119 = memref.load %arg2[%c18] : memref<22xf32, #tpu.memory_space<smem>>
    %c19 = arith.constant 19 : index
    %120 = memref.load %arg2[%c19] : memref<22xf32, #tpu.memory_space<smem>>
    %c20 = arith.constant 20 : index
    %121 = memref.load %arg2[%c20] : memref<22xf32, #tpu.memory_space<smem>>
    %c21 = arith.constant 21 : index
    %122 = memref.load %arg2[%c21] : memref<22xf32, #tpu.memory_space<smem>>
    %123 = vector.broadcast %121 : f32 to vector<1x32xf32>
    %124 = arith.mulf %115, %123 : vector<1x32xf32>
    %cst_12 = arith.constant 1.000000e+00 : f32
    %125 = vector.broadcast %cst_12 : f32 to vector<1x32xf32>
    %126 = arith.subf %125, %115 : vector<1x32xf32>
    %cst_13 = arith.constant 0.333333343 : f32
    %127 = arith.mulf %120, %cst_13 : f32
    %128 = vector.broadcast %127 : f32 to vector<1x32xf32>
    %129 = arith.mulf %126, %128 : vector<1x32xf32>
    %130 = arith.addf %124, %129 : vector<1x32xf32>
    %131 = vector.broadcast %120 : f32 to vector<1x32xf32>
    %132 = arith.mulf %131, %115 : vector<1x32xf32>
    %133 = arith.mulf %132, %112 : vector<1x32xf32>
    %134 = vector.broadcast %122 : f32 to vector<1x32xf32>
    %135 = arith.mulf %130, %134 : vector<1x32xf32>
    %136 = arith.mulf %135, %118 : vector<1x32xf32>
    %137 = arith.addf %133, %136 : vector<1x32xf32>
    %138 = vector.broadcast %119 : f32 to vector<1x32xf32>
    %139 = arith.addf %137, %138 : vector<1x32xf32>
    %140 = math.tanh %139 : vector<1x32xf32>
    %141 = arith.truncf %140 : vector<1x32xf32> to vector<1x32xbf16>
    %c0_14 = arith.constant 0 : index
    %c0_15 = arith.constant 0 : index
    %c0_16 = arith.constant 0 : index
    %142 = vector.load %arg6[%c0_14, %c0_15, %c0_16] : memref<1x1x32xbf16, #tpu.memory_space<vmem>>, vector<1x1x32xbf16>
    %143 = vector.shape_cast %142 : vector<1x1x32xbf16> to vector<1x32xbf16>
    %144 = vector.shape_cast %141 : vector<1x32xbf16> to vector<1x1x32xbf16>
    tpu.vector_store %arg6[%c0_14, %c0_15, %c0_16], %144 {strides = array<i32>} : memref<1x1x32xbf16, #tpu.memory_space<vmem>>, vector<1x1x32xbf16>,
    return
  }
  func.func @transform_0(%arg0: i32, %arg1: i32) -> i32 {
    %c0_i32 = arith.constant 0 : i32
    %c0_i32_0 = arith.constant 0 : i32
    return %c0_i32 : i32
  }
  func.func @transform_1(%arg0: i32, %arg1: i32) -> (i32, i32, i32) {
    %c0_i32 = arith.constant 0 : i32
    %c0_i32_0 = arith.constant 0 : i32
    return %arg0, %c0_i32, %arg1 : i32, i32, i32
  }
  func.func @transform_2(%arg0: i32, %arg1: i32) -> (i32, i32, i32) {
    %c0_i32 = arith.constant 0 : i32
    %c0_i32_0 = arith.constant 0 : i32
    return %arg0, %c0_i32, %arg1 : i32, i32, i32
  }
  func.func @transform_3(%arg0: i32, %arg1: i32) -> (i32, i32, i32) {
    %c0_i32 = arith.constant 0 : i32
    %c0_i32_0 = arith.constant 0 : i32
    return %arg0, %c0_i32, %arg1 : i32, i32, i32
  }
  func.func @transform_4(%arg0: i32, %arg1: i32) -> (i32, i32, i32) {
    %c0_i32 = arith.constant 0 : i32
    %c0_i32_0 = arith.constant 0 : i32
    return %arg0, %c0_i32, %arg1 : i32, i32, i32
  }
}

module attributes {stable_mosaic.version = 11 : i64} {
  func.func @kernel(%arg0: i32, %arg1: i32, %arg2: memref<1x4x8xbf16, #tpu.memory_space<vmem>>, %arg3: memref<16x4xbf16, #tpu.memory_space<vmem>>, %arg4: memref<16x1xf32, #tpu.memory_space<vmem>>, %arg5: memref<1x16x8xbf16, #tpu.memory_space<vmem>>) attributes {dimension_semantics = [#tpu.dimension_semantics<parallel>, #tpu.dimension_semantics<parallel>], iteration_bounds = array<i64: 2, 1>, scalar_prefetch = 0 : i64, scratch_operands = 0 : i64, tpu.core_type = #tpu.core_type<tc>, window_params = [{transform_indices = @transform_0, window_bounds = array<i64: 1, 4, 8>}, {pipeline_mode = #tpu.pipeline_mode<synchronous>, transform_indices = @transform_1, window_bounds = array<i64: 16, 4>}, {pipeline_mode = #tpu.pipeline_mode<synchronous>, transform_indices = @transform_2, window_bounds = array<i64: 16, 1>}, {transform_indices = @transform_3, window_bounds = array<i64: 1, 16, 8>}]} {
    %c0 = arith.constant 0 : index
    %c0_0 = arith.constant 0 : index
    %c0_1 = arith.constant 0 : index
    %0 = vector.load %arg2[%c0, %c0_0, %c0_1] : memref<1x4x8xbf16, #tpu.memory_space<vmem>>, vector<1x4x8xbf16>
    %1 = vector.shape_cast %0 : vector<1x4x8xbf16> to vector<4x8xbf16>
    %2 = arith.extf %1 : vector<4x8xbf16> to vector<4x8xf32>
    %c0_2 = arith.constant 0 : index
    %c0_3 = arith.constant 0 : index
    %3 = vector.load %arg3[%c0_2, %c0_3] : memref<16x4xbf16, #tpu.memory_space<vmem>>, vector<16x4xbf16>
    %c0_4 = arith.constant 0 : index
    %c0_5 = arith.constant 0 : index
    %4 = vector.load %arg4[%c0_4, %c0_5] : memref<16x1xf32, #tpu.memory_space<vmem>>, vector<16x1xf32>
    %5 = arith.truncf %2 : vector<4x8xf32> to vector<4x8xbf16>
    %cst = arith.constant dense<0.000000e+00> : vector<16x8xf32>
    %6 = tpu.matmul %3, %5, %cst {dimension_numbers = #tpu.dot_dimension_numbers<[1], [0], [0], [1], [0, 0, 1, 1], [], []>} : vector<16x4xbf16>, vector<4x8xbf16>, vector<16x8xf32> -> vector<16x8xf32>
    %7 = vector.broadcast %4 : vector<16x1xf32> to vector<16x8xf32>
    %8 = arith.addf %6, %7 : vector<16x8xf32>
    %9 = arith.truncf %8 : vector<16x8xf32> to vector<16x8xbf16>
    %c0_6 = arith.constant 0 : index
    %c0_7 = arith.constant 0 : index
    %c0_8 = arith.constant 0 : index
    %10 = vector.load %arg5[%c0_6, %c0_7, %c0_8] : memref<1x16x8xbf16, #tpu.memory_space<vmem>>, vector<1x16x8xbf16>
    %11 = vector.shape_cast %10 : vector<1x16x8xbf16> to vector<16x8xbf16>
    %12 = vector.shape_cast %9 : vector<16x8xbf16> to vector<1x16x8xbf16>
    tpu.vector_store %arg5[%c0_6, %c0_7, %c0_8], %12 {strides = array<i32>} : memref<1x16x8xbf16, #tpu.memory_space<vmem>>, vector<1x16x8xbf16>,
    return
  }
  func.func @transform_0(%arg0: i32, %arg1: i32) -> (i32, i32, i32) {
    %c0_i32 = arith.constant 0 : i32
    %c0_i32_0 = arith.constant 0 : i32
    return %arg0, %c0_i32, %arg1 : i32, i32, i32
  }
  func.func @transform_1(%arg0: i32, %arg1: i32) -> (i32, i32) {
    %c0_i32 = arith.constant 0 : i32
    %c0_i32_0 = arith.constant 0 : i32
    %c0_i32_1 = arith.constant 0 : i32
    return %c0_i32, %c0_i32_0 : i32, i32
  }
  func.func @transform_2(%arg0: i32, %arg1: i32) -> (i32, i32) {
    %c0_i32 = arith.constant 0 : i32
    %c0_i32_0 = arith.constant 0 : i32
    %c0_i32_1 = arith.constant 0 : i32
    return %c0_i32, %c0_i32_0 : i32, i32
  }
  func.func @transform_3(%arg0: i32, %arg1: i32) -> (i32, i32, i32) {
    %c0_i32 = arith.constant 0 : i32
    %c0_i32_0 = arith.constant 0 : i32
    return %arg0, %c0_i32, %arg1 : i32, i32, i32
  }
}

module attributes {stable_mosaic.version = 11 : i64} {
  func.func @kernel(%arg0: i32, %arg1: i32, %arg2: memref<1x8x14xbf16, #tpu.memory_space<vmem>>, %arg3: memref<16x56xbf16, #tpu.memory_space<vmem>>, %arg4: memref<16x1xf32, #tpu.memory_space<vmem>>, %arg5: memref<1x16x8xbf16, #tpu.memory_space<vmem>>, %arg6: memref<1x16x8xbf16, #tpu.memory_space<vmem>>) attributes {dimension_semantics = [#tpu.dimension_semantics<parallel>, #tpu.dimension_semantics<parallel>], iteration_bounds = array<i64: 2, 1>, scalar_prefetch = 0 : i64, scratch_operands = 0 : i64, tpu.core_type = #tpu.core_type<tc>, window_params = [{transform_indices = @transform_0, window_bounds = array<i64: 1, 8, 14>}, {pipeline_mode = #tpu.pipeline_mode<synchronous>, transform_indices = @transform_1, window_bounds = array<i64: 16, 56>}, {pipeline_mode = #tpu.pipeline_mode<synchronous>, transform_indices = @transform_2, window_bounds = array<i64: 16, 1>}, {transform_indices = @transform_3, window_bounds = array<i64: 1, 16, 8>}, {transform_indices = @transform_4, window_bounds = array<i64: 1, 16, 8>}]} {
    %c0 = arith.constant 0 : index
    %c0_0 = arith.constant 0 : index
    %c0_1 = arith.constant 0 : index
    %0 = vector.load %arg2[%c0, %c0_0, %c0_1] : memref<1x8x14xbf16, #tpu.memory_space<vmem>>, vector<1x8x14xbf16>
    %1 = vector.shape_cast %0 : vector<1x8x14xbf16> to vector<8x14xbf16>
    %2 = arith.extf %1 : vector<8x14xbf16> to vector<8x14xf32>
    %c0_2 = arith.constant 0 : index
    %c0_3 = arith.constant 0 : index
    %3 = vector.load %arg3[%c0_2, %c0_3] : memref<16x56xbf16, #tpu.memory_space<vmem>>, vector<16x56xbf16>
    %c0_4 = arith.constant 0 : index
    %c0_5 = arith.constant 0 : index
    %4 = vector.load %arg4[%c0_4, %c0_5] : memref<16x1xf32, #tpu.memory_space<vmem>>, vector<16x1xf32>
    %5 = arith.truncf %2 : vector<8x14xf32> to vector<8x14xbf16>
    %6 = vector.extract_strided_slice %5 {offsets = [0, 0], sizes = [8, 8], strides = [1, 1]} : vector<8x14xbf16> to vector<8x8xbf16>
    %7 = vector.extract_strided_slice %5 {offsets = [0, 1], sizes = [8, 8], strides = [1, 1]} : vector<8x14xbf16> to vector<8x8xbf16>
    %8 = vector.extract_strided_slice %5 {offsets = [0, 2], sizes = [8, 8], strides = [1, 1]} : vector<8x14xbf16> to vector<8x8xbf16>
    %9 = vector.extract_strided_slice %5 {offsets = [0, 3], sizes = [8, 8], strides = [1, 1]} : vector<8x14xbf16> to vector<8x8xbf16>
    %10 = vector.extract_strided_slice %5 {offsets = [0, 4], sizes = [8, 8], strides = [1, 1]} : vector<8x14xbf16> to vector<8x8xbf16>
    %11 = vector.extract_strided_slice %5 {offsets = [0, 5], sizes = [8, 8], strides = [1, 1]} : vector<8x14xbf16> to vector<8x8xbf16>
    %12 = vector.extract_strided_slice %5 {offsets = [0, 6], sizes = [8, 8], strides = [1, 1]} : vector<8x14xbf16> to vector<8x8xbf16>
    %13 = tpu.concatenate %6, %7, %8, %9, %10, %11, %12 in 0 : vector<8x8xbf16>, vector<8x8xbf16>, vector<8x8xbf16>, vector<8x8xbf16>, vector<8x8xbf16>, vector<8x8xbf16>, vector<8x8xbf16> -> vector<56x8xbf16>
    %cst = arith.constant dense<0.000000e+00> : vector<16x8xf32>
    %14 = tpu.matmul %3, %13, %cst {dimension_numbers = #tpu.dot_dimension_numbers<[1], [0], [0], [1], [0, 0, 1, 1], [], []>} : vector<16x56xbf16>, vector<56x8xbf16>, vector<16x8xf32> -> vector<16x8xf32>
    %15 = vector.broadcast %4 : vector<16x1xf32> to vector<16x8xf32>
    %16 = arith.addf %14, %15 : vector<16x8xf32>
    %c0_6 = arith.constant 0 : index
    %c0_7 = arith.constant 0 : index
    %c0_8 = arith.constant 0 : index
    %17 = vector.load %arg5[%c0_6, %c0_7, %c0_8] : memref<1x16x8xbf16, #tpu.memory_space<vmem>>, vector<1x16x8xbf16>
    %18 = vector.shape_cast %17 : vector<1x16x8xbf16> to vector<16x8xbf16>
    %19 = arith.extf %18 : vector<16x8xbf16> to vector<16x8xf32>
    %20 = arith.addf %16, %19 : vector<16x8xf32>
    %21 = arith.truncf %20 : vector<16x8xf32> to vector<16x8xbf16>
    %c0_9 = arith.constant 0 : index
    %c0_10 = arith.constant 0 : index
    %c0_11 = arith.constant 0 : index
    %22 = vector.load %arg6[%c0_9, %c0_10, %c0_11] : memref<1x16x8xbf16, #tpu.memory_space<vmem>>, vector<1x16x8xbf16>
    %23 = vector.shape_cast %22 : vector<1x16x8xbf16> to vector<16x8xbf16>
    %24 = vector.shape_cast %21 : vector<16x8xbf16> to vector<1x16x8xbf16>
    tpu.vector_store %arg6[%c0_9, %c0_10, %c0_11], %24 {strides = array<i32>} : memref<1x16x8xbf16, #tpu.memory_space<vmem>>, vector<1x16x8xbf16>,
    return
  }
  func.func @transform_0(%arg0: i32, %arg1: i32) -> (i32, i32, i32) {
    %c0_i32 = arith.constant 0 : i32
    %c0_i32_0 = arith.constant 0 : i32
    return %arg0, %c0_i32, %arg1 : i32, i32, i32
  }
  func.func @transform_1(%arg0: i32, %arg1: i32) -> (i32, i32) {
    %c0_i32 = arith.constant 0 : i32
    %c0_i32_0 = arith.constant 0 : i32
    %c0_i32_1 = arith.constant 0 : i32
    return %c0_i32, %c0_i32_0 : i32, i32
  }
  func.func @transform_2(%arg0: i32, %arg1: i32) -> (i32, i32) {
    %c0_i32 = arith.constant 0 : i32
    %c0_i32_0 = arith.constant 0 : i32
    %c0_i32_1 = arith.constant 0 : i32
    return %c0_i32, %c0_i32_0 : i32, i32
  }
  func.func @transform_3(%arg0: i32, %arg1: i32) -> (i32, i32, i32) {
    %c0_i32 = arith.constant 0 : i32
    %c0_i32_0 = arith.constant 0 : i32
    return %arg0, %c0_i32, %arg1 : i32, i32, i32
  }
  func.func @transform_4(%arg0: i32, %arg1: i32) -> (i32, i32, i32) {
    %c0_i32 = arith.constant 0 : i32
    %c0_i32_0 = arith.constant 0 : i32
    return %arg0, %c0_i32, %arg1 : i32, i32, i32
  }
}

module attributes {stable_mosaic.version = 11 : i64} {
  func.func @kernel(%arg0: i32, %arg1: i32, %arg2: memref<1x16x10xbf16, #tpu.memory_space<vmem>>, %arg3: memref<16x48xbf16, #tpu.memory_space<vmem>>, %arg4: memref<16x1xf32, #tpu.memory_space<vmem>>, %arg5: memref<1x16x8xbf16, #tpu.memory_space<vmem>>) attributes {dimension_semantics = [#tpu.dimension_semantics<parallel>, #tpu.dimension_semantics<parallel>], iteration_bounds = array<i64: 2, 1>, scalar_prefetch = 0 : i64, scratch_operands = 0 : i64, tpu.core_type = #tpu.core_type<tc>, window_params = [{transform_indices = @transform_0, window_bounds = array<i64: 1, 16, 10>}, {pipeline_mode = #tpu.pipeline_mode<synchronous>, transform_indices = @transform_1, window_bounds = array<i64: 16, 48>}, {pipeline_mode = #tpu.pipeline_mode<synchronous>, transform_indices = @transform_2, window_bounds = array<i64: 16, 1>}, {transform_indices = @transform_3, window_bounds = array<i64: 1, 16, 8>}]} {
    %c0 = arith.constant 0 : index
    %c0_0 = arith.constant 0 : index
    %c0_1 = arith.constant 0 : index
    %0 = vector.load %arg2[%c0, %c0_0, %c0_1] : memref<1x16x10xbf16, #tpu.memory_space<vmem>>, vector<1x16x10xbf16>
    %1 = vector.shape_cast %0 : vector<1x16x10xbf16> to vector<16x10xbf16>
    %2 = arith.extf %1 : vector<16x10xbf16> to vector<16x10xf32>
    %cst = arith.constant 0.000000e+00 : f32
    %3 = vector.broadcast %cst : f32 to vector<16x10xf32>
    %4 = arith.cmpf oge, %2, %3 : vector<16x10xf32>
    %cst_2 = arith.constant 1.000000e-01 : f32
    %5 = vector.broadcast %cst_2 : f32 to vector<16x10xf32>
    %6 = arith.mulf %5, %2 : vector<16x10xf32>
    %7 = arith.select %4, %2, %6 : vector<16x10xi1>, vector<16x10xf32>
    %c0_3 = arith.constant 0 : index
    %c0_4 = arith.constant 0 : index
    %8 = vector.load %arg3[%c0_3, %c0_4] : memref<16x48xbf16, #tpu.memory_space<vmem>>, vector<16x48xbf16>
    %c0_5 = arith.constant 0 : index
    %c0_6 = arith.constant 0 : index
    %9 = vector.load %arg4[%c0_5, %c0_6] : memref<16x1xf32, #tpu.memory_space<vmem>>, vector<16x1xf32>
    %10 = arith.truncf %7 : vector<16x10xf32> to vector<16x10xbf16>
    %11 = vector.extract_strided_slice %10 {offsets = [0, 0], sizes = [16, 8], strides = [1, 1]} : vector<16x10xbf16> to vector<16x8xbf16>
    %12 = vector.extract_strided_slice %10 {offsets = [0, 1], sizes = [16, 8], strides = [1, 1]} : vector<16x10xbf16> to vector<16x8xbf16>
    %13 = vector.extract_strided_slice %10 {offsets = [0, 2], sizes = [16, 8], strides = [1, 1]} : vector<16x10xbf16> to vector<16x8xbf16>
    %14 = tpu.concatenate %11, %12, %13 in 0 : vector<16x8xbf16>, vector<16x8xbf16>, vector<16x8xbf16> -> vector<48x8xbf16>
    %cst_7 = arith.constant dense<0.000000e+00> : vector<16x8xf32>
    %15 = tpu.matmul %8, %14, %cst_7 {dimension_numbers = #tpu.dot_dimension_numbers<[1], [0], [0], [1], [0, 0, 1, 1], [], []>} : vector<16x48xbf16>, vector<48x8xbf16>, vector<16x8xf32> -> vector<16x8xf32>
    %16 = vector.broadcast %9 : vector<16x1xf32> to vector<16x8xf32>
    %17 = arith.addf %15, %16 : vector<16x8xf32>
    %18 = arith.truncf %17 : vector<16x8xf32> to vector<16x8xbf16>
    %c0_8 = arith.constant 0 : index
    %c0_9 = arith.constant 0 : index
    %c0_10 = arith.constant 0 : index
    %19 = vector.load %arg5[%c0_8, %c0_9, %c0_10] : memref<1x16x8xbf16, #tpu.memory_space<vmem>>, vector<1x16x8xbf16>
    %20 = vector.shape_cast %19 : vector<1x16x8xbf16> to vector<16x8xbf16>
    %21 = vector.shape_cast %18 : vector<16x8xbf16> to vector<1x16x8xbf16>
    tpu.vector_store %arg5[%c0_8, %c0_9, %c0_10], %21 {strides = array<i32>} : memref<1x16x8xbf16, #tpu.memory_space<vmem>>, vector<1x16x8xbf16>,
    return
  }
  func.func @transform_0(%arg0: i32, %arg1: i32) -> (i32, i32, i32) {
    %c0_i32 = arith.constant 0 : i32
    %c0_i32_0 = arith.constant 0 : i32
    return %arg0, %c0_i32, %arg1 : i32, i32, i32
  }
  func.func @transform_1(%arg0: i32, %arg1: i32) -> (i32, i32) {
    %c0_i32 = arith.constant 0 : i32
    %c0_i32_0 = arith.constant 0 : i32
    %c0_i32_1 = arith.constant 0 : i32
    return %c0_i32, %c0_i32_0 : i32, i32
  }
  func.func @transform_2(%arg0: i32, %arg1: i32) -> (i32, i32) {
    %c0_i32 = arith.constant 0 : i32
    %c0_i32_0 = arith.constant 0 : i32
    %c0_i32_1 = arith.constant 0 : i32
    return %c0_i32, %c0_i32_0 : i32, i32
  }
  func.func @transform_3(%arg0: i32, %arg1: i32) -> (i32, i32, i32) {
    %c0_i32 = arith.constant 0 : i32
    %c0_i32_0 = arith.constant 0 : i32
    return %arg0, %c0_i32, %arg1 : i32, i32, i32
  }
}

module attributes {stable_mosaic.version = 11 : i64} {
  func.func @kernel(%arg0: i32, %arg1: i32, %arg2: memref<1x2x18xbf16, #tpu.memory_space<vmem>>, %arg3: memref<8x6xbf16, #tpu.memory_space<vmem>>, %arg4: memref<8x1xf32, #tpu.memory_space<vmem>>, %arg5: memref<1x8x16xbf16, #tpu.memory_space<vmem>>, %arg6: memref<1x8x16xbf16, #tpu.memory_space<vmem>>) attributes {dimension_semantics = [#tpu.dimension_semantics<parallel>, #tpu.dimension_semantics<parallel>], iteration_bounds = array<i64: 2, 1>, scalar_prefetch = 0 : i64, scratch_operands = 0 : i64, tpu.core_type = #tpu.core_type<tc>, window_params = [{transform_indices = @transform_0, window_bounds = array<i64: 1, 2, 18>}, {pipeline_mode = #tpu.pipeline_mode<synchronous>, transform_indices = @transform_1, window_bounds = array<i64: 8, 6>}, {pipeline_mode = #tpu.pipeline_mode<synchronous>, transform_indices = @transform_2, window_bounds = array<i64: 8, 1>}, {transform_indices = @transform_3, window_bounds = array<i64: 1, 8, 16>}, {transform_indices = @transform_4, window_bounds = array<i64: 1, 8, 16>}]} {
    %c0 = arith.constant 0 : index
    %c0_0 = arith.constant 0 : index
    %c0_1 = arith.constant 0 : index
    %0 = vector.load %arg2[%c0, %c0_0, %c0_1] : memref<1x2x18xbf16, #tpu.memory_space<vmem>>, vector<1x2x18xbf16>
    %1 = vector.shape_cast %0 : vector<1x2x18xbf16> to vector<2x18xbf16>
    %2 = arith.extf %1 : vector<2x18xbf16> to vector<2x18xf32>
    %c0_2 = arith.constant 0 : index
    %c0_3 = arith.constant 0 : index
    %3 = vector.load %arg3[%c0_2, %c0_3] : memref<8x6xbf16, #tpu.memory_space<vmem>>, vector<8x6xbf16>
    %c0_4 = arith.constant 0 : index
    %c0_5 = arith.constant 0 : index
    %4 = vector.load %arg4[%c0_4, %c0_5] : memref<8x1xf32, #tpu.memory_space<vmem>>, vector<8x1xf32>
    %5 = arith.truncf %2 : vector<2x18xf32> to vector<2x18xbf16>
    %6 = vector.extract_strided_slice %5 {offsets = [0, 0], sizes = [2, 16], strides = [1, 1]} : vector<2x18xbf16> to vector<2x16xbf16>
    %7 = vector.extract_strided_slice %5 {offsets = [0, 1], sizes = [2, 16], strides = [1, 1]} : vector<2x18xbf16> to vector<2x16xbf16>
    %8 = vector.extract_strided_slice %5 {offsets = [0, 2], sizes = [2, 16], strides = [1, 1]} : vector<2x18xbf16> to vector<2x16xbf16>
    %9 = tpu.concatenate %6, %7, %8 in 0 : vector<2x16xbf16>, vector<2x16xbf16>, vector<2x16xbf16> -> vector<6x16xbf16>
    %cst = arith.constant dense<0.000000e+00> : vector<8x16xf32>
    %10 = tpu.matmul %3, %9, %cst {dimension_numbers = #tpu.dot_dimension_numbers<[1], [0], [0], [1], [0, 0, 1, 1], [], []>} : vector<8x6xbf16>, vector<6x16xbf16>, vector<8x16xf32> -> vector<8x16xf32>
    %11 = vector.broadcast %4 : vector<8x1xf32> to vector<8x16xf32>
    %12 = arith.addf %10, %11 : vector<8x16xf32>
    %c0_6 = arith.constant 0 : index
    %c0_7 = arith.constant 0 : index
    %c0_8 = arith.constant 0 : index
    %13 = vector.load %arg5[%c0_6, %c0_7, %c0_8] : memref<1x8x16xbf16, #tpu.memory_space<vmem>>, vector<1x8x16xbf16>
    %14 = vector.shape_cast %13 : vector<1x8x16xbf16> to vector<8x16xbf16>
    %15 = arith.extf %14 : vector<8x16xbf16> to vector<8x16xf32>
    %16 = arith.addf %12, %15 : vector<8x16xf32>
    %17 = arith.truncf %16 : vector<8x16xf32> to vector<8x16xbf16>
    %c0_9 = arith.constant 0 : index
    %c0_10 = arith.constant 0 : index
    %c0_11 = arith.constant 0 : index
    %18 = vector.load %arg6[%c0_9, %c0_10, %c0_11] : memref<1x8x16xbf16, #tpu.memory_space<vmem>>, vector<1x8x16xbf16>
    %19 = vector.shape_cast %18 : vector<1x8x16xbf16> to vector<8x16xbf16>
    %20 = vector.shape_cast %17 : vector<8x16xbf16> to vector<1x8x16xbf16>
    tpu.vector_store %arg6[%c0_9, %c0_10, %c0_11], %20 {strides = array<i32>} : memref<1x8x16xbf16, #tpu.memory_space<vmem>>, vector<1x8x16xbf16>,
    return
  }
  func.func @transform_0(%arg0: i32, %arg1: i32) -> (i32, i32, i32) {
    %c0_i32 = arith.constant 0 : i32
    %c0_i32_0 = arith.constant 0 : i32
    return %arg0, %c0_i32, %arg1 : i32, i32, i32
  }
  func.func @transform_1(%arg0: i32, %arg1: i32) -> (i32, i32) {
    %c0_i32 = arith.constant 0 : i32
    %c0_i32_0 = arith.constant 0 : i32
    %c0_i32_1 = arith.constant 0 : i32
    return %c0_i32, %c0_i32_0 : i32, i32
  }
  func.func @transform_2(%arg0: i32, %arg1: i32) -> (i32, i32) {
    %c0_i32 = arith.constant 0 : i32
    %c0_i32_0 = arith.constant 0 : i32
    %c0_i32_1 = arith.constant 0 : i32
    return %c0_i32, %c0_i32_0 : i32, i32
  }
  func.func @transform_3(%arg0: i32, %arg1: i32) -> (i32, i32, i32) {
    %c0_i32 = arith.constant 0 : i32
    %c0_i32_0 = arith.constant 0 : i32
    return %arg0, %c0_i32, %arg1 : i32, i32, i32
  }
  func.func @transform_4(%arg0: i32, %arg1: i32) -> (i32, i32, i32) {
    %c0_i32 = arith.constant 0 : i32
    %c0_i32_0 = arith.constant 0 : i32
    return %arg0, %c0_i32, %arg1 : i32, i32, i32
  }
}

module attributes {stable_mosaic.version = 11 : i64} {
  func.func @kernel(%arg0: i32, %arg1: i32, %arg2: memref<1x8x64xbf16, #tpu.memory_space<vmem>>, %arg3: memref<6x8x40xbf16, #tpu.memory_space<vmem>>, %arg4: memref<6x8x1xf32, #tpu.memory_space<vmem>>, %arg5: memref<1x8x16xbf16, #tpu.memory_space<vmem>>, %arg6: memref<1x8x16xbf16, #tpu.memory_space<vmem>>) attributes {dimension_semantics = [#tpu.dimension_semantics<parallel>, #tpu.dimension_semantics<parallel>], iteration_bounds = array<i64: 2, 1>, scalar_prefetch = 0 : i64, scratch_operands = 0 : i64, tpu.core_type = #tpu.core_type<tc>, window_params = [{transform_indices = @transform_0, window_bounds = array<i64: 1, 8, 64>}, {pipeline_mode = #tpu.pipeline_mode<synchronous>, transform_indices = @transform_1, window_bounds = array<i64: 6, 8, 40>}, {pipeline_mode = #tpu.pipeline_mode<synchronous>, transform_indices = @transform_2, window_bounds = array<i64: 6, 8, 1>}, {transform_indices = @transform_3, window_bounds = array<i64: 1, 8, 16>}, {transform_indices = @transform_4, window_bounds = array<i64: 1, 8, 16>}]} {
    %c16_i32 = arith.constant 16 : i32
    %0 = arith.muli %arg1, %c16_i32 : i32
    %c0 = arith.constant 0 : index
    %c0_0 = arith.constant 0 : index
    %c0_1 = arith.constant 0 : index
    %1 = vector.load %arg2[%c0, %c0_0, %c0_1] : memref<1x8x64xbf16, #tpu.memory_space<vmem>>, vector<1x8x64xbf16>
    %2 = vector.shape_cast %1 : vector<1x8x64xbf16> to vector<8x64xbf16>
    %3 = arith.extf %2 : vector<8x64xbf16> to vector<8x64xf32>
    %cst = arith.constant 0.000000e+00 : f32
    %4 = vector.broadcast %cst : f32 to vector<8x64xf32>
    %5 = arith.cmpf oge, %3, %4 : vector<8x64xf32>
    %cst_2 = arith.constant 1.000000e-01 : f32
    %6 = vector.broadcast %cst_2 : f32 to vector<8x64xf32>
    %7 = arith.mulf %6, %3 : vector<8x64xf32>
    %8 = arith.select %5, %3, %7 : vector<8x64xi1>, vector<8x64xf32>
    %c0_3 = arith.constant 0 : index
    %c0_4 = arith.constant 0 : index
    %c0_5 = arith.constant 0 : index
    %9 = vector.load %arg3[%c0_3, %c0_4, %c0_5] : memref<6x8x40xbf16, #tpu.memory_space<vmem>>, vector<1x8x40xbf16>
    %10 = vector.shape_cast %9 : vector<1x8x40xbf16> to vector<8x40xbf16>
    %c0_6 = arith.constant 0 : index
    %c0_7 = arith.constant 0 : index
    %c0_8 = arith.constant 0 : index
    %11 = vector.load %arg4[%c0_6, %c0_7, %c0_8] : memref<6x8x1xf32, #tpu.memory_space<vmem>>, vector<1x8x1xf32>
    %12 = vector.shape_cast %11 : vector<1x8x1xf32> to vector<8x1xf32>
    %13 = arith.truncf %8 : vector<8x64xf32> to vector<8x64xbf16>
    %14 = vector.extract_strided_slice %13 {offsets = [0, 0], sizes = [8, 60], strides = [1, 1]} : vector<8x64xbf16> to vector<8x60xbf16>
    %15 = vector.extract_strided_slice %13 {offsets = [0, 1], sizes = [8, 60], strides = [1, 1]} : vector<8x64xbf16> to vector<8x60xbf16>
    %16 = vector.extract_strided_slice %13 {offsets = [0, 2], sizes = [8, 60], strides = [1, 1]} : vector<8x64xbf16> to vector<8x60xbf16>
    %17 = vector.extract_strided_slice %13 {offsets = [0, 3], sizes = [8, 60], strides = [1, 1]} : vector<8x64xbf16> to vector<8x60xbf16>
    %18 = vector.extract_strided_slice %13 {offsets = [0, 4], sizes = [8, 60], strides = [1, 1]} : vector<8x64xbf16> to vector<8x60xbf16>
    %19 = tpu.concatenate %14, %15, %16, %17, %18 in 0 : vector<8x60xbf16>, vector<8x60xbf16>, vector<8x60xbf16>, vector<8x60xbf16>, vector<8x60xbf16> -> vector<40x60xbf16>
    %cst_9 = arith.constant dense<0.000000e+00> : vector<8x60xf32>
    %20 = tpu.matmul %10, %19, %cst_9 {dimension_numbers = #tpu.dot_dimension_numbers<[1], [0], [0], [1], [0, 0, 1, 1], [], []>} : vector<8x40xbf16>, vector<40x60xbf16>, vector<8x60xf32> -> vector<8x60xf32>
    %21 = vector.broadcast %12 : vector<8x1xf32> to vector<8x60xf32>
    %22 = arith.addf %20, %21 : vector<8x60xf32>
    %c-22_i32 = arith.constant -22 : i32
    %23 = arith.addi %0, %c-22_i32 : i32
    %24 = tpu.iota {dimensions = array<i32: 1>} : vector<1x60xi32>
    %25 = vector.broadcast %23 : i32 to vector<1x60xi32>
    %26 = arith.addi %25, %24 : vector<1x60xi32>
    %c0_i32 = arith.constant 0 : i32
    %27 = vector.broadcast %c0_i32 : i32 to vector<1x60xi32>
    %28 = arith.cmpi sge, %26, %27 : vector<1x60xi32>
    %c16_i32_10 = arith.constant 16 : i32
    %29 = vector.broadcast %c16_i32_10 : i32 to vector<1x60xi32>
    %30 = arith.cmpi slt, %26, %29 : vector<1x60xi32>
    %31 = arith.andi %28, %30 : vector<1x60xi1>
    %cst_11 = arith.constant 0.000000e+00 : f32
    %32 = vector.shape_cast %31 : vector<1x60xi1> to vector<1x60xi1>
    %33 = vector.broadcast %32 : vector<1x60xi1> to vector<8x60xi1>
    %34 = vector.broadcast %cst_11 : f32 to vector<8x60xf32>
    %35 = arith.select %33, %22, %34 : vector<8x60xi1>, vector<8x60xf32>
    %cst_12 = arith.constant 0.000000e+00 : f32
    %36 = vector.broadcast %cst_12 : f32 to vector<8x60xf32>
    %37 = arith.cmpf oge, %35, %36 : vector<8x60xf32>
    %cst_13 = arith.constant 1.000000e-01 : f32
    %38 = vector.broadcast %cst_13 : f32 to vector<8x60xf32>
    %39 = arith.mulf %38, %35 : vector<8x60xf32>
    %40 = arith.select %37, %35, %39 : vector<8x60xi1>, vector<8x60xf32>
    %c1 = arith.constant 1 : index
    %c0_14 = arith.constant 0 : index
    %c0_15 = arith.constant 0 : index
    %41 = vector.load %arg3[%c1, %c0_14, %c0_15] : memref<6x8x40xbf16, #tpu.memory_space<vmem>>, vector<1x8x40xbf16>
    %42 = vector.shape_cast %41 : vector<1x8x40xbf16> to vector<8x40xbf16>
    %c1_16 = arith.constant 1 : index
    %c0_17 = arith.constant 0 : index
    %c0_18 = arith.constant 0 : index
    %43 = vector.load %arg4[%c1_16, %c0_17, %c0_18] : memref<6x8x1xf32, #tpu.memory_space<vmem>>, vector<1x8x1xf32>
    %44 = vector.shape_cast %43 : vector<1x8x1xf32> to vector<8x1xf32>
    %45 = arith.truncf %40 : vector<8x60xf32> to vector<8x60xbf16>
    %46 = vector.extract_strided_slice %45 {offsets = [0, 0], sizes = [8, 56], strides = [1, 1]} : vector<8x60xbf16> to vector<8x56xbf16>
    %47 = vector.extract_strided_slice %45 {offsets = [0, 1], sizes = [8, 56], strides = [1, 1]} : vector<8x60xbf16> to vector<8x56xbf16>
    %48 = vector.extract_strided_slice %45 {offsets = [0, 2], sizes = [8, 56], strides = [1, 1]} : vector<8x60xbf16> to vector<8x56xbf16>
    %49 = vector.extract_strided_slice %45 {offsets = [0, 3], sizes = [8, 56], strides = [1, 1]} : vector<8x60xbf16> to vector<8x56xbf16>
    %50 = vector.extract_strided_slice %45 {offsets = [0, 4], sizes = [8, 56], strides = [1, 1]} : vector<8x60xbf16> to vector<8x56xbf16>
    %51 = tpu.concatenate %46, %47, %48, %49, %50 in 0 : vector<8x56xbf16>, vector<8x56xbf16>, vector<8x56xbf16>, vector<8x56xbf16>, vector<8x56xbf16> -> vector<40x56xbf16>
    %cst_19 = arith.constant dense<0.000000e+00> : vector<8x56xf32>
    %52 = tpu.matmul %42, %51, %cst_19 {dimension_numbers = #tpu.dot_dimension_numbers<[1], [0], [0], [1], [0, 0, 1, 1], [], []>} : vector<8x40xbf16>, vector<40x56xbf16>, vector<8x56xf32> -> vector<8x56xf32>
    %53 = vector.broadcast %44 : vector<8x1xf32> to vector<8x56xf32>
    %54 = arith.addf %52, %53 : vector<8x56xf32>
    %55 = vector.extract_strided_slice %3 {offsets = [0, 4], sizes = [8, 56], strides = [1, 1]} : vector<8x64xf32> to vector<8x56xf32>
    %56 = arith.addf %54, %55 : vector<8x56xf32>
    %c-20_i32 = arith.constant -20 : i32
    %57 = arith.addi %0, %c-20_i32 : i32
    %58 = tpu.iota {dimensions = array<i32: 1>} : vector<1x56xi32>
    %59 = vector.broadcast %57 : i32 to vector<1x56xi32>
    %60 = arith.addi %59, %58 : vector<1x56xi32>
    %c0_i32_20 = arith.constant 0 : i32
    %61 = vector.broadcast %c0_i32_20 : i32 to vector<1x56xi32>
    %62 = arith.cmpi sge, %60, %61 : vector<1x56xi32>
    %c16_i32_21 = arith.constant 16 : i32
    %63 = vector.broadcast %c16_i32_21 : i32 to vector<1x56xi32>
    %64 = arith.cmpi slt, %60, %63 : vector<1x56xi32>
    %65 = arith.andi %62, %64 : vector<1x56xi1>
    %cst_22 = arith.constant 0.000000e+00 : f32
    %66 = vector.shape_cast %65 : vector<1x56xi1> to vector<1x56xi1>
    %67 = vector.broadcast %66 : vector<1x56xi1> to vector<8x56xi1>
    %68 = vector.broadcast %cst_22 : f32 to vector<8x56xf32>
    %69 = arith.select %67, %56, %68 : vector<8x56xi1>, vector<8x56xf32>
    %cst_23 = arith.constant 0.000000e+00 : f32
    %70 = vector.broadcast %cst_23 : f32 to vector<8x56xf32>
    %71 = arith.cmpf oge, %69, %70 : vector<8x56xf32>
    %cst_24 = arith.constant 1.000000e-01 : f32
    %72 = vector.broadcast %cst_24 : f32 to vector<8x56xf32>
    %73 = arith.mulf %72, %69 : vector<8x56xf32>
    %74 = arith.select %71, %69, %73 : vector<8x56xi1>, vector<8x56xf32>
    %c2 = arith.constant 2 : index
    %c0_25 = arith.constant 0 : index
    %c0_26 = arith.constant 0 : index
    %75 = vector.load %arg3[%c2, %c0_25, %c0_26] : memref<6x8x40xbf16, #tpu.memory_space<vmem>>, vector<1x8x40xbf16>
    %76 = vector.shape_cast %75 : vector<1x8x40xbf16> to vector<8x40xbf16>
    %c2_27 = arith.constant 2 : index
    %c0_28 = arith.constant 0 : index
    %c0_29 = arith.constant 0 : index
    %77 = vector.load %arg4[%c2_27, %c0_28, %c0_29] : memref<6x8x1xf32, #tpu.memory_space<vmem>>, vector<1x8x1xf32>
    %78 = vector.shape_cast %77 : vector<1x8x1xf32> to vector<8x1xf32>
    %79 = arith.truncf %74 : vector<8x56xf32> to vector<8x56xbf16>
    %80 = vector.extract_strided_slice %79 {offsets = [0, 0], sizes = [8, 44], strides = [1, 1]} : vector<8x56xbf16> to vector<8x44xbf16>
    %81 = vector.extract_strided_slice %79 {offsets = [0, 3], sizes = [8, 44], strides = [1, 1]} : vector<8x56xbf16> to vector<8x44xbf16>
    %82 = vector.extract_strided_slice %79 {offsets = [0, 6], sizes = [8, 44], strides = [1, 1]} : vector<8x56xbf16> to vector<8x44xbf16>
    %83 = vector.extract_strided_slice %79 {offsets = [0, 9], sizes = [8, 44], strides = [1, 1]} : vector<8x56xbf16> to vector<8x44xbf16>
    %84 = vector.extract_strided_slice %79 {offsets = [0, 12], sizes = [8, 44], strides = [1, 1]} : vector<8x56xbf16> to vector<8x44xbf16>
    %85 = tpu.concatenate %80, %81, %82, %83, %84 in 0 : vector<8x44xbf16>, vector<8x44xbf16>, vector<8x44xbf16>, vector<8x44xbf16>, vector<8x44xbf16> -> vector<40x44xbf16>
    %cst_30 = arith.constant dense<0.000000e+00> : vector<8x44xf32>
    %86 = tpu.matmul %76, %85, %cst_30 {dimension_numbers = #tpu.dot_dimension_numbers<[1], [0], [0], [1], [0, 0, 1, 1], [], []>} : vector<8x40xbf16>, vector<40x44xbf16>, vector<8x44xf32> -> vector<8x44xf32>
    %87 = vector.broadcast %78 : vector<8x1xf32> to vector<8x44xf32>
    %88 = arith.addf %86, %87 : vector<8x44xf32>
    %c-14_i32 = arith.constant -14 : i32
    %89 = arith.addi %0, %c-14_i32 : i32
    %90 = tpu.iota {dimensions = array<i32: 1>} : vector<1x44xi32>
    %91 = vector.broadcast %89 : i32 to vector<1x44xi32>
    %92 = arith.addi %91, %90 : vector<1x44xi32>
    %c0_i32_31 = arith.constant 0 : i32
    %93 = vector.broadcast %c0_i32_31 : i32 to vector<1x44xi32>
    %94 = arith.cmpi sge, %92, %93 : vector<1x44xi32>
    %c16_i32_32 = arith.constant 16 : i32
    %95 = vector.broadcast %c16_i32_32 : i32 to vector<1x44xi32>
    %96 = arith.cmpi slt, %92, %95 : vector<1x44xi32>
    %97 = arith.andi %94, %96 : vector<1x44xi1>
    %cst_33 = arith.constant 0.000000e+00 : f32
    %98 = vector.shape_cast %97 : vector<1x44xi1> to vector<1x44xi1>
    %99 = vector.broadcast %98 : vector<1x44xi1> to vector<8x44xi1>
    %100 = vector.broadcast %cst_33 : f32 to vector<8x44xf32>
    %101 = arith.select %99, %88, %100 : vector<8x44xi1>, vector<8x44xf32>
    %cst_34 = arith.constant 0.000000e+00 : f32
    %102 = vector.broadcast %cst_34 : f32 to vector<8x44xf32>
    %103 = arith.cmpf oge, %101, %102 : vector<8x44xf32>
    %cst_35 = arith.constant 1.000000e-01 : f32
    %104 = vector.broadcast %cst_35 : f32 to vector<8x44xf32>
    %105 = arith.mulf %104, %101 : vector<8x44xf32>
    %106 = arith.select %103, %101, %105 : vector<8x44xi1>, vector<8x44xf32>
    %c3 = arith.constant 3 : index
    %c0_36 = arith.constant 0 : index
    %c0_37 = arith.constant 0 : index
    %107 = vector.load %arg3[%c3, %c0_36, %c0_37] : memref<6x8x40xbf16, #tpu.memory_space<vmem>>, vector<1x8x40xbf16>
    %108 = vector.shape_cast %107 : vector<1x8x40xbf16> to vector<8x40xbf16>
    %c3_38 = arith.constant 3 : index
    %c0_39 = arith.constant 0 : index
    %c0_40 = arith.constant 0 : index
    %109 = vector.load %arg4[%c3_38, %c0_39, %c0_40] : memref<6x8x1xf32, #tpu.memory_space<vmem>>, vector<1x8x1xf32>
    %110 = vector.shape_cast %109 : vector<1x8x1xf32> to vector<8x1xf32>
    %111 = arith.truncf %106 : vector<8x44xf32> to vector<8x44xbf16>
    %112 = vector.extract_strided_slice %111 {offsets = [0, 0], sizes = [8, 40], strides = [1, 1]} : vector<8x44xbf16> to vector<8x40xbf16>
    %113 = vector.extract_strided_slice %111 {offsets = [0, 1], sizes = [8, 40], strides = [1, 1]} : vector<8x44xbf16> to vector<8x40xbf16>
    %114 = vector.extract_strided_slice %111 {offsets = [0, 2], sizes = [8, 40], strides = [1, 1]} : vector<8x44xbf16> to vector<8x40xbf16>
    %115 = vector.extract_strided_slice %111 {offsets = [0, 3], sizes = [8, 40], strides = [1, 1]} : vector<8x44xbf16> to vector<8x40xbf16>
    %116 = vector.extract_strided_slice %111 {offsets = [0, 4], sizes = [8, 40], strides = [1, 1]} : vector<8x44xbf16> to vector<8x40xbf16>
    %117 = tpu.concatenate %112, %113, %114, %115, %116 in 0 : vector<8x40xbf16>, vector<8x40xbf16>, vector<8x40xbf16>, vector<8x40xbf16>, vector<8x40xbf16> -> vector<40x40xbf16>
    %cst_41 = arith.constant dense<0.000000e+00> : vector<8x40xf32>
    %118 = tpu.matmul %108, %117, %cst_41 {dimension_numbers = #tpu.dot_dimension_numbers<[1], [0], [0], [1], [0, 0, 1, 1], [], []>} : vector<8x40xbf16>, vector<40x40xbf16>, vector<8x40xf32> -> vector<8x40xf32>
    %119 = vector.broadcast %110 : vector<8x1xf32> to vector<8x40xf32>
    %120 = arith.addf %118, %119 : vector<8x40xf32>
    %121 = vector.extract_strided_slice %69 {offsets = [0, 8], sizes = [8, 40], strides = [1, 1]} : vector<8x56xf32> to vector<8x40xf32>
    %122 = arith.addf %120, %121 : vector<8x40xf32>
    %c-12_i32 = arith.constant -12 : i32
    %123 = arith.addi %0, %c-12_i32 : i32
    %124 = tpu.iota {dimensions = array<i32: 1>} : vector<1x40xi32>
    %125 = vector.broadcast %123 : i32 to vector<1x40xi32>
    %126 = arith.addi %125, %124 : vector<1x40xi32>
    %c0_i32_42 = arith.constant 0 : i32
    %127 = vector.broadcast %c0_i32_42 : i32 to vector<1x40xi32>
    %128 = arith.cmpi sge, %126, %127 : vector<1x40xi32>
    %c16_i32_43 = arith.constant 16 : i32
    %129 = vector.broadcast %c16_i32_43 : i32 to vector<1x40xi32>
    %130 = arith.cmpi slt, %126, %129 : vector<1x40xi32>
    %131 = arith.andi %128, %130 : vector<1x40xi1>
    %cst_44 = arith.constant 0.000000e+00 : f32
    %132 = vector.shape_cast %131 : vector<1x40xi1> to vector<1x40xi1>
    %133 = vector.broadcast %132 : vector<1x40xi1> to vector<8x40xi1>
    %134 = vector.broadcast %cst_44 : f32 to vector<8x40xf32>
    %135 = arith.select %133, %122, %134 : vector<8x40xi1>, vector<8x40xf32>
    %cst_45 = arith.constant 0.000000e+00 : f32
    %136 = vector.broadcast %cst_45 : f32 to vector<8x40xf32>
    %137 = arith.cmpf oge, %135, %136 : vector<8x40xf32>
    %cst_46 = arith.constant 1.000000e-01 : f32
    %138 = vector.broadcast %cst_46 : f32 to vector<8x40xf32>
    %139 = arith.mulf %138, %135 : vector<8x40xf32>
    %140 = arith.select %137, %135, %139 : vector<8x40xi1>, vector<8x40xf32>
    %c4 = arith.constant 4 : index
    %c0_47 = arith.constant 0 : index
    %c0_48 = arith.constant 0 : index
    %141 = vector.load %arg3[%c4, %c0_47, %c0_48] : memref<6x8x40xbf16, #tpu.memory_space<vmem>>, vector<1x8x40xbf16>
    %142 = vector.shape_cast %141 : vector<1x8x40xbf16> to vector<8x40xbf16>
    %c4_49 = arith.constant 4 : index
    %c0_50 = arith.constant 0 : index
    %c0_51 = arith.constant 0 : index
    %143 = vector.load %arg4[%c4_49, %c0_50, %c0_51] : memref<6x8x1xf32, #tpu.memory_space<vmem>>, vector<1x8x1xf32>
    %144 = vector.shape_cast %143 : vector<1x8x1xf32> to vector<8x1xf32>
    %145 = arith.truncf %140 : vector<8x40xf32> to vector<8x40xbf16>
    %146 = vector.extract_strided_slice %145 {offsets = [0, 0], sizes = [8, 20], strides = [1, 1]} : vector<8x40xbf16> to vector<8x20xbf16>
    %147 = vector.extract_strided_slice %145 {offsets = [0, 5], sizes = [8, 20], strides = [1, 1]} : vector<8x40xbf16> to vector<8x20xbf16>
    %148 = vector.extract_strided_slice %145 {offsets = [0, 10], sizes = [8, 20], strides = [1, 1]} : vector<8x40xbf16> to vector<8x20xbf16>
    %149 = vector.extract_strided_slice %145 {offsets = [0, 15], sizes = [8, 20], strides = [1, 1]} : vector<8x40xbf16> to vector<8x20xbf16>
    %150 = vector.extract_strided_slice %145 {offsets = [0, 20], sizes = [8, 20], strides = [1, 1]} : vector<8x40xbf16> to vector<8x20xbf16>
    %151 = tpu.concatenate %146, %147, %148, %149, %150 in 0 : vector<8x20xbf16>, vector<8x20xbf16>, vector<8x20xbf16>, vector<8x20xbf16>, vector<8x20xbf16> -> vector<40x20xbf16>
    %cst_52 = arith.constant dense<0.000000e+00> : vector<8x20xf32>
    %152 = tpu.matmul %142, %151, %cst_52 {dimension_numbers = #tpu.dot_dimension_numbers<[1], [0], [0], [1], [0, 0, 1, 1], [], []>} : vector<8x40xbf16>, vector<40x20xbf16>, vector<8x20xf32> -> vector<8x20xf32>
    %153 = vector.broadcast %144 : vector<8x1xf32> to vector<8x20xf32>
    %154 = arith.addf %152, %153 : vector<8x20xf32>
    %c-2_i32 = arith.constant -2 : i32
    %155 = arith.addi %0, %c-2_i32 : i32
    %156 = tpu.iota {dimensions = array<i32: 1>} : vector<1x20xi32>
    %157 = vector.broadcast %155 : i32 to vector<1x20xi32>
    %158 = arith.addi %157, %156 : vector<1x20xi32>
    %c0_i32_53 = arith.constant 0 : i32
    %159 = vector.broadcast %c0_i32_53 : i32 to vector<1x20xi32>
    %160 = arith.cmpi sge, %158, %159 : vector<1x20xi32>
    %c16_i32_54 = arith.constant 16 : i32
    %161 = vector.broadcast %c16_i32_54 : i32 to vector<1x20xi32>
    %162 = arith.cmpi slt, %158, %161 : vector<1x20xi32>
    %163 = arith.andi %160, %162 : vector<1x20xi1>
    %cst_55 = arith.constant 0.000000e+00 : f32
    %164 = vector.shape_cast %163 : vector<1x20xi1> to vector<1x20xi1>
    %165 = vector.broadcast %164 : vector<1x20xi1> to vector<8x20xi1>
    %166 = vector.broadcast %cst_55 : f32 to vector<8x20xf32>
    %167 = arith.select %165, %154, %166 : vector<8x20xi1>, vector<8x20xf32>
    %cst_56 = arith.constant 0.000000e+00 : f32
    %168 = vector.broadcast %cst_56 : f32 to vector<8x20xf32>
    %169 = arith.cmpf oge, %167, %168 : vector<8x20xf32>
    %cst_57 = arith.constant 1.000000e-01 : f32
    %170 = vector.broadcast %cst_57 : f32 to vector<8x20xf32>
    %171 = arith.mulf %170, %167 : vector<8x20xf32>
    %172 = arith.select %169, %167, %171 : vector<8x20xi1>, vector<8x20xf32>
    %c5 = arith.constant 5 : index
    %c0_58 = arith.constant 0 : index
    %c0_59 = arith.constant 0 : index
    %173 = vector.load %arg3[%c5, %c0_58, %c0_59] : memref<6x8x40xbf16, #tpu.memory_space<vmem>>, vector<1x8x40xbf16>
    %174 = vector.shape_cast %173 : vector<1x8x40xbf16> to vector<8x40xbf16>
    %c5_60 = arith.constant 5 : index
    %c0_61 = arith.constant 0 : index
    %c0_62 = arith.constant 0 : index
    %175 = vector.load %arg4[%c5_60, %c0_61, %c0_62] : memref<6x8x1xf32, #tpu.memory_space<vmem>>, vector<1x8x1xf32>
    %176 = vector.shape_cast %175 : vector<1x8x1xf32> to vector<8x1xf32>
    %177 = arith.truncf %172 : vector<8x20xf32> to vector<8x20xbf16>
    %178 = vector.extract_strided_slice %177 {offsets = [0, 0], sizes = [8, 16], strides = [1, 1]} : vector<8x20xbf16> to vector<8x16xbf16>
    %179 = vector.extract_strided_slice %177 {offsets = [0, 1], sizes = [8, 16], strides = [1, 1]} : vector<8x20xbf16> to vector<8x16xbf16>
    %180 = vector.extract_strided_slice %177 {offsets = [0, 2], sizes = [8, 16], strides = [1, 1]} : vector<8x20xbf16> to vector<8x16xbf16>
    %181 = vector.extract_strided_slice %177 {offsets = [0, 3], sizes = [8, 16], strides = [1, 1]} : vector<8x20xbf16> to vector<8x16xbf16>
    %182 = vector.extract_strided_slice %177 {offsets = [0, 4], sizes = [8, 16], strides = [1, 1]} : vector<8x20xbf16> to vector<8x16xbf16>
    %183 = tpu.concatenate %178, %179, %180, %181, %182 in 0 : vector<8x16xbf16>, vector<8x16xbf16>, vector<8x16xbf16>, vector<8x16xbf16>, vector<8x16xbf16> -> vector<40x16xbf16>
    %cst_63 = arith.constant dense<0.000000e+00> : vector<8x16xf32>
    %184 = tpu.matmul %174, %183, %cst_63 {dimension_numbers = #tpu.dot_dimension_numbers<[1], [0], [0], [1], [0, 0, 1, 1], [], []>} : vector<8x40xbf16>, vector<40x16xbf16>, vector<8x16xf32> -> vector<8x16xf32>
    %185 = vector.broadcast %176 : vector<8x1xf32> to vector<8x16xf32>
    %186 = arith.addf %184, %185 : vector<8x16xf32>
    %187 = vector.extract_strided_slice %135 {offsets = [0, 12], sizes = [8, 16], strides = [1, 1]} : vector<8x40xf32> to vector<8x16xf32>
    %188 = arith.addf %186, %187 : vector<8x16xf32>
    %c0_i32_64 = arith.constant 0 : i32
    %189 = arith.addi %0, %c0_i32_64 : i32
    %190 = tpu.iota {dimensions = array<i32: 1>} : vector<1x16xi32>
    %191 = vector.broadcast %189 : i32 to vector<1x16xi32>
    %192 = arith.addi %191, %190 : vector<1x16xi32>
    %c0_i32_65 = arith.constant 0 : i32
    %193 = vector.broadcast %c0_i32_65 : i32 to vector<1x16xi32>
    %194 = arith.cmpi sge, %192, %193 : vector<1x16xi32>
    %c16_i32_66 = arith.constant 16 : i32
    %195 = vector.broadcast %c16_i32_66 : i32 to vector<1x16xi32>
    %196 = arith.cmpi slt, %192, %195 : vector<1x16xi32>
    %197 = arith.andi %194, %196 : vector<1x16xi1>
    %cst_67 = arith.constant 0.000000e+00 : f32
    %198 = vector.shape_cast %197 : vector<1x16xi1> to vector<1x16xi1>
    %199 = vector.broadcast %198 : vector<1x16xi1> to vector<8x16xi1>
    %200 = vector.broadcast %cst_67 : f32 to vector<8x16xf32>
    %201 = arith.select %199, %188, %200 : vector<8x16xi1>, vector<8x16xf32>
    %c0_68 = arith.constant 0 : index
    %c0_69 = arith.constant 0 : index
    %c0_70 = arith.constant 0 : index
    %202 = vector.load %arg5[%c0_68, %c0_69, %c0_70] : memref<1x8x16xbf16, #tpu.memory_space<vmem>>, vector<1x8x16xbf16>
    %203 = vector.shape_cast %202 : vector<1x8x16xbf16> to vector<8x16xbf16>
    %204 = arith.extf %203 : vector<8x16xbf16> to vector<8x16xf32>
    %205 = arith.addf %201, %204 : vector<8x16xf32>
    %cst_71 = arith.constant 5.000000e-01 : f32
    %206 = vector.broadcast %cst_71 : f32 to vector<8x16xf32>
    %207 = arith.mulf %205, %206 : vector<8x16xf32>
    %208 = arith.truncf %207 : vector<8x16xf32> to vector<8x16xbf16>
    %c0_72 = arith.constant 0 : index
    %c0_73 = arith.constant 0 : index
    %c0_74 = arith.constant 0 : index
    %209 = vector.load %arg6[%c0_72, %c0_73, %c0_74] : memref<1x8x16xbf16, #tpu.memory_space<vmem>>, vector<1x8x16xbf16>
    %210 = vector.shape_cast %209 : vector<1x8x16xbf16> to vector<8x16xbf16>
    %211 = vector.shape_cast %208 : vector<8x16xbf16> to vector<1x8x16xbf16>
    tpu.vector_store %arg6[%c0_72, %c0_73, %c0_74], %211 {strides = array<i32>} : memref<1x8x16xbf16, #tpu.memory_space<vmem>>, vector<1x8x16xbf16>,
    return
  }
  func.func @transform_0(%arg0: i32, %arg1: i32) -> (i32, i32, i32) {
    %c0_i32 = arith.constant 0 : i32
    %c0_i32_0 = arith.constant 0 : i32
    return %arg0, %c0_i32, %arg1 : i32, i32, i32
  }
  func.func @transform_1(%arg0: i32, %arg1: i32) -> (i32, i32, i32) {
    %c0_i32 = arith.constant 0 : i32
    %c0_i32_0 = arith.constant 0 : i32
    %c0_i32_1 = arith.constant 0 : i32
    %c0_i32_2 = arith.constant 0 : i32
    return %c0_i32, %c0_i32_0, %c0_i32_1 : i32, i32, i32
  }
  func.func @transform_2(%arg0: i32, %arg1: i32) -> (i32, i32, i32) {
    %c0_i32 = arith.constant 0 : i32
    %c0_i32_0 = arith.constant 0 : i32
    %c0_i32_1 = arith.constant 0 : i32
    %c0_i32_2 = arith.constant 0 : i32
    return %c0_i32, %c0_i32_0, %c0_i32_1 : i32, i32, i32
  }
  func.func @transform_3(%arg0: i32, %arg1: i32) -> (i32, i32, i32) {
    %c0_i32 = arith.constant 0 : i32
    %c0_i32_0 = arith.constant 0 : i32
    return %arg0, %c0_i32, %arg1 : i32, i32, i32
  }
  func.func @transform_4(%arg0: i32, %arg1: i32) -> (i32, i32, i32) {
    %c0_i32 = arith.constant 0 : i32
    %c0_i32_0 = arith.constant 0 : i32
    return %arg0, %c0_i32, %arg1 : i32, i32, i32
  }
}

module attributes {stable_mosaic.version = 11 : i64} {
  func.func @kernel(%arg0: i32, %arg1: i32, %arg2: memref<1x8x18xbf16, #tpu.memory_space<vmem>>, %arg3: memref<8x24xbf16, #tpu.memory_space<vmem>>, %arg4: memref<8x1xf32, #tpu.memory_space<vmem>>, %arg5: memref<1x8x16xbf16, #tpu.memory_space<vmem>>) attributes {dimension_semantics = [#tpu.dimension_semantics<parallel>, #tpu.dimension_semantics<parallel>], iteration_bounds = array<i64: 2, 1>, scalar_prefetch = 0 : i64, scratch_operands = 0 : i64, tpu.core_type = #tpu.core_type<tc>, window_params = [{transform_indices = @transform_0, window_bounds = array<i64: 1, 8, 18>}, {pipeline_mode = #tpu.pipeline_mode<synchronous>, transform_indices = @transform_1, window_bounds = array<i64: 8, 24>}, {pipeline_mode = #tpu.pipeline_mode<synchronous>, transform_indices = @transform_2, window_bounds = array<i64: 8, 1>}, {transform_indices = @transform_3, window_bounds = array<i64: 1, 8, 16>}]} {
    %c0 = arith.constant 0 : index
    %c0_0 = arith.constant 0 : index
    %c0_1 = arith.constant 0 : index
    %0 = vector.load %arg2[%c0, %c0_0, %c0_1] : memref<1x8x18xbf16, #tpu.memory_space<vmem>>, vector<1x8x18xbf16>
    %1 = vector.shape_cast %0 : vector<1x8x18xbf16> to vector<8x18xbf16>
    %2 = arith.extf %1 : vector<8x18xbf16> to vector<8x18xf32>
    %cst = arith.constant 0.000000e+00 : f32
    %3 = vector.broadcast %cst : f32 to vector<8x18xf32>
    %4 = arith.cmpf oge, %2, %3 : vector<8x18xf32>
    %cst_2 = arith.constant 1.000000e-01 : f32
    %5 = vector.broadcast %cst_2 : f32 to vector<8x18xf32>
    %6 = arith.mulf %5, %2 : vector<8x18xf32>
    %7 = arith.select %4, %2, %6 : vector<8x18xi1>, vector<8x18xf32>
    %c0_3 = arith.constant 0 : index
    %c0_4 = arith.constant 0 : index
    %8 = vector.load %arg3[%c0_3, %c0_4] : memref<8x24xbf16, #tpu.memory_space<vmem>>, vector<8x24xbf16>
    %c0_5 = arith.constant 0 : index
    %c0_6 = arith.constant 0 : index
    %9 = vector.load %arg4[%c0_5, %c0_6] : memref<8x1xf32, #tpu.memory_space<vmem>>, vector<8x1xf32>
    %10 = arith.truncf %7 : vector<8x18xf32> to vector<8x18xbf16>
    %11 = vector.extract_strided_slice %10 {offsets = [0, 0], sizes = [8, 16], strides = [1, 1]} : vector<8x18xbf16> to vector<8x16xbf16>
    %12 = vector.extract_strided_slice %10 {offsets = [0, 1], sizes = [8, 16], strides = [1, 1]} : vector<8x18xbf16> to vector<8x16xbf16>
    %13 = vector.extract_strided_slice %10 {offsets = [0, 2], sizes = [8, 16], strides = [1, 1]} : vector<8x18xbf16> to vector<8x16xbf16>
    %14 = tpu.concatenate %11, %12, %13 in 0 : vector<8x16xbf16>, vector<8x16xbf16>, vector<8x16xbf16> -> vector<24x16xbf16>
    %cst_7 = arith.constant dense<0.000000e+00> : vector<8x16xf32>
    %15 = tpu.matmul %8, %14, %cst_7 {dimension_numbers = #tpu.dot_dimension_numbers<[1], [0], [0], [1], [0, 0, 1, 1], [], []>} : vector<8x24xbf16>, vector<24x16xbf16>, vector<8x16xf32> -> vector<8x16xf32>
    %16 = vector.broadcast %9 : vector<8x1xf32> to vector<8x16xf32>
    %17 = arith.addf %15, %16 : vector<8x16xf32>
    %18 = arith.truncf %17 : vector<8x16xf32> to vector<8x16xbf16>
    %c0_8 = arith.constant 0 : index
    %c0_9 = arith.constant 0 : index
    %c0_10 = arith.constant 0 : index
    %19 = vector.load %arg5[%c0_8, %c0_9, %c0_10] : memref<1x8x16xbf16, #tpu.memory_space<vmem>>, vector<1x8x16xbf16>
    %20 = vector.shape_cast %19 : vector<1x8x16xbf16> to vector<8x16xbf16>
    %21 = vector.shape_cast %18 : vector<8x16xbf16> to vector<1x8x16xbf16>
    tpu.vector_store %arg5[%c0_8, %c0_9, %c0_10], %21 {strides = array<i32>} : memref<1x8x16xbf16, #tpu.memory_space<vmem>>, vector<1x8x16xbf16>,
    return
  }
  func.func @transform_0(%arg0: i32, %arg1: i32) -> (i32, i32, i32) {
    %c0_i32 = arith.constant 0 : i32
    %c0_i32_0 = arith.constant 0 : i32
    return %arg0, %c0_i32, %arg1 : i32, i32, i32
  }
  func.func @transform_1(%arg0: i32, %arg1: i32) -> (i32, i32) {
    %c0_i32 = arith.constant 0 : i32
    %c0_i32_0 = arith.constant 0 : i32
    %c0_i32_1 = arith.constant 0 : i32
    return %c0_i32, %c0_i32_0 : i32, i32
  }
  func.func @transform_2(%arg0: i32, %arg1: i32) -> (i32, i32) {
    %c0_i32 = arith.constant 0 : i32
    %c0_i32_0 = arith.constant 0 : i32
    %c0_i32_1 = arith.constant 0 : i32
    return %c0_i32, %c0_i32_0 : i32, i32
  }
  func.func @transform_3(%arg0: i32, %arg1: i32) -> (i32, i32, i32) {
    %c0_i32 = arith.constant 0 : i32
    %c0_i32_0 = arith.constant 0 : i32
    return %arg0, %c0_i32, %arg1 : i32, i32, i32
  }
}

module attributes {stable_mosaic.version = 11 : i64} {
  func.func @kernel(%arg0: i32, %arg1: i32, %arg2: memref<1x8x40xbf16, #tpu.memory_space<vmem>>, %arg3: memref<6x8x24xbf16, #tpu.memory_space<vmem>>, %arg4: memref<6x8x1xf32, #tpu.memory_space<vmem>>, %arg5: memref<1x8x16xbf16, #tpu.memory_space<vmem>>) attributes {dimension_semantics = [#tpu.dimension_semantics<parallel>, #tpu.dimension_semantics<parallel>], iteration_bounds = array<i64: 2, 1>, scalar_prefetch = 0 : i64, scratch_operands = 0 : i64, tpu.core_type = #tpu.core_type<tc>, window_params = [{transform_indices = @transform_0, window_bounds = array<i64: 1, 8, 40>}, {pipeline_mode = #tpu.pipeline_mode<synchronous>, transform_indices = @transform_1, window_bounds = array<i64: 6, 8, 24>}, {pipeline_mode = #tpu.pipeline_mode<synchronous>, transform_indices = @transform_2, window_bounds = array<i64: 6, 8, 1>}, {transform_indices = @transform_3, window_bounds = array<i64: 1, 8, 16>}]} {
    %c16_i32 = arith.constant 16 : i32
    %0 = arith.muli %arg1, %c16_i32 : i32
    %c0 = arith.constant 0 : index
    %c0_0 = arith.constant 0 : index
    %c0_1 = arith.constant 0 : index
    %1 = vector.load %arg2[%c0, %c0_0, %c0_1] : memref<1x8x40xbf16, #tpu.memory_space<vmem>>, vector<1x8x40xbf16>
    %2 = vector.shape_cast %1 : vector<1x8x40xbf16> to vector<8x40xbf16>
    %3 = arith.extf %2 : vector<8x40xbf16> to vector<8x40xf32>
    %cst = arith.constant 0.000000e+00 : f32
    %4 = vector.broadcast %cst : f32 to vector<8x40xf32>
    %5 = arith.cmpf oge, %3, %4 : vector<8x40xf32>
    %cst_2 = arith.constant 1.000000e-01 : f32
    %6 = vector.broadcast %cst_2 : f32 to vector<8x40xf32>
    %7 = arith.mulf %6, %3 : vector<8x40xf32>
    %8 = arith.select %5, %3, %7 : vector<8x40xi1>, vector<8x40xf32>
    %c0_3 = arith.constant 0 : index
    %c0_4 = arith.constant 0 : index
    %c0_5 = arith.constant 0 : index
    %9 = vector.load %arg3[%c0_3, %c0_4, %c0_5] : memref<6x8x24xbf16, #tpu.memory_space<vmem>>, vector<1x8x24xbf16>
    %10 = vector.shape_cast %9 : vector<1x8x24xbf16> to vector<8x24xbf16>
    %c0_6 = arith.constant 0 : index
    %c0_7 = arith.constant 0 : index
    %c0_8 = arith.constant 0 : index
    %11 = vector.load %arg4[%c0_6, %c0_7, %c0_8] : memref<6x8x1xf32, #tpu.memory_space<vmem>>, vector<1x8x1xf32>
    %12 = vector.shape_cast %11 : vector<1x8x1xf32> to vector<8x1xf32>
    %13 = arith.truncf %8 : vector<8x40xf32> to vector<8x40xbf16>
    %14 = vector.extract_strided_slice %13 {offsets = [0, 0], sizes = [8, 38], strides = [1, 1]} : vector<8x40xbf16> to vector<8x38xbf16>
    %15 = vector.extract_strided_slice %13 {offsets = [0, 1], sizes = [8, 38], strides = [1, 1]} : vector<8x40xbf16> to vector<8x38xbf16>
    %16 = vector.extract_strided_slice %13 {offsets = [0, 2], sizes = [8, 38], strides = [1, 1]} : vector<8x40xbf16> to vector<8x38xbf16>
    %17 = tpu.concatenate %14, %15, %16 in 0 : vector<8x38xbf16>, vector<8x38xbf16>, vector<8x38xbf16> -> vector<24x38xbf16>
    %cst_9 = arith.constant dense<0.000000e+00> : vector<8x38xf32>
    %18 = tpu.matmul %10, %17, %cst_9 {dimension_numbers = #tpu.dot_dimension_numbers<[1], [0], [0], [1], [0, 0, 1, 1], [], []>} : vector<8x24xbf16>, vector<24x38xbf16>, vector<8x38xf32> -> vector<8x38xf32>
    %19 = vector.broadcast %12 : vector<8x1xf32> to vector<8x38xf32>
    %20 = arith.addf %18, %19 : vector<8x38xf32>
    %c-11_i32 = arith.constant -11 : i32
    %21 = arith.addi %0, %c-11_i32 : i32
    %22 = tpu.iota {dimensions = array<i32: 1>} : vector<1x38xi32>
    %23 = vector.broadcast %21 : i32 to vector<1x38xi32>
    %24 = arith.addi %23, %22 : vector<1x38xi32>
    %c0_i32 = arith.constant 0 : i32
    %25 = vector.broadcast %c0_i32 : i32 to vector<1x38xi32>
    %26 = arith.cmpi sge, %24, %25 : vector<1x38xi32>
    %c16_i32_10 = arith.constant 16 : i32
    %27 = vector.broadcast %c16_i32_10 : i32 to vector<1x38xi32>
    %28 = arith.cmpi slt, %24, %27 : vector<1x38xi32>
    %29 = arith.andi %26, %28 : vector<1x38xi1>
    %cst_11 = arith.constant 0.000000e+00 : f32
    %30 = vector.shape_cast %29 : vector<1x38xi1> to vector<1x38xi1>
    %31 = vector.broadcast %30 : vector<1x38xi1> to vector<8x38xi1>
    %32 = vector.broadcast %cst_11 : f32 to vector<8x38xf32>
    %33 = arith.select %31, %20, %32 : vector<8x38xi1>, vector<8x38xf32>
    %cst_12 = arith.constant 0.000000e+00 : f32
    %34 = vector.broadcast %cst_12 : f32 to vector<8x38xf32>
    %35 = arith.cmpf oge, %33, %34 : vector<8x38xf32>
    %cst_13 = arith.constant 1.000000e-01 : f32
    %36 = vector.broadcast %cst_13 : f32 to vector<8x38xf32>
    %37 = arith.mulf %36, %33 : vector<8x38xf32>
    %38 = arith.select %35, %33, %37 : vector<8x38xi1>, vector<8x38xf32>
    %c1 = arith.constant 1 : index
    %c0_14 = arith.constant 0 : index
    %c0_15 = arith.constant 0 : index
    %39 = vector.load %arg3[%c1, %c0_14, %c0_15] : memref<6x8x24xbf16, #tpu.memory_space<vmem>>, vector<1x8x24xbf16>
    %40 = vector.shape_cast %39 : vector<1x8x24xbf16> to vector<8x24xbf16>
    %c1_16 = arith.constant 1 : index
    %c0_17 = arith.constant 0 : index
    %c0_18 = arith.constant 0 : index
    %41 = vector.load %arg4[%c1_16, %c0_17, %c0_18] : memref<6x8x1xf32, #tpu.memory_space<vmem>>, vector<1x8x1xf32>
    %42 = vector.shape_cast %41 : vector<1x8x1xf32> to vector<8x1xf32>
    %43 = arith.truncf %38 : vector<8x38xf32> to vector<8x38xbf16>
    %44 = vector.extract_strided_slice %43 {offsets = [0, 0], sizes = [8, 36], strides = [1, 1]} : vector<8x38xbf16> to vector<8x36xbf16>
    %45 = vector.extract_strided_slice %43 {offsets = [0, 1], sizes = [8, 36], strides = [1, 1]} : vector<8x38xbf16> to vector<8x36xbf16>
    %46 = vector.extract_strided_slice %43 {offsets = [0, 2], sizes = [8, 36], strides = [1, 1]} : vector<8x38xbf16> to vector<8x36xbf16>
    %47 = tpu.concatenate %44, %45, %46 in 0 : vector<8x36xbf16>, vector<8x36xbf16>, vector<8x36xbf16> -> vector<24x36xbf16>
    %cst_19 = arith.constant dense<0.000000e+00> : vector<8x36xf32>
    %48 = tpu.matmul %40, %47, %cst_19 {dimension_numbers = #tpu.dot_dimension_numbers<[1], [0], [0], [1], [0, 0, 1, 1], [], []>} : vector<8x24xbf16>, vector<24x36xbf16>, vector<8x36xf32> -> vector<8x36xf32>
    %49 = vector.broadcast %42 : vector<8x1xf32> to vector<8x36xf32>
    %50 = arith.addf %48, %49 : vector<8x36xf32>
    %51 = vector.extract_strided_slice %3 {offsets = [0, 2], sizes = [8, 36], strides = [1, 1]} : vector<8x40xf32> to vector<8x36xf32>
    %52 = arith.addf %50, %51 : vector<8x36xf32>
    %c-10_i32 = arith.constant -10 : i32
    %53 = arith.addi %0, %c-10_i32 : i32
    %54 = tpu.iota {dimensions = array<i32: 1>} : vector<1x36xi32>
    %55 = vector.broadcast %53 : i32 to vector<1x36xi32>
    %56 = arith.addi %55, %54 : vector<1x36xi32>
    %c0_i32_20 = arith.constant 0 : i32
    %57 = vector.broadcast %c0_i32_20 : i32 to vector<1x36xi32>
    %58 = arith.cmpi sge, %56, %57 : vector<1x36xi32>
    %c16_i32_21 = arith.constant 16 : i32
    %59 = vector.broadcast %c16_i32_21 : i32 to vector<1x36xi32>
    %60 = arith.cmpi slt, %56, %59 : vector<1x36xi32>
    %61 = arith.andi %58, %60 : vector<1x36xi1>
    %cst_22 = arith.constant 0.000000e+00 : f32
    %62 = vector.shape_cast %61 : vector<1x36xi1> to vector<1x36xi1>
    %63 = vector.broadcast %62 : vector<1x36xi1> to vector<8x36xi1>
    %64 = vector.broadcast %cst_22 : f32 to vector<8x36xf32>
    %65 = arith.select %63, %52, %64 : vector<8x36xi1>, vector<8x36xf32>
    %cst_23 = arith.constant 0.000000e+00 : f32
    %66 = vector.broadcast %cst_23 : f32 to vector<8x36xf32>
    %67 = arith.cmpf oge, %65, %66 : vector<8x36xf32>
    %cst_24 = arith.constant 1.000000e-01 : f32
    %68 = vector.broadcast %cst_24 : f32 to vector<8x36xf32>
    %69 = arith.mulf %68, %65 : vector<8x36xf32>
    %70 = arith.select %67, %65, %69 : vector<8x36xi1>, vector<8x36xf32>
    %c2 = arith.constant 2 : index
    %c0_25 = arith.constant 0 : index
    %c0_26 = arith.constant 0 : index
    %71 = vector.load %arg3[%c2, %c0_25, %c0_26] : memref<6x8x24xbf16, #tpu.memory_space<vmem>>, vector<1x8x24xbf16>
    %72 = vector.shape_cast %71 : vector<1x8x24xbf16> to vector<8x24xbf16>
    %c2_27 = arith.constant 2 : index
    %c0_28 = arith.constant 0 : index
    %c0_29 = arith.constant 0 : index
    %73 = vector.load %arg4[%c2_27, %c0_28, %c0_29] : memref<6x8x1xf32, #tpu.memory_space<vmem>>, vector<1x8x1xf32>
    %74 = vector.shape_cast %73 : vector<1x8x1xf32> to vector<8x1xf32>
    %75 = arith.truncf %70 : vector<8x36xf32> to vector<8x36xbf16>
    %76 = vector.extract_strided_slice %75 {offsets = [0, 0], sizes = [8, 30], strides = [1, 1]} : vector<8x36xbf16> to vector<8x30xbf16>
    %77 = vector.extract_strided_slice %75 {offsets = [0, 3], sizes = [8, 30], strides = [1, 1]} : vector<8x36xbf16> to vector<8x30xbf16>
    %78 = vector.extract_strided_slice %75 {offsets = [0, 6], sizes = [8, 30], strides = [1, 1]} : vector<8x36xbf16> to vector<8x30xbf16>
    %79 = tpu.concatenate %76, %77, %78 in 0 : vector<8x30xbf16>, vector<8x30xbf16>, vector<8x30xbf16> -> vector<24x30xbf16>
    %cst_30 = arith.constant dense<0.000000e+00> : vector<8x30xf32>
    %80 = tpu.matmul %72, %79, %cst_30 {dimension_numbers = #tpu.dot_dimension_numbers<[1], [0], [0], [1], [0, 0, 1, 1], [], []>} : vector<8x24xbf16>, vector<24x30xbf16>, vector<8x30xf32> -> vector<8x30xf32>
    %81 = vector.broadcast %74 : vector<8x1xf32> to vector<8x30xf32>
    %82 = arith.addf %80, %81 : vector<8x30xf32>
    %c-7_i32 = arith.constant -7 : i32
    %83 = arith.addi %0, %c-7_i32 : i32
    %84 = tpu.iota {dimensions = array<i32: 1>} : vector<1x30xi32>
    %85 = vector.broadcast %83 : i32 to vector<1x30xi32>
    %86 = arith.addi %85, %84 : vector<1x30xi32>
    %c0_i32_31 = arith.constant 0 : i32
    %87 = vector.broadcast %c0_i32_31 : i32 to vector<1x30xi32>
    %88 = arith.cmpi sge, %86, %87 : vector<1x30xi32>
    %c16_i32_32 = arith.constant 16 : i32
    %89 = vector.broadcast %c16_i32_32 : i32 to vector<1x30xi32>
    %90 = arith.cmpi slt, %86, %89 : vector<1x30xi32>
    %91 = arith.andi %88, %90 : vector<1x30xi1>
    %cst_33 = arith.constant 0.000000e+00 : f32
    %92 = vector.shape_cast %91 : vector<1x30xi1> to vector<1x30xi1>
    %93 = vector.broadcast %92 : vector<1x30xi1> to vector<8x30xi1>
    %94 = vector.broadcast %cst_33 : f32 to vector<8x30xf32>
    %95 = arith.select %93, %82, %94 : vector<8x30xi1>, vector<8x30xf32>
    %cst_34 = arith.constant 0.000000e+00 : f32
    %96 = vector.broadcast %cst_34 : f32 to vector<8x30xf32>
    %97 = arith.cmpf oge, %95, %96 : vector<8x30xf32>
    %cst_35 = arith.constant 1.000000e-01 : f32
    %98 = vector.broadcast %cst_35 : f32 to vector<8x30xf32>
    %99 = arith.mulf %98, %95 : vector<8x30xf32>
    %100 = arith.select %97, %95, %99 : vector<8x30xi1>, vector<8x30xf32>
    %c3 = arith.constant 3 : index
    %c0_36 = arith.constant 0 : index
    %c0_37 = arith.constant 0 : index
    %101 = vector.load %arg3[%c3, %c0_36, %c0_37] : memref<6x8x24xbf16, #tpu.memory_space<vmem>>, vector<1x8x24xbf16>
    %102 = vector.shape_cast %101 : vector<1x8x24xbf16> to vector<8x24xbf16>
    %c3_38 = arith.constant 3 : index
    %c0_39 = arith.constant 0 : index
    %c0_40 = arith.constant 0 : index
    %103 = vector.load %arg4[%c3_38, %c0_39, %c0_40] : memref<6x8x1xf32, #tpu.memory_space<vmem>>, vector<1x8x1xf32>
    %104 = vector.shape_cast %103 : vector<1x8x1xf32> to vector<8x1xf32>
    %105 = arith.truncf %100 : vector<8x30xf32> to vector<8x30xbf16>
    %106 = vector.extract_strided_slice %105 {offsets = [0, 0], sizes = [8, 28], strides = [1, 1]} : vector<8x30xbf16> to vector<8x28xbf16>
    %107 = vector.extract_strided_slice %105 {offsets = [0, 1], sizes = [8, 28], strides = [1, 1]} : vector<8x30xbf16> to vector<8x28xbf16>
    %108 = vector.extract_strided_slice %105 {offsets = [0, 2], sizes = [8, 28], strides = [1, 1]} : vector<8x30xbf16> to vector<8x28xbf16>
    %109 = tpu.concatenate %106, %107, %108 in 0 : vector<8x28xbf16>, vector<8x28xbf16>, vector<8x28xbf16> -> vector<24x28xbf16>
    %cst_41 = arith.constant dense<0.000000e+00> : vector<8x28xf32>
    %110 = tpu.matmul %102, %109, %cst_41 {dimension_numbers = #tpu.dot_dimension_numbers<[1], [0], [0], [1], [0, 0, 1, 1], [], []>} : vector<8x24xbf16>, vector<24x28xbf16>, vector<8x28xf32> -> vector<8x28xf32>
    %111 = vector.broadcast %104 : vector<8x1xf32> to vector<8x28xf32>
    %112 = arith.addf %110, %111 : vector<8x28xf32>
    %113 = vector.extract_strided_slice %65 {offsets = [0, 4], sizes = [8, 28], strides = [1, 1]} : vector<8x36xf32> to vector<8x28xf32>
    %114 = arith.addf %112, %113 : vector<8x28xf32>
    %c-6_i32 = arith.constant -6 : i32
    %115 = arith.addi %0, %c-6_i32 : i32
    %116 = tpu.iota {dimensions = array<i32: 1>} : vector<1x28xi32>
    %117 = vector.broadcast %115 : i32 to vector<1x28xi32>
    %118 = arith.addi %117, %116 : vector<1x28xi32>
    %c0_i32_42 = arith.constant 0 : i32
    %119 = vector.broadcast %c0_i32_42 : i32 to vector<1x28xi32>
    %120 = arith.cmpi sge, %118, %119 : vector<1x28xi32>
    %c16_i32_43 = arith.constant 16 : i32
    %121 = vector.broadcast %c16_i32_43 : i32 to vector<1x28xi32>
    %122 = arith.cmpi slt, %118, %121 : vector<1x28xi32>
    %123 = arith.andi %120, %122 : vector<1x28xi1>
    %cst_44 = arith.constant 0.000000e+00 : f32
    %124 = vector.shape_cast %123 : vector<1x28xi1> to vector<1x28xi1>
    %125 = vector.broadcast %124 : vector<1x28xi1> to vector<8x28xi1>
    %126 = vector.broadcast %cst_44 : f32 to vector<8x28xf32>
    %127 = arith.select %125, %114, %126 : vector<8x28xi1>, vector<8x28xf32>
    %cst_45 = arith.constant 0.000000e+00 : f32
    %128 = vector.broadcast %cst_45 : f32 to vector<8x28xf32>
    %129 = arith.cmpf oge, %127, %128 : vector<8x28xf32>
    %cst_46 = arith.constant 1.000000e-01 : f32
    %130 = vector.broadcast %cst_46 : f32 to vector<8x28xf32>
    %131 = arith.mulf %130, %127 : vector<8x28xf32>
    %132 = arith.select %129, %127, %131 : vector<8x28xi1>, vector<8x28xf32>
    %c4 = arith.constant 4 : index
    %c0_47 = arith.constant 0 : index
    %c0_48 = arith.constant 0 : index
    %133 = vector.load %arg3[%c4, %c0_47, %c0_48] : memref<6x8x24xbf16, #tpu.memory_space<vmem>>, vector<1x8x24xbf16>
    %134 = vector.shape_cast %133 : vector<1x8x24xbf16> to vector<8x24xbf16>
    %c4_49 = arith.constant 4 : index
    %c0_50 = arith.constant 0 : index
    %c0_51 = arith.constant 0 : index
    %135 = vector.load %arg4[%c4_49, %c0_50, %c0_51] : memref<6x8x1xf32, #tpu.memory_space<vmem>>, vector<1x8x1xf32>
    %136 = vector.shape_cast %135 : vector<1x8x1xf32> to vector<8x1xf32>
    %137 = arith.truncf %132 : vector<8x28xf32> to vector<8x28xbf16>
    %138 = vector.extract_strided_slice %137 {offsets = [0, 0], sizes = [8, 18], strides = [1, 1]} : vector<8x28xbf16> to vector<8x18xbf16>
    %139 = vector.extract_strided_slice %137 {offsets = [0, 5], sizes = [8, 18], strides = [1, 1]} : vector<8x28xbf16> to vector<8x18xbf16>
    %140 = vector.extract_strided_slice %137 {offsets = [0, 10], sizes = [8, 18], strides = [1, 1]} : vector<8x28xbf16> to vector<8x18xbf16>
    %141 = tpu.concatenate %138, %139, %140 in 0 : vector<8x18xbf16>, vector<8x18xbf16>, vector<8x18xbf16> -> vector<24x18xbf16>
    %cst_52 = arith.constant dense<0.000000e+00> : vector<8x18xf32>
    %142 = tpu.matmul %134, %141, %cst_52 {dimension_numbers = #tpu.dot_dimension_numbers<[1], [0], [0], [1], [0, 0, 1, 1], [], []>} : vector<8x24xbf16>, vector<24x18xbf16>, vector<8x18xf32> -> vector<8x18xf32>
    %143 = vector.broadcast %136 : vector<8x1xf32> to vector<8x18xf32>
    %144 = arith.addf %142, %143 : vector<8x18xf32>
    %c-1_i32 = arith.constant -1 : i32
    %145 = arith.addi %0, %c-1_i32 : i32
    %146 = tpu.iota {dimensions = array<i32: 1>} : vector<1x18xi32>
    %147 = vector.broadcast %145 : i32 to vector<1x18xi32>
    %148 = arith.addi %147, %146 : vector<1x18xi32>
    %c0_i32_53 = arith.constant 0 : i32
    %149 = vector.broadcast %c0_i32_53 : i32 to vector<1x18xi32>
    %150 = arith.cmpi sge, %148, %149 : vector<1x18xi32>
    %c16_i32_54 = arith.constant 16 : i32
    %151 = vector.broadcast %c16_i32_54 : i32 to vector<1x18xi32>
    %152 = arith.cmpi slt, %148, %151 : vector<1x18xi32>
    %153 = arith.andi %150, %152 : vector<1x18xi1>
    %cst_55 = arith.constant 0.000000e+00 : f32
    %154 = vector.shape_cast %153 : vector<1x18xi1> to vector<1x18xi1>
    %155 = vector.broadcast %154 : vector<1x18xi1> to vector<8x18xi1>
    %156 = vector.broadcast %cst_55 : f32 to vector<8x18xf32>
    %157 = arith.select %155, %144, %156 : vector<8x18xi1>, vector<8x18xf32>
    %cst_56 = arith.constant 0.000000e+00 : f32
    %158 = vector.broadcast %cst_56 : f32 to vector<8x18xf32>
    %159 = arith.cmpf oge, %157, %158 : vector<8x18xf32>
    %cst_57 = arith.constant 1.000000e-01 : f32
    %160 = vector.broadcast %cst_57 : f32 to vector<8x18xf32>
    %161 = arith.mulf %160, %157 : vector<8x18xf32>
    %162 = arith.select %159, %157, %161 : vector<8x18xi1>, vector<8x18xf32>
    %c5 = arith.constant 5 : index
    %c0_58 = arith.constant 0 : index
    %c0_59 = arith.constant 0 : index
    %163 = vector.load %arg3[%c5, %c0_58, %c0_59] : memref<6x8x24xbf16, #tpu.memory_space<vmem>>, vector<1x8x24xbf16>
    %164 = vector.shape_cast %163 : vector<1x8x24xbf16> to vector<8x24xbf16>
    %c5_60 = arith.constant 5 : index
    %c0_61 = arith.constant 0 : index
    %c0_62 = arith.constant 0 : index
    %165 = vector.load %arg4[%c5_60, %c0_61, %c0_62] : memref<6x8x1xf32, #tpu.memory_space<vmem>>, vector<1x8x1xf32>
    %166 = vector.shape_cast %165 : vector<1x8x1xf32> to vector<8x1xf32>
    %167 = arith.truncf %162 : vector<8x18xf32> to vector<8x18xbf16>
    %168 = vector.extract_strided_slice %167 {offsets = [0, 0], sizes = [8, 16], strides = [1, 1]} : vector<8x18xbf16> to vector<8x16xbf16>
    %169 = vector.extract_strided_slice %167 {offsets = [0, 1], sizes = [8, 16], strides = [1, 1]} : vector<8x18xbf16> to vector<8x16xbf16>
    %170 = vector.extract_strided_slice %167 {offsets = [0, 2], sizes = [8, 16], strides = [1, 1]} : vector<8x18xbf16> to vector<8x16xbf16>
    %171 = tpu.concatenate %168, %169, %170 in 0 : vector<8x16xbf16>, vector<8x16xbf16>, vector<8x16xbf16> -> vector<24x16xbf16>
    %cst_63 = arith.constant dense<0.000000e+00> : vector<8x16xf32>
    %172 = tpu.matmul %164, %171, %cst_63 {dimension_numbers = #tpu.dot_dimension_numbers<[1], [0], [0], [1], [0, 0, 1, 1], [], []>} : vector<8x24xbf16>, vector<24x16xbf16>, vector<8x16xf32> -> vector<8x16xf32>
    %173 = vector.broadcast %166 : vector<8x1xf32> to vector<8x16xf32>
    %174 = arith.addf %172, %173 : vector<8x16xf32>
    %175 = vector.extract_strided_slice %127 {offsets = [0, 6], sizes = [8, 16], strides = [1, 1]} : vector<8x28xf32> to vector<8x16xf32>
    %176 = arith.addf %174, %175 : vector<8x16xf32>
    %c0_i32_64 = arith.constant 0 : i32
    %177 = arith.addi %0, %c0_i32_64 : i32
    %178 = tpu.iota {dimensions = array<i32: 1>} : vector<1x16xi32>
    %179 = vector.broadcast %177 : i32 to vector<1x16xi32>
    %180 = arith.addi %179, %178 : vector<1x16xi32>
    %c0_i32_65 = arith.constant 0 : i32
    %181 = vector.broadcast %c0_i32_65 : i32 to vector<1x16xi32>
    %182 = arith.cmpi sge, %180, %181 : vector<1x16xi32>
    %c16_i32_66 = arith.constant 16 : i32
    %183 = vector.broadcast %c16_i32_66 : i32 to vector<1x16xi32>
    %184 = arith.cmpi slt, %180, %183 : vector<1x16xi32>
    %185 = arith.andi %182, %184 : vector<1x16xi1>
    %cst_67 = arith.constant 0.000000e+00 : f32
    %186 = vector.shape_cast %185 : vector<1x16xi1> to vector<1x16xi1>
    %187 = vector.broadcast %186 : vector<1x16xi1> to vector<8x16xi1>
    %188 = vector.broadcast %cst_67 : f32 to vector<8x16xf32>
    %189 = arith.select %187, %176, %188 : vector<8x16xi1>, vector<8x16xf32>
    %190 = arith.truncf %189 : vector<8x16xf32> to vector<8x16xbf16>
    %c0_68 = arith.constant 0 : index
    %c0_69 = arith.constant 0 : index
    %c0_70 = arith.constant 0 : index
    %191 = vector.load %arg5[%c0_68, %c0_69, %c0_70] : memref<1x8x16xbf16, #tpu.memory_space<vmem>>, vector<1x8x16xbf16>
    %192 = vector.shape_cast %191 : vector<1x8x16xbf16> to vector<8x16xbf16>
    %193 = vector.shape_cast %190 : vector<8x16xbf16> to vector<1x8x16xbf16>
    tpu.vector_store %arg5[%c0_68, %c0_69, %c0_70], %193 {strides = array<i32>} : memref<1x8x16xbf16, #tpu.memory_space<vmem>>, vector<1x8x16xbf16>,
    return
  }
  func.func @transform_0(%arg0: i32, %arg1: i32) -> (i32, i32, i32) {
    %c0_i32 = arith.constant 0 : i32
    %c0_i32_0 = arith.constant 0 : i32
    return %arg0, %c0_i32, %arg1 : i32, i32, i32
  }
  func.func @transform_1(%arg0: i32, %arg1: i32) -> (i32, i32, i32) {
    %c0_i32 = arith.constant 0 : i32
    %c0_i32_0 = arith.constant 0 : i32
    %c0_i32_1 = arith.constant 0 : i32
    %c0_i32_2 = arith.constant 0 : i32
    return %c0_i32, %c0_i32_0, %c0_i32_1 : i32, i32, i32
  }
  func.func @transform_2(%arg0: i32, %arg1: i32) -> (i32, i32, i32) {
    %c0_i32 = arith.constant 0 : i32
    %c0_i32_0 = arith.constant 0 : i32
    %c0_i32_1 = arith.constant 0 : i32
    %c0_i32_2 = arith.constant 0 : i32
    return %c0_i32, %c0_i32_0, %c0_i32_1 : i32, i32, i32
  }
  func.func @transform_3(%arg0: i32, %arg1: i32) -> (i32, i32, i32) {
    %c0_i32 = arith.constant 0 : i32
    %c0_i32_0 = arith.constant 0 : i32
    return %arg0, %c0_i32, %arg1 : i32, i32, i32
  }
}

module attributes {stable_mosaic.version = 11 : i64} {
  func.func @kernel(%arg0: i32, %arg1: i32, %arg2: memref<1x1x32xbf16, #tpu.memory_space<vmem>>, %arg3: memref<4x1xbf16, #tpu.memory_space<vmem>>, %arg4: memref<4x1xf32, #tpu.memory_space<vmem>>, %arg5: memref<1x4x32xbf16, #tpu.memory_space<vmem>>, %arg6: memref<1x4x32xbf16, #tpu.memory_space<vmem>>) attributes {dimension_semantics = [#tpu.dimension_semantics<parallel>, #tpu.dimension_semantics<parallel>], iteration_bounds = array<i64: 2, 1>, scalar_prefetch = 0 : i64, scratch_operands = 0 : i64, tpu.core_type = #tpu.core_type<tc>, window_params = [{transform_indices = @transform_0, window_bounds = array<i64: 1, 1, 32>}, {pipeline_mode = #tpu.pipeline_mode<synchronous>, transform_indices = @transform_1, window_bounds = array<i64: 4, 1>}, {pipeline_mode = #tpu.pipeline_mode<synchronous>, transform_indices = @transform_2, window_bounds = array<i64: 4, 1>}, {transform_indices = @transform_3, window_bounds = array<i64: 1, 4, 32>}, {transform_indices = @transform_4, window_bounds = array<i64: 1, 4, 32>}]} {
    %c0 = arith.constant 0 : index
    %c0_0 = arith.constant 0 : index
    %c0_1 = arith.constant 0 : index
    %0 = vector.load %arg2[%c0, %c0_0, %c0_1] : memref<1x1x32xbf16, #tpu.memory_space<vmem>>, vector<1x1x32xbf16>
    %1 = vector.shape_cast %0 : vector<1x1x32xbf16> to vector<1x32xbf16>
    %2 = arith.extf %1 : vector<1x32xbf16> to vector<1x32xf32>
    %c0_2 = arith.constant 0 : index
    %c0_3 = arith.constant 0 : index
    %3 = vector.load %arg3[%c0_2, %c0_3] : memref<4x1xbf16, #tpu.memory_space<vmem>>, vector<4x1xbf16>
    %c0_4 = arith.constant 0 : index
    %c0_5 = arith.constant 0 : index
    %4 = vector.load %arg4[%c0_4, %c0_5] : memref<4x1xf32, #tpu.memory_space<vmem>>, vector<4x1xf32>
    %5 = arith.extf %3 : vector<4x1xbf16> to vector<4x1xf32>
    %6 = vector.broadcast %5 : vector<4x1xf32> to vector<4x32xf32>
    %7 = vector.broadcast %2 : vector<1x32xf32> to vector<4x32xf32>
    %8 = arith.mulf %6, %7 : vector<4x32xf32>
    %9 = vector.broadcast %4 : vector<4x1xf32> to vector<4x32xf32>
    %10 = arith.addf %8, %9 : vector<4x32xf32>
    %c0_6 = arith.constant 0 : index
    %c0_7 = arith.constant 0 : index
    %c0_8 = arith.constant 0 : index
    %11 = vector.load %arg5[%c0_6, %c0_7, %c0_8] : memref<1x4x32xbf16, #tpu.memory_space<vmem>>, vector<1x4x32xbf16>
    %12 = vector.shape_cast %11 : vector<1x4x32xbf16> to vector<4x32xbf16>
    %13 = arith.extf %12 : vector<4x32xbf16> to vector<4x32xf32>
    %14 = arith.addf %10, %13 : vector<4x32xf32>
    %15 = arith.truncf %14 : vector<4x32xf32> to vector<4x32xbf16>
    %c0_9 = arith.constant 0 : index
    %c0_10 = arith.constant 0 : index
    %c0_11 = arith.constant 0 : index
    %16 = vector.load %arg6[%c0_9, %c0_10, %c0_11] : memref<1x4x32xbf16, #tpu.memory_space<vmem>>, vector<1x4x32xbf16>
    %17 = vector.shape_cast %16 : vector<1x4x32xbf16> to vector<4x32xbf16>
    %18 = vector.shape_cast %15 : vector<4x32xbf16> to vector<1x4x32xbf16>
    tpu.vector_store %arg6[%c0_9, %c0_10, %c0_11], %18 {strides = array<i32>} : memref<1x4x32xbf16, #tpu.memory_space<vmem>>, vector<1x4x32xbf16>,
    return
  }
  func.func @transform_0(%arg0: i32, %arg1: i32) -> (i32, i32, i32) {
    %c0_i32 = arith.constant 0 : i32
    %c0_i32_0 = arith.constant 0 : i32
    return %arg0, %c0_i32, %arg1 : i32, i32, i32
  }
  func.func @transform_1(%arg0: i32, %arg1: i32) -> (i32, i32) {
    %c0_i32 = arith.constant 0 : i32
    %c0_i32_0 = arith.constant 0 : i32
    %c0_i32_1 = arith.constant 0 : i32
    return %c0_i32, %c0_i32_0 : i32, i32
  }
  func.func @transform_2(%arg0: i32, %arg1: i32) -> (i32, i32) {
    %c0_i32 = arith.constant 0 : i32
    %c0_i32_0 = arith.constant 0 : i32
    %c0_i32_1 = arith.constant 0 : i32
    return %c0_i32, %c0_i32_0 : i32, i32
  }
  func.func @transform_3(%arg0: i32, %arg1: i32) -> (i32, i32, i32) {
    %c0_i32 = arith.constant 0 : i32
    %c0_i32_0 = arith.constant 0 : i32
    return %arg0, %c0_i32, %arg1 : i32, i32, i32
  }
  func.func @transform_4(%arg0: i32, %arg1: i32) -> (i32, i32, i32) {
    %c0_i32 = arith.constant 0 : i32
    %c0_i32_0 = arith.constant 0 : i32
    return %arg0, %c0_i32, %arg1 : i32, i32, i32
  }
}

module attributes {stable_mosaic.version = 11 : i64} {
  func.func @kernel(%arg0: i32, %arg1: i32, %arg2: memref<1x4x56xbf16, #tpu.memory_space<vmem>>, %arg3: memref<6x4x12xbf16, #tpu.memory_space<vmem>>, %arg4: memref<6x4x1xf32, #tpu.memory_space<vmem>>, %arg5: memref<1x4x32xbf16, #tpu.memory_space<vmem>>) attributes {dimension_semantics = [#tpu.dimension_semantics<parallel>, #tpu.dimension_semantics<parallel>], iteration_bounds = array<i64: 2, 1>, scalar_prefetch = 0 : i64, scratch_operands = 0 : i64, tpu.core_type = #tpu.core_type<tc>, window_params = [{transform_indices = @transform_0, window_bounds = array<i64: 1, 4, 56>}, {pipeline_mode = #tpu.pipeline_mode<synchronous>, transform_indices = @transform_1, window_bounds = array<i64: 6, 4, 12>}, {pipeline_mode = #tpu.pipeline_mode<synchronous>, transform_indices = @transform_2, window_bounds = array<i64: 6, 4, 1>}, {transform_indices = @transform_3, window_bounds = array<i64: 1, 4, 32>}]} {
    %c32_i32 = arith.constant 32 : i32
    %0 = arith.muli %arg1, %c32_i32 : i32
    %c0 = arith.constant 0 : index
    %c0_0 = arith.constant 0 : index
    %c0_1 = arith.constant 0 : index
    %1 = vector.load %arg2[%c0, %c0_0, %c0_1] : memref<1x4x56xbf16, #tpu.memory_space<vmem>>, vector<1x4x56xbf16>
    %2 = vector.shape_cast %1 : vector<1x4x56xbf16> to vector<4x56xbf16>
    %3 = arith.extf %2 : vector<4x56xbf16> to vector<4x56xf32>
    %cst = arith.constant 0.000000e+00 : f32
    %4 = vector.broadcast %cst : f32 to vector<4x56xf32>
    %5 = arith.cmpf oge, %3, %4 : vector<4x56xf32>
    %cst_2 = arith.constant 1.000000e-01 : f32
    %6 = vector.broadcast %cst_2 : f32 to vector<4x56xf32>
    %7 = arith.mulf %6, %3 : vector<4x56xf32>
    %8 = arith.select %5, %3, %7 : vector<4x56xi1>, vector<4x56xf32>
    %c0_3 = arith.constant 0 : index
    %c0_4 = arith.constant 0 : index
    %c0_5 = arith.constant 0 : index
    %9 = vector.load %arg3[%c0_3, %c0_4, %c0_5] : memref<6x4x12xbf16, #tpu.memory_space<vmem>>, vector<1x4x12xbf16>
    %10 = vector.shape_cast %9 : vector<1x4x12xbf16> to vector<4x12xbf16>
    %c0_6 = arith.constant 0 : index
    %c0_7 = arith.constant 0 : index
    %c0_8 = arith.constant 0 : index
    %11 = vector.load %arg4[%c0_6, %c0_7, %c0_8] : memref<6x4x1xf32, #tpu.memory_space<vmem>>, vector<1x4x1xf32>
    %12 = vector.shape_cast %11 : vector<1x4x1xf32> to vector<4x1xf32>
    %13 = arith.truncf %8 : vector<4x56xf32> to vector<4x56xbf16>
    %14 = vector.extract_strided_slice %13 {offsets = [0, 0], sizes = [4, 54], strides = [1, 1]} : vector<4x56xbf16> to vector<4x54xbf16>
    %15 = vector.extract_strided_slice %13 {offsets = [0, 1], sizes = [4, 54], strides = [1, 1]} : vector<4x56xbf16> to vector<4x54xbf16>
    %16 = vector.extract_strided_slice %13 {offsets = [0, 2], sizes = [4, 54], strides = [1, 1]} : vector<4x56xbf16> to vector<4x54xbf16>
    %17 = tpu.concatenate %14, %15, %16 in 0 : vector<4x54xbf16>, vector<4x54xbf16>, vector<4x54xbf16> -> vector<12x54xbf16>
    %cst_9 = arith.constant dense<0.000000e+00> : vector<4x54xf32>
    %18 = tpu.matmul %10, %17, %cst_9 {dimension_numbers = #tpu.dot_dimension_numbers<[1], [0], [0], [1], [0, 0, 1, 1], [], []>} : vector<4x12xbf16>, vector<12x54xbf16>, vector<4x54xf32> -> vector<4x54xf32>
    %19 = vector.broadcast %12 : vector<4x1xf32> to vector<4x54xf32>
    %20 = arith.addf %18, %19 : vector<4x54xf32>
    %c-11_i32 = arith.constant -11 : i32
    %21 = arith.addi %0, %c-11_i32 : i32
    %22 = tpu.iota {dimensions = array<i32: 1>} : vector<1x54xi32>
    %23 = vector.broadcast %21 : i32 to vector<1x54xi32>
    %24 = arith.addi %23, %22 : vector<1x54xi32>
    %c0_i32 = arith.constant 0 : i32
    %25 = vector.broadcast %c0_i32 : i32 to vector<1x54xi32>
    %26 = arith.cmpi sge, %24, %25 : vector<1x54xi32>
    %c32_i32_10 = arith.constant 32 : i32
    %27 = vector.broadcast %c32_i32_10 : i32 to vector<1x54xi32>
    %28 = arith.cmpi slt, %24, %27 : vector<1x54xi32>
    %29 = arith.andi %26, %28 : vector<1x54xi1>
    %cst_11 = arith.constant 0.000000e+00 : f32
    %30 = vector.shape_cast %29 : vector<1x54xi1> to vector<1x54xi1>
    %31 = vector.broadcast %30 : vector<1x54xi1> to vector<4x54xi1>
    %32 = vector.broadcast %cst_11 : f32 to vector<4x54xf32>
    %33 = arith.select %31, %20, %32 : vector<4x54xi1>, vector<4x54xf32>
    %cst_12 = arith.constant 0.000000e+00 : f32
    %34 = vector.broadcast %cst_12 : f32 to vector<4x54xf32>
    %35 = arith.cmpf oge, %33, %34 : vector<4x54xf32>
    %cst_13 = arith.constant 1.000000e-01 : f32
    %36 = vector.broadcast %cst_13 : f32 to vector<4x54xf32>
    %37 = arith.mulf %36, %33 : vector<4x54xf32>
    %38 = arith.select %35, %33, %37 : vector<4x54xi1>, vector<4x54xf32>
    %c1 = arith.constant 1 : index
    %c0_14 = arith.constant 0 : index
    %c0_15 = arith.constant 0 : index
    %39 = vector.load %arg3[%c1, %c0_14, %c0_15] : memref<6x4x12xbf16, #tpu.memory_space<vmem>>, vector<1x4x12xbf16>
    %40 = vector.shape_cast %39 : vector<1x4x12xbf16> to vector<4x12xbf16>
    %c1_16 = arith.constant 1 : index
    %c0_17 = arith.constant 0 : index
    %c0_18 = arith.constant 0 : index
    %41 = vector.load %arg4[%c1_16, %c0_17, %c0_18] : memref<6x4x1xf32, #tpu.memory_space<vmem>>, vector<1x4x1xf32>
    %42 = vector.shape_cast %41 : vector<1x4x1xf32> to vector<4x1xf32>
    %43 = arith.truncf %38 : vector<4x54xf32> to vector<4x54xbf16>
    %44 = vector.extract_strided_slice %43 {offsets = [0, 0], sizes = [4, 52], strides = [1, 1]} : vector<4x54xbf16> to vector<4x52xbf16>
    %45 = vector.extract_strided_slice %43 {offsets = [0, 1], sizes = [4, 52], strides = [1, 1]} : vector<4x54xbf16> to vector<4x52xbf16>
    %46 = vector.extract_strided_slice %43 {offsets = [0, 2], sizes = [4, 52], strides = [1, 1]} : vector<4x54xbf16> to vector<4x52xbf16>
    %47 = tpu.concatenate %44, %45, %46 in 0 : vector<4x52xbf16>, vector<4x52xbf16>, vector<4x52xbf16> -> vector<12x52xbf16>
    %cst_19 = arith.constant dense<0.000000e+00> : vector<4x52xf32>
    %48 = tpu.matmul %40, %47, %cst_19 {dimension_numbers = #tpu.dot_dimension_numbers<[1], [0], [0], [1], [0, 0, 1, 1], [], []>} : vector<4x12xbf16>, vector<12x52xbf16>, vector<4x52xf32> -> vector<4x52xf32>
    %49 = vector.broadcast %42 : vector<4x1xf32> to vector<4x52xf32>
    %50 = arith.addf %48, %49 : vector<4x52xf32>
    %51 = vector.extract_strided_slice %3 {offsets = [0, 2], sizes = [4, 52], strides = [1, 1]} : vector<4x56xf32> to vector<4x52xf32>
    %52 = arith.addf %50, %51 : vector<4x52xf32>
    %c-10_i32 = arith.constant -10 : i32
    %53 = arith.addi %0, %c-10_i32 : i32
    %54 = tpu.iota {dimensions = array<i32: 1>} : vector<1x52xi32>
    %55 = vector.broadcast %53 : i32 to vector<1x52xi32>
    %56 = arith.addi %55, %54 : vector<1x52xi32>
    %c0_i32_20 = arith.constant 0 : i32
    %57 = vector.broadcast %c0_i32_20 : i32 to vector<1x52xi32>
    %58 = arith.cmpi sge, %56, %57 : vector<1x52xi32>
    %c32_i32_21 = arith.constant 32 : i32
    %59 = vector.broadcast %c32_i32_21 : i32 to vector<1x52xi32>
    %60 = arith.cmpi slt, %56, %59 : vector<1x52xi32>
    %61 = arith.andi %58, %60 : vector<1x52xi1>
    %cst_22 = arith.constant 0.000000e+00 : f32
    %62 = vector.shape_cast %61 : vector<1x52xi1> to vector<1x52xi1>
    %63 = vector.broadcast %62 : vector<1x52xi1> to vector<4x52xi1>
    %64 = vector.broadcast %cst_22 : f32 to vector<4x52xf32>
    %65 = arith.select %63, %52, %64 : vector<4x52xi1>, vector<4x52xf32>
    %cst_23 = arith.constant 0.000000e+00 : f32
    %66 = vector.broadcast %cst_23 : f32 to vector<4x52xf32>
    %67 = arith.cmpf oge, %65, %66 : vector<4x52xf32>
    %cst_24 = arith.constant 1.000000e-01 : f32
    %68 = vector.broadcast %cst_24 : f32 to vector<4x52xf32>
    %69 = arith.mulf %68, %65 : vector<4x52xf32>
    %70 = arith.select %67, %65, %69 : vector<4x52xi1>, vector<4x52xf32>
    %c2 = arith.constant 2 : index
    %c0_25 = arith.constant 0 : index
    %c0_26 = arith.constant 0 : index
    %71 = vector.load %arg3[%c2, %c0_25, %c0_26] : memref<6x4x12xbf16, #tpu.memory_space<vmem>>, vector<1x4x12xbf16>
    %72 = vector.shape_cast %71 : vector<1x4x12xbf16> to vector<4x12xbf16>
    %c2_27 = arith.constant 2 : index
    %c0_28 = arith.constant 0 : index
    %c0_29 = arith.constant 0 : index
    %73 = vector.load %arg4[%c2_27, %c0_28, %c0_29] : memref<6x4x1xf32, #tpu.memory_space<vmem>>, vector<1x4x1xf32>
    %74 = vector.shape_cast %73 : vector<1x4x1xf32> to vector<4x1xf32>
    %75 = arith.truncf %70 : vector<4x52xf32> to vector<4x52xbf16>
    %76 = vector.extract_strided_slice %75 {offsets = [0, 0], sizes = [4, 46], strides = [1, 1]} : vector<4x52xbf16> to vector<4x46xbf16>
    %77 = vector.extract_strided_slice %75 {offsets = [0, 3], sizes = [4, 46], strides = [1, 1]} : vector<4x52xbf16> to vector<4x46xbf16>
    %78 = vector.extract_strided_slice %75 {offsets = [0, 6], sizes = [4, 46], strides = [1, 1]} : vector<4x52xbf16> to vector<4x46xbf16>
    %79 = tpu.concatenate %76, %77, %78 in 0 : vector<4x46xbf16>, vector<4x46xbf16>, vector<4x46xbf16> -> vector<12x46xbf16>
    %cst_30 = arith.constant dense<0.000000e+00> : vector<4x46xf32>
    %80 = tpu.matmul %72, %79, %cst_30 {dimension_numbers = #tpu.dot_dimension_numbers<[1], [0], [0], [1], [0, 0, 1, 1], [], []>} : vector<4x12xbf16>, vector<12x46xbf16>, vector<4x46xf32> -> vector<4x46xf32>
    %81 = vector.broadcast %74 : vector<4x1xf32> to vector<4x46xf32>
    %82 = arith.addf %80, %81 : vector<4x46xf32>
    %c-7_i32 = arith.constant -7 : i32
    %83 = arith.addi %0, %c-7_i32 : i32
    %84 = tpu.iota {dimensions = array<i32: 1>} : vector<1x46xi32>
    %85 = vector.broadcast %83 : i32 to vector<1x46xi32>
    %86 = arith.addi %85, %84 : vector<1x46xi32>
    %c0_i32_31 = arith.constant 0 : i32
    %87 = vector.broadcast %c0_i32_31 : i32 to vector<1x46xi32>
    %88 = arith.cmpi sge, %86, %87 : vector<1x46xi32>
    %c32_i32_32 = arith.constant 32 : i32
    %89 = vector.broadcast %c32_i32_32 : i32 to vector<1x46xi32>
    %90 = arith.cmpi slt, %86, %89 : vector<1x46xi32>
    %91 = arith.andi %88, %90 : vector<1x46xi1>
    %cst_33 = arith.constant 0.000000e+00 : f32
    %92 = vector.shape_cast %91 : vector<1x46xi1> to vector<1x46xi1>
    %93 = vector.broadcast %92 : vector<1x46xi1> to vector<4x46xi1>
    %94 = vector.broadcast %cst_33 : f32 to vector<4x46xf32>
    %95 = arith.select %93, %82, %94 : vector<4x46xi1>, vector<4x46xf32>
    %cst_34 = arith.constant 0.000000e+00 : f32
    %96 = vector.broadcast %cst_34 : f32 to vector<4x46xf32>
    %97 = arith.cmpf oge, %95, %96 : vector<4x46xf32>
    %cst_35 = arith.constant 1.000000e-01 : f32
    %98 = vector.broadcast %cst_35 : f32 to vector<4x46xf32>
    %99 = arith.mulf %98, %95 : vector<4x46xf32>
    %100 = arith.select %97, %95, %99 : vector<4x46xi1>, vector<4x46xf32>
    %c3 = arith.constant 3 : index
    %c0_36 = arith.constant 0 : index
    %c0_37 = arith.constant 0 : index
    %101 = vector.load %arg3[%c3, %c0_36, %c0_37] : memref<6x4x12xbf16, #tpu.memory_space<vmem>>, vector<1x4x12xbf16>
    %102 = vector.shape_cast %101 : vector<1x4x12xbf16> to vector<4x12xbf16>
    %c3_38 = arith.constant 3 : index
    %c0_39 = arith.constant 0 : index
    %c0_40 = arith.constant 0 : index
    %103 = vector.load %arg4[%c3_38, %c0_39, %c0_40] : memref<6x4x1xf32, #tpu.memory_space<vmem>>, vector<1x4x1xf32>
    %104 = vector.shape_cast %103 : vector<1x4x1xf32> to vector<4x1xf32>
    %105 = arith.truncf %100 : vector<4x46xf32> to vector<4x46xbf16>
    %106 = vector.extract_strided_slice %105 {offsets = [0, 0], sizes = [4, 44], strides = [1, 1]} : vector<4x46xbf16> to vector<4x44xbf16>
    %107 = vector.extract_strided_slice %105 {offsets = [0, 1], sizes = [4, 44], strides = [1, 1]} : vector<4x46xbf16> to vector<4x44xbf16>
    %108 = vector.extract_strided_slice %105 {offsets = [0, 2], sizes = [4, 44], strides = [1, 1]} : vector<4x46xbf16> to vector<4x44xbf16>
    %109 = tpu.concatenate %106, %107, %108 in 0 : vector<4x44xbf16>, vector<4x44xbf16>, vector<4x44xbf16> -> vector<12x44xbf16>
    %cst_41 = arith.constant dense<0.000000e+00> : vector<4x44xf32>
    %110 = tpu.matmul %102, %109, %cst_41 {dimension_numbers = #tpu.dot_dimension_numbers<[1], [0], [0], [1], [0, 0, 1, 1], [], []>} : vector<4x12xbf16>, vector<12x44xbf16>, vector<4x44xf32> -> vector<4x44xf32>
    %111 = vector.broadcast %104 : vector<4x1xf32> to vector<4x44xf32>
    %112 = arith.addf %110, %111 : vector<4x44xf32>
    %113 = vector.extract_strided_slice %65 {offsets = [0, 4], sizes = [4, 44], strides = [1, 1]} : vector<4x52xf32> to vector<4x44xf32>
    %114 = arith.addf %112, %113 : vector<4x44xf32>
    %c-6_i32 = arith.constant -6 : i32
    %115 = arith.addi %0, %c-6_i32 : i32
    %116 = tpu.iota {dimensions = array<i32: 1>} : vector<1x44xi32>
    %117 = vector.broadcast %115 : i32 to vector<1x44xi32>
    %118 = arith.addi %117, %116 : vector<1x44xi32>
    %c0_i32_42 = arith.constant 0 : i32
    %119 = vector.broadcast %c0_i32_42 : i32 to vector<1x44xi32>
    %120 = arith.cmpi sge, %118, %119 : vector<1x44xi32>
    %c32_i32_43 = arith.constant 32 : i32
    %121 = vector.broadcast %c32_i32_43 : i32 to vector<1x44xi32>
    %122 = arith.cmpi slt, %118, %121 : vector<1x44xi32>
    %123 = arith.andi %120, %122 : vector<1x44xi1>
    %cst_44 = arith.constant 0.000000e+00 : f32
    %124 = vector.shape_cast %123 : vector<1x44xi1> to vector<1x44xi1>
    %125 = vector.broadcast %124 : vector<1x44xi1> to vector<4x44xi1>
    %126 = vector.broadcast %cst_44 : f32 to vector<4x44xf32>
    %127 = arith.select %125, %114, %126 : vector<4x44xi1>, vector<4x44xf32>
    %cst_45 = arith.constant 0.000000e+00 : f32
    %128 = vector.broadcast %cst_45 : f32 to vector<4x44xf32>
    %129 = arith.cmpf oge, %127, %128 : vector<4x44xf32>
    %cst_46 = arith.constant 1.000000e-01 : f32
    %130 = vector.broadcast %cst_46 : f32 to vector<4x44xf32>
    %131 = arith.mulf %130, %127 : vector<4x44xf32>
    %132 = arith.select %129, %127, %131 : vector<4x44xi1>, vector<4x44xf32>
    %c4 = arith.constant 4 : index
    %c0_47 = arith.constant 0 : index
    %c0_48 = arith.constant 0 : index
    %133 = vector.load %arg3[%c4, %c0_47, %c0_48] : memref<6x4x12xbf16, #tpu.memory_space<vmem>>, vector<1x4x12xbf16>
    %134 = vector.shape_cast %133 : vector<1x4x12xbf16> to vector<4x12xbf16>
    %c4_49 = arith.constant 4 : index
    %c0_50 = arith.constant 0 : index
    %c0_51 = arith.constant 0 : index
    %135 = vector.load %arg4[%c4_49, %c0_50, %c0_51] : memref<6x4x1xf32, #tpu.memory_space<vmem>>, vector<1x4x1xf32>
    %136 = vector.shape_cast %135 : vector<1x4x1xf32> to vector<4x1xf32>
    %137 = arith.truncf %132 : vector<4x44xf32> to vector<4x44xbf16>
    %138 = vector.extract_strided_slice %137 {offsets = [0, 0], sizes = [4, 34], strides = [1, 1]} : vector<4x44xbf16> to vector<4x34xbf16>
    %139 = vector.extract_strided_slice %137 {offsets = [0, 5], sizes = [4, 34], strides = [1, 1]} : vector<4x44xbf16> to vector<4x34xbf16>
    %140 = vector.extract_strided_slice %137 {offsets = [0, 10], sizes = [4, 34], strides = [1, 1]} : vector<4x44xbf16> to vector<4x34xbf16>
    %141 = tpu.concatenate %138, %139, %140 in 0 : vector<4x34xbf16>, vector<4x34xbf16>, vector<4x34xbf16> -> vector<12x34xbf16>
    %cst_52 = arith.constant dense<0.000000e+00> : vector<4x34xf32>
    %142 = tpu.matmul %134, %141, %cst_52 {dimension_numbers = #tpu.dot_dimension_numbers<[1], [0], [0], [1], [0, 0, 1, 1], [], []>} : vector<4x12xbf16>, vector<12x34xbf16>, vector<4x34xf32> -> vector<4x34xf32>
    %143 = vector.broadcast %136 : vector<4x1xf32> to vector<4x34xf32>
    %144 = arith.addf %142, %143 : vector<4x34xf32>
    %c-1_i32 = arith.constant -1 : i32
    %145 = arith.addi %0, %c-1_i32 : i32
    %146 = tpu.iota {dimensions = array<i32: 1>} : vector<1x34xi32>
    %147 = vector.broadcast %145 : i32 to vector<1x34xi32>
    %148 = arith.addi %147, %146 : vector<1x34xi32>
    %c0_i32_53 = arith.constant 0 : i32
    %149 = vector.broadcast %c0_i32_53 : i32 to vector<1x34xi32>
    %150 = arith.cmpi sge, %148, %149 : vector<1x34xi32>
    %c32_i32_54 = arith.constant 32 : i32
    %151 = vector.broadcast %c32_i32_54 : i32 to vector<1x34xi32>
    %152 = arith.cmpi slt, %148, %151 : vector<1x34xi32>
    %153 = arith.andi %150, %152 : vector<1x34xi1>
    %cst_55 = arith.constant 0.000000e+00 : f32
    %154 = vector.shape_cast %153 : vector<1x34xi1> to vector<1x34xi1>
    %155 = vector.broadcast %154 : vector<1x34xi1> to vector<4x34xi1>
    %156 = vector.broadcast %cst_55 : f32 to vector<4x34xf32>
    %157 = arith.select %155, %144, %156 : vector<4x34xi1>, vector<4x34xf32>
    %cst_56 = arith.constant 0.000000e+00 : f32
    %158 = vector.broadcast %cst_56 : f32 to vector<4x34xf32>
    %159 = arith.cmpf oge, %157, %158 : vector<4x34xf32>
    %cst_57 = arith.constant 1.000000e-01 : f32
    %160 = vector.broadcast %cst_57 : f32 to vector<4x34xf32>
    %161 = arith.mulf %160, %157 : vector<4x34xf32>
    %162 = arith.select %159, %157, %161 : vector<4x34xi1>, vector<4x34xf32>
    %c5 = arith.constant 5 : index
    %c0_58 = arith.constant 0 : index
    %c0_59 = arith.constant 0 : index
    %163 = vector.load %arg3[%c5, %c0_58, %c0_59] : memref<6x4x12xbf16, #tpu.memory_space<vmem>>, vector<1x4x12xbf16>
    %164 = vector.shape_cast %163 : vector<1x4x12xbf16> to vector<4x12xbf16>
    %c5_60 = arith.constant 5 : index
    %c0_61 = arith.constant 0 : index
    %c0_62 = arith.constant 0 : index
    %165 = vector.load %arg4[%c5_60, %c0_61, %c0_62] : memref<6x4x1xf32, #tpu.memory_space<vmem>>, vector<1x4x1xf32>
    %166 = vector.shape_cast %165 : vector<1x4x1xf32> to vector<4x1xf32>
    %167 = arith.truncf %162 : vector<4x34xf32> to vector<4x34xbf16>
    %168 = vector.extract_strided_slice %167 {offsets = [0, 0], sizes = [4, 32], strides = [1, 1]} : vector<4x34xbf16> to vector<4x32xbf16>
    %169 = vector.extract_strided_slice %167 {offsets = [0, 1], sizes = [4, 32], strides = [1, 1]} : vector<4x34xbf16> to vector<4x32xbf16>
    %170 = vector.extract_strided_slice %167 {offsets = [0, 2], sizes = [4, 32], strides = [1, 1]} : vector<4x34xbf16> to vector<4x32xbf16>
    %171 = tpu.concatenate %168, %169, %170 in 0 : vector<4x32xbf16>, vector<4x32xbf16>, vector<4x32xbf16> -> vector<12x32xbf16>
    %cst_63 = arith.constant dense<0.000000e+00> : vector<4x32xf32>
    %172 = tpu.matmul %164, %171, %cst_63 {dimension_numbers = #tpu.dot_dimension_numbers<[1], [0], [0], [1], [0, 0, 1, 1], [], []>} : vector<4x12xbf16>, vector<12x32xbf16>, vector<4x32xf32> -> vector<4x32xf32>
    %173 = vector.broadcast %166 : vector<4x1xf32> to vector<4x32xf32>
    %174 = arith.addf %172, %173 : vector<4x32xf32>
    %175 = vector.extract_strided_slice %127 {offsets = [0, 6], sizes = [4, 32], strides = [1, 1]} : vector<4x44xf32> to vector<4x32xf32>
    %176 = arith.addf %174, %175 : vector<4x32xf32>
    %c0_i32_64 = arith.constant 0 : i32
    %177 = arith.addi %0, %c0_i32_64 : i32
    %178 = tpu.iota {dimensions = array<i32: 1>} : vector<1x32xi32>
    %179 = vector.broadcast %177 : i32 to vector<1x32xi32>
    %180 = arith.addi %179, %178 : vector<1x32xi32>
    %c0_i32_65 = arith.constant 0 : i32
    %181 = vector.broadcast %c0_i32_65 : i32 to vector<1x32xi32>
    %182 = arith.cmpi sge, %180, %181 : vector<1x32xi32>
    %c32_i32_66 = arith.constant 32 : i32
    %183 = vector.broadcast %c32_i32_66 : i32 to vector<1x32xi32>
    %184 = arith.cmpi slt, %180, %183 : vector<1x32xi32>
    %185 = arith.andi %182, %184 : vector<1x32xi1>
    %cst_67 = arith.constant 0.000000e+00 : f32
    %186 = vector.shape_cast %185 : vector<1x32xi1> to vector<1x32xi1>
    %187 = vector.broadcast %186 : vector<1x32xi1> to vector<4x32xi1>
    %188 = vector.broadcast %cst_67 : f32 to vector<4x32xf32>
    %189 = arith.select %187, %176, %188 : vector<4x32xi1>, vector<4x32xf32>
    %190 = arith.truncf %189 : vector<4x32xf32> to vector<4x32xbf16>
    %c0_68 = arith.constant 0 : index
    %c0_69 = arith.constant 0 : index
    %c0_70 = arith.constant 0 : index
    %191 = vector.load %arg5[%c0_68, %c0_69, %c0_70] : memref<1x4x32xbf16, #tpu.memory_space<vmem>>, vector<1x4x32xbf16>
    %192 = vector.shape_cast %191 : vector<1x4x32xbf16> to vector<4x32xbf16>
    %193 = vector.shape_cast %190 : vector<4x32xbf16> to vector<1x4x32xbf16>
    tpu.vector_store %arg5[%c0_68, %c0_69, %c0_70], %193 {strides = array<i32>} : memref<1x4x32xbf16, #tpu.memory_space<vmem>>, vector<1x4x32xbf16>,
    return
  }
  func.func @transform_0(%arg0: i32, %arg1: i32) -> (i32, i32, i32) {
    %c0_i32 = arith.constant 0 : i32
    %c0_i32_0 = arith.constant 0 : i32
    return %arg0, %c0_i32, %arg1 : i32, i32, i32
  }
  func.func @transform_1(%arg0: i32, %arg1: i32) -> (i32, i32, i32) {
    %c0_i32 = arith.constant 0 : i32
    %c0_i32_0 = arith.constant 0 : i32
    %c0_i32_1 = arith.constant 0 : i32
    %c0_i32_2 = arith.constant 0 : i32
    return %c0_i32, %c0_i32_0, %c0_i32_1 : i32, i32, i32
  }
  func.func @transform_2(%arg0: i32, %arg1: i32) -> (i32, i32, i32) {
    %c0_i32 = arith.constant 0 : i32
    %c0_i32_0 = arith.constant 0 : i32
    %c0_i32_1 = arith.constant 0 : i32
    %c0_i32_2 = arith.constant 0 : i32
    return %c0_i32, %c0_i32_0, %c0_i32_1 : i32, i32, i32
  }
  func.func @transform_3(%arg0: i32, %arg1: i32) -> (i32, i32, i32) {
    %c0_i32 = arith.constant 0 : i32
    %c0_i32_0 = arith.constant 0 : i32
    return %arg0, %c0_i32, %arg1 : i32, i32, i32
  }
}

module attributes {stable_mosaic.version = 11 : i64} {
  func.func @kernel(%arg0: i32, %arg1: i32, %arg2: memref<1x4x80xbf16, #tpu.memory_space<vmem>>, %arg3: memref<6x4x20xbf16, #tpu.memory_space<vmem>>, %arg4: memref<6x4x1xf32, #tpu.memory_space<vmem>>, %arg5: memref<1x4x32xbf16, #tpu.memory_space<vmem>>, %arg6: memref<1x4x32xbf16, #tpu.memory_space<vmem>>) attributes {dimension_semantics = [#tpu.dimension_semantics<parallel>, #tpu.dimension_semantics<parallel>], iteration_bounds = array<i64: 2, 1>, scalar_prefetch = 0 : i64, scratch_operands = 0 : i64, tpu.core_type = #tpu.core_type<tc>, window_params = [{transform_indices = @transform_0, window_bounds = array<i64: 1, 4, 80>}, {pipeline_mode = #tpu.pipeline_mode<synchronous>, transform_indices = @transform_1, window_bounds = array<i64: 6, 4, 20>}, {pipeline_mode = #tpu.pipeline_mode<synchronous>, transform_indices = @transform_2, window_bounds = array<i64: 6, 4, 1>}, {transform_indices = @transform_3, window_bounds = array<i64: 1, 4, 32>}, {transform_indices = @transform_4, window_bounds = array<i64: 1, 4, 32>}]} {
    %c32_i32 = arith.constant 32 : i32
    %0 = arith.muli %arg1, %c32_i32 : i32
    %c0 = arith.constant 0 : index
    %c0_0 = arith.constant 0 : index
    %c0_1 = arith.constant 0 : index
    %1 = vector.load %arg2[%c0, %c0_0, %c0_1] : memref<1x4x80xbf16, #tpu.memory_space<vmem>>, vector<1x4x80xbf16>
    %2 = vector.shape_cast %1 : vector<1x4x80xbf16> to vector<4x80xbf16>
    %3 = arith.extf %2 : vector<4x80xbf16> to vector<4x80xf32>
    %cst = arith.constant 0.000000e+00 : f32
    %4 = vector.broadcast %cst : f32 to vector<4x80xf32>
    %5 = arith.cmpf oge, %3, %4 : vector<4x80xf32>
    %cst_2 = arith.constant 1.000000e-01 : f32
    %6 = vector.broadcast %cst_2 : f32 to vector<4x80xf32>
    %7 = arith.mulf %6, %3 : vector<4x80xf32>
    %8 = arith.select %5, %3, %7 : vector<4x80xi1>, vector<4x80xf32>
    %c0_3 = arith.constant 0 : index
    %c0_4 = arith.constant 0 : index
    %c0_5 = arith.constant 0 : index
    %9 = vector.load %arg3[%c0_3, %c0_4, %c0_5] : memref<6x4x20xbf16, #tpu.memory_space<vmem>>, vector<1x4x20xbf16>
    %10 = vector.shape_cast %9 : vector<1x4x20xbf16> to vector<4x20xbf16>
    %c0_6 = arith.constant 0 : index
    %c0_7 = arith.constant 0 : index
    %c0_8 = arith.constant 0 : index
    %11 = vector.load %arg4[%c0_6, %c0_7, %c0_8] : memref<6x4x1xf32, #tpu.memory_space<vmem>>, vector<1x4x1xf32>
    %12 = vector.shape_cast %11 : vector<1x4x1xf32> to vector<4x1xf32>
    %13 = arith.truncf %8 : vector<4x80xf32> to vector<4x80xbf16>
    %14 = vector.extract_strided_slice %13 {offsets = [0, 0], sizes = [4, 76], strides = [1, 1]} : vector<4x80xbf16> to vector<4x76xbf16>
    %15 = vector.extract_strided_slice %13 {offsets = [0, 1], sizes = [4, 76], strides = [1, 1]} : vector<4x80xbf16> to vector<4x76xbf16>
    %16 = vector.extract_strided_slice %13 {offsets = [0, 2], sizes = [4, 76], strides = [1, 1]} : vector<4x80xbf16> to vector<4x76xbf16>
    %17 = vector.extract_strided_slice %13 {offsets = [0, 3], sizes = [4, 76], strides = [1, 1]} : vector<4x80xbf16> to vector<4x76xbf16>
    %18 = vector.extract_strided_slice %13 {offsets = [0, 4], sizes = [4, 76], strides = [1, 1]} : vector<4x80xbf16> to vector<4x76xbf16>
    %19 = tpu.concatenate %14, %15, %16, %17, %18 in 0 : vector<4x76xbf16>, vector<4x76xbf16>, vector<4x76xbf16>, vector<4x76xbf16>, vector<4x76xbf16> -> vector<20x76xbf16>
    %cst_9 = arith.constant dense<0.000000e+00> : vector<4x76xf32>
    %20 = tpu.matmul %10, %19, %cst_9 {dimension_numbers = #tpu.dot_dimension_numbers<[1], [0], [0], [1], [0, 0, 1, 1], [], []>} : vector<4x20xbf16>, vector<20x76xbf16>, vector<4x76xf32> -> vector<4x76xf32>
    %21 = vector.broadcast %12 : vector<4x1xf32> to vector<4x76xf32>
    %22 = arith.addf %20, %21 : vector<4x76xf32>
    %c-22_i32 = arith.constant -22 : i32
    %23 = arith.addi %0, %c-22_i32 : i32
    %24 = tpu.iota {dimensions = array<i32: 1>} : vector<1x76xi32>
    %25 = vector.broadcast %23 : i32 to vector<1x76xi32>
    %26 = arith.addi %25, %24 : vector<1x76xi32>
    %c0_i32 = arith.constant 0 : i32
    %27 = vector.broadcast %c0_i32 : i32 to vector<1x76xi32>
    %28 = arith.cmpi sge, %26, %27 : vector<1x76xi32>
    %c32_i32_10 = arith.constant 32 : i32
    %29 = vector.broadcast %c32_i32_10 : i32 to vector<1x76xi32>
    %30 = arith.cmpi slt, %26, %29 : vector<1x76xi32>
    %31 = arith.andi %28, %30 : vector<1x76xi1>
    %cst_11 = arith.constant 0.000000e+00 : f32
    %32 = vector.shape_cast %31 : vector<1x76xi1> to vector<1x76xi1>
    %33 = vector.broadcast %32 : vector<1x76xi1> to vector<4x76xi1>
    %34 = vector.broadcast %cst_11 : f32 to vector<4x76xf32>
    %35 = arith.select %33, %22, %34 : vector<4x76xi1>, vector<4x76xf32>
    %cst_12 = arith.constant 0.000000e+00 : f32
    %36 = vector.broadcast %cst_12 : f32 to vector<4x76xf32>
    %37 = arith.cmpf oge, %35, %36 : vector<4x76xf32>
    %cst_13 = arith.constant 1.000000e-01 : f32
    %38 = vector.broadcast %cst_13 : f32 to vector<4x76xf32>
    %39 = arith.mulf %38, %35 : vector<4x76xf32>
    %40 = arith.select %37, %35, %39 : vector<4x76xi1>, vector<4x76xf32>
    %c1 = arith.constant 1 : index
    %c0_14 = arith.constant 0 : index
    %c0_15 = arith.constant 0 : index
    %41 = vector.load %arg3[%c1, %c0_14, %c0_15] : memref<6x4x20xbf16, #tpu.memory_space<vmem>>, vector<1x4x20xbf16>
    %42 = vector.shape_cast %41 : vector<1x4x20xbf16> to vector<4x20xbf16>
    %c1_16 = arith.constant 1 : index
    %c0_17 = arith.constant 0 : index
    %c0_18 = arith.constant 0 : index
    %43 = vector.load %arg4[%c1_16, %c0_17, %c0_18] : memref<6x4x1xf32, #tpu.memory_space<vmem>>, vector<1x4x1xf32>
    %44 = vector.shape_cast %43 : vector<1x4x1xf32> to vector<4x1xf32>
    %45 = arith.truncf %40 : vector<4x76xf32> to vector<4x76xbf16>
    %46 = vector.extract_strided_slice %45 {offsets = [0, 0], sizes = [4, 72], strides = [1, 1]} : vector<4x76xbf16> to vector<4x72xbf16>
    %47 = vector.extract_strided_slice %45 {offsets = [0, 1], sizes = [4, 72], strides = [1, 1]} : vector<4x76xbf16> to vector<4x72xbf16>
    %48 = vector.extract_strided_slice %45 {offsets = [0, 2], sizes = [4, 72], strides = [1, 1]} : vector<4x76xbf16> to vector<4x72xbf16>
    %49 = vector.extract_strided_slice %45 {offsets = [0, 3], sizes = [4, 72], strides = [1, 1]} : vector<4x76xbf16> to vector<4x72xbf16>
    %50 = vector.extract_strided_slice %45 {offsets = [0, 4], sizes = [4, 72], strides = [1, 1]} : vector<4x76xbf16> to vector<4x72xbf16>
    %51 = tpu.concatenate %46, %47, %48, %49, %50 in 0 : vector<4x72xbf16>, vector<4x72xbf16>, vector<4x72xbf16>, vector<4x72xbf16>, vector<4x72xbf16> -> vector<20x72xbf16>
    %cst_19 = arith.constant dense<0.000000e+00> : vector<4x72xf32>
    %52 = tpu.matmul %42, %51, %cst_19 {dimension_numbers = #tpu.dot_dimension_numbers<[1], [0], [0], [1], [0, 0, 1, 1], [], []>} : vector<4x20xbf16>, vector<20x72xbf16>, vector<4x72xf32> -> vector<4x72xf32>
    %53 = vector.broadcast %44 : vector<4x1xf32> to vector<4x72xf32>
    %54 = arith.addf %52, %53 : vector<4x72xf32>
    %55 = vector.extract_strided_slice %3 {offsets = [0, 4], sizes = [4, 72], strides = [1, 1]} : vector<4x80xf32> to vector<4x72xf32>
    %56 = arith.addf %54, %55 : vector<4x72xf32>
    %c-20_i32 = arith.constant -20 : i32
    %57 = arith.addi %0, %c-20_i32 : i32
    %58 = tpu.iota {dimensions = array<i32: 1>} : vector<1x72xi32>
    %59 = vector.broadcast %57 : i32 to vector<1x72xi32>
    %60 = arith.addi %59, %58 : vector<1x72xi32>
    %c0_i32_20 = arith.constant 0 : i32
    %61 = vector.broadcast %c0_i32_20 : i32 to vector<1x72xi32>
    %62 = arith.cmpi sge, %60, %61 : vector<1x72xi32>
    %c32_i32_21 = arith.constant 32 : i32
    %63 = vector.broadcast %c32_i32_21 : i32 to vector<1x72xi32>
    %64 = arith.cmpi slt, %60, %63 : vector<1x72xi32>
    %65 = arith.andi %62, %64 : vector<1x72xi1>
    %cst_22 = arith.constant 0.000000e+00 : f32
    %66 = vector.shape_cast %65 : vector<1x72xi1> to vector<1x72xi1>
    %67 = vector.broadcast %66 : vector<1x72xi1> to vector<4x72xi1>
    %68 = vector.broadcast %cst_22 : f32 to vector<4x72xf32>
    %69 = arith.select %67, %56, %68 : vector<4x72xi1>, vector<4x72xf32>
    %cst_23 = arith.constant 0.000000e+00 : f32
    %70 = vector.broadcast %cst_23 : f32 to vector<4x72xf32>
    %71 = arith.cmpf oge, %69, %70 : vector<4x72xf32>
    %cst_24 = arith.constant 1.000000e-01 : f32
    %72 = vector.broadcast %cst_24 : f32 to vector<4x72xf32>
    %73 = arith.mulf %72, %69 : vector<4x72xf32>
    %74 = arith.select %71, %69, %73 : vector<4x72xi1>, vector<4x72xf32>
    %c2 = arith.constant 2 : index
    %c0_25 = arith.constant 0 : index
    %c0_26 = arith.constant 0 : index
    %75 = vector.load %arg3[%c2, %c0_25, %c0_26] : memref<6x4x20xbf16, #tpu.memory_space<vmem>>, vector<1x4x20xbf16>
    %76 = vector.shape_cast %75 : vector<1x4x20xbf16> to vector<4x20xbf16>
    %c2_27 = arith.constant 2 : index
    %c0_28 = arith.constant 0 : index
    %c0_29 = arith.constant 0 : index
    %77 = vector.load %arg4[%c2_27, %c0_28, %c0_29] : memref<6x4x1xf32, #tpu.memory_space<vmem>>, vector<1x4x1xf32>
    %78 = vector.shape_cast %77 : vector<1x4x1xf32> to vector<4x1xf32>
    %79 = arith.truncf %74 : vector<4x72xf32> to vector<4x72xbf16>
    %80 = vector.extract_strided_slice %79 {offsets = [0, 0], sizes = [4, 60], strides = [1, 1]} : vector<4x72xbf16> to vector<4x60xbf16>
    %81 = vector.extract_strided_slice %79 {offsets = [0, 3], sizes = [4, 60], strides = [1, 1]} : vector<4x72xbf16> to vector<4x60xbf16>
    %82 = vector.extract_strided_slice %79 {offsets = [0, 6], sizes = [4, 60], strides = [1, 1]} : vector<4x72xbf16> to vector<4x60xbf16>
    %83 = vector.extract_strided_slice %79 {offsets = [0, 9], sizes = [4, 60], strides = [1, 1]} : vector<4x72xbf16> to vector<4x60xbf16>
    %84 = vector.extract_strided_slice %79 {offsets = [0, 12], sizes = [4, 60], strides = [1, 1]} : vector<4x72xbf16> to vector<4x60xbf16>
    %85 = tpu.concatenate %80, %81, %82, %83, %84 in 0 : vector<4x60xbf16>, vector<4x60xbf16>, vector<4x60xbf16>, vector<4x60xbf16>, vector<4x60xbf16> -> vector<20x60xbf16>
    %cst_30 = arith.constant dense<0.000000e+00> : vector<4x60xf32>
    %86 = tpu.matmul %76, %85, %cst_30 {dimension_numbers = #tpu.dot_dimension_numbers<[1], [0], [0], [1], [0, 0, 1, 1], [], []>} : vector<4x20xbf16>, vector<20x60xbf16>, vector<4x60xf32> -> vector<4x60xf32>
    %87 = vector.broadcast %78 : vector<4x1xf32> to vector<4x60xf32>
    %88 = arith.addf %86, %87 : vector<4x60xf32>
    %c-14_i32 = arith.constant -14 : i32
    %89 = arith.addi %0, %c-14_i32 : i32
    %90 = tpu.iota {dimensions = array<i32: 1>} : vector<1x60xi32>
    %91 = vector.broadcast %89 : i32 to vector<1x60xi32>
    %92 = arith.addi %91, %90 : vector<1x60xi32>
    %c0_i32_31 = arith.constant 0 : i32
    %93 = vector.broadcast %c0_i32_31 : i32 to vector<1x60xi32>
    %94 = arith.cmpi sge, %92, %93 : vector<1x60xi32>
    %c32_i32_32 = arith.constant 32 : i32
    %95 = vector.broadcast %c32_i32_32 : i32 to vector<1x60xi32>
    %96 = arith.cmpi slt, %92, %95 : vector<1x60xi32>
    %97 = arith.andi %94, %96 : vector<1x60xi1>
    %cst_33 = arith.constant 0.000000e+00 : f32
    %98 = vector.shape_cast %97 : vector<1x60xi1> to vector<1x60xi1>
    %99 = vector.broadcast %98 : vector<1x60xi1> to vector<4x60xi1>
    %100 = vector.broadcast %cst_33 : f32 to vector<4x60xf32>
    %101 = arith.select %99, %88, %100 : vector<4x60xi1>, vector<4x60xf32>
    %cst_34 = arith.constant 0.000000e+00 : f32
    %102 = vector.broadcast %cst_34 : f32 to vector<4x60xf32>
    %103 = arith.cmpf oge, %101, %102 : vector<4x60xf32>
    %cst_35 = arith.constant 1.000000e-01 : f32
    %104 = vector.broadcast %cst_35 : f32 to vector<4x60xf32>
    %105 = arith.mulf %104, %101 : vector<4x60xf32>
    %106 = arith.select %103, %101, %105 : vector<4x60xi1>, vector<4x60xf32>
    %c3 = arith.constant 3 : index
    %c0_36 = arith.constant 0 : index
    %c0_37 = arith.constant 0 : index
    %107 = vector.load %arg3[%c3, %c0_36, %c0_37] : memref<6x4x20xbf16, #tpu.memory_space<vmem>>, vector<1x4x20xbf16>
    %108 = vector.shape_cast %107 : vector<1x4x20xbf16> to vector<4x20xbf16>
    %c3_38 = arith.constant 3 : index
    %c0_39 = arith.constant 0 : index
    %c0_40 = arith.constant 0 : index
    %109 = vector.load %arg4[%c3_38, %c0_39, %c0_40] : memref<6x4x1xf32, #tpu.memory_space<vmem>>, vector<1x4x1xf32>
    %110 = vector.shape_cast %109 : vector<1x4x1xf32> to vector<4x1xf32>
    %111 = arith.truncf %106 : vector<4x60xf32> to vector<4x60xbf16>
    %112 = vector.extract_strided_slice %111 {offsets = [0, 0], sizes = [4, 56], strides = [1, 1]} : vector<4x60xbf16> to vector<4x56xbf16>
    %113 = vector.extract_strided_slice %111 {offsets = [0, 1], sizes = [4, 56], strides = [1, 1]} : vector<4x60xbf16> to vector<4x56xbf16>
    %114 = vector.extract_strided_slice %111 {offsets = [0, 2], sizes = [4, 56], strides = [1, 1]} : vector<4x60xbf16> to vector<4x56xbf16>
    %115 = vector.extract_strided_slice %111 {offsets = [0, 3], sizes = [4, 56], strides = [1, 1]} : vector<4x60xbf16> to vector<4x56xbf16>
    %116 = vector.extract_strided_slice %111 {offsets = [0, 4], sizes = [4, 56], strides = [1, 1]} : vector<4x60xbf16> to vector<4x56xbf16>
    %117 = tpu.concatenate %112, %113, %114, %115, %116 in 0 : vector<4x56xbf16>, vector<4x56xbf16>, vector<4x56xbf16>, vector<4x56xbf16>, vector<4x56xbf16> -> vector<20x56xbf16>
    %cst_41 = arith.constant dense<0.000000e+00> : vector<4x56xf32>
    %118 = tpu.matmul %108, %117, %cst_41 {dimension_numbers = #tpu.dot_dimension_numbers<[1], [0], [0], [1], [0, 0, 1, 1], [], []>} : vector<4x20xbf16>, vector<20x56xbf16>, vector<4x56xf32> -> vector<4x56xf32>
    %119 = vector.broadcast %110 : vector<4x1xf32> to vector<4x56xf32>
    %120 = arith.addf %118, %119 : vector<4x56xf32>
    %121 = vector.extract_strided_slice %69 {offsets = [0, 8], sizes = [4, 56], strides = [1, 1]} : vector<4x72xf32> to vector<4x56xf32>
    %122 = arith.addf %120, %121 : vector<4x56xf32>
    %c-12_i32 = arith.constant -12 : i32
    %123 = arith.addi %0, %c-12_i32 : i32
    %124 = tpu.iota {dimensions = array<i32: 1>} : vector<1x56xi32>
    %125 = vector.broadcast %123 : i32 to vector<1x56xi32>
    %126 = arith.addi %125, %124 : vector<1x56xi32>
    %c0_i32_42 = arith.constant 0 : i32
    %127 = vector.broadcast %c0_i32_42 : i32 to vector<1x56xi32>
    %128 = arith.cmpi sge, %126, %127 : vector<1x56xi32>
    %c32_i32_43 = arith.constant 32 : i32
    %129 = vector.broadcast %c32_i32_43 : i32 to vector<1x56xi32>
    %130 = arith.cmpi slt, %126, %129 : vector<1x56xi32>
    %131 = arith.andi %128, %130 : vector<1x56xi1>
    %cst_44 = arith.constant 0.000000e+00 : f32
    %132 = vector.shape_cast %131 : vector<1x56xi1> to vector<1x56xi1>
    %133 = vector.broadcast %132 : vector<1x56xi1> to vector<4x56xi1>
    %134 = vector.broadcast %cst_44 : f32 to vector<4x56xf32>
    %135 = arith.select %133, %122, %134 : vector<4x56xi1>, vector<4x56xf32>
    %cst_45 = arith.constant 0.000000e+00 : f32
    %136 = vector.broadcast %cst_45 : f32 to vector<4x56xf32>
    %137 = arith.cmpf oge, %135, %136 : vector<4x56xf32>
    %cst_46 = arith.constant 1.000000e-01 : f32
    %138 = vector.broadcast %cst_46 : f32 to vector<4x56xf32>
    %139 = arith.mulf %138, %135 : vector<4x56xf32>
    %140 = arith.select %137, %135, %139 : vector<4x56xi1>, vector<4x56xf32>
    %c4 = arith.constant 4 : index
    %c0_47 = arith.constant 0 : index
    %c0_48 = arith.constant 0 : index
    %141 = vector.load %arg3[%c4, %c0_47, %c0_48] : memref<6x4x20xbf16, #tpu.memory_space<vmem>>, vector<1x4x20xbf16>
    %142 = vector.shape_cast %141 : vector<1x4x20xbf16> to vector<4x20xbf16>
    %c4_49 = arith.constant 4 : index
    %c0_50 = arith.constant 0 : index
    %c0_51 = arith.constant 0 : index
    %143 = vector.load %arg4[%c4_49, %c0_50, %c0_51] : memref<6x4x1xf32, #tpu.memory_space<vmem>>, vector<1x4x1xf32>
    %144 = vector.shape_cast %143 : vector<1x4x1xf32> to vector<4x1xf32>
    %145 = arith.truncf %140 : vector<4x56xf32> to vector<4x56xbf16>
    %146 = vector.extract_strided_slice %145 {offsets = [0, 0], sizes = [4, 36], strides = [1, 1]} : vector<4x56xbf16> to vector<4x36xbf16>
    %147 = vector.extract_strided_slice %145 {offsets = [0, 5], sizes = [4, 36], strides = [1, 1]} : vector<4x56xbf16> to vector<4x36xbf16>
    %148 = vector.extract_strided_slice %145 {offsets = [0, 10], sizes = [4, 36], strides = [1, 1]} : vector<4x56xbf16> to vector<4x36xbf16>
    %149 = vector.extract_strided_slice %145 {offsets = [0, 15], sizes = [4, 36], strides = [1, 1]} : vector<4x56xbf16> to vector<4x36xbf16>
    %150 = vector.extract_strided_slice %145 {offsets = [0, 20], sizes = [4, 36], strides = [1, 1]} : vector<4x56xbf16> to vector<4x36xbf16>
    %151 = tpu.concatenate %146, %147, %148, %149, %150 in 0 : vector<4x36xbf16>, vector<4x36xbf16>, vector<4x36xbf16>, vector<4x36xbf16>, vector<4x36xbf16> -> vector<20x36xbf16>
    %cst_52 = arith.constant dense<0.000000e+00> : vector<4x36xf32>
    %152 = tpu.matmul %142, %151, %cst_52 {dimension_numbers = #tpu.dot_dimension_numbers<[1], [0], [0], [1], [0, 0, 1, 1], [], []>} : vector<4x20xbf16>, vector<20x36xbf16>, vector<4x36xf32> -> vector<4x36xf32>
    %153 = vector.broadcast %144 : vector<4x1xf32> to vector<4x36xf32>
    %154 = arith.addf %152, %153 : vector<4x36xf32>
    %c-2_i32 = arith.constant -2 : i32
    %155 = arith.addi %0, %c-2_i32 : i32
    %156 = tpu.iota {dimensions = array<i32: 1>} : vector<1x36xi32>
    %157 = vector.broadcast %155 : i32 to vector<1x36xi32>
    %158 = arith.addi %157, %156 : vector<1x36xi32>
    %c0_i32_53 = arith.constant 0 : i32
    %159 = vector.broadcast %c0_i32_53 : i32 to vector<1x36xi32>
    %160 = arith.cmpi sge, %158, %159 : vector<1x36xi32>
    %c32_i32_54 = arith.constant 32 : i32
    %161 = vector.broadcast %c32_i32_54 : i32 to vector<1x36xi32>
    %162 = arith.cmpi slt, %158, %161 : vector<1x36xi32>
    %163 = arith.andi %160, %162 : vector<1x36xi1>
    %cst_55 = arith.constant 0.000000e+00 : f32
    %164 = vector.shape_cast %163 : vector<1x36xi1> to vector<1x36xi1>
    %165 = vector.broadcast %164 : vector<1x36xi1> to vector<4x36xi1>
    %166 = vector.broadcast %cst_55 : f32 to vector<4x36xf32>
    %167 = arith.select %165, %154, %166 : vector<4x36xi1>, vector<4x36xf32>
    %cst_56 = arith.constant 0.000000e+00 : f32
    %168 = vector.broadcast %cst_56 : f32 to vector<4x36xf32>
    %169 = arith.cmpf oge, %167, %168 : vector<4x36xf32>
    %cst_57 = arith.constant 1.000000e-01 : f32
    %170 = vector.broadcast %cst_57 : f32 to vector<4x36xf32>
    %171 = arith.mulf %170, %167 : vector<4x36xf32>
    %172 = arith.select %169, %167, %171 : vector<4x36xi1>, vector<4x36xf32>
    %c5 = arith.constant 5 : index
    %c0_58 = arith.constant 0 : index
    %c0_59 = arith.constant 0 : index
    %173 = vector.load %arg3[%c5, %c0_58, %c0_59] : memref<6x4x20xbf16, #tpu.memory_space<vmem>>, vector<1x4x20xbf16>
    %174 = vector.shape_cast %173 : vector<1x4x20xbf16> to vector<4x20xbf16>
    %c5_60 = arith.constant 5 : index
    %c0_61 = arith.constant 0 : index
    %c0_62 = arith.constant 0 : index
    %175 = vector.load %arg4[%c5_60, %c0_61, %c0_62] : memref<6x4x1xf32, #tpu.memory_space<vmem>>, vector<1x4x1xf32>
    %176 = vector.shape_cast %175 : vector<1x4x1xf32> to vector<4x1xf32>
    %177 = arith.truncf %172 : vector<4x36xf32> to vector<4x36xbf16>
    %178 = vector.extract_strided_slice %177 {offsets = [0, 0], sizes = [4, 32], strides = [1, 1]} : vector<4x36xbf16> to vector<4x32xbf16>
    %179 = vector.extract_strided_slice %177 {offsets = [0, 1], sizes = [4, 32], strides = [1, 1]} : vector<4x36xbf16> to vector<4x32xbf16>
    %180 = vector.extract_strided_slice %177 {offsets = [0, 2], sizes = [4, 32], strides = [1, 1]} : vector<4x36xbf16> to vector<4x32xbf16>
    %181 = vector.extract_strided_slice %177 {offsets = [0, 3], sizes = [4, 32], strides = [1, 1]} : vector<4x36xbf16> to vector<4x32xbf16>
    %182 = vector.extract_strided_slice %177 {offsets = [0, 4], sizes = [4, 32], strides = [1, 1]} : vector<4x36xbf16> to vector<4x32xbf16>
    %183 = tpu.concatenate %178, %179, %180, %181, %182 in 0 : vector<4x32xbf16>, vector<4x32xbf16>, vector<4x32xbf16>, vector<4x32xbf16>, vector<4x32xbf16> -> vector<20x32xbf16>
    %cst_63 = arith.constant dense<0.000000e+00> : vector<4x32xf32>
    %184 = tpu.matmul %174, %183, %cst_63 {dimension_numbers = #tpu.dot_dimension_numbers<[1], [0], [0], [1], [0, 0, 1, 1], [], []>} : vector<4x20xbf16>, vector<20x32xbf16>, vector<4x32xf32> -> vector<4x32xf32>
    %185 = vector.broadcast %176 : vector<4x1xf32> to vector<4x32xf32>
    %186 = arith.addf %184, %185 : vector<4x32xf32>
    %187 = vector.extract_strided_slice %135 {offsets = [0, 12], sizes = [4, 32], strides = [1, 1]} : vector<4x56xf32> to vector<4x32xf32>
    %188 = arith.addf %186, %187 : vector<4x32xf32>
    %c0_i32_64 = arith.constant 0 : i32
    %189 = arith.addi %0, %c0_i32_64 : i32
    %190 = tpu.iota {dimensions = array<i32: 1>} : vector<1x32xi32>
    %191 = vector.broadcast %189 : i32 to vector<1x32xi32>
    %192 = arith.addi %191, %190 : vector<1x32xi32>
    %c0_i32_65 = arith.constant 0 : i32
    %193 = vector.broadcast %c0_i32_65 : i32 to vector<1x32xi32>
    %194 = arith.cmpi sge, %192, %193 : vector<1x32xi32>
    %c32_i32_66 = arith.constant 32 : i32
    %195 = vector.broadcast %c32_i32_66 : i32 to vector<1x32xi32>
    %196 = arith.cmpi slt, %192, %195 : vector<1x32xi32>
    %197 = arith.andi %194, %196 : vector<1x32xi1>
    %cst_67 = arith.constant 0.000000e+00 : f32
    %198 = vector.shape_cast %197 : vector<1x32xi1> to vector<1x32xi1>
    %199 = vector.broadcast %198 : vector<1x32xi1> to vector<4x32xi1>
    %200 = vector.broadcast %cst_67 : f32 to vector<4x32xf32>
    %201 = arith.select %199, %188, %200 : vector<4x32xi1>, vector<4x32xf32>
    %c0_68 = arith.constant 0 : index
    %c0_69 = arith.constant 0 : index
    %c0_70 = arith.constant 0 : index
    %202 = vector.load %arg5[%c0_68, %c0_69, %c0_70] : memref<1x4x32xbf16, #tpu.memory_space<vmem>>, vector<1x4x32xbf16>
    %203 = vector.shape_cast %202 : vector<1x4x32xbf16> to vector<4x32xbf16>
    %204 = arith.extf %203 : vector<4x32xbf16> to vector<4x32xf32>
    %205 = arith.addf %201, %204 : vector<4x32xf32>
    %cst_71 = arith.constant 5.000000e-01 : f32
    %206 = vector.broadcast %cst_71 : f32 to vector<4x32xf32>
    %207 = arith.mulf %205, %206 : vector<4x32xf32>
    %208 = arith.truncf %207 : vector<4x32xf32> to vector<4x32xbf16>
    %c0_72 = arith.constant 0 : index
    %c0_73 = arith.constant 0 : index
    %c0_74 = arith.constant 0 : index
    %209 = vector.load %arg6[%c0_72, %c0_73, %c0_74] : memref<1x4x32xbf16, #tpu.memory_space<vmem>>, vector<1x4x32xbf16>
    %210 = vector.shape_cast %209 : vector<1x4x32xbf16> to vector<4x32xbf16>
    %211 = vector.shape_cast %208 : vector<4x32xbf16> to vector<1x4x32xbf16>
    tpu.vector_store %arg6[%c0_72, %c0_73, %c0_74], %211 {strides = array<i32>} : memref<1x4x32xbf16, #tpu.memory_space<vmem>>, vector<1x4x32xbf16>,
    return
  }
  func.func @transform_0(%arg0: i32, %arg1: i32) -> (i32, i32, i32) {
    %c0_i32 = arith.constant 0 : i32
    %c0_i32_0 = arith.constant 0 : i32
    return %arg0, %c0_i32, %arg1 : i32, i32, i32
  }
  func.func @transform_1(%arg0: i32, %arg1: i32) -> (i32, i32, i32) {
    %c0_i32 = arith.constant 0 : i32
    %c0_i32_0 = arith.constant 0 : i32
    %c0_i32_1 = arith.constant 0 : i32
    %c0_i32_2 = arith.constant 0 : i32
    return %c0_i32, %c0_i32_0, %c0_i32_1 : i32, i32, i32
  }
  func.func @transform_2(%arg0: i32, %arg1: i32) -> (i32, i32, i32) {
    %c0_i32 = arith.constant 0 : i32
    %c0_i32_0 = arith.constant 0 : i32
    %c0_i32_1 = arith.constant 0 : i32
    %c0_i32_2 = arith.constant 0 : i32
    return %c0_i32, %c0_i32_0, %c0_i32_1 : i32, i32, i32
  }
  func.func @transform_3(%arg0: i32, %arg1: i32) -> (i32, i32, i32) {
    %c0_i32 = arith.constant 0 : i32
    %c0_i32_0 = arith.constant 0 : i32
    return %arg0, %c0_i32, %arg1 : i32, i32, i32
  }
  func.func @transform_4(%arg0: i32, %arg1: i32) -> (i32, i32, i32) {
    %c0_i32 = arith.constant 0 : i32
    %c0_i32_0 = arith.constant 0 : i32
    return %arg0, %c0_i32, %arg1 : i32, i32, i32
  }
}

module attributes {stable_mosaic.version = 11 : i64} {
  func.func @kernel(%arg0: i32, %arg1: i32, %arg2: memref<1x4x38xbf16, #tpu.memory_space<vmem>>, %arg3: memref<1x28xbf16, #tpu.memory_space<vmem>>, %arg4: memref<1x1xf32, #tpu.memory_space<vmem>>, %arg5: memref<1x1x32xf32, #tpu.memory_space<vmem>>) attributes {dimension_semantics = [#tpu.dimension_semantics<parallel>, #tpu.dimension_semantics<parallel>], iteration_bounds = array<i64: 2, 1>, scalar_prefetch = 0 : i64, scratch_operands = 0 : i64, tpu.core_type = #tpu.core_type<tc>, window_params = [{transform_indices = @transform_0, window_bounds = array<i64: 1, 4, 38>}, {pipeline_mode = #tpu.pipeline_mode<synchronous>, transform_indices = @transform_1, window_bounds = array<i64: 1, 28>}, {pipeline_mode = #tpu.pipeline_mode<synchronous>, transform_indices = @transform_2, window_bounds = array<i64: 1, 1>}, {transform_indices = @transform_3, window_bounds = array<i64: 1, 1, 32>}]} {
    %c0 = arith.constant 0 : index
    %c0_0 = arith.constant 0 : index
    %c0_1 = arith.constant 0 : index
    %0 = vector.load %arg2[%c0, %c0_0, %c0_1] : memref<1x4x38xbf16, #tpu.memory_space<vmem>>, vector<1x4x38xbf16>
    %1 = vector.shape_cast %0 : vector<1x4x38xbf16> to vector<4x38xbf16>
    %2 = arith.extf %1 : vector<4x38xbf16> to vector<4x38xf32>
    %cst = arith.constant 0.000000e+00 : f32
    %3 = vector.broadcast %cst : f32 to vector<4x38xf32>
    %4 = arith.cmpf oge, %2, %3 : vector<4x38xf32>
    %cst_2 = arith.constant 0.00999999977 : f32
    %5 = vector.broadcast %cst_2 : f32 to vector<4x38xf32>
    %6 = arith.mulf %5, %2 : vector<4x38xf32>
    %7 = arith.select %4, %2, %6 : vector<4x38xi1>, vector<4x38xf32>
    %c0_3 = arith.constant 0 : index
    %c0_4 = arith.constant 0 : index
    %8 = vector.load %arg3[%c0_3, %c0_4] : memref<1x28xbf16, #tpu.memory_space<vmem>>, vector<1x28xbf16>
    %c0_5 = arith.constant 0 : index
    %c0_6 = arith.constant 0 : index
    %9 = vector.load %arg4[%c0_5, %c0_6] : memref<1x1xf32, #tpu.memory_space<vmem>>, vector<1x1xf32>
    %10 = arith.truncf %7 : vector<4x38xf32> to vector<4x38xbf16>
    %11 = vector.extract_strided_slice %10 {offsets = [0, 0], sizes = [4, 32], strides = [1, 1]} : vector<4x38xbf16> to vector<4x32xbf16>
    %12 = vector.extract_strided_slice %10 {offsets = [0, 1], sizes = [4, 32], strides = [1, 1]} : vector<4x38xbf16> to vector<4x32xbf16>
    %13 = vector.extract_strided_slice %10 {offsets = [0, 2], sizes = [4, 32], strides = [1, 1]} : vector<4x38xbf16> to vector<4x32xbf16>
    %14 = vector.extract_strided_slice %10 {offsets = [0, 3], sizes = [4, 32], strides = [1, 1]} : vector<4x38xbf16> to vector<4x32xbf16>
    %15 = vector.extract_strided_slice %10 {offsets = [0, 4], sizes = [4, 32], strides = [1, 1]} : vector<4x38xbf16> to vector<4x32xbf16>
    %16 = vector.extract_strided_slice %10 {offsets = [0, 5], sizes = [4, 32], strides = [1, 1]} : vector<4x38xbf16> to vector<4x32xbf16>
    %17 = vector.extract_strided_slice %10 {offsets = [0, 6], sizes = [4, 32], strides = [1, 1]} : vector<4x38xbf16> to vector<4x32xbf16>
    %18 = tpu.concatenate %11, %12, %13, %14, %15, %16, %17 in 0 : vector<4x32xbf16>, vector<4x32xbf16>, vector<4x32xbf16>, vector<4x32xbf16>, vector<4x32xbf16>, vector<4x32xbf16>, vector<4x32xbf16> -> vector<28x32xbf16>
    %cst_7 = arith.constant dense<0.000000e+00> : vector<1x32xf32>
    %19 = tpu.matmul %8, %18, %cst_7 {dimension_numbers = #tpu.dot_dimension_numbers<[1], [0], [0], [1], [0, 0, 1, 1], [], []>} : vector<1x28xbf16>, vector<28x32xbf16>, vector<1x32xf32> -> vector<1x32xf32>
    %20 = vector.broadcast %9 : vector<1x1xf32> to vector<1x32xf32>
    %21 = arith.addf %19, %20 : vector<1x32xf32>
    %22 = math.tanh %21 : vector<1x32xf32>
    %c0_8 = arith.constant 0 : index
    %c0_9 = arith.constant 0 : index
    %c0_10 = arith.constant 0 : index
    %23 = vector.load %arg5[%c0_8, %c0_9, %c0_10] : memref<1x1x32xf32, #tpu.memory_space<vmem>>, vector<1x1x32xf32>
    %24 = vector.shape_cast %23 : vector<1x1x32xf32> to vector<1x32xf32>
    %25 = vector.shape_cast %22 : vector<1x32xf32> to vector<1x1x32xf32>
    tpu.vector_store %arg5[%c0_8, %c0_9, %c0_10], %25 {strides = array<i32>} : memref<1x1x32xf32, #tpu.memory_space<vmem>>, vector<1x1x32xf32>,
    return
  }
  func.func @transform_0(%arg0: i32, %arg1: i32) -> (i32, i32, i32) {
    %c0_i32 = arith.constant 0 : i32
    %c0_i32_0 = arith.constant 0 : i32
    return %arg0, %c0_i32, %arg1 : i32, i32, i32
  }
  func.func @transform_1(%arg0: i32, %arg1: i32) -> (i32, i32) {
    %c0_i32 = arith.constant 0 : i32
    %c0_i32_0 = arith.constant 0 : i32
    %c0_i32_1 = arith.constant 0 : i32
    return %c0_i32, %c0_i32_0 : i32, i32
  }
  func.func @transform_2(%arg0: i32, %arg1: i32) -> (i32, i32) {
    %c0_i32 = arith.constant 0 : i32
    %c0_i32_0 = arith.constant 0 : i32
    %c0_i32_1 = arith.constant 0 : i32
    return %c0_i32, %c0_i32_0 : i32, i32
  }
  func.func @transform_3(%arg0: i32, %arg1: i32) -> (i32, i32, i32) {
    %c0_i32 = arith.constant 0 : i32
    %c0_i32_0 = arith.constant 0 : i32
    return %arg0, %c0_i32, %arg1 : i32, i32, i32
  }
}

</mosaic_0001>

<llo_original>
// kernel: generator_forward.12
$region0: #{generator_forward.12}
  #allocation0 [shape = 'u32[]', space=smem, size = 0x4, offset = 0x4, fixed_abs, tag = 'smem constant byte address 0x4 - core index']
  #allocation1 [shape = 'u32[72,128]{1,0:T(1,128)}', space=vmem, size = 0x9000, scoped, tag = 'internal scratch']
  %s0 = inlined_call_operand.vmem [shape: f32[22], index: 0, kind: input, shape index: {}]
  %s1 = inlined_call_operand.vmem [shape: f32[2,1,32], index: 1, kind: input, shape index: {}]
  %s2 = inlined_call_operand.vmem [shape: bf16[2,1,32], index: 2, kind: input, shape index: {}]
  %s3 = inlined_call_operand.vmem [shape: bf16[2,1,32], index: 3, kind: input, shape index: {}]
  %s4 = inlined_call_operand.vmem [shape: bf16[2,1,32], index: 4, kind: output, shape index: {}]
  %s5 = sld [smem:[#allocation0]]
  $region53: #{generator_forward.12} parent=0
    _
  %s7 = ssub.s32 1, %s5
  %s8 = scalar_select 0, %s7, %s5
  $region1: #{generator_forward.12} parent=0
    #allocation2 [shape = 'u8[512]{0}', space=smem, size = 0x200, scoped, tag = 'input window, operand 0, single buffered']
    #allocation3 [shape = 's32[2]{0}', space=sflag, size = 0x8, scoped, tag = 'scoped memory for generator_forward.12']
    %9 = vsyncpa [#allocation3], 0
    loop: start=0, step=1, limit=4
    $region2: #{generator_forward.12} parent=1 // loop_pre_header
      _
    $region3: #{generator_forward.12} parent=1 // loop_header
      %s11 = sphi 0, %s15
      %p12 = scmp.ge.s32.totalorder %s11, 4
      %s18 = sphi 0, %s30
      %s19 = sphi 0, %s26
      %s20 = sphi 0, %s18
      %s21 = sphi 0, %s19
      %s22 = sphi 0, %s20
      %s23 = sphi 0, %s21
      %s31 = sphi 0, %s31
      %s33 = sphi 0, %s31
      %s34 = sphi 0, %s33
      %s48 = sphi 0, %s34
      %s56 = sphi 0, %s58
      %s59 = sphi 0, %s56
      %s60 = sphi 0, %s59
      %s76 = sphi 0, %s60
      %s84 = sphi 0, %s86
      %s87 = sphi 0, %s84
      %s88 = sphi 0, %s87
      %s104 = sphi 0, %s88
      %s112 = sphi 0, %s114
      %s115 = sphi 0, %s112
      %s116 = sphi 0, %s115
      %s132 = sphi 0, %s116
      %s140 = sphi 0, %s142
      %s143 = sphi 0, %s140
      %s144 = sphi 0, %s143
      %s160 = sphi 0, %s144
    $region4: #{generator_forward.12} parent=1 // loop_header_branch
      %14 = sbr.rel (%p12) target = $region8
    $region5: #{generator_forward.12} parent=1 // loop_body
      %s16 = ssub.s32 %s11, 1
      %s17 = ssub.s32 %s11, 2
      %s24 = sadd.s32 1, %s19
      %p25 = scmp.ge.s32.totalorder %s24, 1
      %s26 = scalar_select %p25, 0, %s24
      %s27 = sadd.s32 1, %s18
      %s28 = scalar_select %p25, %s27, %s18
      %p29 = scmp.ge.s32.totalorder %s28, 2
      %s30 = scalar_select %p29, 0, %s28
      %s32 = sadd.s32 %s31, 1
      %p35 = scmp.eq.s32.totalorder %s11, 1
      %p36 = scmp.ne.s32.totalorder %s31, %s33
      %p37 = scmp.eq.s32.totalorder %s11, 0
      %p38 = por %p36, %p37
      %p39 = scmp.ne.s32.totalorder %s31, %s33
      %p40 = scmp.eq.s32.totalorder %s16, 1
      %p41 = por %p39, %p40
      %p42 = scmp.ne.s32.totalorder %s33, %s34
      %p43 = scmp.eq.s32.totalorder %s16, 0
      %p44 = por %p42, %p43
      %p45 = scmp.ne.s32.totalorder %s33, %s34
      %p46 = scmp.eq.s32.totalorder %s17, 1
      %p47 = por %p45, %p46
      %p49 = scmp.ne.s32.totalorder %s34, %s48
      %p50 = scmp.eq.s32.totalorder %s17, 0
      %p51 = por %p49, %p50
      %s52 = ssub.s32 %s18, %s30
      %s53 = ssub.s32 %s19, %s26
      %s54 = sor.u32 %s52, %s53
      %p55 = scmp.eq.s32.totalorder %s54, 0
      %s57 = sadd.s32 %s56, 1
      %s58 = scalar_select %p55, %s56, %s57
      %p61 = pneg %p55
      %p62 = scmp.eq.s32.totalorder %s11, 1
      %p63 = por %p61, %p62
      %p64 = scmp.ne.s32.totalorder %s56, %s59
      %p65 = scmp.eq.s32.totalorder %s11, 0
      %p66 = por %p64, %p65
      %p67 = scmp.ne.s32.totalorder %s56, %s59
      %p68 = scmp.eq.s32.totalorder %s16, 1
      %p69 = por %p67, %p68
      %p70 = scmp.ne.s32.totalorder %s59, %s60
      %p71 = scmp.eq.s32.totalorder %s16, 0
      %p72 = por %p70, %p71
      %p73 = scmp.ne.s32.totalorder %s59, %s60
      %p74 = scmp.eq.s32.totalorder %s17, 1
      %p75 = por %p73, %p74
      %p77 = scmp.ne.s32.totalorder %s60, %s76
      %p78 = scmp.eq.s32.totalorder %s17, 0
      %p79 = por %p77, %p78
      %s80 = ssub.s32 %s18, %s30
      %s81 = ssub.s32 %s19, %s26
      %s82 = sor.u32 %s80, %s81
      %p83 = scmp.eq.s32.totalorder %s82, 0
      %s85 = sadd.s32 %s84, 1
      %s86 = scalar_select %p83, %s84, %s85
      %p89 = pneg %p83
      %p90 = scmp.eq.s32.totalorder %s11, 1
      %p91 = por %p89, %p90
      %p92 = scmp.ne.s32.totalorder %s84, %s87
      %p93 = scmp.eq.s32.totalorder %s11, 0
      %p94 = por %p92, %p93
      %p95 = scmp.ne.s32.totalorder %s84, %s87
      %p96 = scmp.eq.s32.totalorder %s16, 1
      %p97 = por %p95, %p96
      %p98 = scmp.ne.s32.totalorder %s87, %s88
      %p99 = scmp.eq.s32.totalorder %s16, 0
      %p100 = por %p98, %p99
      %p101 = scmp.ne.s32.totalorder %s87, %s88
      %p102 = scmp.eq.s32.totalorder %s17, 1
      %p103 = por %p101, %p102
      %p105 = scmp.ne.s32.totalorder %s88, %s104
      %p106 = scmp.eq.s32.totalorder %s17, 0
      %p107 = por %p105, %p106
      %s108 = ssub.s32 %s18, %s30
      %s109 = ssub.s32 %s19, %s26
      %s110 = sor.u32 %s108, %s109
      %p111 = scmp.eq.s32.totalorder %s110, 0
      %s113 = sadd.s32 %s112, 1
      %s114 = scalar_select %p111, %s112, %s113
      %p117 = pneg %p111
      %p118 = scmp.eq.s32.totalorder %s11, 1
      %p119 = por %p117, %p118
      %p120 = scmp.ne.s32.totalorder %s112, %s115
      %p121 = scmp.eq.s32.totalorder %s11, 0
      %p122 = por %p120, %p121
      %p123 = scmp.ne.s32.totalorder %s112, %s115
      %p124 = scmp.eq.s32.totalorder %s16, 1
      %p125 = por %p123, %p124
      %p126 = scmp.ne.s32.totalorder %s115, %s116
      %p127 = scmp.eq.s32.totalorder %s16, 0
      %p128 = por %p126, %p127
      %p129 = scmp.ne.s32.totalorder %s115, %s116
      %p130 = scmp.eq.s32.totalorder %s17, 1
      %p131 = por %p129, %p130
      %p133 = scmp.ne.s32.totalorder %s116, %s132
      %p134 = scmp.eq.s32.totalorder %s17, 0
      %p135 = por %p133, %p134
      %s136 = ssub.s32 %s18, %s30
      %s137 = ssub.s32 %s19, %s26
      %s138 = sor.u32 %s136, %s137
      %p139 = scmp.eq.s32.totalorder %s138, 0
      %s141 = sadd.s32 %s140, 1
      %s142 = scalar_select %p139, %s140, %s141
      %p145 = pneg %p139
      %p146 = scmp.eq.s32.totalorder %s11, 1
      %p147 = por %p145, %p146
      %p148 = scmp.ne.s32.totalorder %s140, %s143
      %p149 = scmp.eq.s32.totalorder %s11, 0
      %p150 = por %p148, %p149
      %p151 = scmp.ne.s32.totalorder %s140, %s143
      %p152 = scmp.eq.s32.totalorder %s16, 1
      %p153 = por %p151, %p152
      %p154 = scmp.ne.s32.totalorder %s143, %s144
      %p155 = scmp.eq.s32.totalorder %s16, 0
      %p156 = por %p154, %p155
      %p157 = scmp.ne.s32.totalorder %s143, %s144
      %p158 = scmp.eq.s32.totalorder %s17, 1
      %p159 = por %p157, %p158
      %p161 = scmp.ne.s32.totalorder %s144, %s160
      %p162 = scmp.eq.s32.totalorder %s17, 0
      %p163 = por %p161, %p162
      %p164 = scmp.le.s32.totalorder 1, %s11
      %p165 = scmp.lt.s32.totalorder %s11, 3
      %p166 = pnand %p164, %p165
      %p167 = pneg %p166
      // Predicated region
      $region9: #{generator_forward.12} parent=5 // pred_check
        _
      $region10: #{generator_forward.12} parent=5 // pred_check_branch
        %169 = sbr.rel (%p166) target = $region12
      $region11: #{generator_forward.12} parent=5 // pred_region
        %s170 = ssub.s32 %s11, 1
        // Predicated region
        $region13: #{generator_forward.12} parent=11 // pred_check
          %p171 = pneg %p44
        $region14: #{generator_forward.12} parent=11 // pred_check_branch
          %173 = sbr.rel (%p171) target = $region16
        $region15: #{generator_forward.12} parent=11 // pred_region
          %175 = vsyncadd [#allocation3], 0
          %s177 = sshll.u32 %s0, 4
          %s178 = int_to_ptr.vmem [resolvable:$true] %s177
          %180 = dma.vmem_to_smem %s178, 16, [#allocation2], [#allocation3]
        $region16: #{generator_forward.12} parent=11 // pred_fallthru
          _
      $region12: #{generator_forward.12} parent=5 // pred_fallthru
        _
      %p181 = scmp.lt.s32.totalorder %s11, 2
      // Predicated region
      $region17: #{generator_forward.12} parent=5 // pred_check
        %p182 = pneg %p181
      $region18: #{generator_forward.12} parent=5 // pred_check_branch
        %184 = sbr.rel (%p182) target = $region20
      $region19: #{generator_forward.12} parent=5 // pred_region
        // Predicated region
        $region21: #{generator_forward.12} parent=19 // pred_check
          %p185 = pneg %p66
        $region22: #{generator_forward.12} parent=19 // pred_check_branch
          %187 = sbr.rel (%p185) target = $region24
        $region23: #{generator_forward.12} parent=19 // pred_region
          %p188 = scmp.lt.s32.totalorder %s18, 1
          %s189 = scalar_select %p188, %s18, 1
          %p190 = scmp.lt.s32.totalorder %s19, 0
          %s191 = scalar_select %p190, %s19, 0
          %s192 = sadd.s32 %s191, %s189
          %s193 = scalar_lea.vmem %s1, %s192
        $region24: #{generator_forward.12} parent=19 // pred_fallthru
          _
        // Predicated region
        $region25: #{generator_forward.12} parent=19 // pred_check
          %p194 = pneg %p94
        $region26: #{generator_forward.12} parent=19 // pred_check_branch
          %196 = sbr.rel (%p194) target = $region28
        $region27: #{generator_forward.12} parent=19 // pred_region
          %p197 = scmp.lt.s32.totalorder %s18, 1
          %s198 = scalar_select %p197, %s18, 1
          %p199 = scmp.lt.s32.totalorder %s19, 0
          %s200 = scalar_select %p199, %s19, 0
          %s201 = sadd.s32 %s200, %s198
          %s202 = scalar_lea.vmem %s2, %s201
        $region28: #{generator_forward.12} parent=19 // pred_fallthru
          _
        // Predicated region
        $region29: #{generator_forward.12} parent=19 // pred_check
          %p203 = pneg %p122
        $region30: #{generator_forward.12} parent=19 // pred_check_branch
          %205 = sbr.rel (%p203) target = $region32
        $region31: #{generator_forward.12} parent=19 // pred_region
          %p206 = scmp.lt.s32.totalorder %s18, 1
          %s207 = scalar_select %p206, %s18, 1
          %p208 = scmp.lt.s32.totalorder %s19, 0
          %s209 = scalar_select %p208, %s19, 0
          %s210 = sadd.s32 %s209, %s207
          %s211 = scalar_lea.vmem %s3, %s210
        $region32: #{generator_forward.12} parent=19 // pred_fallthru
          _
      $region20: #{generator_forward.12} parent=5 // pred_fallthru
        _
      %p212 = scmp.le.s32.totalorder 1, %s11
      %p213 = scmp.lt.s32.totalorder %s11, 3
      %p214 = pnand %p212, %p213
      %p215 = pneg %p214
      // Predicated region
      $region33: #{generator_forward.12} parent=5 // pred_check
        _
      $region34: #{generator_forward.12} parent=5 // pred_check_branch
        %217 = sbr.rel (%p214) target = $region36
      $region35: #{generator_forward.12} parent=5 // pred_region
        %s218 = ssub.s32 %s11, 1
        // Predicated region
        $region37: #{generator_forward.12} parent=35 // pred_check
          %p219 = pneg %p44
        $region38: #{generator_forward.12} parent=35 // pred_check_branch
          %221 = sbr.rel (%p219) target = $region40
        $region39: #{generator_forward.12} parent=35 // pred_region
          %223 = dma.done [#allocation3], 16
        $region40: #{generator_forward.12} parent=35 // pred_fallthru
          _
        %224 = sfence
        %p225 = pneg %p44
        %p226 = pneg %p41
        %p227 = scmp.lt.s32.totalorder %s20, 1
        %s228 = scalar_select %p227, %s20, 1
        %p229 = scmp.lt.s32.totalorder %s21, 0
        %s230 = scalar_select %p229, %s21, 0
        %s231 = sadd.s32 %s230, %s228
        %s232 = scalar_lea.vmem %s1, %s231
        %p233 = pneg %p72
        %p234 = pneg %p69
        %p235 = scmp.lt.s32.totalorder %s20, 1
        %s236 = scalar_select %p235, %s20, 1
        %p237 = scmp.lt.s32.totalorder %s21, 0
        %s238 = scalar_select %p237, %s21, 0
        %s239 = sadd.s32 %s238, %s236
        %s240 = scalar_lea.vmem %s2, %s239
        %p241 = pneg %p100
        %p242 = pneg %p97
        %p243 = scmp.lt.s32.totalorder %s20, 1
        %s244 = scalar_select %p243, %s20, 1
        %p245 = scmp.lt.s32.totalorder %s21, 0
        %s246 = scalar_select %p245, %s21, 0
        %s247 = sadd.s32 %s246, %s244
        %s248 = scalar_lea.vmem %s3, %s247
        %p249 = pneg %p128
        %p250 = pneg %p125
        %p251 = pneg %p156
        %p252 = pneg %p153
        %p253 = scmp.lt.s32.totalorder %s20, 1
        %s254 = scalar_select %p253, %s20, 1
        %p255 = scmp.lt.s32.totalorder %s21, 0
        %s256 = scalar_select %p255, %s21, 0
        %s257 = sadd.s32 %s256, %s254
        %s258 = scalar_lea.vmem %s4, %s257
        %p259 = scmp.lt.s32.totalorder %s20, 1
        %s260 = scalar_select %p259, %s20, 1
        %p261 = scmp.lt.s32.totalorder %s21, 0
        %s262 = scalar_select %p261, %s21, 0
        %s263 = sadd.s32 %s262, %s260
        %s264 = scalar_lea.vmem %s1, %s263
        %p265 = scmp.lt.s32.totalorder %s20, 1
        %s266 = scalar_select %p265, %s20, 1
        %p267 = scmp.lt.s32.totalorder %s21, 0
        %s268 = scalar_select %p267, %s21, 0
        %s269 = sadd.s32 %s268, %s266
        %s270 = scalar_lea.vmem %s2, %s269
        %p271 = scmp.lt.s32.totalorder %s20, 1
        %s272 = scalar_select %p271, %s20, 1
        %p273 = scmp.lt.s32.totalorder %s21, 0
        %s274 = scalar_select %p273, %s21, 0
        %s275 = sadd.s32 %s274, %s272
        %s276 = scalar_lea.vmem %s3, %s275
        %p277 = scmp.lt.s32.totalorder %s20, 1
        %s278 = scalar_select %p277, %s20, 1
        %p279 = scmp.lt.s32.totalorder %s21, 0
        %s280 = scalar_select %p279, %s21, 0
        %s281 = sadd.s32 %s280, %s278
        %s282 = scalar_lea.vmem %s4, %s281
        %v283 = vld [vmem:[%s264] sm:$0x1]
        %v284 = vmul.f32 %v283, 6.2831855
        %v285 = vand.u32 2147483647, %v284
        %vm286 = vcmp.le.f32.partialorder %v285, 0.7853982
        %vm287 = vcmp.lt.s32.totalorder %v284, 0
        %v288 = vand.u32 %v284, 2139095040
        %v289 = vshrl.u32 %v288, 23
        %v290 = vsub.s32 %v289, 127
        %v291 = vand.u32 2147483647, %v284
        %v292 = vand.u32 %v291, 8388607
        %v293 = vor.u32 %v292, 8388608
        %v294 = vsub.s32 0, %v293
        %v295 = vadd.s32 %v290, 1
        %vm296 = vcmp.gt.s32.totalorder %v295, 0
        %v297 = vsel %vm296, %v295, 0
        %v298 = vshrl.u32 %v297, 5
        %v299 = vand.u32 %v297, 31
        %v300 = vsub.s32 32, %v299
        %v301 = vshrl.u32 683565275, %v300
        %v302 = vshll.u32 683565275, %v299
        %v303 = vshrl.u32 2475754826, %v300
        %v304 = vor.u32 %v302, %v303
        %v305 = vshll.u32 2475754826, %v299
        %v306 = vshrl.u32 2131351028, %v300
        %v307 = vor.u32 %v305, %v306
        %v308 = vshll.u32 2131351028, %v299
        %v309 = vshrl.u32 2102212464, %v300
        %v310 = vor.u32 %v308, %v309
        %v311 = vshll.u32 2102212464, %v299
        %v312 = vshrl.u32 920167782, %v300
        %v313 = vor.u32 %v311, %v312
        %v314 = vshll.u32 920167782, %v299
        %v315 = vshrl.u32 1326507024, %v300
        %v316 = vor.u32 %v314, %v315
        %vm317 = vcmp.lt.s32.totalorder %v298, 1
        %vm318 = vcmp.lt.s32.totalorder %v298, 2
        %vm319 = vcmp.lt.s32.totalorder %v298, 3
        %vm320 = vcmp.lt.s32.totalorder %v298, 4
        %v321 = vsel %vm317, %v301, %v304
        %v322 = vsel %vm320, %v310, 2102212464
        %v323 = vsel %vm319, %v307, %v322
        %v324 = vsel %vm318, %v321, %v323
        %v325 = vsel %vm317, %v304, %v307
        %v326 = vsel %vm320, %v313, 920167782
        %v327 = vsel %vm319, %v310, %v326
        %v328 = vsel %vm318, %v325, %v327
        %v329 = vsel %vm317, %v307, %v310
        %v330 = vsel %vm320, %v316, 1326507024
        %v331 = vsel %vm319, %v313, %v330
        %v332 = vsel %vm318, %v329, %v331
        %v333 = vshll.u32 %v293, 8
        %v334 = vand.u32 %v333, 65535
        %v335 = vshrl.u32 %v333, 16
        %v336 = vand.u32 %v332, 65535
        %v337 = vshrl.u32 %v332, 16
        %v338 = vmul.u32 %v334, %v336
        %v339 = vmul.u32 %v334, %v337
        %v340 = vmul.u32 %v335, %v336
        %v341 = vmul.u32 %v335, %v337
        %v342 = vshll.u32 %v339, 16
        %v343 = vshrl.u32 %v339, 16
        %v344 = vshll.u32 %v340, 16
        %v345 = vshrl.u32 %v340, 16
        %vm346 = vc.u32 %v338, %v342
        %v347 = vsel %vm346, 1, 0
        %v348 = vadd.s32 %v338, %v342
        %v349 = vadd.s32 %v341, %v347
        %vm350 = vc.u32 %v348, %v344
        %v351 = vsel %vm350, 1, 0
        %v352 = vadd.s32 %v348, %v344
        %v353 = vadd.s32 %v349, %v351
        %v354 = vadd.s32 %v353, %v343
        %v355 = vadd.s32 %v354, %v345
        %v356 = vand.u32 %v333, 65535
        %v357 = vshrl.u32 %v333, 16
        %v358 = vand.u32 %v328, 65535
        %v359 = vshrl.u32 %v328, 16
        %v360 = vmul.u32 %v356, %v358
        %v361 = vmul.u32 %v356, %v359
        %v362 = vmul.u32 %v357, %v358
        %v363 = vmul.u32 %v357, %v359
        %v364 = vshll.u32 %v361, 16
        %v365 = vshrl.u32 %v361, 16
        %v366 = vshll.u32 %v362, 16
        %v367 = vshrl.u32 %v362, 16
        %vm368 = vc.u32 %v360, %v364
        %v369 = vsel %vm368, 1, 0
        %v370 = vadd.s32 %v360, %v364
        %v371 = vadd.s32 %v363, %v369
        %vm372 = vc.u32 %v370, %v366
        %v373 = vsel %vm372, 1, 0
        %v374 = vadd.s32 %v370, %v366
        %v375 = vadd.s32 %v371, %v373
        %v376 = vadd.s32 %v375, %v365
        %v377 = vadd.s32 %v376, %v367
        %v378 = vmul.u32 %v333, %v324
        %v379 = vadd.s32 %v355, %v374
        %vm380 = vc.u32 %v355, %v374
        %v381 = vadd.s32 %v377, 1
        %v382 = vsel %vm380, %v381, %v377
        %v383 = vadd.s32 %v378, %v382
        %v384 = vadd.s32 %v383, 536870912
        %v385 = vshrl.u32 %v384, 30
        %v386 = vshll.u32 %v385, 30
        %v387 = vsub.s32 %v383, %v386
        %vm388 = vcmp.lt.s32.totalorder %v387, 0
        %v389 = vsub.s32 0, %v387
        %v390 = vsel %vm388, %v389, %v387
        %v391 = vclz %v390
        %v392 = vsub.s32 %v391, 2
        %vm393 = vcmp.gt.s32.totalorder 0, %v392
        %v394 = vsel %vm393, 0, %v392
        %v395 = vsub.s32 32, %v394
        %v396 = vshll.u32 %v387, %v394
        %v397 = vshrl.u32 %v379, %v395
        %v398 = vor.u32 %v396, %v397
        %v399 = vsub.s32 4294967266, %v394
        %v400 = vadd.s32 %v399, 127
        %v401 = vshll.u32 %v400, 23
        %v402 = vor.u32 4788187, %v401
        %v403 = vand.u32 2147483647, %v402
        %v405 = vcvt.s32.f32 %v398
        %v406 = vmul.f32 %v405, %v403
        %v407 = vxor.u32 %v406, 2147483648
        %v408 = vsel %vm287, %v407, %v406
        %v409 = vsub.s32 4, %v385
        %v410 = vsel %vm287, %v409, %v385
        %v411 = vsel %vm286, %v284, %v408
        %v412 = vsel %vm286, 0, %v410
        %v413 = vmul.f32 %v411, %v411
        %v414 = vmul.f32 %v413, -0.001358992
        %v415 = vadd.f32 %v414, 0.041655596
        %v416 = vmul.f32 %v413, %v415
        %v417 = vadd.f32 %v416, -0.4999988
        %v418 = vmul.f32 %v413, %v417
        %v419 = vadd.f32 1.0, %v418
        %v420 = vmul.f32 %v411, %v411
        %v421 = vmul.f32 %v420, -0.00019511016
        %v422 = vadd.f32 %v421, 0.008332121
        %v423 = vmul.f32 %v420, %v422
        %v424 = vadd.f32 %v423, -0.16666654
        %v425 = vmul.f32 %v420, %v424
        %v426 = vadd.f32 %v425, 1.0
        %v427 = vmul.f32 %v426, %v411
        %vm428 = vweird.f32 %v284
        %v429 = vadd.s32 %v412, 3
        %v430 = vand.u32 %v429, 3
        %vm431 = vcmp.lt.s32.totalorder %v430, 2
        %vm432 = vcmp.eq.s32.totalorder %v430, 0
        %v433 = vxor.u32 %v427, 2147483648
        %v434 = vsel %vm432, %v419, %v433
        %vm435 = vcmp.eq.s32.totalorder %v430, 2
        %v436 = vxor.u32 %v419, 2147483648
        %v437 = vsel %vm435, %v436, %v427
        %v438 = vsel %vm431, %v434, %v437
        %v439 = vsel %vm428, nan, %v438
        %v440 = vand.u32 2147483647, %v284
        %vm441 = vcmp.le.f32.partialorder %v440, 0.7853982
        %vm442 = vcmp.lt.s32.totalorder %v284, 0
        %v443 = vand.u32 %v284, 2139095040
        %v444 = vshrl.u32 %v443, 23
        %v445 = vsub.s32 %v444, 127
        %v446 = vand.u32 2147483647, %v284
        %v447 = vand.u32 %v446, 8388607
        %v448 = vor.u32 %v447, 8388608
        %v449 = vsub.s32 0, %v448
        %v450 = vadd.s32 %v445, 1
        %vm451 = vcmp.gt.s32.totalorder %v450, 0
        %v452 = vsel %vm451, %v450, 0
        %v453 = vshrl.u32 %v452, 5
        %v454 = vand.u32 %v452, 31
        %v455 = vsub.s32 32, %v454
        %v456 = vshrl.u32 683565275, %v455
        %v457 = vshll.u32 683565275, %v454
        %v458 = vshrl.u32 2475754826, %v455
        %v459 = vor.u32 %v457, %v458
        %v460 = vshll.u32 2475754826, %v454
        %v461 = vshrl.u32 2131351028, %v455
        %v462 = vor.u32 %v460, %v461
        %v463 = vshll.u32 2131351028, %v454
        %v464 = vshrl.u32 2102212464, %v455
        %v465 = vor.u32 %v463, %v464
        %v466 = vshll.u32 2102212464, %v454
        %v467 = vshrl.u32 920167782, %v455
        %v468 = vor.u32 %v466, %v467
        %v469 = vshll.u32 920167782, %v454
        %v470 = vshrl.u32 1326507024, %v455
        %v471 = vor.u32 %v469, %v470
        %vm472 = vcmp.lt.s32.totalorder %v453, 1
        %vm473 = vcmp.lt.s32.totalorder %v453, 2
        %vm474 = vcmp.lt.s32.totalorder %v453, 3
        %vm475 = vcmp.lt.s32.totalorder %v453, 4
        %v476 = vsel %vm472, %v456, %v459
        %v477 = vsel %vm475, %v465, 2102212464
        %v478 = vsel %vm474, %v462, %v477
        %v479 = vsel %vm473, %v476, %v478
        %v480 = vsel %vm472, %v459, %v462
        %v481 = vsel %vm475, %v468, 920167782
        %v482 = vsel %vm474, %v465, %v481
        %v483 = vsel %vm473, %v480, %v482
        %v484 = vsel %vm472, %v462, %v465
        %v485 = vsel %vm475, %v471, 1326507024
        %v486 = vsel %vm474, %v468, %v485
        %v487 = vsel %vm473, %v484, %v486
        %v488 = vshll.u32 %v448, 8
        %v489 = vand.u32 %v488, 65535
        %v490 = vshrl.u32 %v488, 16
        %v491 = vand.u32 %v487, 65535
        %v492 = vshrl.u32 %v487, 16
        %v493 = vmul.u32 %v489, %v491
        %v494 = vmul.u32 %v489, %v492
        %v495 = vmul.u32 %v490, %v491
        %v496 = vmul.u32 %v490, %v492
        %v497 = vshll.u32 %v494, 16
        %v498 = vshrl.u32 %v494, 16
        %v499 = vshll.u32 %v495, 16
        %v500 = vshrl.u32 %v495, 16
        %vm501 = vc.u32 %v493, %v497
        %v502 = vsel %vm501, 1, 0
        %v503 = vadd.s32 %v493, %v497
        %v504 = vadd.s32 %v496, %v502
        %vm505 = vc.u32 %v503, %v499
        %v506 = vsel %vm505, 1, 0
        %v507 = vadd.s32 %v503, %v499
        %v508 = vadd.s32 %v504, %v506
        %v509 = vadd.s32 %v508, %v498
        %v510 = vadd.s32 %v509, %v500
        %v511 = vand.u32 %v488, 65535
        %v512 = vshrl.u32 %v488, 16
        %v513 = vand.u32 %v483, 65535
        %v514 = vshrl.u32 %v483, 16
        %v515 = vmul.u32 %v511, %v513
        %v516 = vmul.u32 %v511, %v514
        %v517 = vmul.u32 %v512, %v513
        %v518 = vmul.u32 %v512, %v514
        %v519 = vshll.u32 %v516, 16
        %v520 = vshrl.u32 %v516, 16
        %v521 = vshll.u32 %v517, 16
        %v522 = vshrl.u32 %v517, 16
        %vm523 = vc.u32 %v515, %v519
        %v524 = vsel %vm523, 1, 0
        %v525 = vadd.s32 %v515, %v519
        %v526 = vadd.s32 %v518, %v524
        %vm527 = vc.u32 %v525, %v521
        %v528 = vsel %vm527, 1, 0
        %v529 = vadd.s32 %v525, %v521
        %v530 = vadd.s32 %v526, %v528
        %v531 = vadd.s32 %v530, %v520
        %v532 = vadd.s32 %v531, %v522
        %v533 = vmul.u32 %v488, %v479
        %v534 = vadd.s32 %v510, %v529
        %vm535 = vc.u32 %v510, %v529
        %v536 = vadd.s32 %v532, 1
        %v537 = vsel %vm535, %v536, %v532
        %v538 = vadd.s32 %v533, %v537
        %v539 = vadd.s32 %v538, 536870912
        %v540 = vshrl.u32 %v539, 30
        %v541 = vshll.u32 %v540, 30
        %v542 = vsub.s32 %v538, %v541
        %vm543 = vcmp.lt.s32.totalorder %v542, 0
        %v544 = vsub.s32 0, %v542
        %v545 = vsel %vm543, %v544, %v542
        %v546 = vclz %v545
        %v547 = vsub.s32 %v546, 2
        %vm548 = vcmp.gt.s32.totalorder 0, %v547
        %v549 = vsel %vm548, 0, %v547
        %v550 = vsub.s32 32, %v549
        %v551 = vshll.u32 %v542, %v549
        %v552 = vshrl.u32 %v534, %v550
        %v553 = vor.u32 %v551, %v552
        %v554 = vsub.s32 4294967266, %v549
        %v555 = vadd.s32 %v554, 127
        %v556 = vshll.u32 %v555, 23
        %v557 = vor.u32 4788187, %v556
        %v558 = vand.u32 2147483647, %v557
        %v560 = vcvt.s32.f32 %v553
        %v561 = vmul.f32 %v560, %v558
        %v562 = vxor.u32 %v561, 2147483648
        %v563 = vsel %vm442, %v562, %v561
        %v564 = vsub.s32 4, %v540
        %v565 = vsel %vm442, %v564, %v540
        %v566 = vsel %vm441, %v284, %v563
        %v567 = vsel %vm441, 0, %v565
        %v568 = vmul.f32 %v566, %v566
        %v569 = vmul.f32 %v568, -0.001358992
        %v570 = vadd.f32 %v569, 0.041655596
        %v571 = vmul.f32 %v568, %v570
        %v572 = vadd.f32 %v571, -0.4999988
        %v573 = vmul.f32 %v568, %v572
        %v574 = vadd.f32 1.0, %v573
        %v575 = vmul.f32 %v566, %v566
        %v576 = vmul.f32 %v575, -0.00019511016
        %v577 = vadd.f32 %v576, 0.008332121
        %v578 = vmul.f32 %v575, %v577
        %v579 = vadd.f32 %v578, -0.16666654
        %v580 = vmul.f32 %v575, %v579
        %v581 = vadd.f32 %v580, 1.0
        %v582 = vmul.f32 %v581, %v566
        %vm583 = vweird.f32 %v284
        %v584 = vand.u32 %v567, 3
        %vm585 = vcmp.lt.s32.totalorder %v584, 2
        %vm586 = vcmp.eq.s32.totalorder %v584, 0
        %v587 = vxor.u32 %v582, 2147483648
        %v588 = vsel %vm586, %v574, %v587
        %vm589 = vcmp.eq.s32.totalorder %v584, 2
        %v590 = vxor.u32 %v574, 2147483648
        %v591 = vsel %vm589, %v590, %v582
        %v592 = vsel %vm585, %v588, %v591
        %v593 = vsel %vm583, nan, %v592
        %s594 = sld [smem:[#allocation2]]
        %v595 = vstv %s594
        %v596 = vmul.f32 %v595, %v439
        %s597 = sld [smem:[#allocation2 + $0x9]]
        %v598 = vstv %s597
        %v599 = vmul.f32 %v598, %v593
        %v600 = vadd.f32 %v596, %v599
        %v601 = vmul.f32 %v593, 2.0
        %v602 = vmul.f32 %v601, %v439
        %v603 = vmul.f32 %v601, %v593
        %v604 = vsub.f32 %v603, 1.0
        %s605 = sld [smem:[#allocation2 + $0x1]]
        %v606 = vstv %s605
        %v607 = vmul.f32 %v606, %v602
        %v608 = vadd.f32 %v600, %v607
        %s609 = sld [smem:[#allocation2 + $0xa]]
        %v610 = vstv %s609
        %v611 = vmul.f32 %v610, %v604
        %v612 = vadd.f32 %v608, %v611
        %v613 = vmul.f32 %v601, %v602
        %v614 = vsub.f32 %v613, %v439
        %v615 = vmul.f32 %v601, %v604
        %v616 = vsub.f32 %v615, %v593
        %s617 = sld [smem:[#allocation2 + $0x2]]
        %v618 = vstv %s617
        %v619 = vmul.f32 %v618, %v614
        %v620 = vadd.f32 %v612, %v619
        %s621 = sld [smem:[#allocation2 + $0xb]]
        %v622 = vstv %s621
        %v623 = vmul.f32 %v622, %v616
        %v624 = vadd.f32 %v620, %v623
        %v625 = vmul.f32 %v601, %v614
        %v626 = vsub.f32 %v625, %v602
        %v627 = vmul.f32 %v601, %v616
        %v628 = vsub.f32 %v627, %v604
        %s629 = sld [smem:[#allocation2 + $0x3]]
        %v630 = vstv %s629
        %v631 = vmul.f32 %v630, %v626
        %v632 = vadd.f32 %v624, %v631
        %s633 = sld [smem:[#allocation2 + $0xc]]
        %v634 = vstv %s633
        %v635 = vmul.f32 %v634, %v628
        %v636 = vadd.f32 %v632, %v635
        %v637 = vmul.f32 %v601, %v626
        %v638 = vsub.f32 %v637, %v614
        %v639 = vmul.f32 %v601, %v628
        %v640 = vsub.f32 %v639, %v616
        %s641 = sld [smem:[#allocation2 + $0x4]]
        %v642 = vstv %s641
        %v643 = vmul.f32 %v642, %v638
        %v644 = vadd.f32 %v636, %v643
        %s645 = sld [smem:[#allocation2 + $0xd]]
        %v646 = vstv %s645
        %v647 = vmul.f32 %v646, %v640
        %v648 = vadd.f32 %v644, %v647
        %v649 = vmul.f32 %v601, %v638
        %v650 = vsub.f32 %v649, %v626
        %v651 = vmul.f32 %v601, %v640
        %v652 = vsub.f32 %v651, %v628
        %s653 = sld [smem:[#allocation2 + $0x5]]
        %v654 = vstv %s653
        %v655 = vmul.f32 %v654, %v650
        %v656 = vadd.f32 %v648, %v655
        %s657 = sld [smem:[#allocation2 + $0xe]]
        %v658 = vstv %s657
        %v659 = vmul.f32 %v658, %v652
        %v660 = vadd.f32 %v656, %v659
        %v661 = vmul.f32 %v601, %v650
        %v662 = vsub.f32 %v661, %v638
        %v663 = vmul.f32 %v601, %v652
        %v664 = vsub.f32 %v663, %v640
        %s665 = sld [smem:[#allocation2 + $0x6]]
        %v666 = vstv %s665
        %v667 = vmul.f32 %v666, %v662
        %v668 = vadd.f32 %v660, %v667
        %s669 = sld [smem:[#allocation2 + $0xf]]
        %v670 = vstv %s669
        %v671 = vmul.f32 %v670, %v664
        %v672 = vadd.f32 %v668, %v671
        %v673 = vmul.f32 %v601, %v662
        %v674 = vsub.f32 %v673, %v650
        %v675 = vmul.f32 %v601, %v664
        %v676 = vsub.f32 %v675, %v652
        %s677 = sld [smem:[#allocation2 + $0x7]]
        %v678 = vstv %s677
        %v679 = vmul.f32 %v678, %v674
        %v680 = vadd.f32 %v672, %v679
        %s681 = sld [smem:[#allocation2 + $0x10]]
        %v682 = vstv %s681
        %v683 = vmul.f32 %v682, %v676
        %v684 = vadd.f32 %v680, %v683
        %v685 = vmul.f32 %v601, %v674
        %v686 = vsub.f32 %v685, %v662
        %v687 = vmul.f32 %v601, %v676
        %v688 = vsub.f32 %v687, %v664
        %s689 = sld [smem:[#allocation2 + $0x8]]
        %v690 = vstv %s689
        %v691 = vmul.f32 %v690, %v686
        %v692 = vadd.f32 %v684, %v691
        %s693 = sld [smem:[#allocation2 + $0x11]]
        %v694 = vstv %s693
        %v695 = vmul.f32 %v694, %v688
        %v696 = vadd.f32 %v692, %v695
        %v697 = vld [vmem:[%s270] sm:$0x1]
        %v698 = vunpack.c.l.bf16 %v697
        %v699 = vld [vmem:[%s276] sm:$0x1]
        %v700 = vunpack.c.l.bf16 %v699
        %s701 = sld [smem:[#allocation2 + $0x12]]
        %s702 = sld [smem:[#allocation2 + $0x13]]
        %s703 = sld [smem:[#allocation2 + $0x14]]
        %s704 = sld [smem:[#allocation2 + $0x15]]
        %v705 = vstv %s703
        %v706 = vmul.f32 %v698, %v705
        %v707 = vsub.f32 1.0, %v698
        %s708 = smul.f32 %s702, 0.33333334
        %v709 = vstv %s708
        %v710 = vmul.f32 %v707, %v709
        %v711 = vadd.f32 %v706, %v710
        %v712 = vstv %s702
        %v713 = vmul.f32 %v712, %v698
        %v714 = vmul.f32 %v713, %v696
        %v715 = vstv %s704
        %v716 = vmul.f32 %v711, %v715
        %v717 = vmul.f32 %v716, %v700
        %v718 = vadd.f32 %v714, %v717
        %v719 = vstv %s701
        %v720 = vadd.f32 %v718, %v719
        %v721 = vtanh.pop %v720
        %v722 = vpack.c.bf16 %v721, %v721
        %vm723 = vcmask 253952
        %vm724 = vsmask.f32 256
        %vm725 = vmand %vm723, %vm724
        %v726 = vld [vmem:[%s282] sm:$0x1]
        %v727 = vsel %vm725, %v722, %v726
        %728 = vst [vmem:[%s282] sm:$0x1] %v727
        %p729 = scmp.lt.s32.totalorder %s20, 1
        %s730 = scalar_select %p729, %s20, 1
        %p731 = scmp.lt.s32.totalorder %s21, 0
        %s732 = scalar_select %p731, %s21, 0
        %s733 = sadd.s32 %s732, %s730
        %s734 = scalar_lea.vmem %s4, %s733
        // Predicated region
        $region41: #{generator_forward.12} parent=35 // pred_check
          %p735 = pneg %p153
        $region42: #{generator_forward.12} parent=35 // pred_check_branch
          %737 = sbr.rel (%p735) target = $region44
        $region43: #{generator_forward.12} parent=35 // pred_region
          _
        $region44: #{generator_forward.12} parent=35 // pred_fallthru
          _
      $region36: #{generator_forward.12} parent=5 // pred_fallthru
        _
      %p738 = scmp.le.s32.totalorder 2, %s11
      // Predicated region
      $region45: #{generator_forward.12} parent=5 // pred_check
        %p739 = pneg %p738
      $region46: #{generator_forward.12} parent=5 // pred_check_branch
        %741 = sbr.rel (%p739) target = $region48
      $region47: #{generator_forward.12} parent=5 // pred_region
        %s742 = ssub.s32 %s11, 2
        // Predicated region
        $region49: #{generator_forward.12} parent=47 // pred_check
          %p743 = pneg %p159
        $region50: #{generator_forward.12} parent=47 // pred_check_branch
          %745 = sbr.rel (%p743) target = $region52
        $region51: #{generator_forward.12} parent=47 // pred_region
          %p746 = scmp.lt.s32.totalorder %s22, 1
          %s747 = scalar_select %p746, %s22, 1
          %p748 = scmp.lt.s32.totalorder %s23, 0
          %s749 = scalar_select %p748, %s23, 0
          %s750 = sadd.s32 %s749, %s747
          %s751 = scalar_lea.vmem %s4, %s750
        $region52: #{generator_forward.12} parent=47 // pred_fallthru
          _
      $region48: #{generator_forward.12} parent=5 // pred_fallthru
        _
    $region6: #{generator_forward.12} parent=1 // loop_footer
      %s15 = sadd.s32 1, %s11
    $region7: #{generator_forward.12} parent=1 // loop_footer_branch
      %10 = sbr.rel target = $region3
    $region8: #{generator_forward.12} parent=1 // loop_exit
      _
    %752 = vsyncpa [#allocation3], 1
    %s753 = scalar_lea.sflag [#allocation3], 1
    %754 = vsyncpa %s753, 1

// kernel: generator_forward.13
$region0: #{generator_forward.13}
  #allocation0 [shape = 'u32[]', space=smem, size = 0x4, offset = 0x4, fixed_abs, tag = 'smem constant byte address 0x4 - core index']
  #allocation1 [shape = 'u32[72,128]{1,0:T(1,128)}', space=vmem, size = 0x9000, scoped, tag = 'internal scratch']
  %s0 = inlined_call_operand.vmem [shape: bf16[2,4,8], index: 0, kind: input, shape index: {}]
  %s1 = inlined_call_operand.vmem [shape: bf16[16,4], index: 1, kind: input, shape index: {}]
  %s2 = inlined_call_operand.vmem [shape: f32[16,1], index: 2, kind: input, shape index: {}]
  %s3 = inlined_call_operand.vmem [shape: bf16[2,16,8], index: 3, kind: output, shape index: {}]
  %s4 = sld [smem:[#allocation0]]
  $region45: #{generator_forward.13} parent=0
    _
  %s6 = ssub.s32 1, %s4
  %s7 = scalar_select 0, %s6, %s4
  loop: start=0, step=1, limit=4
  $region2: #{generator_forward.13} parent=0 // loop_pre_header
    _
  $region3: #{generator_forward.13} parent=0 // loop_header
    %s9 = sphi 0, %s13
    %p10 = scmp.ge.s32.totalorder %s9, 4
    %s16 = sphi 0, %s28
    %s17 = sphi 0, %s24
    %s18 = sphi 0, %s16
    %s19 = sphi 0, %s17
    %s20 = sphi 0, %s18
    %s21 = sphi 0, %s19
    %s33 = sphi 0, %s35
    %s36 = sphi 0, %s33
    %s37 = sphi 0, %s36
    %s53 = sphi 0, %s37
    %s57 = sphi 0, %s57
    %s59 = sphi 0, %s57
    %s60 = sphi 0, %s59
    %s74 = sphi 0, %s60
    %s78 = sphi 0, %s78
    %s80 = sphi 0, %s78
    %s81 = sphi 0, %s80
    %s95 = sphi 0, %s81
    %s103 = sphi 0, %s105
    %s106 = sphi 0, %s103
    %s107 = sphi 0, %s106
    %s123 = sphi 0, %s107
  $region4: #{generator_forward.13} parent=0 // loop_header_branch
    %12 = sbr.rel (%p10) target = $region8
  $region5: #{generator_forward.13} parent=0 // loop_body
    %s14 = ssub.s32 %s9, 1
    %s15 = ssub.s32 %s9, 2
    %s22 = sadd.s32 1, %s17
    %p23 = scmp.ge.s32.totalorder %s22, 1
    %s24 = scalar_select %p23, 0, %s22
    %s25 = sadd.s32 1, %s16
    %s26 = scalar_select %p23, %s25, %s16
    %p27 = scmp.ge.s32.totalorder %s26, 2
    %s28 = scalar_select %p27, 0, %s26
    %s29 = ssub.s32 %s16, %s28
    %s30 = ssub.s32 %s17, %s24
    %s31 = sor.u32 %s29, %s30
    %p32 = scmp.eq.s32.totalorder %s31, 0
    %s34 = sadd.s32 %s33, 1
    %s35 = scalar_select %p32, %s33, %s34
    %p38 = pneg %p32
    %p39 = scmp.eq.s32.totalorder %s9, 1
    %p40 = por %p38, %p39
    %p41 = scmp.ne.s32.totalorder %s33, %s36
    %p42 = scmp.eq.s32.totalorder %s9, 0
    %p43 = por %p41, %p42
    %p44 = scmp.ne.s32.totalorder %s33, %s36
    %p45 = scmp.eq.s32.totalorder %s14, 1
    %p46 = por %p44, %p45
    %p47 = scmp.ne.s32.totalorder %s36, %s37
    %p48 = scmp.eq.s32.totalorder %s14, 0
    %p49 = por %p47, %p48
    %p50 = scmp.ne.s32.totalorder %s36, %s37
    %p51 = scmp.eq.s32.totalorder %s15, 1
    %p52 = por %p50, %p51
    %p54 = scmp.ne.s32.totalorder %s37, %s53
    %p55 = scmp.eq.s32.totalorder %s15, 0
    %p56 = por %p54, %p55
    %s58 = sadd.s32 %s57, 1
    %p61 = scmp.eq.s32.totalorder %s9, 1
    %p62 = scmp.ne.s32.totalorder %s57, %s59
    %p63 = scmp.eq.s32.totalorder %s9, 0
    %p64 = por %p62, %p63
    %p65 = scmp.ne.s32.totalorder %s57, %s59
    %p66 = scmp.eq.s32.totalorder %s14, 1
    %p67 = por %p65, %p66
    %p68 = scmp.ne.s32.totalorder %s59, %s60
    %p69 = scmp.eq.s32.totalorder %s14, 0
    %p70 = por %p68, %p69
    %p71 = scmp.ne.s32.totalorder %s59, %s60
    %p72 = scmp.eq.s32.totalorder %s15, 1
    %p73 = por %p71, %p72
    %p75 = scmp.ne.s32.totalorder %s60, %s74
    %p76 = scmp.eq.s32.totalorder %s15, 0
    %p77 = por %p75, %p76
    %s79 = sadd.s32 %s78, 1
    %p82 = scmp.eq.s32.totalorder %s9, 1
    %p83 = scmp.ne.s32.totalorder %s78, %s80
    %p84 = scmp.eq.s32.totalorder %s9, 0
    %p85 = por %p83, %p84
    %p86 = scmp.ne.s32.totalorder %s78, %s80
    %p87 = scmp.eq.s32.totalorder %s14, 1
    %p88 = por %p86, %p87
    %p89 = scmp.ne.s32.totalorder %s80, %s81
    %p90 = scmp.eq.s32.totalorder %s14, 0
    %p91 = por %p89, %p90
    %p92 = scmp.ne.s32.totalorder %s80, %s81
    %p93 = scmp.eq.s32.totalorder %s15, 1
    %p94 = por %p92, %p93
    %p96 = scmp.ne.s32.totalorder %s81, %s95
    %p97 = scmp.eq.s32.totalorder %s15, 0
    %p98 = por %p96, %p97
    %s99 = ssub.s32 %s16, %s28
    %s100 = ssub.s32 %s17, %s24
    %s101 = sor.u32 %s99, %s100
    %p102 = scmp.eq.s32.totalorder %s101, 0
    %s104 = sadd.s32 %s103, 1
    %s105 = scalar_select %p102, %s103, %s104
    %p108 = pneg %p102
    %p109 = scmp.eq.s32.totalorder %s9, 1
    %p110 = por %p108, %p109
    %p111 = scmp.ne.s32.totalorder %s103, %s106
    %p112 = scmp.eq.s32.totalorder %s9, 0
    %p113 = por %p111, %p112
    %p114 = scmp.ne.s32.totalorder %s103, %s106
    %p115 = scmp.eq.s32.totalorder %s14, 1
    %p116 = por %p114, %p115
    %p117 = scmp.ne.s32.totalorder %s106, %s107
    %p118 = scmp.eq.s32.totalorder %s14, 0
    %p119 = por %p117, %p118
    %p120 = scmp.ne.s32.totalorder %s106, %s107
    %p121 = scmp.eq.s32.totalorder %s15, 1
    %p122 = por %p120, %p121
    %p124 = scmp.ne.s32.totalorder %s107, %s123
    %p125 = scmp.eq.s32.totalorder %s15, 0
    %p126 = por %p124, %p125
    %p127 = scmp.le.s32.totalorder 1, %s9
    %p128 = scmp.lt.s32.totalorder %s9, 3
    %p129 = pnand %p127, %p128
    %p130 = pneg %p129
    // Predicated region
    $region9: #{generator_forward.13} parent=5 // pred_check
      _
    $region10: #{generator_forward.13} parent=5 // pred_check_branch
      %132 = sbr.rel (%p129) target = $region12
    $region11: #{generator_forward.13} parent=5 // pred_region
      %s133 = ssub.s32 %s9, 1
      // Predicated region
      $region13: #{generator_forward.13} parent=11 // pred_check
        %p134 = pneg %p70
      $region14: #{generator_forward.13} parent=11 // pred_check_branch
        %136 = sbr.rel (%p134) target = $region16
      $region15: #{generator_forward.13} parent=11 // pred_region
        _
      $region16: #{generator_forward.13} parent=11 // pred_fallthru
        _
      // Predicated region
      $region17: #{generator_forward.13} parent=11 // pred_check
        %p137 = pneg %p91
      $region18: #{generator_forward.13} parent=11 // pred_check_branch
        %139 = sbr.rel (%p137) target = $region20
      $region19: #{generator_forward.13} parent=11 // pred_region
        _
      $region20: #{generator_forward.13} parent=11 // pred_fallthru
        _
    $region12: #{generator_forward.13} parent=5 // pred_fallthru
      _
    %p140 = scmp.lt.s32.totalorder %s9, 2
    // Predicated region
    $region21: #{generator_forward.13} parent=5 // pred_check
      %p141 = pneg %p140
    $region22: #{generator_forward.13} parent=5 // pred_check_branch
      %143 = sbr.rel (%p141) target = $region24
    $region23: #{generator_forward.13} parent=5 // pred_region
      // Predicated region
      $region25: #{generator_forward.13} parent=23 // pred_check
        %p144 = pneg %p43
      $region26: #{generator_forward.13} parent=23 // pred_check_branch
        %146 = sbr.rel (%p144) target = $region28
      $region27: #{generator_forward.13} parent=23 // pred_region
        %p147 = scmp.lt.s32.totalorder %s16, 1
        %s148 = scalar_select %p147, %s16, 1
        %p149 = scmp.lt.s32.totalorder %s17, 0
        %s150 = scalar_select %p149, %s17, 0
        %s151 = sadd.s32 %s150, %s148
        %s152 = smul.addr %s151, 2
        %s153 = scalar_lea.vmem %s0, %s152
      $region28: #{generator_forward.13} parent=23 // pred_fallthru
        _
    $region24: #{generator_forward.13} parent=5 // pred_fallthru
      _
    %p154 = scmp.le.s32.totalorder 1, %s9
    %p155 = scmp.lt.s32.totalorder %s9, 3
    %p156 = pnand %p154, %p155
    %p157 = pneg %p156
    // Predicated region
    $region29: #{generator_forward.13} parent=5 // pred_check
      _
    $region30: #{generator_forward.13} parent=5 // pred_check_branch
      %159 = sbr.rel (%p156) target = $region32
    $region31: #{generator_forward.13} parent=5 // pred_region
      %s160 = ssub.s32 %s9, 1
      %p161 = scmp.lt.s32.totalorder %s18, 1
      %s162 = scalar_select %p161, %s18, 1
      %p163 = scmp.lt.s32.totalorder %s19, 0
      %s164 = scalar_select %p163, %s19, 0
      %s165 = sadd.s32 %s164, %s162
      %s166 = smul.addr %s165, 2
      %s167 = scalar_lea.vmem %s0, %s166
      %p168 = pneg %p49
      %p169 = pneg %p46
      %p170 = pneg %p70
      %p171 = pneg %p67
      %p172 = pneg %p91
      %p173 = pneg %p88
      %p174 = pneg %p119
      %p175 = pneg %p116
      %p176 = scmp.lt.s32.totalorder %s18, 1
      %s177 = scalar_select %p176, %s18, 1
      %p178 = scmp.lt.s32.totalorder %s19, 0
      %s179 = scalar_select %p178, %s19, 0
      %s180 = smul.addr %s177, 2
      %s181 = sadd.s32 %s179, %s180
      %s182 = smul.addr %s181, 4
      %s183 = scalar_lea.vmem %s3, %s182
      %p184 = scmp.lt.s32.totalorder %s18, 1
      %s185 = scalar_select %p184, %s18, 1
      %p186 = scmp.lt.s32.totalorder %s19, 0
      %s187 = scalar_select %p186, %s19, 0
      %s188 = sadd.s32 %s187, %s185
      %s189 = smul.addr %s188, 2
      %s190 = scalar_lea.vmem %s0, %s189
      %p191 = scmp.lt.s32.totalorder %s18, 1
      %s192 = scalar_select %p191, %s18, 1
      %p193 = scmp.lt.s32.totalorder %s19, 0
      %s194 = scalar_select %p193, %s19, 0
      %s195 = smul.addr %s192, 2
      %s196 = sadd.s32 %s194, %s195
      %s197 = smul.addr %s196, 4
      %s198 = scalar_lea.vmem %s3, %s197
      %v200 = vld [vmem:[%s190] sm:$0x3]
      %v201 = vld [vmem:[%s1] sm:$0xf]
      %v202 = vld [vmem:[%s1 + $0x4] sm:$0xf]
      %v203 = vld [vmem:[%s2] sm:$0xff]
      %v204 = vld [vmem:[%s2 + $0x8] sm:$0xff]
      %206 = vset.pattern.permute.xlu0 0
      %207 = vperm.xlu0 %206, %v203
      %v208 = vpop.permute.xlu0 %207
      %211 = vset.pattern.permute.xlu0 0
      %212 = vperm.xlu0 %211, %v204
      %v213 = vpop.permute.xlu0 %212
      %v217 = vunpack.c.l.b16 %v201
      %v218 = vunpack.c.l.b16 %v202
      %v219 = vpack.c.b16 %v218, %v217
      %vm220 = vcmask 31744
      %v222 = vsel %vm220, %v219, 0
      %vm224 = vcmask 1041408
      %v226 = vsel %vm224, %v200, 0
      %228 = vmatpush.bf16.msra.mxu0 0
      %229 = vmatpush.bf16.msra.mxu0 0
      %230 = vmatpush.bf16.msra.mxu0 0
      %231 = vmatpush.bf16.msra.mxu0 0
      %232 = vmatpush.bf16.msra.mxu0 0
      %233 = vmatpush.bf16.msra.mxu0 0
      %234 = vmatpush.bf16.msra.mxu0 0
      %235 = vmatpush.bf16.msra.mxu0 %v226
      %236 = vmatmul.bf16.gmra.mxu0 %v222
      %v237 = vpop.f32.mrf.mxu0
      %v238 = vadd.f32 %v208, %v237
      %v239 = vpop.f32.mrf.mxu0
      %v240 = vadd.f32 %v213, %v239
      %241 = vdwg.mxu0
      %v242 = vpack.c.bf16 %v238, %v238
      %v243 = vpack.c.bf16 %v240, %v240
      %vm244 = vcmask 60416
      %245 = vst.msk [vmem:[%s198] sm:$0xf] %vm244, %v242
      %246 = vst.msk [vmem:[%s198 + $0x4] sm:$0xf] %vm244, %v243
      %p247 = scmp.lt.s32.totalorder %s18, 1
      %s248 = scalar_select %p247, %s18, 1
      %p249 = scmp.lt.s32.totalorder %s19, 0
      %s250 = scalar_select %p249, %s19, 0
      %s251 = smul.addr %s248, 2
      %s252 = sadd.s32 %s250, %s251
      %s253 = smul.addr %s252, 4
      %s254 = scalar_lea.vmem %s3, %s253
      // Predicated region
      $region33: #{generator_forward.13} parent=31 // pred_check
        %p255 = pneg %p116
      $region34: #{generator_forward.13} parent=31 // pred_check_branch
        %257 = sbr.rel (%p255) target = $region36
      $region35: #{generator_forward.13} parent=31 // pred_region
        _
      $region36: #{generator_forward.13} parent=31 // pred_fallthru
        _
    $region32: #{generator_forward.13} parent=5 // pred_fallthru
      _
    %p258 = scmp.le.s32.totalorder 2, %s9
    // Predicated region
    $region37: #{generator_forward.13} parent=5 // pred_check
      %p259 = pneg %p258
    $region38: #{generator_forward.13} parent=5 // pred_check_branch
      %261 = sbr.rel (%p259) target = $region40
    $region39: #{generator_forward.13} parent=5 // pred_region
      %s262 = ssub.s32 %s9, 2
      // Predicated region
      $region41: #{generator_forward.13} parent=39 // pred_check
        %p263 = pneg %p122
      $region42: #{generator_forward.13} parent=39 // pred_check_branch
        %265 = sbr.rel (%p263) target = $region44
      $region43: #{generator_forward.13} parent=39 // pred_region
        %p266 = scmp.lt.s32.totalorder %s20, 1
        %s267 = scalar_select %p266, %s20, 1
        %p268 = scmp.lt.s32.totalorder %s21, 0
        %s269 = scalar_select %p268, %s21, 0
        %s270 = smul.addr %s267, 2
        %s271 = sadd.s32 %s269, %s270
        %s272 = smul.addr %s271, 4
        %s273 = scalar_lea.vmem %s3, %s272
      $region44: #{generator_forward.13} parent=39 // pred_fallthru
        _
    $region40: #{generator_forward.13} parent=5 // pred_fallthru
      _
  $region6: #{generator_forward.13} parent=0 // loop_footer
    %s13 = sadd.s32 1, %s9
  $region7: #{generator_forward.13} parent=0 // loop_footer_branch
    %8 = sbr.rel target = $region3
  $region8: #{generator_forward.13} parent=0 // loop_exit
    _

// kernel: generator_forward.14
$region0: #{generator_forward.14}
  #allocation0 [shape = 'u32[]', space=smem, size = 0x4, offset = 0x4, fixed_abs, tag = 'smem constant byte address 0x4 - core index']
  #allocation1 [shape = 'u32[72,128]{1,0:T(1,128)}', space=vmem, size = 0x9000, scoped, tag = 'internal scratch']
  %s0 = inlined_call_operand.vmem [shape: bf16[2,8,14], index: 0, kind: input, shape index: {}]
  %s1 = inlined_call_operand.vmem [shape: bf16[16,56], index: 1, kind: input, shape index: {}]
  %s2 = inlined_call_operand.vmem [shape: f32[16,1], index: 2, kind: input, shape index: {}]
  %s3 = inlined_call_operand.vmem [shape: bf16[2,16,8], index: 3, kind: input, shape index: {}]
  %s4 = inlined_call_operand.vmem [shape: bf16[2,16,8], index: 4, kind: output, shape index: {}]
  %s5 = sld [smem:[#allocation0]]
  $region49: #{generator_forward.14} parent=0
    _
  %s7 = ssub.s32 1, %s5
  %s8 = scalar_select 0, %s7, %s5
  loop: start=0, step=1, limit=4
  $region2: #{generator_forward.14} parent=0 // loop_pre_header
    _
  $region3: #{generator_forward.14} parent=0 // loop_header
    %s10 = sphi 0, %s14
    %p11 = scmp.ge.s32.totalorder %s10, 4
    %s17 = sphi 0, %s29
    %s18 = sphi 0, %s25
    %s19 = sphi 0, %s17
    %s20 = sphi 0, %s18
    %s21 = sphi 0, %s19
    %s22 = sphi 0, %s20
    %s34 = sphi 0, %s36
    %s37 = sphi 0, %s34
    %s38 = sphi 0, %s37
    %s54 = sphi 0, %s38
    %s58 = sphi 0, %s58
    %s60 = sphi 0, %s58
    %s61 = sphi 0, %s60
    %s75 = sphi 0, %s61
    %s79 = sphi 0, %s79
    %s81 = sphi 0, %s79
    %s82 = sphi 0, %s81
    %s96 = sphi 0, %s82
    %s104 = sphi 0, %s106
    %s107 = sphi 0, %s104
    %s108 = sphi 0, %s107
    %s124 = sphi 0, %s108
    %s132 = sphi 0, %s134
    %s135 = sphi 0, %s132
    %s136 = sphi 0, %s135
    %s152 = sphi 0, %s136
  $region4: #{generator_forward.14} parent=0 // loop_header_branch
    %13 = sbr.rel (%p11) target = $region8
  $region5: #{generator_forward.14} parent=0 // loop_body
    %s15 = ssub.s32 %s10, 1
    %s16 = ssub.s32 %s10, 2
    %s23 = sadd.s32 1, %s18
    %p24 = scmp.ge.s32.totalorder %s23, 1
    %s25 = scalar_select %p24, 0, %s23
    %s26 = sadd.s32 1, %s17
    %s27 = scalar_select %p24, %s26, %s17
    %p28 = scmp.ge.s32.totalorder %s27, 2
    %s29 = scalar_select %p28, 0, %s27
    %s30 = ssub.s32 %s17, %s29
    %s31 = ssub.s32 %s18, %s25
    %s32 = sor.u32 %s30, %s31
    %p33 = scmp.eq.s32.totalorder %s32, 0
    %s35 = sadd.s32 %s34, 1
    %s36 = scalar_select %p33, %s34, %s35
    %p39 = pneg %p33
    %p40 = scmp.eq.s32.totalorder %s10, 1
    %p41 = por %p39, %p40
    %p42 = scmp.ne.s32.totalorder %s34, %s37
    %p43 = scmp.eq.s32.totalorder %s10, 0
    %p44 = por %p42, %p43
    %p45 = scmp.ne.s32.totalorder %s34, %s37
    %p46 = scmp.eq.s32.totalorder %s15, 1
    %p47 = por %p45, %p46
    %p48 = scmp.ne.s32.totalorder %s37, %s38
    %p49 = scmp.eq.s32.totalorder %s15, 0
    %p50 = por %p48, %p49
    %p51 = scmp.ne.s32.totalorder %s37, %s38
    %p52 = scmp.eq.s32.totalorder %s16, 1
    %p53 = por %p51, %p52
    %p55 = scmp.ne.s32.totalorder %s38, %s54
    %p56 = scmp.eq.s32.totalorder %s16, 0
    %p57 = por %p55, %p56
    %s59 = sadd.s32 %s58, 1
    %p62 = scmp.eq.s32.totalorder %s10, 1
    %p63 = scmp.ne.s32.totalorder %s58, %s60
    %p64 = scmp.eq.s32.totalorder %s10, 0
    %p65 = por %p63, %p64
    %p66 = scmp.ne.s32.totalorder %s58, %s60
    %p67 = scmp.eq.s32.totalorder %s15, 1
    %p68 = por %p66, %p67
    %p69 = scmp.ne.s32.totalorder %s60, %s61
    %p70 = scmp.eq.s32.totalorder %s15, 0
    %p71 = por %p69, %p70
    %p72 = scmp.ne.s32.totalorder %s60, %s61
    %p73 = scmp.eq.s32.totalorder %s16, 1
    %p74 = por %p72, %p73
    %p76 = scmp.ne.s32.totalorder %s61, %s75
    %p77 = scmp.eq.s32.totalorder %s16, 0
    %p78 = por %p76, %p77
    %s80 = sadd.s32 %s79, 1
    %p83 = scmp.eq.s32.totalorder %s10, 1
    %p84 = scmp.ne.s32.totalorder %s79, %s81
    %p85 = scmp.eq.s32.totalorder %s10, 0
    %p86 = por %p84, %p85
    %p87 = scmp.ne.s32.totalorder %s79, %s81
    %p88 = scmp.eq.s32.totalorder %s15, 1
    %p89 = por %p87, %p88
    %p90 = scmp.ne.s32.totalorder %s81, %s82
    %p91 = scmp.eq.s32.totalorder %s15, 0
    %p92 = por %p90, %p91
    %p93 = scmp.ne.s32.totalorder %s81, %s82
    %p94 = scmp.eq.s32.totalorder %s16, 1
    %p95 = por %p93, %p94
    %p97 = scmp.ne.s32.totalorder %s82, %s96
    %p98 = scmp.eq.s32.totalorder %s16, 0
    %p99 = por %p97, %p98
    %s100 = ssub.s32 %s17, %s29
    %s101 = ssub.s32 %s18, %s25
    %s102 = sor.u32 %s100, %s101
    %p103 = scmp.eq.s32.totalorder %s102, 0
    %s105 = sadd.s32 %s104, 1
    %s106 = scalar_select %p103, %s104, %s105
    %p109 = pneg %p103
    %p110 = scmp.eq.s32.totalorder %s10, 1
    %p111 = por %p109, %p110
    %p112 = scmp.ne.s32.totalorder %s104, %s107
    %p113 = scmp.eq.s32.totalorder %s10, 0
    %p114 = por %p112, %p113
    %p115 = scmp.ne.s32.totalorder %s104, %s107
    %p116 = scmp.eq.s32.totalorder %s15, 1
    %p117 = por %p115, %p116
    %p118 = scmp.ne.s32.totalorder %s107, %s108
    %p119 = scmp.eq.s32.totalorder %s15, 0
    %p120 = por %p118, %p119
    %p121 = scmp.ne.s32.totalorder %s107, %s108
    %p122 = scmp.eq.s32.totalorder %s16, 1
    %p123 = por %p121, %p122
    %p125 = scmp.ne.s32.totalorder %s108, %s124
    %p126 = scmp.eq.s32.totalorder %s16, 0
    %p127 = por %p125, %p126
    %s128 = ssub.s32 %s17, %s29
    %s129 = ssub.s32 %s18, %s25
    %s130 = sor.u32 %s128, %s129
    %p131 = scmp.eq.s32.totalorder %s130, 0
    %s133 = sadd.s32 %s132, 1
    %s134 = scalar_select %p131, %s132, %s133
    %p137 = pneg %p131
    %p138 = scmp.eq.s32.totalorder %s10, 1
    %p139 = por %p137, %p138
    %p140 = scmp.ne.s32.totalorder %s132, %s135
    %p141 = scmp.eq.s32.totalorder %s10, 0
    %p142 = por %p140, %p141
    %p143 = scmp.ne.s32.totalorder %s132, %s135
    %p144 = scmp.eq.s32.totalorder %s15, 1
    %p145 = por %p143, %p144
    %p146 = scmp.ne.s32.totalorder %s135, %s136
    %p147 = scmp.eq.s32.totalorder %s15, 0
    %p148 = por %p146, %p147
    %p149 = scmp.ne.s32.totalorder %s135, %s136
    %p150 = scmp.eq.s32.totalorder %s16, 1
    %p151 = por %p149, %p150
    %p153 = scmp.ne.s32.totalorder %s136, %s152
    %p154 = scmp.eq.s32.totalorder %s16, 0
    %p155 = por %p153, %p154
    %p156 = scmp.le.s32.totalorder 1, %s10
    %p157 = scmp.lt.s32.totalorder %s10, 3
    %p158 = pnand %p156, %p157
    %p159 = pneg %p158
    // Predicated region
    $region9: #{generator_forward.14} parent=5 // pred_check
      _
    $region10: #{generator_forward.14} parent=5 // pred_check_branch
      %161 = sbr.rel (%p158) target = $region12
    $region11: #{generator_forward.14} parent=5 // pred_region
      %s162 = ssub.s32 %s10, 1
      // Predicated region
      $region13: #{generator_forward.14} parent=11 // pred_check
        %p163 = pneg %p71
      $region14: #{generator_forward.14} parent=11 // pred_check_branch
        %165 = sbr.rel (%p163) target = $region16
      $region15: #{generator_forward.14} parent=11 // pred_region
        _
      $region16: #{generator_forward.14} parent=11 // pred_fallthru
        _
      // Predicated region
      $region17: #{generator_forward.14} parent=11 // pred_check
        %p166 = pneg %p92
      $region18: #{generator_forward.14} parent=11 // pred_check_branch
        %168 = sbr.rel (%p166) target = $region20
      $region19: #{generator_forward.14} parent=11 // pred_region
        _
      $region20: #{generator_forward.14} parent=11 // pred_fallthru
        _
    $region12: #{generator_forward.14} parent=5 // pred_fallthru
      _
    %p169 = scmp.lt.s32.totalorder %s10, 2
    // Predicated region
    $region21: #{generator_forward.14} parent=5 // pred_check
      %p170 = pneg %p169
    $region22: #{generator_forward.14} parent=5 // pred_check_branch
      %172 = sbr.rel (%p170) target = $region24
    $region23: #{generator_forward.14} parent=5 // pred_region
      // Predicated region
      $region25: #{generator_forward.14} parent=23 // pred_check
        %p173 = pneg %p44
      $region26: #{generator_forward.14} parent=23 // pred_check_branch
        %175 = sbr.rel (%p173) target = $region28
      $region27: #{generator_forward.14} parent=23 // pred_region
        %p176 = scmp.lt.s32.totalorder %s17, 1
        %s177 = scalar_select %p176, %s17, 1
        %p178 = scmp.lt.s32.totalorder %s18, 0
        %s179 = scalar_select %p178, %s18, 0
        %s180 = sadd.s32 %s179, %s177
        %s181 = smul.addr %s180, 4
        %s182 = scalar_lea.vmem %s0, %s181
      $region28: #{generator_forward.14} parent=23 // pred_fallthru
        _
      // Predicated region
      $region29: #{generator_forward.14} parent=23 // pred_check
        %p183 = pneg %p114
      $region30: #{generator_forward.14} parent=23 // pred_check_branch
        %185 = sbr.rel (%p183) target = $region32
      $region31: #{generator_forward.14} parent=23 // pred_region
        %p186 = scmp.lt.s32.totalorder %s17, 1
        %s187 = scalar_select %p186, %s17, 1
        %p188 = scmp.lt.s32.totalorder %s18, 0
        %s189 = scalar_select %p188, %s18, 0
        %s190 = smul.addr %s187, 2
        %s191 = sadd.s32 %s189, %s190
        %s192 = smul.addr %s191, 4
        %s193 = scalar_lea.vmem %s3, %s192
      $region32: #{generator_forward.14} parent=23 // pred_fallthru
        _
    $region24: #{generator_forward.14} parent=5 // pred_fallthru
      _
    %p194 = scmp.le.s32.totalorder 1, %s10
    %p195 = scmp.lt.s32.totalorder %s10, 3
    %p196 = pnand %p194, %p195
    %p197 = pneg %p196
    // Predicated region
    $region33: #{generator_forward.14} parent=5 // pred_check
      _
    $region34: #{generator_forward.14} parent=5 // pred_check_branch
      %199 = sbr.rel (%p196) target = $region36
    $region35: #{generator_forward.14} parent=5 // pred_region
      %s200 = ssub.s32 %s10, 1
      %p201 = scmp.lt.s32.totalorder %s19, 1
      %s202 = scalar_select %p201, %s19, 1
      %p203 = scmp.lt.s32.totalorder %s20, 0
      %s204 = scalar_select %p203, %s20, 0
      %s205 = sadd.s32 %s204, %s202
      %s206 = smul.addr %s205, 4
      %s207 = scalar_lea.vmem %s0, %s206
      %p208 = pneg %p50
      %p209 = pneg %p47
      %p210 = pneg %p71
      %p211 = pneg %p68
      %p212 = pneg %p92
      %p213 = pneg %p89
      %p214 = scmp.lt.s32.totalorder %s19, 1
      %s215 = scalar_select %p214, %s19, 1
      %p216 = scmp.lt.s32.totalorder %s20, 0
      %s217 = scalar_select %p216, %s20, 0
      %s218 = smul.addr %s215, 2
      %s219 = sadd.s32 %s217, %s218
      %s220 = smul.addr %s219, 4
      %s221 = scalar_lea.vmem %s3, %s220
      %p222 = pneg %p120
      %p223 = pneg %p117
      %p224 = pneg %p148
      %p225 = pneg %p145
      %p226 = scmp.lt.s32.totalorder %s19, 1
      %s227 = scalar_select %p226, %s19, 1
      %p228 = scmp.lt.s32.totalorder %s20, 0
      %s229 = scalar_select %p228, %s20, 0
      %s230 = smul.addr %s227, 2
      %s231 = sadd.s32 %s229, %s230
      %s232 = smul.addr %s231, 4
      %s233 = scalar_lea.vmem %s4, %s232
      %p234 = scmp.lt.s32.totalorder %s19, 1
      %s235 = scalar_select %p234, %s19, 1
      %p236 = scmp.lt.s32.totalorder %s20, 0
      %s237 = scalar_select %p236, %s20, 0
      %s238 = sadd.s32 %s237, %s235
      %s239 = smul.addr %s238, 4
      %s240 = scalar_lea.vmem %s0, %s239
      %p241 = scmp.lt.s32.totalorder %s19, 1
      %s242 = scalar_select %p241, %s19, 1
      %p243 = scmp.lt.s32.totalorder %s20, 0
      %s244 = scalar_select %p243, %s20, 0
      %s245 = smul.addr %s242, 2
      %s246 = sadd.s32 %s244, %s245
      %s247 = smul.addr %s246, 4
      %s248 = scalar_lea.vmem %s3, %s247
      %p249 = scmp.lt.s32.totalorder %s19, 1
      %s250 = scalar_select %p249, %s19, 1
      %p251 = scmp.lt.s32.totalorder %s20, 0
      %s252 = scalar_select %p251, %s20, 0
      %s253 = smul.addr %s250, 2
      %s254 = sadd.s32 %s252, %s253
      %s255 = smul.addr %s254, 4
      %s256 = scalar_lea.vmem %s4, %s255
      %v258 = vld [vmem:[%s240] sm:$0xf]
      %v259 = vld [vmem:[%s1] sm:$0xf]
      %v260 = vld [vmem:[%s1 + $0x4] sm:$0xf]
      %v261 = vld [vmem:[%s2] sm:$0xff]
      %v262 = vld [vmem:[%s2 + $0x8] sm:$0xff]
      %v264 = vunpack.c.l.b16 %v258
      %v265 = vpack.c.b16 %v264, %v264
      %266 = vrot.lane.b32.xlu0 %v265, 127
      %v267 = vpop.permute.xlu0 %266
      %268 = vrot.lane.b32.xlu0 %v265, 126
      %v269 = vpop.permute.xlu0 %268
      %270 = vrot.lane.b32.xlu0 %v265, 125
      %v271 = vpop.permute.xlu0 %270
      %272 = vrot.lane.b32.xlu0 %v265, 124
      %v273 = vpop.permute.xlu0 %272
      %274 = vrot.lane.b32.xlu0 %v265, 123
      %v275 = vpop.permute.xlu0 %274
      %276 = vrot.lane.b32.xlu0 %v265, 122
      %v277 = vpop.permute.xlu0 %276
      %vm278 = vcmask 1043456
      %v281 = vsel %vm278, %v258, %v267
      %v285 = vsel %vm278, %v269, %v271
      %v289 = vsel %vm278, %v273, %v275
      %292 = vset.pattern.permute.xlu0 0
      %293 = vperm.xlu0 %292, %v261
      %v294 = vpop.permute.xlu0 %293
      %297 = vset.pattern.permute.xlu0 0
      %298 = vperm.xlu0 %297, %v262
      %v299 = vpop.permute.xlu0 %298
      %v303 = vunpack.c.l.b16 %v259
      %v304 = vunpack.c.l.b16 %v260
      %v305 = vpack.c.b16 %v304, %v303
      %vm306 = vcmask 457728
      %v308 = vsel %vm306, %v305, 0
      %v311 = vsel %vm278, %v277, 0
      %313 = vmatpush.bf16.msra.mxu0 0
      %314 = vmatpush.bf16.msra.mxu0 0
      %315 = vmatpush.bf16.msra.mxu0 0
      %316 = vmatpush.bf16.msra.mxu0 0
      %317 = vmatpush.bf16.msra.mxu0 %v311
      %318 = vmatpush.bf16.msra.mxu0 %v289
      %319 = vmatpush.bf16.msra.mxu0 %v285
      %320 = vmatpush.bf16.msra.mxu0 %v281
      %321 = vmatmul.bf16.gmra.mxu0 %v308
      %v322 = vpop.f32.mrf.mxu0
      %v323 = vadd.f32 %v294, %v322
      %v324 = vpop.f32.mrf.mxu0
      %v325 = vadd.f32 %v299, %v324
      %326 = vdwg.mxu0
      %v327 = vld [vmem:[%s248] sm:$0xf]
      %v328 = vld [vmem:[%s248 + $0x4] sm:$0xf]
      %v329 = vunpack.c.l.bf16 %v327
      %v330 = vunpack.c.l.bf16 %v328
      %v331 = vadd.f32 %v323, %v329
      %v332 = vadd.f32 %v325, %v330
      %v333 = vpack.c.bf16 %v331, %v331
      %v334 = vpack.c.bf16 %v332, %v332
      %vm335 = vcmask 60416
      %336 = vst.msk [vmem:[%s256] sm:$0xf] %vm335, %v333
      %337 = vst.msk [vmem:[%s256 + $0x4] sm:$0xf] %vm335, %v334
      %p338 = scmp.lt.s32.totalorder %s19, 1
      %s339 = scalar_select %p338, %s19, 1
      %p340 = scmp.lt.s32.totalorder %s20, 0
      %s341 = scalar_select %p340, %s20, 0
      %s342 = smul.addr %s339, 2
      %s343 = sadd.s32 %s341, %s342
      %s344 = smul.addr %s343, 4
      %s345 = scalar_lea.vmem %s4, %s344
      // Predicated region
      $region37: #{generator_forward.14} parent=35 // pred_check
        %p346 = pneg %p145
      $region38: #{generator_forward.14} parent=35 // pred_check_branch
        %348 = sbr.rel (%p346) target = $region40
      $region39: #{generator_forward.14} parent=35 // pred_region
        _
      $region40: #{generator_forward.14} parent=35 // pred_fallthru
        _
    $region36: #{generator_forward.14} parent=5 // pred_fallthru
      _
    %p349 = scmp.le.s32.totalorder 2, %s10
    // Predicated region
    $region41: #{generator_forward.14} parent=5 // pred_check
      %p350 = pneg %p349
    $region42: #{generator_forward.14} parent=5 // pred_check_branch
      %352 = sbr.rel (%p350) target = $region44
    $region43: #{generator_forward.14} parent=5 // pred_region
      %s353 = ssub.s32 %s10, 2
      // Predicated region
      $region45: #{generator_forward.14} parent=43 // pred_check
        %p354 = pneg %p151
      $region46: #{generator_forward.14} parent=43 // pred_check_branch
        %356 = sbr.rel (%p354) target = $region48
      $region47: #{generator_forward.14} parent=43 // pred_region
        %p357 = scmp.lt.s32.totalorder %s21, 1
        %s358 = scalar_select %p357, %s21, 1
        %p359 = scmp.lt.s32.totalorder %s22, 0
        %s360 = scalar_select %p359, %s22, 0
        %s361 = smul.addr %s358, 2
        %s362 = sadd.s32 %s360, %s361
        %s363 = smul.addr %s362, 4
        %s364 = scalar_lea.vmem %s4, %s363
      $region48: #{generator_forward.14} parent=43 // pred_fallthru
        _
    $region44: #{generator_forward.14} parent=5 // pred_fallthru
      _
  $region6: #{generator_forward.14} parent=0 // loop_footer
    %s14 = sadd.s32 1, %s10
  $region7: #{generator_forward.14} parent=0 // loop_footer_branch
    %9 = sbr.rel target = $region3
  $region8: #{generator_forward.14} parent=0 // loop_exit
    _

// kernel: generator_forward.15
$region0: #{generator_forward.15}
  #allocation0 [shape = 'u32[]', space=smem, size = 0x4, offset = 0x4, fixed_abs, tag = 'smem constant byte address 0x4 - core index']
  #allocation1 [shape = 'u32[72,128]{1,0:T(1,128)}', space=vmem, size = 0x9000, scoped, tag = 'internal scratch']
  %s0 = inlined_call_operand.vmem [shape: bf16[2,16,10], index: 0, kind: input, shape index: {}]
  %s1 = inlined_call_operand.vmem [shape: bf16[16,48], index: 1, kind: input, shape index: {}]
  %s2 = inlined_call_operand.vmem [shape: f32[16,1], index: 2, kind: input, shape index: {}]
  %s3 = inlined_call_operand.vmem [shape: bf16[2,16,8], index: 3, kind: output, shape index: {}]
  %s4 = sld [smem:[#allocation0]]
  $region45: #{generator_forward.15} parent=0
    _
  %s6 = ssub.s32 1, %s4
  %s7 = scalar_select 0, %s6, %s4
  loop: start=0, step=1, limit=4
  $region2: #{generator_forward.15} parent=0 // loop_pre_header
    _
  $region3: #{generator_forward.15} parent=0 // loop_header
    %s9 = sphi 0, %s13
    %p10 = scmp.ge.s32.totalorder %s9, 4
    %s16 = sphi 0, %s28
    %s17 = sphi 0, %s24
    %s18 = sphi 0, %s16
    %s19 = sphi 0, %s17
    %s20 = sphi 0, %s18
    %s21 = sphi 0, %s19
    %s33 = sphi 0, %s35
    %s36 = sphi 0, %s33
    %s37 = sphi 0, %s36
    %s53 = sphi 0, %s37
    %s57 = sphi 0, %s57
    %s59 = sphi 0, %s57
    %s60 = sphi 0, %s59
    %s74 = sphi 0, %s60
    %s78 = sphi 0, %s78
    %s80 = sphi 0, %s78
    %s81 = sphi 0, %s80
    %s95 = sphi 0, %s81
    %s103 = sphi 0, %s105
    %s106 = sphi 0, %s103
    %s107 = sphi 0, %s106
    %s123 = sphi 0, %s107
  $region4: #{generator_forward.15} parent=0 // loop_header_branch
    %12 = sbr.rel (%p10) target = $region8
  $region5: #{generator_forward.15} parent=0 // loop_body
    %s14 = ssub.s32 %s9, 1
    %s15 = ssub.s32 %s9, 2
    %s22 = sadd.s32 1, %s17
    %p23 = scmp.ge.s32.totalorder %s22, 1
    %s24 = scalar_select %p23, 0, %s22
    %s25 = sadd.s32 1, %s16
    %s26 = scalar_select %p23, %s25, %s16
    %p27 = scmp.ge.s32.totalorder %s26, 2
    %s28 = scalar_select %p27, 0, %s26
    %s29 = ssub.s32 %s16, %s28
    %s30 = ssub.s32 %s17, %s24
    %s31 = sor.u32 %s29, %s30
    %p32 = scmp.eq.s32.totalorder %s31, 0
    %s34 = sadd.s32 %s33, 1
    %s35 = scalar_select %p32, %s33, %s34
    %p38 = pneg %p32
    %p39 = scmp.eq.s32.totalorder %s9, 1
    %p40 = por %p38, %p39
    %p41 = scmp.ne.s32.totalorder %s33, %s36
    %p42 = scmp.eq.s32.totalorder %s9, 0
    %p43 = por %p41, %p42
    %p44 = scmp.ne.s32.totalorder %s33, %s36
    %p45 = scmp.eq.s32.totalorder %s14, 1
    %p46 = por %p44, %p45
    %p47 = scmp.ne.s32.totalorder %s36, %s37
    %p48 = scmp.eq.s32.totalorder %s14, 0
    %p49 = por %p47, %p48
    %p50 = scmp.ne.s32.totalorder %s36, %s37
    %p51 = scmp.eq.s32.totalorder %s15, 1
    %p52 = por %p50, %p51
    %p54 = scmp.ne.s32.totalorder %s37, %s53
    %p55 = scmp.eq.s32.totalorder %s15, 0
    %p56 = por %p54, %p55
    %s58 = sadd.s32 %s57, 1
    %p61 = scmp.eq.s32.totalorder %s9, 1
    %p62 = scmp.ne.s32.totalorder %s57, %s59
    %p63 = scmp.eq.s32.totalorder %s9, 0
    %p64 = por %p62, %p63
    %p65 = scmp.ne.s32.totalorder %s57, %s59
    %p66 = scmp.eq.s32.totalorder %s14, 1
    %p67 = por %p65, %p66
    %p68 = scmp.ne.s32.totalorder %s59, %s60
    %p69 = scmp.eq.s32.totalorder %s14, 0
    %p70 = por %p68, %p69
    %p71 = scmp.ne.s32.totalorder %s59, %s60
    %p72 = scmp.eq.s32.totalorder %s15, 1
    %p73 = por %p71, %p72
    %p75 = scmp.ne.s32.totalorder %s60, %s74
    %p76 = scmp.eq.s32.totalorder %s15, 0
    %p77 = por %p75, %p76
    %s79 = sadd.s32 %s78, 1
    %p82 = scmp.eq.s32.totalorder %s9, 1
    %p83 = scmp.ne.s32.totalorder %s78, %s80
    %p84 = scmp.eq.s32.totalorder %s9, 0
    %p85 = por %p83, %p84
    %p86 = scmp.ne.s32.totalorder %s78, %s80
    %p87 = scmp.eq.s32.totalorder %s14, 1
    %p88 = por %p86, %p87
    %p89 = scmp.ne.s32.totalorder %s80, %s81
    %p90 = scmp.eq.s32.totalorder %s14, 0
    %p91 = por %p89, %p90
    %p92 = scmp.ne.s32.totalorder %s80, %s81
    %p93 = scmp.eq.s32.totalorder %s15, 1
    %p94 = por %p92, %p93
    %p96 = scmp.ne.s32.totalorder %s81, %s95
    %p97 = scmp.eq.s32.totalorder %s15, 0
    %p98 = por %p96, %p97
    %s99 = ssub.s32 %s16, %s28
    %s100 = ssub.s32 %s17, %s24
    %s101 = sor.u32 %s99, %s100
    %p102 = scmp.eq.s32.totalorder %s101, 0
    %s104 = sadd.s32 %s103, 1
    %s105 = scalar_select %p102, %s103, %s104
    %p108 = pneg %p102
    %p109 = scmp.eq.s32.totalorder %s9, 1
    %p110 = por %p108, %p109
    %p111 = scmp.ne.s32.totalorder %s103, %s106
    %p112 = scmp.eq.s32.totalorder %s9, 0
    %p113 = por %p111, %p112
    %p114 = scmp.ne.s32.totalorder %s103, %s106
    %p115 = scmp.eq.s32.totalorder %s14, 1
    %p116 = por %p114, %p115
    %p117 = scmp.ne.s32.totalorder %s106, %s107
    %p118 = scmp.eq.s32.totalorder %s14, 0
    %p119 = por %p117, %p118
    %p120 = scmp.ne.s32.totalorder %s106, %s107
    %p121 = scmp.eq.s32.totalorder %s15, 1
    %p122 = por %p120, %p121
    %p124 = scmp.ne.s32.totalorder %s107, %s123
    %p125 = scmp.eq.s32.totalorder %s15, 0
    %p126 = por %p124, %p125
    %p127 = scmp.le.s32.totalorder 1, %s9
    %p128 = scmp.lt.s32.totalorder %s9, 3
    %p129 = pnand %p127, %p128
    %p130 = pneg %p129
    // Predicated region
    $region9: #{generator_forward.15} parent=5 // pred_check
      _
    $region10: #{generator_forward.15} parent=5 // pred_check_branch
      %132 = sbr.rel (%p129) target = $region12
    $region11: #{generator_forward.15} parent=5 // pred_region
      %s133 = ssub.s32 %s9, 1
      // Predicated region
      $region13: #{generator_forward.15} parent=11 // pred_check
        %p134 = pneg %p70
      $region14: #{generator_forward.15} parent=11 // pred_check_branch
        %136 = sbr.rel (%p134) target = $region16
      $region15: #{generator_forward.15} parent=11 // pred_region
        _
      $region16: #{generator_forward.15} parent=11 // pred_fallthru
        _
      // Predicated region
      $region17: #{generator_forward.15} parent=11 // pred_check
        %p137 = pneg %p91
      $region18: #{generator_forward.15} parent=11 // pred_check_branch
        %139 = sbr.rel (%p137) target = $region20
      $region19: #{generator_forward.15} parent=11 // pred_region
        _
      $region20: #{generator_forward.15} parent=11 // pred_fallthru
        _
    $region12: #{generator_forward.15} parent=5 // pred_fallthru
      _
    %p140 = scmp.lt.s32.totalorder %s9, 2
    // Predicated region
    $region21: #{generator_forward.15} parent=5 // pred_check
      %p141 = pneg %p140
    $region22: #{generator_forward.15} parent=5 // pred_check_branch
      %143 = sbr.rel (%p141) target = $region24
    $region23: #{generator_forward.15} parent=5 // pred_region
      // Predicated region
      $region25: #{generator_forward.15} parent=23 // pred_check
        %p144 = pneg %p43
      $region26: #{generator_forward.15} parent=23 // pred_check_branch
        %146 = sbr.rel (%p144) target = $region28
      $region27: #{generator_forward.15} parent=23 // pred_region
        %p147 = scmp.lt.s32.totalorder %s16, 1
        %s148 = scalar_select %p147, %s16, 1
        %p149 = scmp.lt.s32.totalorder %s17, 0
        %s150 = scalar_select %p149, %s17, 0
        %s151 = smul.addr %s148, 2
        %s152 = sadd.s32 %s150, %s151
        %s153 = smul.addr %s152, 4
        %s154 = scalar_lea.vmem %s0, %s153
      $region28: #{generator_forward.15} parent=23 // pred_fallthru
        _
    $region24: #{generator_forward.15} parent=5 // pred_fallthru
      _
    %p155 = scmp.le.s32.totalorder 1, %s9
    %p156 = scmp.lt.s32.totalorder %s9, 3
    %p157 = pnand %p155, %p156
    %p158 = pneg %p157
    // Predicated region
    $region29: #{generator_forward.15} parent=5 // pred_check
      _
    $region30: #{generator_forward.15} parent=5 // pred_check_branch
      %160 = sbr.rel (%p157) target = $region32
    $region31: #{generator_forward.15} parent=5 // pred_region
      %s161 = ssub.s32 %s9, 1
      %p162 = scmp.lt.s32.totalorder %s18, 1
      %s163 = scalar_select %p162, %s18, 1
      %p164 = scmp.lt.s32.totalorder %s19, 0
      %s165 = scalar_select %p164, %s19, 0
      %s166 = smul.addr %s163, 2
      %s167 = sadd.s32 %s165, %s166
      %s168 = smul.addr %s167, 4
      %s169 = scalar_lea.vmem %s0, %s168
      %p170 = pneg %p49
      %p171 = pneg %p46
      %p172 = pneg %p70
      %p173 = pneg %p67
      %p174 = pneg %p91
      %p175 = pneg %p88
      %p176 = pneg %p119
      %p177 = pneg %p116
      %p178 = scmp.lt.s32.totalorder %s18, 1
      %s179 = scalar_select %p178, %s18, 1
      %p180 = scmp.lt.s32.totalorder %s19, 0
      %s181 = scalar_select %p180, %s19, 0
      %s182 = smul.addr %s179, 2
      %s183 = sadd.s32 %s181, %s182
      %s184 = smul.addr %s183, 4
      %s185 = scalar_lea.vmem %s3, %s184
      %p186 = scmp.lt.s32.totalorder %s18, 1
      %s187 = scalar_select %p186, %s18, 1
      %p188 = scmp.lt.s32.totalorder %s19, 0
      %s189 = scalar_select %p188, %s19, 0
      %s190 = smul.addr %s187, 2
      %s191 = sadd.s32 %s189, %s190
      %s192 = smul.addr %s191, 4
      %s193 = scalar_lea.vmem %s0, %s192
      %p194 = scmp.lt.s32.totalorder %s18, 1
      %s195 = scalar_select %p194, %s18, 1
      %p196 = scmp.lt.s32.totalorder %s19, 0
      %s197 = scalar_select %p196, %s19, 0
      %s198 = smul.addr %s195, 2
      %s199 = sadd.s32 %s197, %s198
      %s200 = smul.addr %s199, 4
      %s201 = scalar_lea.vmem %s3, %s200
      %v203 = vld [vmem:[%s193] sm:$0xf]
      %v204 = vld [vmem:[%s193 + $0x4] sm:$0xf]
      %v205 = vunpack.c.l.bf16 %v203
      %v206 = vunpack.c.l.bf16 %v204
      %vm207 = vcmp.ge.f32.partialorder %v205, 0.0
      %vm208 = vcmp.ge.f32.partialorder %v206, 0.0
      %v209 = vmul.f32 %v205, 0.1
      %v210 = vmul.f32 %v206, 0.1
      %v211 = vsel %vm207, %v205, %v209
      %v212 = vsel %vm208, %v206, %v210
      %v213 = vld [vmem:[%s1] sm:$0xf]
      %v214 = vld [vmem:[%s1 + $0x4] sm:$0xf]
      %v215 = vld [vmem:[%s2] sm:$0xff]
      %v216 = vld [vmem:[%s2 + $0x8] sm:$0xff]
      %v217 = vpack.c.bf16 %v211, %v211
      %v218 = vpack.c.bf16 %v212, %v212
      %v221 = vunpack.c.l.b16 %v217
      %v222 = vunpack.c.l.b16 %v218
      %v223 = vpack.c.b16 %v222, %v221
      %225 = vrot.lane.b32.xlu0 %v223, 127
      %v226 = vpop.permute.xlu0 %225
      %228 = vrot.lane.b32.xlu0 %v223, 126
      %v229 = vpop.permute.xlu0 %228
      %232 = vset.pattern.permute.xlu0 0
      %233 = vperm.xlu0 %232, %v215
      %v234 = vpop.permute.xlu0 %233
      %237 = vset.pattern.permute.xlu0 0
      %238 = vperm.xlu0 %237, %v216
      %v239 = vpop.permute.xlu0 %238
      %v243 = vunpack.c.l.b16 %v213
      %v244 = vunpack.c.l.b16 %v214
      %v245 = vpack.c.b16 %v244, %v243
      %vm246 = vcmask 392192
      %v248 = vsel %vm246, %v245, 0
      %250 = vmatpush.bf16.msra.mxu0 0
      %251 = vmatpush.bf16.msra.mxu0 0
      %252 = vmatpush.bf16.msra.mxu0 0
      %253 = vmatpush.bf16.msra.mxu0 0
      %254 = vmatpush.bf16.msra.mxu0 0
      %255 = vmatpush.bf16.msra.mxu0 %v229
      %256 = vmatpush.bf16.msra.mxu0 %v226
      %257 = vmatpush.bf16.msra.mxu0 %v223
      %258 = vmatmul.bf16.gmra.mxu0 %v248
      %v259 = vpop.f32.mrf.mxu0
      %v260 = vadd.f32 %v234, %v259
      %v261 = vpop.f32.mrf.mxu0
      %v262 = vadd.f32 %v239, %v261
      %263 = vdwg.mxu0
      %v264 = vpack.c.bf16 %v260, %v260
      %v265 = vpack.c.bf16 %v262, %v262
      %vm266 = vcmask 60416
      %267 = vst.msk [vmem:[%s201] sm:$0xf] %vm266, %v264
      %268 = vst.msk [vmem:[%s201 + $0x4] sm:$0xf] %vm266, %v265
      %p269 = scmp.lt.s32.totalorder %s18, 1
      %s270 = scalar_select %p269, %s18, 1
      %p271 = scmp.lt.s32.totalorder %s19, 0
      %s272 = scalar_select %p271, %s19, 0
      %s273 = smul.addr %s270, 2
      %s274 = sadd.s32 %s272, %s273
      %s275 = smul.addr %s274, 4
      %s276 = scalar_lea.vmem %s3, %s275
      // Predicated region
      $region33: #{generator_forward.15} parent=31 // pred_check
        %p277 = pneg %p116
      $region34: #{generator_forward.15} parent=31 // pred_check_branch
        %279 = sbr.rel (%p277) target = $region36
      $region35: #{generator_forward.15} parent=31 // pred_region
        _
      $region36: #{generator_forward.15} parent=31 // pred_fallthru
        _
    $region32: #{generator_forward.15} parent=5 // pred_fallthru
      _
    %p280 = scmp.le.s32.totalorder 2, %s9
    // Predicated region
    $region37: #{generator_forward.15} parent=5 // pred_check
      %p281 = pneg %p280
    $region38: #{generator_forward.15} parent=5 // pred_check_branch
      %283 = sbr.rel (%p281) target = $region40
    $region39: #{generator_forward.15} parent=5 // pred_region
      %s284 = ssub.s32 %s9, 2
      // Predicated region
      $region41: #{generator_forward.15} parent=39 // pred_check
        %p285 = pneg %p122
      $region42: #{generator_forward.15} parent=39 // pred_check_branch
        %287 = sbr.rel (%p285) target = $region44
      $region43: #{generator_forward.15} parent=39 // pred_region
        %p288 = scmp.lt.s32.totalorder %s20, 1
        %s289 = scalar_select %p288, %s20, 1
        %p290 = scmp.lt.s32.totalorder %s21, 0
        %s291 = scalar_select %p290, %s21, 0
        %s292 = smul.addr %s289, 2
        %s293 = sadd.s32 %s291, %s292
        %s294 = smul.addr %s293, 4
        %s295 = scalar_lea.vmem %s3, %s294
      $region44: #{generator_forward.15} parent=39 // pred_fallthru
        _
    $region40: #{generator_forward.15} parent=5 // pred_fallthru
      _
  $region6: #{generator_forward.15} parent=0 // loop_footer
    %s13 = sadd.s32 1, %s9
  $region7: #{generator_forward.15} parent=0 // loop_footer_branch
    %8 = sbr.rel target = $region3
  $region8: #{generator_forward.15} parent=0 // loop_exit
    _

// kernel: generator_forward.16
$region0: #{generator_forward.16}
  #allocation0 [shape = 'u32[]', space=smem, size = 0x4, offset = 0x4, fixed_abs, tag = 'smem constant byte address 0x4 - core index']
  #allocation1 [shape = 'u32[72,128]{1,0:T(1,128)}', space=vmem, size = 0x9000, scoped, tag = 'internal scratch']
  %s0 = inlined_call_operand.vmem [shape: bf16[2,2,18], index: 0, kind: input, shape index: {}]
  %s1 = inlined_call_operand.vmem [shape: bf16[8,6], index: 1, kind: input, shape index: {}]
  %s2 = inlined_call_operand.vmem [shape: f32[8,1], index: 2, kind: input, shape index: {}]
  %s3 = inlined_call_operand.vmem [shape: bf16[2,8,16], index: 3, kind: input, shape index: {}]
  %s4 = inlined_call_operand.vmem [shape: bf16[2,8,16], index: 4, kind: output, shape index: {}]
  %s5 = sld [smem:[#allocation0]]
  $region49: #{generator_forward.16} parent=0
    _
  %s7 = ssub.s32 1, %s5
  %s8 = scalar_select 0, %s7, %s5
  loop: start=0, step=1, limit=4
  $region2: #{generator_forward.16} parent=0 // loop_pre_header
    _
  $region3: #{generator_forward.16} parent=0 // loop_header
    %s10 = sphi 0, %s14
    %p11 = scmp.ge.s32.totalorder %s10, 4
    %s17 = sphi 0, %s29
    %s18 = sphi 0, %s25
    %s19 = sphi 0, %s17
    %s20 = sphi 0, %s18
    %s21 = sphi 0, %s19
    %s22 = sphi 0, %s20
    %s34 = sphi 0, %s36
    %s37 = sphi 0, %s34
    %s38 = sphi 0, %s37
    %s54 = sphi 0, %s38
    %s58 = sphi 0, %s58
    %s60 = sphi 0, %s58
    %s61 = sphi 0, %s60
    %s75 = sphi 0, %s61
    %s79 = sphi 0, %s79
    %s81 = sphi 0, %s79
    %s82 = sphi 0, %s81
    %s96 = sphi 0, %s82
    %s104 = sphi 0, %s106
    %s107 = sphi 0, %s104
    %s108 = sphi 0, %s107
    %s124 = sphi 0, %s108
    %s132 = sphi 0, %s134
    %s135 = sphi 0, %s132
    %s136 = sphi 0, %s135
    %s152 = sphi 0, %s136
  $region4: #{generator_forward.16} parent=0 // loop_header_branch
    %13 = sbr.rel (%p11) target = $region8
  $region5: #{generator_forward.16} parent=0 // loop_body
    %s15 = ssub.s32 %s10, 1
    %s16 = ssub.s32 %s10, 2
    %s23 = sadd.s32 1, %s18
    %p24 = scmp.ge.s32.totalorder %s23, 1
    %s25 = scalar_select %p24, 0, %s23
    %s26 = sadd.s32 1, %s17
    %s27 = scalar_select %p24, %s26, %s17
    %p28 = scmp.ge.s32.totalorder %s27, 2
    %s29 = scalar_select %p28, 0, %s27
    %s30 = ssub.s32 %s17, %s29
    %s31 = ssub.s32 %s18, %s25
    %s32 = sor.u32 %s30, %s31
    %p33 = scmp.eq.s32.totalorder %s32, 0
    %s35 = sadd.s32 %s34, 1
    %s36 = scalar_select %p33, %s34, %s35
    %p39 = pneg %p33
    %p40 = scmp.eq.s32.totalorder %s10, 1
    %p41 = por %p39, %p40
    %p42 = scmp.ne.s32.totalorder %s34, %s37
    %p43 = scmp.eq.s32.totalorder %s10, 0
    %p44 = por %p42, %p43
    %p45 = scmp.ne.s32.totalorder %s34, %s37
    %p46 = scmp.eq.s32.totalorder %s15, 1
    %p47 = por %p45, %p46
    %p48 = scmp.ne.s32.totalorder %s37, %s38
    %p49 = scmp.eq.s32.totalorder %s15, 0
    %p50 = por %p48, %p49
    %p51 = scmp.ne.s32.totalorder %s37, %s38
    %p52 = scmp.eq.s32.totalorder %s16, 1
    %p53 = por %p51, %p52
    %p55 = scmp.ne.s32.totalorder %s38, %s54
    %p56 = scmp.eq.s32.totalorder %s16, 0
    %p57 = por %p55, %p56
    %s59 = sadd.s32 %s58, 1
    %p62 = scmp.eq.s32.totalorder %s10, 1
    %p63 = scmp.ne.s32.totalorder %s58, %s60
    %p64 = scmp.eq.s32.totalorder %s10, 0
    %p65 = por %p63, %p64
    %p66 = scmp.ne.s32.totalorder %s58, %s60
    %p67 = scmp.eq.s32.totalorder %s15, 1
    %p68 = por %p66, %p67
    %p69 = scmp.ne.s32.totalorder %s60, %s61
    %p70 = scmp.eq.s32.totalorder %s15, 0
    %p71 = por %p69, %p70
    %p72 = scmp.ne.s32.totalorder %s60, %s61
    %p73 = scmp.eq.s32.totalorder %s16, 1
    %p74 = por %p72, %p73
    %p76 = scmp.ne.s32.totalorder %s61, %s75
    %p77 = scmp.eq.s32.totalorder %s16, 0
    %p78 = por %p76, %p77
    %s80 = sadd.s32 %s79, 1
    %p83 = scmp.eq.s32.totalorder %s10, 1
    %p84 = scmp.ne.s32.totalorder %s79, %s81
    %p85 = scmp.eq.s32.totalorder %s10, 0
    %p86 = por %p84, %p85
    %p87 = scmp.ne.s32.totalorder %s79, %s81
    %p88 = scmp.eq.s32.totalorder %s15, 1
    %p89 = por %p87, %p88
    %p90 = scmp.ne.s32.totalorder %s81, %s82
    %p91 = scmp.eq.s32.totalorder %s15, 0
    %p92 = por %p90, %p91
    %p93 = scmp.ne.s32.totalorder %s81, %s82
    %p94 = scmp.eq.s32.totalorder %s16, 1
    %p95 = por %p93, %p94
    %p97 = scmp.ne.s32.totalorder %s82, %s96
    %p98 = scmp.eq.s32.totalorder %s16, 0
    %p99 = por %p97, %p98
    %s100 = ssub.s32 %s17, %s29
    %s101 = ssub.s32 %s18, %s25
    %s102 = sor.u32 %s100, %s101
    %p103 = scmp.eq.s32.totalorder %s102, 0
    %s105 = sadd.s32 %s104, 1
    %s106 = scalar_select %p103, %s104, %s105
    %p109 = pneg %p103
    %p110 = scmp.eq.s32.totalorder %s10, 1
    %p111 = por %p109, %p110
    %p112 = scmp.ne.s32.totalorder %s104, %s107
    %p113 = scmp.eq.s32.totalorder %s10, 0
    %p114 = por %p112, %p113
    %p115 = scmp.ne.s32.totalorder %s104, %s107
    %p116 = scmp.eq.s32.totalorder %s15, 1
    %p117 = por %p115, %p116
    %p118 = scmp.ne.s32.totalorder %s107, %s108
    %p119 = scmp.eq.s32.totalorder %s15, 0
    %p120 = por %p118, %p119
    %p121 = scmp.ne.s32.totalorder %s107, %s108
    %p122 = scmp.eq.s32.totalorder %s16, 1
    %p123 = por %p121, %p122
    %p125 = scmp.ne.s32.totalorder %s108, %s124
    %p126 = scmp.eq.s32.totalorder %s16, 0
    %p127 = por %p125, %p126
    %s128 = ssub.s32 %s17, %s29
    %s129 = ssub.s32 %s18, %s25
    %s130 = sor.u32 %s128, %s129
    %p131 = scmp.eq.s32.totalorder %s130, 0
    %s133 = sadd.s32 %s132, 1
    %s134 = scalar_select %p131, %s132, %s133
    %p137 = pneg %p131
    %p138 = scmp.eq.s32.totalorder %s10, 1
    %p139 = por %p137, %p138
    %p140 = scmp.ne.s32.totalorder %s132, %s135
    %p141 = scmp.eq.s32.totalorder %s10, 0
    %p142 = por %p140, %p141
    %p143 = scmp.ne.s32.totalorder %s132, %s135
    %p144 = scmp.eq.s32.totalorder %s15, 1
    %p145 = por %p143, %p144
    %p146 = scmp.ne.s32.totalorder %s135, %s136
    %p147 = scmp.eq.s32.totalorder %s15, 0
    %p148 = por %p146, %p147
    %p149 = scmp.ne.s32.totalorder %s135, %s136
    %p150 = scmp.eq.s32.totalorder %s16, 1
    %p151 = por %p149, %p150
    %p153 = scmp.ne.s32.totalorder %s136, %s152
    %p154 = scmp.eq.s32.totalorder %s16, 0
    %p155 = por %p153, %p154
    %p156 = scmp.le.s32.totalorder 1, %s10
    %p157 = scmp.lt.s32.totalorder %s10, 3
    %p158 = pnand %p156, %p157
    %p159 = pneg %p158
    // Predicated region
    $region9: #{generator_forward.16} parent=5 // pred_check
      _
    $region10: #{generator_forward.16} parent=5 // pred_check_branch
      %161 = sbr.rel (%p158) target = $region12
    $region11: #{generator_forward.16} parent=5 // pred_region
      %s162 = ssub.s32 %s10, 1
      // Predicated region
      $region13: #{generator_forward.16} parent=11 // pred_check
        %p163 = pneg %p71
      $region14: #{generator_forward.16} parent=11 // pred_check_branch
        %165 = sbr.rel (%p163) target = $region16
      $region15: #{generator_forward.16} parent=11 // pred_region
        _
      $region16: #{generator_forward.16} parent=11 // pred_fallthru
        _
      // Predicated region
      $region17: #{generator_forward.16} parent=11 // pred_check
        %p166 = pneg %p92
      $region18: #{generator_forward.16} parent=11 // pred_check_branch
        %168 = sbr.rel (%p166) target = $region20
      $region19: #{generator_forward.16} parent=11 // pred_region
        _
      $region20: #{generator_forward.16} parent=11 // pred_fallthru
        _
    $region12: #{generator_forward.16} parent=5 // pred_fallthru
      _
    %p169 = scmp.lt.s32.totalorder %s10, 2
    // Predicated region
    $region21: #{generator_forward.16} parent=5 // pred_check
      %p170 = pneg %p169
    $region22: #{generator_forward.16} parent=5 // pred_check_branch
      %172 = sbr.rel (%p170) target = $region24
    $region23: #{generator_forward.16} parent=5 // pred_region
      // Predicated region
      $region25: #{generator_forward.16} parent=23 // pred_check
        %p173 = pneg %p44
      $region26: #{generator_forward.16} parent=23 // pred_check_branch
        %175 = sbr.rel (%p173) target = $region28
      $region27: #{generator_forward.16} parent=23 // pred_region
        %p176 = scmp.lt.s32.totalorder %s17, 1
        %s177 = scalar_select %p176, %s17, 1
        %p178 = scmp.lt.s32.totalorder %s18, 0
        %s179 = scalar_select %p178, %s18, 0
        %s180 = sadd.s32 %s179, %s177
        %s181 = scalar_lea.vmem %s0, %s180
      $region28: #{generator_forward.16} parent=23 // pred_fallthru
        _
      // Predicated region
      $region29: #{generator_forward.16} parent=23 // pred_check
        %p182 = pneg %p114
      $region30: #{generator_forward.16} parent=23 // pred_check_branch
        %184 = sbr.rel (%p182) target = $region32
      $region31: #{generator_forward.16} parent=23 // pred_region
        %p185 = scmp.lt.s32.totalorder %s17, 1
        %s186 = scalar_select %p185, %s17, 1
        %p187 = scmp.lt.s32.totalorder %s18, 0
        %s188 = scalar_select %p187, %s18, 0
        %s189 = sadd.s32 %s188, %s186
        %s190 = smul.addr %s189, 4
        %s191 = scalar_lea.vmem %s3, %s190
      $region32: #{generator_forward.16} parent=23 // pred_fallthru
        _
    $region24: #{generator_forward.16} parent=5 // pred_fallthru
      _
    %p192 = scmp.le.s32.totalorder 1, %s10
    %p193 = scmp.lt.s32.totalorder %s10, 3
    %p194 = pnand %p192, %p193
    %p195 = pneg %p194
    // Predicated region
    $region33: #{generator_forward.16} parent=5 // pred_check
      _
    $region34: #{generator_forward.16} parent=5 // pred_check_branch
      %197 = sbr.rel (%p194) target = $region36
    $region35: #{generator_forward.16} parent=5 // pred_region
      %s198 = ssub.s32 %s10, 1
      %p199 = scmp.lt.s32.totalorder %s19, 1
      %s200 = scalar_select %p199, %s19, 1
      %p201 = scmp.lt.s32.totalorder %s20, 0
      %s202 = scalar_select %p201, %s20, 0
      %s203 = sadd.s32 %s202, %s200
      %s204 = scalar_lea.vmem %s0, %s203
      %p205 = pneg %p50
      %p206 = pneg %p47
      %p207 = pneg %p71
      %p208 = pneg %p68
      %p209 = pneg %p92
      %p210 = pneg %p89
      %p211 = scmp.lt.s32.totalorder %s19, 1
      %s212 = scalar_select %p211, %s19, 1
      %p213 = scmp.lt.s32.totalorder %s20, 0
      %s214 = scalar_select %p213, %s20, 0
      %s215 = sadd.s32 %s214, %s212
      %s216 = smul.addr %s215, 4
      %s217 = scalar_lea.vmem %s3, %s216
      %p218 = pneg %p120
      %p219 = pneg %p117
      %p220 = pneg %p148
      %p221 = pneg %p145
      %p222 = scmp.lt.s32.totalorder %s19, 1
      %s223 = scalar_select %p222, %s19, 1
      %p224 = scmp.lt.s32.totalorder %s20, 0
      %s225 = scalar_select %p224, %s20, 0
      %s226 = sadd.s32 %s225, %s223
      %s227 = smul.addr %s226, 4
      %s228 = scalar_lea.vmem %s4, %s227
      %p229 = scmp.lt.s32.totalorder %s19, 1
      %s230 = scalar_select %p229, %s19, 1
      %p231 = scmp.lt.s32.totalorder %s20, 0
      %s232 = scalar_select %p231, %s20, 0
      %s233 = sadd.s32 %s232, %s230
      %s234 = scalar_lea.vmem %s0, %s233
      %p235 = scmp.lt.s32.totalorder %s19, 1
      %s236 = scalar_select %p235, %s19, 1
      %p237 = scmp.lt.s32.totalorder %s20, 0
      %s238 = scalar_select %p237, %s20, 0
      %s239 = sadd.s32 %s238, %s236
      %s240 = smul.addr %s239, 4
      %s241 = scalar_lea.vmem %s3, %s240
      %p242 = scmp.lt.s32.totalorder %s19, 1
      %s243 = scalar_select %p242, %s19, 1
      %p244 = scmp.lt.s32.totalorder %s20, 0
      %s245 = scalar_select %p244, %s20, 0
      %s246 = sadd.s32 %s245, %s243
      %s247 = smul.addr %s246, 4
      %s248 = scalar_lea.vmem %s4, %s247
      %v250 = vld [vmem:[%s234] sm:$0x1]
      %v251 = vld [vmem:[%s1] sm:$0xf]
      %v252 = vld [vmem:[%s2] sm:$0xff]
      %s254 = scalar_lea.vmem [#allocation1], 1
      %255 = vst [vmem:[%s254] ss:$9 sm:$0xff] %v250
      %v256 = vld [vmem:[#allocation1] sm:$0xff]
      %258 = vrot.lane.b32.xlu0 %v256, 127
      %v259 = vpop.permute.xlu0 %258
      %s260 = scalar_lea.vmem [#allocation1], 2
      %261 = vst [vmem:[%s260] ss:$9 sm:$0xff] %v250
      %v262 = vld [vmem:[#allocation1] sm:$0xff]
      %264 = vrot.lane.b32.xlu0 %v262, 126
      %v265 = vpop.permute.xlu0 %264
      %vm266 = vcmask 1040384
      %v268 = vsel %vm266, %v250, %v259
      %vm269 = vcmask 1041408
      %v271 = vsel %vm269, %v268, %v265
      %273 = vset.pattern.permute.xlu0 0
      %274 = vperm.xlu0 %273, %v252
      %v275 = vpop.permute.xlu0 %274
      %vm277 = vcmask 48128
      %v279 = vsel %vm277, %v251, 0
      %vm281 = vcmask 1042432
      %v282 = vsel %vm281, %v271, 0
      %284 = vmatpush.bf16.msra.mxu0 0
      %285 = vmatpush.bf16.msra.mxu0 0
      %286 = vmatpush.bf16.msra.mxu0 0
      %287 = vmatpush.bf16.msra.mxu0 0
      %288 = vmatpush.bf16.msra.mxu0 0
      %289 = vmatpush.bf16.msra.mxu0 0
      %290 = vmatpush.bf16.msra.mxu0 0
      %291 = vmatpush.bf16.msra.mxu0 %v282
      %292 = vmatmul.bf16.gmra.mxu0 %v279
      %v293 = vpop.f32.mrf.mxu0
      %v294 = vadd.f32 %v275, %v293
      %v295 = vpop.f32.mrf.mxu0
      %296 = vdwg.mxu0
      %v297 = vld [vmem:[%s241] sm:$0xf]
      %v298 = vunpack.c.l.bf16 %v297
      %v299 = vadd.f32 %v294, %v298
      %v300 = vpack.c.bf16 %v299, %v299
      %vm301 = vcmask 125952
      %302 = vst.msk [vmem:[%s248] sm:$0xf] %vm301, %v300
      %p303 = scmp.lt.s32.totalorder %s19, 1
      %s304 = scalar_select %p303, %s19, 1
      %p305 = scmp.lt.s32.totalorder %s20, 0
      %s306 = scalar_select %p305, %s20, 0
      %s307 = sadd.s32 %s306, %s304
      %s308 = smul.addr %s307, 4
      %s309 = scalar_lea.vmem %s4, %s308
      // Predicated region
      $region37: #{generator_forward.16} parent=35 // pred_check
        %p310 = pneg %p145
      $region38: #{generator_forward.16} parent=35 // pred_check_branch
        %312 = sbr.rel (%p310) target = $region40
      $region39: #{generator_forward.16} parent=35 // pred_region
        _
      $region40: #{generator_forward.16} parent=35 // pred_fallthru
        _
    $region36: #{generator_forward.16} parent=5 // pred_fallthru
      _
    %p313 = scmp.le.s32.totalorder 2, %s10
    // Predicated region
    $region41: #{generator_forward.16} parent=5 // pred_check
      %p314 = pneg %p313
    $region42: #{generator_forward.16} parent=5 // pred_check_branch
      %316 = sbr.rel (%p314) target = $region44
    $region43: #{generator_forward.16} parent=5 // pred_region
      %s317 = ssub.s32 %s10, 2
      // Predicated region
      $region45: #{generator_forward.16} parent=43 // pred_check
        %p318 = pneg %p151
      $region46: #{generator_forward.16} parent=43 // pred_check_branch
        %320 = sbr.rel (%p318) target = $region48
      $region47: #{generator_forward.16} parent=43 // pred_region
        %p321 = scmp.lt.s32.totalorder %s21, 1
        %s322 = scalar_select %p321, %s21, 1
        %p323 = scmp.lt.s32.totalorder %s22, 0
        %s324 = scalar_select %p323, %s22, 0
        %s325 = sadd.s32 %s324, %s322
        %s326 = smul.addr %s325, 4
        %s327 = scalar_lea.vmem %s4, %s326
      $region48: #{generator_forward.16} parent=43 // pred_fallthru
        _
    $region44: #{generator_forward.16} parent=5 // pred_fallthru
      _
  $region6: #{generator_forward.16} parent=0 // loop_footer
    %s14 = sadd.s32 1, %s10
  $region7: #{generator_forward.16} parent=0 // loop_footer_branch
    %9 = sbr.rel target = $region3
  $region8: #{generator_forward.16} parent=0 // loop_exit
    _

// kernel: generator_forward.19
$region0: #{generator_forward.19}
  #allocation0 [shape = 'u32[]', space=smem, size = 0x4, offset = 0x4, fixed_abs, tag = 'smem constant byte address 0x4 - core index']
  #allocation1 [shape = 'u32[72,128]{1,0:T(1,128)}', space=vmem, size = 0x9000, scoped, tag = 'internal scratch']
  %s0 = inlined_call_operand.vmem [shape: bf16[2,8,18], index: 0, kind: input, shape index: {}]
  %s1 = inlined_call_operand.vmem [shape: bf16[8,24], index: 1, kind: input, shape index: {}]
  %s2 = inlined_call_operand.vmem [shape: f32[8,1], index: 2, kind: input, shape index: {}]
  %s3 = inlined_call_operand.vmem [shape: bf16[2,8,16], index: 3, kind: output, shape index: {}]
  %s4 = sld [smem:[#allocation0]]
  $region45: #{generator_forward.19} parent=0
    _
  %s6 = ssub.s32 1, %s4
  %s7 = scalar_select 0, %s6, %s4
  loop: start=0, step=1, limit=4
  $region2: #{generator_forward.19} parent=0 // loop_pre_header
    _
  $region3: #{generator_forward.19} parent=0 // loop_header
    %s9 = sphi 0, %s13
    %p10 = scmp.ge.s32.totalorder %s9, 4
    %s16 = sphi 0, %s28
    %s17 = sphi 0, %s24
    %s18 = sphi 0, %s16
    %s19 = sphi 0, %s17
    %s20 = sphi 0, %s18
    %s21 = sphi 0, %s19
    %s33 = sphi 0, %s35
    %s36 = sphi 0, %s33
    %s37 = sphi 0, %s36
    %s53 = sphi 0, %s37
    %s57 = sphi 0, %s57
    %s59 = sphi 0, %s57
    %s60 = sphi 0, %s59
    %s74 = sphi 0, %s60
    %s78 = sphi 0, %s78
    %s80 = sphi 0, %s78
    %s81 = sphi 0, %s80
    %s95 = sphi 0, %s81
    %s103 = sphi 0, %s105
    %s106 = sphi 0, %s103
    %s107 = sphi 0, %s106
    %s123 = sphi 0, %s107
  $region4: #{generator_forward.19} parent=0 // loop_header_branch
    %12 = sbr.rel (%p10) target = $region8
  $region5: #{generator_forward.19} parent=0 // loop_body
    %s14 = ssub.s32 %s9, 1
    %s15 = ssub.s32 %s9, 2
    %s22 = sadd.s32 1, %s17
    %p23 = scmp.ge.s32.totalorder %s22, 1
    %s24 = scalar_select %p23, 0, %s22
    %s25 = sadd.s32 1, %s16
    %s26 = scalar_select %p23, %s25, %s16
    %p27 = scmp.ge.s32.totalorder %s26, 2
    %s28 = scalar_select %p27, 0, %s26
    %s29 = ssub.s32 %s16, %s28
    %s30 = ssub.s32 %s17, %s24
    %s31 = sor.u32 %s29, %s30
    %p32 = scmp.eq.s32.totalorder %s31, 0
    %s34 = sadd.s32 %s33, 1
    %s35 = scalar_select %p32, %s33, %s34
    %p38 = pneg %p32
    %p39 = scmp.eq.s32.totalorder %s9, 1
    %p40 = por %p38, %p39
    %p41 = scmp.ne.s32.totalorder %s33, %s36
    %p42 = scmp.eq.s32.totalorder %s9, 0
    %p43 = por %p41, %p42
    %p44 = scmp.ne.s32.totalorder %s33, %s36
    %p45 = scmp.eq.s32.totalorder %s14, 1
    %p46 = por %p44, %p45
    %p47 = scmp.ne.s32.totalorder %s36, %s37
    %p48 = scmp.eq.s32.totalorder %s14, 0
    %p49 = por %p47, %p48
    %p50 = scmp.ne.s32.totalorder %s36, %s37
    %p51 = scmp.eq.s32.totalorder %s15, 1
    %p52 = por %p50, %p51
    %p54 = scmp.ne.s32.totalorder %s37, %s53
    %p55 = scmp.eq.s32.totalorder %s15, 0
    %p56 = por %p54, %p55
    %s58 = sadd.s32 %s57, 1
    %p61 = scmp.eq.s32.totalorder %s9, 1
    %p62 = scmp.ne.s32.totalorder %s57, %s59
    %p63 = scmp.eq.s32.totalorder %s9, 0
    %p64 = por %p62, %p63
    %p65 = scmp.ne.s32.totalorder %s57, %s59
    %p66 = scmp.eq.s32.totalorder %s14, 1
    %p67 = por %p65, %p66
    %p68 = scmp.ne.s32.totalorder %s59, %s60
    %p69 = scmp.eq.s32.totalorder %s14, 0
    %p70 = por %p68, %p69
    %p71 = scmp.ne.s32.totalorder %s59, %s60
    %p72 = scmp.eq.s32.totalorder %s15, 1
    %p73 = por %p71, %p72
    %p75 = scmp.ne.s32.totalorder %s60, %s74
    %p76 = scmp.eq.s32.totalorder %s15, 0
    %p77 = por %p75, %p76
    %s79 = sadd.s32 %s78, 1
    %p82 = scmp.eq.s32.totalorder %s9, 1
    %p83 = scmp.ne.s32.totalorder %s78, %s80
    %p84 = scmp.eq.s32.totalorder %s9, 0
    %p85 = por %p83, %p84
    %p86 = scmp.ne.s32.totalorder %s78, %s80
    %p87 = scmp.eq.s32.totalorder %s14, 1
    %p88 = por %p86, %p87
    %p89 = scmp.ne.s32.totalorder %s80, %s81
    %p90 = scmp.eq.s32.totalorder %s14, 0
    %p91 = por %p89, %p90
    %p92 = scmp.ne.s32.totalorder %s80, %s81
    %p93 = scmp.eq.s32.totalorder %s15, 1
    %p94 = por %p92, %p93
    %p96 = scmp.ne.s32.totalorder %s81, %s95
    %p97 = scmp.eq.s32.totalorder %s15, 0
    %p98 = por %p96, %p97
    %s99 = ssub.s32 %s16, %s28
    %s100 = ssub.s32 %s17, %s24
    %s101 = sor.u32 %s99, %s100
    %p102 = scmp.eq.s32.totalorder %s101, 0
    %s104 = sadd.s32 %s103, 1
    %s105 = scalar_select %p102, %s103, %s104
    %p108 = pneg %p102
    %p109 = scmp.eq.s32.totalorder %s9, 1
    %p110 = por %p108, %p109
    %p111 = scmp.ne.s32.totalorder %s103, %s106
    %p112 = scmp.eq.s32.totalorder %s9, 0
    %p113 = por %p111, %p112
    %p114 = scmp.ne.s32.totalorder %s103, %s106
    %p115 = scmp.eq.s32.totalorder %s14, 1
    %p116 = por %p114, %p115
    %p117 = scmp.ne.s32.totalorder %s106, %s107
    %p118 = scmp.eq.s32.totalorder %s14, 0
    %p119 = por %p117, %p118
    %p120 = scmp.ne.s32.totalorder %s106, %s107
    %p121 = scmp.eq.s32.totalorder %s15, 1
    %p122 = por %p120, %p121
    %p124 = scmp.ne.s32.totalorder %s107, %s123
    %p125 = scmp.eq.s32.totalorder %s15, 0
    %p126 = por %p124, %p125
    %p127 = scmp.le.s32.totalorder 1, %s9
    %p128 = scmp.lt.s32.totalorder %s9, 3
    %p129 = pnand %p127, %p128
    %p130 = pneg %p129
    // Predicated region
    $region9: #{generator_forward.19} parent=5 // pred_check
      _
    $region10: #{generator_forward.19} parent=5 // pred_check_branch
      %132 = sbr.rel (%p129) target = $region12
    $region11: #{generator_forward.19} parent=5 // pred_region
      %s133 = ssub.s32 %s9, 1
      // Predicated region
      $region13: #{generator_forward.19} parent=11 // pred_check
        %p134 = pneg %p70
      $region14: #{generator_forward.19} parent=11 // pred_check_branch
        %136 = sbr.rel (%p134) target = $region16
      $region15: #{generator_forward.19} parent=11 // pred_region
        _
      $region16: #{generator_forward.19} parent=11 // pred_fallthru
        _
      // Predicated region
      $region17: #{generator_forward.19} parent=11 // pred_check
        %p137 = pneg %p91
      $region18: #{generator_forward.19} parent=11 // pred_check_branch
        %139 = sbr.rel (%p137) target = $region20
      $region19: #{generator_forward.19} parent=11 // pred_region
        _
      $region20: #{generator_forward.19} parent=11 // pred_fallthru
        _
    $region12: #{generator_forward.19} parent=5 // pred_fallthru
      _
    %p140 = scmp.lt.s32.totalorder %s9, 2
    // Predicated region
    $region21: #{generator_forward.19} parent=5 // pred_check
      %p141 = pneg %p140
    $region22: #{generator_forward.19} parent=5 // pred_check_branch
      %143 = sbr.rel (%p141) target = $region24
    $region23: #{generator_forward.19} parent=5 // pred_region
      // Predicated region
      $region25: #{generator_forward.19} parent=23 // pred_check
        %p144 = pneg %p43
      $region26: #{generator_forward.19} parent=23 // pred_check_branch
        %146 = sbr.rel (%p144) target = $region28
      $region27: #{generator_forward.19} parent=23 // pred_region
        %p147 = scmp.lt.s32.totalorder %s16, 1
        %s148 = scalar_select %p147, %s16, 1
        %p149 = scmp.lt.s32.totalorder %s17, 0
        %s150 = scalar_select %p149, %s17, 0
        %s151 = sadd.s32 %s150, %s148
        %s152 = smul.addr %s151, 4
        %s153 = scalar_lea.vmem %s0, %s152
      $region28: #{generator_forward.19} parent=23 // pred_fallthru
        _
    $region24: #{generator_forward.19} parent=5 // pred_fallthru
      _
    %p154 = scmp.le.s32.totalorder 1, %s9
    %p155 = scmp.lt.s32.totalorder %s9, 3
    %p156 = pnand %p154, %p155
    %p157 = pneg %p156
    // Predicated region
    $region29: #{generator_forward.19} parent=5 // pred_check
      _
    $region30: #{generator_forward.19} parent=5 // pred_check_branch
      %159 = sbr.rel (%p156) target = $region32
    $region31: #{generator_forward.19} parent=5 // pred_region
      %s160 = ssub.s32 %s9, 1
      %p161 = scmp.lt.s32.totalorder %s18, 1
      %s162 = scalar_select %p161, %s18, 1
      %p163 = scmp.lt.s32.totalorder %s19, 0
      %s164 = scalar_select %p163, %s19, 0
      %s165 = sadd.s32 %s164, %s162
      %s166 = smul.addr %s165, 4
      %s167 = scalar_lea.vmem %s0, %s166
      %p168 = pneg %p49
      %p169 = pneg %p46
      %p170 = pneg %p70
      %p171 = pneg %p67
      %p172 = pneg %p91
      %p173 = pneg %p88
      %p174 = pneg %p119
      %p175 = pneg %p116
      %p176 = scmp.lt.s32.totalorder %s18, 1
      %s177 = scalar_select %p176, %s18, 1
      %p178 = scmp.lt.s32.totalorder %s19, 0
      %s179 = scalar_select %p178, %s19, 0
      %s180 = sadd.s32 %s179, %s177
      %s181 = smul.addr %s180, 4
      %s182 = scalar_lea.vmem %s3, %s181
      %p183 = scmp.lt.s32.totalorder %s18, 1
      %s184 = scalar_select %p183, %s18, 1
      %p185 = scmp.lt.s32.totalorder %s19, 0
      %s186 = scalar_select %p185, %s19, 0
      %s187 = sadd.s32 %s186, %s184
      %s188 = smul.addr %s187, 4
      %s189 = scalar_lea.vmem %s0, %s188
      %p190 = scmp.lt.s32.totalorder %s18, 1
      %s191 = scalar_select %p190, %s18, 1
      %p192 = scmp.lt.s32.totalorder %s19, 0
      %s193 = scalar_select %p192, %s19, 0
      %s194 = sadd.s32 %s193, %s191
      %s195 = smul.addr %s194, 4
      %s196 = scalar_lea.vmem %s3, %s195
      %v198 = vld [vmem:[%s189] sm:$0xf]
      %v199 = vunpack.c.l.bf16 %v198
      %vm200 = vcmp.ge.f32.partialorder %v199, 0.0
      %v201 = vmul.f32 %v199, 0.1
      %v202 = vsel %vm200, %v199, %v201
      %v203 = vld [vmem:[%s1] sm:$0xf]
      %v204 = vld [vmem:[%s2] sm:$0xff]
      %v205 = vpack.c.bf16 %v202, %v202
      %v207 = vunpack.c.l.b16 %v205
      %v208 = vpack.c.b16 %v207, %v207
      %209 = vrot.lane.b32.xlu0 %v208, 127
      %v210 = vpop.permute.xlu0 %209
      %211 = vrot.lane.b32.xlu0 %v208, 126
      %v212 = vpop.permute.xlu0 %211
      %vm213 = vcmask 1043456
      %v216 = vsel %vm213, %v205, %v210
      %219 = vset.pattern.permute.xlu0 0
      %220 = vperm.xlu0 %219, %v204
      %v221 = vpop.permute.xlu0 %220
      %vm223 = vcmask 195584
      %v225 = vsel %vm223, %v203, 0
      %v228 = vsel %vm213, %v212, 0
      %230 = vmatpush.bf16.msra.mxu0 0
      %231 = vmatpush.bf16.msra.mxu0 0
      %232 = vmatpush.bf16.msra.mxu0 0
      %233 = vmatpush.bf16.msra.mxu0 0
      %234 = vmatpush.bf16.msra.mxu0 0
      %235 = vmatpush.bf16.msra.mxu0 0
      %236 = vmatpush.bf16.msra.mxu0 %v228
      %237 = vmatpush.bf16.msra.mxu0 %v216
      %238 = vmatmul.bf16.gmra.mxu0 %v225
      %v239 = vpop.f32.mrf.mxu0
      %v240 = vadd.f32 %v221, %v239
      %v241 = vpop.f32.mrf.mxu0
      %242 = vdwg.mxu0
      %v243 = vpack.c.bf16 %v240, %v240
      %vm244 = vcmask 125952
      %245 = vst.msk [vmem:[%s196] sm:$0xf] %vm244, %v243
      %p246 = scmp.lt.s32.totalorder %s18, 1
      %s247 = scalar_select %p246, %s18, 1
      %p248 = scmp.lt.s32.totalorder %s19, 0
      %s249 = scalar_select %p248, %s19, 0
      %s250 = sadd.s32 %s249, %s247
      %s251 = smul.addr %s250, 4
      %s252 = scalar_lea.vmem %s3, %s251
      // Predicated region
      $region33: #{generator_forward.19} parent=31 // pred_check
        %p253 = pneg %p116
      $region34: #{generator_forward.19} parent=31 // pred_check_branch
        %255 = sbr.rel (%p253) target = $region36
      $region35: #{generator_forward.19} parent=31 // pred_region
        _
      $region36: #{generator_forward.19} parent=31 // pred_fallthru
        _
    $region32: #{generator_forward.19} parent=5 // pred_fallthru
      _
    %p256 = scmp.le.s32.totalorder 2, %s9
    // Predicated region
    $region37: #{generator_forward.19} parent=5 // pred_check
      %p257 = pneg %p256
    $region38: #{generator_forward.19} parent=5 // pred_check_branch
      %259 = sbr.rel (%p257) target = $region40
    $region39: #{generator_forward.19} parent=5 // pred_region
      %s260 = ssub.s32 %s9, 2
      // Predicated region
      $region41: #{generator_forward.19} parent=39 // pred_check
        %p261 = pneg %p122
      $region42: #{generator_forward.19} parent=39 // pred_check_branch
        %263 = sbr.rel (%p261) target = $region44
      $region43: #{generator_forward.19} parent=39 // pred_region
        %p264 = scmp.lt.s32.totalorder %s20, 1
        %s265 = scalar_select %p264, %s20, 1
        %p266 = scmp.lt.s32.totalorder %s21, 0
        %s267 = scalar_select %p266, %s21, 0
        %s268 = sadd.s32 %s267, %s265
        %s269 = smul.addr %s268, 4
        %s270 = scalar_lea.vmem %s3, %s269
      $region44: #{generator_forward.19} parent=39 // pred_fallthru
        _
    $region40: #{generator_forward.19} parent=5 // pred_fallthru
      _
  $region6: #{generator_forward.19} parent=0 // loop_footer
    %s13 = sadd.s32 1, %s9
  $region7: #{generator_forward.19} parent=0 // loop_footer_branch
    %8 = sbr.rel target = $region3
  $region8: #{generator_forward.19} parent=0 // loop_exit
    _

// kernel: generator_forward.18
$region0: #{generator_forward.18}
  #allocation0 [shape = 'u32[]', space=smem, size = 0x4, offset = 0x4, fixed_abs, tag = 'smem constant byte address 0x4 - core index']
  #allocation1 [shape = 'u32[72,128]{1,0:T(1,128)}', space=vmem, size = 0x9000, scoped, tag = 'internal scratch']
  %s0 = inlined_call_operand.vmem [shape: bf16[2,8,64], index: 0, kind: input, shape index: {}]
  %s1 = inlined_call_operand.vmem [shape: bf16[6,8,40], index: 1, kind: input, shape index: {}]
  %s2 = inlined_call_operand.vmem [shape: f32[6,8,1], index: 2, kind: input, shape index: {}]
  %s3 = inlined_call_operand.vmem [shape: bf16[2,8,16], index: 3, kind: input, shape index: {}]
  %s4 = inlined_call_operand.vmem [shape: bf16[2,8,16], index: 4, kind: output, shape index: {}]
  %s5 = sld [smem:[#allocation0]]
  $region49: #{generator_forward.18} parent=0
    _
  %s7 = ssub.s32 1, %s5
  %s8 = scalar_select 0, %s7, %s5
  loop: start=0, step=1, limit=4
  $region2: #{generator_forward.18} parent=0 // loop_pre_header
    _
  $region3: #{generator_forward.18} parent=0 // loop_header
    %s10 = sphi 0, %s14
    %p11 = scmp.ge.s32.totalorder %s10, 4
    %s17 = sphi 0, %s29
    %s18 = sphi 0, %s25
    %s19 = sphi 0, %s17
    %s20 = sphi 0, %s18
    %s21 = sphi 0, %s19
    %s22 = sphi 0, %s20
    %s34 = sphi 0, %s36
    %s37 = sphi 0, %s34
    %s38 = sphi 0, %s37
    %s54 = sphi 0, %s38
    %s58 = sphi 0, %s58
    %s60 = sphi 0, %s58
    %s61 = sphi 0, %s60
    %s75 = sphi 0, %s61
    %s79 = sphi 0, %s79
    %s81 = sphi 0, %s79
    %s82 = sphi 0, %s81
    %s96 = sphi 0, %s82
    %s104 = sphi 0, %s106
    %s107 = sphi 0, %s104
    %s108 = sphi 0, %s107
    %s124 = sphi 0, %s108
    %s132 = sphi 0, %s134
    %s135 = sphi 0, %s132
    %s136 = sphi 0, %s135
    %s152 = sphi 0, %s136
  $region4: #{generator_forward.18} parent=0 // loop_header_branch
    %13 = sbr.rel (%p11) target = $region8
  $region5: #{generator_forward.18} parent=0 // loop_body
    %s15 = ssub.s32 %s10, 1
    %s16 = ssub.s32 %s10, 2
    %s23 = sadd.s32 1, %s18
    %p24 = scmp.ge.s32.totalorder %s23, 1
    %s25 = scalar_select %p24, 0, %s23
    %s26 = sadd.s32 1, %s17
    %s27 = scalar_select %p24, %s26, %s17
    %p28 = scmp.ge.s32.totalorder %s27, 2
    %s29 = scalar_select %p28, 0, %s27
    %s30 = ssub.s32 %s17, %s29
    %s31 = ssub.s32 %s18, %s25
    %s32 = sor.u32 %s30, %s31
    %p33 = scmp.eq.s32.totalorder %s32, 0
    %s35 = sadd.s32 %s34, 1
    %s36 = scalar_select %p33, %s34, %s35
    %p39 = pneg %p33
    %p40 = scmp.eq.s32.totalorder %s10, 1
    %p41 = por %p39, %p40
    %p42 = scmp.ne.s32.totalorder %s34, %s37
    %p43 = scmp.eq.s32.totalorder %s10, 0
    %p44 = por %p42, %p43
    %p45 = scmp.ne.s32.totalorder %s34, %s37
    %p46 = scmp.eq.s32.totalorder %s15, 1
    %p47 = por %p45, %p46
    %p48 = scmp.ne.s32.totalorder %s37, %s38
    %p49 = scmp.eq.s32.totalorder %s15, 0
    %p50 = por %p48, %p49
    %p51 = scmp.ne.s32.totalorder %s37, %s38
    %p52 = scmp.eq.s32.totalorder %s16, 1
    %p53 = por %p51, %p52
    %p55 = scmp.ne.s32.totalorder %s38, %s54
    %p56 = scmp.eq.s32.totalorder %s16, 0
    %p57 = por %p55, %p56
    %s59 = sadd.s32 %s58, 1
    %p62 = scmp.eq.s32.totalorder %s10, 1
    %p63 = scmp.ne.s32.totalorder %s58, %s60
    %p64 = scmp.eq.s32.totalorder %s10, 0
    %p65 = por %p63, %p64
    %p66 = scmp.ne.s32.totalorder %s58, %s60
    %p67 = scmp.eq.s32.totalorder %s15, 1
    %p68 = por %p66, %p67
    %p69 = scmp.ne.s32.totalorder %s60, %s61
    %p70 = scmp.eq.s32.totalorder %s15, 0
    %p71 = por %p69, %p70
    %p72 = scmp.ne.s32.totalorder %s60, %s61
    %p73 = scmp.eq.s32.totalorder %s16, 1
    %p74 = por %p72, %p73
    %p76 = scmp.ne.s32.totalorder %s61, %s75
    %p77 = scmp.eq.s32.totalorder %s16, 0
    %p78 = por %p76, %p77
    %s80 = sadd.s32 %s79, 1
    %p83 = scmp.eq.s32.totalorder %s10, 1
    %p84 = scmp.ne.s32.totalorder %s79, %s81
    %p85 = scmp.eq.s32.totalorder %s10, 0
    %p86 = por %p84, %p85
    %p87 = scmp.ne.s32.totalorder %s79, %s81
    %p88 = scmp.eq.s32.totalorder %s15, 1
    %p89 = por %p87, %p88
    %p90 = scmp.ne.s32.totalorder %s81, %s82
    %p91 = scmp.eq.s32.totalorder %s15, 0
    %p92 = por %p90, %p91
    %p93 = scmp.ne.s32.totalorder %s81, %s82
    %p94 = scmp.eq.s32.totalorder %s16, 1
    %p95 = por %p93, %p94
    %p97 = scmp.ne.s32.totalorder %s82, %s96
    %p98 = scmp.eq.s32.totalorder %s16, 0
    %p99 = por %p97, %p98
    %s100 = ssub.s32 %s17, %s29
    %s101 = ssub.s32 %s18, %s25
    %s102 = sor.u32 %s100, %s101
    %p103 = scmp.eq.s32.totalorder %s102, 0
    %s105 = sadd.s32 %s104, 1
    %s106 = scalar_select %p103, %s104, %s105
    %p109 = pneg %p103
    %p110 = scmp.eq.s32.totalorder %s10, 1
    %p111 = por %p109, %p110
    %p112 = scmp.ne.s32.totalorder %s104, %s107
    %p113 = scmp.eq.s32.totalorder %s10, 0
    %p114 = por %p112, %p113
    %p115 = scmp.ne.s32.totalorder %s104, %s107
    %p116 = scmp.eq.s32.totalorder %s15, 1
    %p117 = por %p115, %p116
    %p118 = scmp.ne.s32.totalorder %s107, %s108
    %p119 = scmp.eq.s32.totalorder %s15, 0
    %p120 = por %p118, %p119
    %p121 = scmp.ne.s32.totalorder %s107, %s108
    %p122 = scmp.eq.s32.totalorder %s16, 1
    %p123 = por %p121, %p122
    %p125 = scmp.ne.s32.totalorder %s108, %s124
    %p126 = scmp.eq.s32.totalorder %s16, 0
    %p127 = por %p125, %p126
    %s128 = ssub.s32 %s17, %s29
    %s129 = ssub.s32 %s18, %s25
    %s130 = sor.u32 %s128, %s129
    %p131 = scmp.eq.s32.totalorder %s130, 0
    %s133 = sadd.s32 %s132, 1
    %s134 = scalar_select %p131, %s132, %s133
    %p137 = pneg %p131
    %p138 = scmp.eq.s32.totalorder %s10, 1
    %p139 = por %p137, %p138
    %p140 = scmp.ne.s32.totalorder %s132, %s135
    %p141 = scmp.eq.s32.totalorder %s10, 0
    %p142 = por %p140, %p141
    %p143 = scmp.ne.s32.totalorder %s132, %s135
    %p144 = scmp.eq.s32.totalorder %s15, 1
    %p145 = por %p143, %p144
    %p146 = scmp.ne.s32.totalorder %s135, %s136
    %p147 = scmp.eq.s32.totalorder %s15, 0
    %p148 = por %p146, %p147
    %p149 = scmp.ne.s32.totalorder %s135, %s136
    %p150 = scmp.eq.s32.totalorder %s16, 1
    %p151 = por %p149, %p150
    %p153 = scmp.ne.s32.totalorder %s136, %s152
    %p154 = scmp.eq.s32.totalorder %s16, 0
    %p155 = por %p153, %p154
    %p156 = scmp.le.s32.totalorder 1, %s10
    %p157 = scmp.lt.s32.totalorder %s10, 3
    %p158 = pnand %p156, %p157
    %p159 = pneg %p158
    // Predicated region
    $region9: #{generator_forward.18} parent=5 // pred_check
      _
    $region10: #{generator_forward.18} parent=5 // pred_check_branch
      %161 = sbr.rel (%p158) target = $region12
    $region11: #{generator_forward.18} parent=5 // pred_region
      %s162 = ssub.s32 %s10, 1
      // Predicated region
      $region13: #{generator_forward.18} parent=11 // pred_check
        %p163 = pneg %p71
      $region14: #{generator_forward.18} parent=11 // pred_check_branch
        %165 = sbr.rel (%p163) target = $region16
      $region15: #{generator_forward.18} parent=11 // pred_region
        _
      $region16: #{generator_forward.18} parent=11 // pred_fallthru
        _
      // Predicated region
      $region17: #{generator_forward.18} parent=11 // pred_check
        %p166 = pneg %p92
      $region18: #{generator_forward.18} parent=11 // pred_check_branch
        %168 = sbr.rel (%p166) target = $region20
      $region19: #{generator_forward.18} parent=11 // pred_region
        _
      $region20: #{generator_forward.18} parent=11 // pred_fallthru
        _
    $region12: #{generator_forward.18} parent=5 // pred_fallthru
      _
    %p169 = scmp.lt.s32.totalorder %s10, 2
    // Predicated region
    $region21: #{generator_forward.18} parent=5 // pred_check
      %p170 = pneg %p169
    $region22: #{generator_forward.18} parent=5 // pred_check_branch
      %172 = sbr.rel (%p170) target = $region24
    $region23: #{generator_forward.18} parent=5 // pred_region
      // Predicated region
      $region25: #{generator_forward.18} parent=23 // pred_check
        %p173 = pneg %p44
      $region26: #{generator_forward.18} parent=23 // pred_check_branch
        %175 = sbr.rel (%p173) target = $region28
      $region27: #{generator_forward.18} parent=23 // pred_region
        %p176 = scmp.lt.s32.totalorder %s17, 1
        %s177 = scalar_select %p176, %s17, 1
        %p178 = scmp.lt.s32.totalorder %s18, 0
        %s179 = scalar_select %p178, %s18, 0
        %s180 = sadd.s32 %s179, %s177
        %s181 = smul.addr %s180, 4
        %s182 = scalar_lea.vmem %s0, %s181
      $region28: #{generator_forward.18} parent=23 // pred_fallthru
        _
      // Predicated region
      $region29: #{generator_forward.18} parent=23 // pred_check
        %p183 = pneg %p114
      $region30: #{generator_forward.18} parent=23 // pred_check_branch
        %185 = sbr.rel (%p183) target = $region32
      $region31: #{generator_forward.18} parent=23 // pred_region
        %p186 = scmp.lt.s32.totalorder %s17, 1
        %s187 = scalar_select %p186, %s17, 1
        %p188 = scmp.lt.s32.totalorder %s18, 0
        %s189 = scalar_select %p188, %s18, 0
        %s190 = sadd.s32 %s189, %s187
        %s191 = smul.addr %s190, 4
        %s192 = scalar_lea.vmem %s3, %s191
      $region32: #{generator_forward.18} parent=23 // pred_fallthru
        _
    $region24: #{generator_forward.18} parent=5 // pred_fallthru
      _
    %p193 = scmp.le.s32.totalorder 1, %s10
    %p194 = scmp.lt.s32.totalorder %s10, 3
    %p195 = pnand %p193, %p194
    %p196 = pneg %p195
    // Predicated region
    $region33: #{generator_forward.18} parent=5 // pred_check
      _
    $region34: #{generator_forward.18} parent=5 // pred_check_branch
      %198 = sbr.rel (%p195) target = $region36
    $region35: #{generator_forward.18} parent=5 // pred_region
      %s199 = ssub.s32 %s10, 1
      %p200 = scmp.lt.s32.totalorder %s19, 1
      %s201 = scalar_select %p200, %s19, 1
      %p202 = scmp.lt.s32.totalorder %s20, 0
      %s203 = scalar_select %p202, %s20, 0
      %s204 = sadd.s32 %s203, %s201
      %s205 = smul.addr %s204, 4
      %s206 = scalar_lea.vmem %s0, %s205
      %p207 = pneg %p50
      %p208 = pneg %p47
      %p209 = pneg %p71
      %p210 = pneg %p68
      %p211 = pneg %p92
      %p212 = pneg %p89
      %p213 = scmp.lt.s32.totalorder %s19, 1
      %s214 = scalar_select %p213, %s19, 1
      %p215 = scmp.lt.s32.totalorder %s20, 0
      %s216 = scalar_select %p215, %s20, 0
      %s217 = sadd.s32 %s216, %s214
      %s218 = smul.addr %s217, 4
      %s219 = scalar_lea.vmem %s3, %s218
      %p220 = pneg %p120
      %p221 = pneg %p117
      %p222 = pneg %p148
      %p223 = pneg %p145
      %p224 = scmp.lt.s32.totalorder %s19, 1
      %s225 = scalar_select %p224, %s19, 1
      %p226 = scmp.lt.s32.totalorder %s20, 0
      %s227 = scalar_select %p226, %s20, 0
      %s228 = sadd.s32 %s227, %s225
      %s229 = smul.addr %s228, 4
      %s230 = scalar_lea.vmem %s4, %s229
      %p231 = scmp.lt.s32.totalorder %s19, 1
      %s232 = scalar_select %p231, %s19, 1
      %p233 = scmp.lt.s32.totalorder %s20, 0
      %s234 = scalar_select %p233, %s20, 0
      %s235 = sadd.s32 %s234, %s232
      %s236 = smul.addr %s235, 4
      %s237 = scalar_lea.vmem %s0, %s236
      %p238 = scmp.lt.s32.totalorder %s19, 1
      %s239 = scalar_select %p238, %s19, 1
      %p240 = scmp.lt.s32.totalorder %s20, 0
      %s241 = scalar_select %p240, %s20, 0
      %s242 = sadd.s32 %s241, %s239
      %s243 = smul.addr %s242, 4
      %s244 = scalar_lea.vmem %s3, %s243
      %p245 = scmp.lt.s32.totalorder %s19, 1
      %s246 = scalar_select %p245, %s19, 1
      %p247 = scmp.lt.s32.totalorder %s20, 0
      %s248 = scalar_select %p247, %s20, 0
      %s249 = sadd.s32 %s248, %s246
      %s250 = smul.addr %s249, 4
      %s251 = scalar_lea.vmem %s4, %s250
      %s253 = smul.u32 %s20, 16
      %v254 = vld [vmem:[%s237] sm:$0xf]
      %v255 = vunpack.c.l.bf16 %v254
      %vm256 = vcmp.ge.f32.partialorder %v255, 0.0
      %v257 = vmul.f32 %v255, 0.1
      %v258 = vsel %vm256, %v255, %v257
      %v259 = vld [vmem:[%s1] sm:$0xf]
      %v260 = vld [vmem:[%s2] sm:$0xff]
      %v261 = vpack.c.bf16 %v258, %v258
      %v263 = vunpack.c.l.b16 %v261
      %v264 = vpack.c.b16 %v263, %v263
      %265 = vrot.lane.b32.xlu0 %v264, 127
      %v266 = vpop.permute.xlu0 %265
      %267 = vrot.lane.b32.xlu0 %v264, 126
      %v268 = vpop.permute.xlu0 %267
      %269 = vrot.lane.b32.xlu0 %v264, 125
      %v270 = vpop.permute.xlu0 %269
      %271 = vrot.lane.b32.xlu0 %v264, 124
      %v272 = vpop.permute.xlu0 %271
      %vm273 = vcmask 1043456
      %v276 = vsel %vm273, %v261, %v266
      %v280 = vsel %vm273, %v268, %v270
      %283 = vset.pattern.permute.xlu0 0
      %284 = vperm.xlu0 %283, %v260
      %v285 = vpop.permute.xlu0 %284
      %vm287 = vcmask 326656
      %v289 = vsel %vm287, %v259, 0
      %v292 = vsel %vm273, %v272, 0
      %294 = vmatpush.bf16.msra.mxu0 0
      %295 = vmatpush.bf16.msra.mxu0 0
      %296 = vmatpush.bf16.msra.mxu0 0
      %297 = vmatpush.bf16.msra.mxu0 0
      %298 = vmatpush.bf16.msra.mxu0 0
      %299 = vmatpush.bf16.msra.mxu0 %v292
      %300 = vmatpush.bf16.msra.mxu0 %v280
      %301 = vmatpush.bf16.msra.mxu0 %v276
      %302 = vmatmul.bf16.gmra.mxu0 %v289
      %v303 = vpop.f32.mrf.mxu0
      %v304 = vadd.f32 %v285, %v303
      %v305 = vpop.f32.mrf.mxu0
      %306 = vdwg.mxu0
      %s307 = sadd.s32 %s253, 4294967274
      %v308 = vlaneseq
      %v309 = vand.u32 %v308, 127
      %v310 = vstv %s307
      %v311 = vadd.s32 %v310, %v309
      %vm312 = vcmp.ge.s32.totalorder %v311, 0
      %vm313 = vcmp.lt.s32.totalorder %v311, 16
      %vm314 = vmand %vm312, %vm313
      %v315 = vsel %vm314, 1, 0
      %vm316 = vcmp.eq.s32.totalorder %v315, 1
      %v317 = vsel %vm316, %v304, 0.0
      %vm318 = vcmp.ge.f32.partialorder %v317, 0.0
      %v319 = vmul.f32 %v317, 0.1
      %v320 = vsel %vm318, %v317, %v319
      %s321 = scalar_lea.vmem %s1, 4
      %v322 = vld [vmem:[%s321] sm:$0xf]
      %s323 = scalar_lea.vmem %s2, 8
      %v324 = vld [vmem:[%s323] sm:$0xff]
      %v325 = vpack.c.bf16 %v320, %v320
      %v327 = vunpack.c.l.b16 %v325
      %v328 = vpack.c.b16 %v327, %v327
      %329 = vrot.lane.b32.xlu0 %v328, 127
      %v330 = vpop.permute.xlu0 %329
      %331 = vrot.lane.b32.xlu0 %v328, 126
      %v332 = vpop.permute.xlu0 %331
      %333 = vrot.lane.b32.xlu0 %v328, 125
      %v334 = vpop.permute.xlu0 %333
      %335 = vrot.lane.b32.xlu0 %v328, 124
      %v336 = vpop.permute.xlu0 %335
      %v339 = vsel %vm273, %v325, %v330
      %v343 = vsel %vm273, %v332, %v334
      %346 = vset.pattern.permute.xlu0 0
      %347 = vperm.xlu0 %346, %v324
      %v348 = vpop.permute.xlu0 %347
      %v351 = vsel %vm287, %v322, 0
      %v354 = vsel %vm273, %v336, 0
      %356 = vmatpush.bf16.msra.mxu0 0
      %357 = vmatpush.bf16.msra.mxu0 0
      %358 = vmatpush.bf16.msra.mxu0 0
      %359 = vmatpush.bf16.msra.mxu0 0
      %360 = vmatpush.bf16.msra.mxu0 0
      %361 = vmatpush.bf16.msra.mxu0 %v354
      %362 = vmatpush.bf16.msra.mxu0 %v343
      %363 = vmatpush.bf16.msra.mxu0 %v339
      %364 = vmatmul.bf16.gmra.mxu0 %v351
      %v365 = vpop.f32.mrf.mxu0
      %v366 = vadd.f32 %v348, %v365
      %v367 = vpop.f32.mrf.mxu0
      %368 = vdwg.mxu0
      %370 = vrot.lane.b32.xlu0 %v255, 124
      %v371 = vpop.permute.xlu0 %370
      %v373 = vadd.f32 %v366, %v371
      %s374 = sadd.s32 %s253, 4294967276
      %v375 = vstv %s374
      %v376 = vadd.s32 %v375, %v309
      %vm377 = vcmp.ge.s32.totalorder %v376, 0
      %vm378 = vcmp.lt.s32.totalorder %v376, 16
      %vm379 = vmand %vm377, %vm378
      %v380 = vsel %vm379, 1, 0
      %vm381 = vcmp.eq.s32.totalorder %v380, 1
      %v382 = vsel %vm381, %v373, 0.0
      %vm383 = vcmp.ge.f32.partialorder %v382, 0.0
      %v384 = vmul.f32 %v382, 0.1
      %v385 = vsel %vm383, %v382, %v384
      %s386 = scalar_lea.vmem %s1, 8
      %v387 = vld [vmem:[%s386] sm:$0xf]
      %s388 = scalar_lea.vmem %s2, 16
      %v389 = vld [vmem:[%s388] sm:$0xff]
      %v390 = vpack.c.bf16 %v385, %v385
      %v392 = vunpack.c.l.b16 %v390
      %v393 = vpack.c.b16 %v392, %v392
      %394 = vrot.lane.b32.xlu0 %v393, 125
      %v395 = vpop.permute.xlu0 %394
      %396 = vrot.lane.b32.xlu0 %v393, 122
      %v397 = vpop.permute.xlu0 %396
      %398 = vrot.lane.b32.xlu0 %v393, 119
      %v399 = vpop.permute.xlu0 %398
      %400 = vrot.lane.b32.xlu0 %v393, 116
      %v401 = vpop.permute.xlu0 %400
      %v404 = vsel %vm273, %v390, %v395
      %v408 = vsel %vm273, %v397, %v399
      %411 = vset.pattern.permute.xlu0 0
      %412 = vperm.xlu0 %411, %v389
      %v413 = vpop.permute.xlu0 %412
      %v416 = vsel %vm287, %v387, 0
      %v419 = vsel %vm273, %v401, 0
      %421 = vmatpush.bf16.msra.mxu0 0
      %422 = vmatpush.bf16.msra.mxu0 0
      %423 = vmatpush.bf16.msra.mxu0 0
      %424 = vmatpush.bf16.msra.mxu0 0
      %425 = vmatpush.bf16.msra.mxu0 0
      %426 = vmatpush.bf16.msra.mxu0 %v419
      %427 = vmatpush.bf16.msra.mxu0 %v408
      %428 = vmatpush.bf16.msra.mxu0 %v404
      %429 = vmatmul.bf16.gmra.mxu0 %v416
      %v430 = vpop.f32.mrf.mxu0
      %v431 = vadd.f32 %v413, %v430
      %v432 = vpop.f32.mrf.mxu0
      %433 = vdwg.mxu0
      %s434 = sadd.s32 %s253, 4294967282
      %v435 = vstv %s434
      %v436 = vadd.s32 %v435, %v309
      %vm437 = vcmp.ge.s32.totalorder %v436, 0
      %vm438 = vcmp.lt.s32.totalorder %v436, 16
      %vm439 = vmand %vm437, %vm438
      %v440 = vsel %vm439, 1, 0
      %vm441 = vcmp.eq.s32.totalorder %v440, 1
      %v442 = vsel %vm441, %v431, 0.0
      %vm443 = vcmp.ge.f32.partialorder %v442, 0.0
      %v444 = vmul.f32 %v442, 0.1
      %v445 = vsel %vm443, %v442, %v444
      %s446 = scalar_lea.vmem %s1, 12
      %v447 = vld [vmem:[%s446] sm:$0xf]
      %s448 = scalar_lea.vmem %s2, 24
      %v449 = vld [vmem:[%s448] sm:$0xff]
      %v450 = vpack.c.bf16 %v445, %v445
      %v452 = vunpack.c.l.b16 %v450
      %v453 = vpack.c.b16 %v452, %v452
      %454 = vrot.lane.b32.xlu0 %v453, 127
      %v455 = vpop.permute.xlu0 %454
      %456 = vrot.lane.b32.xlu0 %v453, 126
      %v457 = vpop.permute.xlu0 %456
      %458 = vrot.lane.b32.xlu0 %v453, 125
      %v459 = vpop.permute.xlu0 %458
      %460 = vrot.lane.b32.xlu0 %v453, 124
      %v461 = vpop.permute.xlu0 %460
      %v464 = vsel %vm273, %v450, %v455
      %v468 = vsel %vm273, %v457, %v459
      %471 = vset.pattern.permute.xlu0 0
      %472 = vperm.xlu0 %471, %v449
      %v473 = vpop.permute.xlu0 %472
      %v476 = vsel %vm287, %v447, 0
      %v479 = vsel %vm273, %v461, 0
      %481 = vmatpush.bf16.msra.mxu0 0
      %482 = vmatpush.bf16.msra.mxu0 0
      %483 = vmatpush.bf16.msra.mxu0 0
      %484 = vmatpush.bf16.msra.mxu0 0
      %485 = vmatpush.bf16.msra.mxu0 0
      %486 = vmatpush.bf16.msra.mxu0 %v479
      %487 = vmatpush.bf16.msra.mxu0 %v468
      %488 = vmatpush.bf16.msra.mxu0 %v464
      %489 = vmatmul.bf16.gmra.mxu0 %v476
      %v490 = vpop.f32.mrf.mxu0
      %v491 = vadd.f32 %v473, %v490
      %v492 = vpop.f32.mrf.mxu0
      %493 = vdwg.mxu0
      %495 = vrot.lane.b32.xlu0 %v382, 120
      %v496 = vpop.permute.xlu0 %495
      %v498 = vadd.f32 %v491, %v496
      %s499 = sadd.s32 %s253, 4294967284
      %v500 = vstv %s499
      %v501 = vadd.s32 %v500, %v309
      %vm502 = vcmp.ge.s32.totalorder %v501, 0
      %vm503 = vcmp.lt.s32.totalorder %v501, 16
      %vm504 = vmand %vm502, %vm503
      %v505 = vsel %vm504, 1, 0
      %vm506 = vcmp.eq.s32.totalorder %v505, 1
      %v507 = vsel %vm506, %v498, 0.0
      %vm508 = vcmp.ge.f32.partialorder %v507, 0.0
      %v509 = vmul.f32 %v507, 0.1
      %v510 = vsel %vm508, %v507, %v509
      %s511 = scalar_lea.vmem %s1, 16
      %v512 = vld [vmem:[%s511] sm:$0xf]
      %s513 = scalar_lea.vmem %s2, 32
      %v514 = vld [vmem:[%s513] sm:$0xff]
      %v515 = vpack.c.bf16 %v510, %v510
      %v517 = vunpack.c.l.b16 %v515
      %v518 = vpack.c.b16 %v517, %v517
      %519 = vrot.lane.b32.xlu0 %v518, 123
      %v520 = vpop.permute.xlu0 %519
      %521 = vrot.lane.b32.xlu0 %v518, 118
      %v522 = vpop.permute.xlu0 %521
      %523 = vrot.lane.b32.xlu0 %v518, 113
      %v524 = vpop.permute.xlu0 %523
      %525 = vrot.lane.b32.xlu0 %v518, 108
      %v526 = vpop.permute.xlu0 %525
      %v529 = vsel %vm273, %v515, %v520
      %v533 = vsel %vm273, %v522, %v524
      %536 = vset.pattern.permute.xlu0 0
      %537 = vperm.xlu0 %536, %v514
      %v538 = vpop.permute.xlu0 %537
      %v541 = vsel %vm287, %v512, 0
      %v544 = vsel %vm273, %v526, 0
      %546 = vmatpush.bf16.msra.mxu0 0
      %547 = vmatpush.bf16.msra.mxu0 0
      %548 = vmatpush.bf16.msra.mxu0 0
      %549 = vmatpush.bf16.msra.mxu0 0
      %550 = vmatpush.bf16.msra.mxu0 0
      %551 = vmatpush.bf16.msra.mxu0 %v544
      %552 = vmatpush.bf16.msra.mxu0 %v533
      %553 = vmatpush.bf16.msra.mxu0 %v529
      %554 = vmatmul.bf16.gmra.mxu0 %v541
      %v555 = vpop.f32.mrf.mxu0
      %v556 = vadd.f32 %v538, %v555
      %v557 = vpop.f32.mrf.mxu0
      %558 = vdwg.mxu0
      %s559 = sadd.s32 %s253, 4294967294
      %v560 = vstv %s559
      %v561 = vadd.s32 %v560, %v309
      %vm562 = vcmp.ge.s32.totalorder %v561, 0
      %vm563 = vcmp.lt.s32.totalorder %v561, 16
      %vm564 = vmand %vm562, %vm563
      %v565 = vsel %vm564, 1, 0
      %vm566 = vcmp.eq.s32.totalorder %v565, 1
      %v567 = vsel %vm566, %v556, 0.0
      %vm568 = vcmp.ge.f32.partialorder %v567, 0.0
      %v569 = vmul.f32 %v567, 0.1
      %v570 = vsel %vm568, %v567, %v569
      %s571 = scalar_lea.vmem %s1, 20
      %v572 = vld [vmem:[%s571] sm:$0xf]
      %s573 = scalar_lea.vmem %s2, 40
      %v574 = vld [vmem:[%s573] sm:$0xff]
      %v575 = vpack.c.bf16 %v570, %v570
      %v577 = vunpack.c.l.b16 %v575
      %v578 = vpack.c.b16 %v577, %v577
      %579 = vrot.lane.b32.xlu0 %v578, 127
      %v580 = vpop.permute.xlu0 %579
      %581 = vrot.lane.b32.xlu0 %v578, 126
      %v582 = vpop.permute.xlu0 %581
      %583 = vrot.lane.b32.xlu0 %v578, 125
      %v584 = vpop.permute.xlu0 %583
      %585 = vrot.lane.b32.xlu0 %v578, 124
      %v586 = vpop.permute.xlu0 %585
      %v589 = vsel %vm273, %v575, %v580
      %v593 = vsel %vm273, %v582, %v584
      %596 = vset.pattern.permute.xlu0 0
      %597 = vperm.xlu0 %596, %v574
      %v598 = vpop.permute.xlu0 %597
      %v601 = vsel %vm287, %v572, 0
      %v604 = vsel %vm273, %v586, 0
      %606 = vmatpush.bf16.msra.mxu0 0
      %607 = vmatpush.bf16.msra.mxu0 0
      %608 = vmatpush.bf16.msra.mxu0 0
      %609 = vmatpush.bf16.msra.mxu0 0
      %610 = vmatpush.bf16.msra.mxu0 0
      %611 = vmatpush.bf16.msra.mxu0 %v604
      %612 = vmatpush.bf16.msra.mxu0 %v593
      %613 = vmatpush.bf16.msra.mxu0 %v589
      %614 = vmatmul.bf16.gmra.mxu0 %v601
      %v615 = vpop.f32.mrf.mxu0
      %v616 = vadd.f32 %v598, %v615
      %v617 = vpop.f32.mrf.mxu0
      %618 = vdwg.mxu0
      %620 = vrot.lane.b32.xlu0 %v507, 116
      %v621 = vpop.permute.xlu0 %620
      %v623 = vadd.f32 %v616, %v621
      %v624 = vstv %s253
      %v625 = vadd.s32 %v624, %v309
      %vm626 = vcmp.ge.s32.totalorder %v625, 0
      %vm627 = vcmp.lt.s32.totalorder %v625, 16
      %vm628 = vmand %vm626, %vm627
      %v629 = vsel %vm628, 1, 0
      %vm630 = vcmp.eq.s32.totalorder %v629, 1
      %v631 = vsel %vm630, %v623, 0.0
      %v632 = vld [vmem:[%s244] sm:$0xf]
      %v633 = vunpack.c.l.bf16 %v632
      %v634 = vadd.f32 %v631, %v633
      %v635 = vmul.f32 %v634, 0.5
      %v636 = vpack.c.bf16 %v635, %v635
      %vm637 = vcmask 125952
      %638 = vst.msk [vmem:[%s251] sm:$0xf] %vm637, %v636
      %p639 = scmp.lt.s32.totalorder %s19, 1
      %s640 = scalar_select %p639, %s19, 1
      %p641 = scmp.lt.s32.totalorder %s20, 0
      %s642 = scalar_select %p641, %s20, 0
      %s643 = sadd.s32 %s642, %s640
      %s644 = smul.addr %s643, 4
      %s645 = scalar_lea.vmem %s4, %s644
      // Predicated region
      $region37: #{generator_forward.18} parent=35 // pred_check
        %p646 = pneg %p145
      $region38: #{generator_forward.18} parent=35 // pred_check_branch
        %648 = sbr.rel (%p646) target = $region40
      $region39: #{generator_forward.18} parent=35 // pred_region
        _
      $region40: #{generator_forward.18} parent=35 // pred_fallthru
        _
    $region36: #{generator_forward.18} parent=5 // pred_fallthru
      _
    %p649 = scmp.le.s32.totalorder 2, %s10
    // Predicated region
    $region41: #{generator_forward.18} parent=5 // pred_check
      %p650 = pneg %p649
    $region42: #{generator_forward.18} parent=5 // pred_check_branch
      %652 = sbr.rel (%p650) target = $region44
    $region43: #{generator_forward.18} parent=5 // pred_region
      %s653 = ssub.s32 %s10, 2
      // Predicated region
      $region45: #{generator_forward.18} parent=43 // pred_check
        %p654 = pneg %p151
      $region46: #{generator_forward.18} parent=43 // pred_check_branch
        %656 = sbr.rel (%p654) target = $region48
      $region47: #{generator_forward.18} parent=43 // pred_region
        %p657 = scmp.lt.s32.totalorder %s21, 1
        %s658 = scalar_select %p657, %s21, 1
        %p659 = scmp.lt.s32.totalorder %s22, 0
        %s660 = scalar_select %p659, %s22, 0
        %s661 = sadd.s32 %s660, %s658
        %s662 = smul.addr %s661, 4
        %s663 = scalar_lea.vmem %s4, %s662
      $region48: #{generator_forward.18} parent=43 // pred_fallthru
        _
    $region44: #{generator_forward.18} parent=5 // pred_fallthru
      _
  $region6: #{generator_forward.18} parent=0 // loop_footer
    %s14 = sadd.s32 1, %s10
  $region7: #{generator_forward.18} parent=0 // loop_footer_branch
    %9 = sbr.rel target = $region3
  $region8: #{generator_forward.18} parent=0 // loop_exit
    _

// kernel: generator_forward.17
$region0: #{generator_forward.17}
  #allocation0 [shape = 'u32[]', space=smem, size = 0x4, offset = 0x4, fixed_abs, tag = 'smem constant byte address 0x4 - core index']
  #allocation1 [shape = 'u32[72,128]{1,0:T(1,128)}', space=vmem, size = 0x9000, scoped, tag = 'internal scratch']
  %s0 = inlined_call_operand.vmem [shape: bf16[2,8,40], index: 0, kind: input, shape index: {}]
  %s1 = inlined_call_operand.vmem [shape: bf16[6,8,24], index: 1, kind: input, shape index: {}]
  %s2 = inlined_call_operand.vmem [shape: f32[6,8,1], index: 2, kind: input, shape index: {}]
  %s3 = inlined_call_operand.vmem [shape: bf16[2,8,16], index: 3, kind: output, shape index: {}]
  %s4 = sld [smem:[#allocation0]]
  $region45: #{generator_forward.17} parent=0
    _
  %s6 = ssub.s32 1, %s4
  %s7 = scalar_select 0, %s6, %s4
  loop: start=0, step=1, limit=4
  $region2: #{generator_forward.17} parent=0 // loop_pre_header
    _
  $region3: #{generator_forward.17} parent=0 // loop_header
    %s9 = sphi 0, %s13
    %p10 = scmp.ge.s32.totalorder %s9, 4
    %s16 = sphi 0, %s28
    %s17 = sphi 0, %s24
    %s18 = sphi 0, %s16
    %s19 = sphi 0, %s17
    %s20 = sphi 0, %s18
    %s21 = sphi 0, %s19
    %s33 = sphi 0, %s35
    %s36 = sphi 0, %s33
    %s37 = sphi 0, %s36
    %s53 = sphi 0, %s37
    %s57 = sphi 0, %s57
    %s59 = sphi 0, %s57
    %s60 = sphi 0, %s59
    %s74 = sphi 0, %s60
    %s78 = sphi 0, %s78
    %s80 = sphi 0, %s78
    %s81 = sphi 0, %s80
    %s95 = sphi 0, %s81
    %s103 = sphi 0, %s105
    %s106 = sphi 0, %s103
    %s107 = sphi 0, %s106
    %s123 = sphi 0, %s107
  $region4: #{generator_forward.17} parent=0 // loop_header_branch
    %12 = sbr.rel (%p10) target = $region8
  $region5: #{generator_forward.17} parent=0 // loop_body
    %s14 = ssub.s32 %s9, 1
    %s15 = ssub.s32 %s9, 2
    %s22 = sadd.s32 1, %s17
    %p23 = scmp.ge.s32.totalorder %s22, 1
    %s24 = scalar_select %p23, 0, %s22
    %s25 = sadd.s32 1, %s16
    %s26 = scalar_select %p23, %s25, %s16
    %p27 = scmp.ge.s32.totalorder %s26, 2
    %s28 = scalar_select %p27, 0, %s26
    %s29 = ssub.s32 %s16, %s28
    %s30 = ssub.s32 %s17, %s24
    %s31 = sor.u32 %s29, %s30
    %p32 = scmp.eq.s32.totalorder %s31, 0
    %s34 = sadd.s32 %s33, 1
    %s35 = scalar_select %p32, %s33, %s34
    %p38 = pneg %p32
    %p39 = scmp.eq.s32.totalorder %s9, 1
    %p40 = por %p38, %p39
    %p41 = scmp.ne.s32.totalorder %s33, %s36
    %p42 = scmp.eq.s32.totalorder %s9, 0
    %p43 = por %p41, %p42
    %p44 = scmp.ne.s32.totalorder %s33, %s36
    %p45 = scmp.eq.s32.totalorder %s14, 1
    %p46 = por %p44, %p45
    %p47 = scmp.ne.s32.totalorder %s36, %s37
    %p48 = scmp.eq.s32.totalorder %s14, 0
    %p49 = por %p47, %p48
    %p50 = scmp.ne.s32.totalorder %s36, %s37
    %p51 = scmp.eq.s32.totalorder %s15, 1
    %p52 = por %p50, %p51
    %p54 = scmp.ne.s32.totalorder %s37, %s53
    %p55 = scmp.eq.s32.totalorder %s15, 0
    %p56 = por %p54, %p55
    %s58 = sadd.s32 %s57, 1
    %p61 = scmp.eq.s32.totalorder %s9, 1
    %p62 = scmp.ne.s32.totalorder %s57, %s59
    %p63 = scmp.eq.s32.totalorder %s9, 0
    %p64 = por %p62, %p63
    %p65 = scmp.ne.s32.totalorder %s57, %s59
    %p66 = scmp.eq.s32.totalorder %s14, 1
    %p67 = por %p65, %p66
    %p68 = scmp.ne.s32.totalorder %s59, %s60
    %p69 = scmp.eq.s32.totalorder %s14, 0
    %p70 = por %p68, %p69
    %p71 = scmp.ne.s32.totalorder %s59, %s60
    %p72 = scmp.eq.s32.totalorder %s15, 1
    %p73 = por %p71, %p72
    %p75 = scmp.ne.s32.totalorder %s60, %s74
    %p76 = scmp.eq.s32.totalorder %s15, 0
    %p77 = por %p75, %p76
    %s79 = sadd.s32 %s78, 1
    %p82 = scmp.eq.s32.totalorder %s9, 1
    %p83 = scmp.ne.s32.totalorder %s78, %s80
    %p84 = scmp.eq.s32.totalorder %s9, 0
    %p85 = por %p83, %p84
    %p86 = scmp.ne.s32.totalorder %s78, %s80
    %p87 = scmp.eq.s32.totalorder %s14, 1
    %p88 = por %p86, %p87
    %p89 = scmp.ne.s32.totalorder %s80, %s81
    %p90 = scmp.eq.s32.totalorder %s14, 0
    %p91 = por %p89, %p90
    %p92 = scmp.ne.s32.totalorder %s80, %s81
    %p93 = scmp.eq.s32.totalorder %s15, 1
    %p94 = por %p92, %p93
    %p96 = scmp.ne.s32.totalorder %s81, %s95
    %p97 = scmp.eq.s32.totalorder %s15, 0
    %p98 = por %p96, %p97
    %s99 = ssub.s32 %s16, %s28
    %s100 = ssub.s32 %s17, %s24
    %s101 = sor.u32 %s99, %s100
    %p102 = scmp.eq.s32.totalorder %s101, 0
    %s104 = sadd.s32 %s103, 1
    %s105 = scalar_select %p102, %s103, %s104
    %p108 = pneg %p102
    %p109 = scmp.eq.s32.totalorder %s9, 1
    %p110 = por %p108, %p109
    %p111 = scmp.ne.s32.totalorder %s103, %s106
    %p112 = scmp.eq.s32.totalorder %s9, 0
    %p113 = por %p111, %p112
    %p114 = scmp.ne.s32.totalorder %s103, %s106
    %p115 = scmp.eq.s32.totalorder %s14, 1
    %p116 = por %p114, %p115
    %p117 = scmp.ne.s32.totalorder %s106, %s107
    %p118 = scmp.eq.s32.totalorder %s14, 0
    %p119 = por %p117, %p118
    %p120 = scmp.ne.s32.totalorder %s106, %s107
    %p121 = scmp.eq.s32.totalorder %s15, 1
    %p122 = por %p120, %p121
    %p124 = scmp.ne.s32.totalorder %s107, %s123
    %p125 = scmp.eq.s32.totalorder %s15, 0
    %p126 = por %p124, %p125
    %p127 = scmp.le.s32.totalorder 1, %s9
    %p128 = scmp.lt.s32.totalorder %s9, 3
    %p129 = pnand %p127, %p128
    %p130 = pneg %p129
    // Predicated region
    $region9: #{generator_forward.17} parent=5 // pred_check
      _
    $region10: #{generator_forward.17} parent=5 // pred_check_branch
      %132 = sbr.rel (%p129) target = $region12
    $region11: #{generator_forward.17} parent=5 // pred_region
      %s133 = ssub.s32 %s9, 1
      // Predicated region
      $region13: #{generator_forward.17} parent=11 // pred_check
        %p134 = pneg %p70
      $region14: #{generator_forward.17} parent=11 // pred_check_branch
        %136 = sbr.rel (%p134) target = $region16
      $region15: #{generator_forward.17} parent=11 // pred_region
        _
      $region16: #{generator_forward.17} parent=11 // pred_fallthru
        _
      // Predicated region
      $region17: #{generator_forward.17} parent=11 // pred_check
        %p137 = pneg %p91
      $region18: #{generator_forward.17} parent=11 // pred_check_branch
        %139 = sbr.rel (%p137) target = $region20
      $region19: #{generator_forward.17} parent=11 // pred_region
        _
      $region20: #{generator_forward.17} parent=11 // pred_fallthru
        _
    $region12: #{generator_forward.17} parent=5 // pred_fallthru
      _
    %p140 = scmp.lt.s32.totalorder %s9, 2
    // Predicated region
    $region21: #{generator_forward.17} parent=5 // pred_check
      %p141 = pneg %p140
    $region22: #{generator_forward.17} parent=5 // pred_check_branch
      %143 = sbr.rel (%p141) target = $region24
    $region23: #{generator_forward.17} parent=5 // pred_region
      // Predicated region
      $region25: #{generator_forward.17} parent=23 // pred_check
        %p144 = pneg %p43
      $region26: #{generator_forward.17} parent=23 // pred_check_branch
        %146 = sbr.rel (%p144) target = $region28
      $region27: #{generator_forward.17} parent=23 // pred_region
        %p147 = scmp.lt.s32.totalorder %s16, 1
        %s148 = scalar_select %p147, %s16, 1
        %p149 = scmp.lt.s32.totalorder %s17, 0
        %s150 = scalar_select %p149, %s17, 0
        %s151 = sadd.s32 %s150, %s148
        %s152 = smul.addr %s151, 4
        %s153 = scalar_lea.vmem %s0, %s152
      $region28: #{generator_forward.17} parent=23 // pred_fallthru
        _
    $region24: #{generator_forward.17} parent=5 // pred_fallthru
      _
    %p154 = scmp.le.s32.totalorder 1, %s9
    %p155 = scmp.lt.s32.totalorder %s9, 3
    %p156 = pnand %p154, %p155
    %p157 = pneg %p156
    // Predicated region
    $region29: #{generator_forward.17} parent=5 // pred_check
      _
    $region30: #{generator_forward.17} parent=5 // pred_check_branch
      %159 = sbr.rel (%p156) target = $region32
    $region31: #{generator_forward.17} parent=5 // pred_region
      %s160 = ssub.s32 %s9, 1
      %p161 = scmp.lt.s32.totalorder %s18, 1
      %s162 = scalar_select %p161, %s18, 1
      %p163 = scmp.lt.s32.totalorder %s19, 0
      %s164 = scalar_select %p163, %s19, 0
      %s165 = sadd.s32 %s164, %s162
      %s166 = smul.addr %s165, 4
      %s167 = scalar_lea.vmem %s0, %s166
      %p168 = pneg %p49
      %p169 = pneg %p46
      %p170 = pneg %p70
      %p171 = pneg %p67
      %p172 = pneg %p91
      %p173 = pneg %p88
      %p174 = pneg %p119
      %p175 = pneg %p116
      %p176 = scmp.lt.s32.totalorder %s18, 1
      %s177 = scalar_select %p176, %s18, 1
      %p178 = scmp.lt.s32.totalorder %s19, 0
      %s179 = scalar_select %p178, %s19, 0
      %s180 = sadd.s32 %s179, %s177
      %s181 = smul.addr %s180, 4
      %s182 = scalar_lea.vmem %s3, %s181
      %p183 = scmp.lt.s32.totalorder %s18, 1
      %s184 = scalar_select %p183, %s18, 1
      %p185 = scmp.lt.s32.totalorder %s19, 0
      %s186 = scalar_select %p185, %s19, 0
      %s187 = sadd.s32 %s186, %s184
      %s188 = smul.addr %s187, 4
      %s189 = scalar_lea.vmem %s0, %s188
      %p190 = scmp.lt.s32.totalorder %s18, 1
      %s191 = scalar_select %p190, %s18, 1
      %p192 = scmp.lt.s32.totalorder %s19, 0
      %s193 = scalar_select %p192, %s19, 0
      %s194 = sadd.s32 %s193, %s191
      %s195 = smul.addr %s194, 4
      %s196 = scalar_lea.vmem %s3, %s195
      %s198 = smul.u32 %s19, 16
      %v199 = vld [vmem:[%s189] sm:$0xf]
      %v200 = vunpack.c.l.bf16 %v199
      %vm201 = vcmp.ge.f32.partialorder %v200, 0.0
      %v202 = vmul.f32 %v200, 0.1
      %v203 = vsel %vm201, %v200, %v202
      %v204 = vld [vmem:[%s1] sm:$0xf]
      %v205 = vld [vmem:[%s2] sm:$0xff]
      %v206 = vpack.c.bf16 %v203, %v203
      %v208 = vunpack.c.l.b16 %v206
      %v209 = vpack.c.b16 %v208, %v208
      %210 = vrot.lane.b32.xlu0 %v209, 127
      %v211 = vpop.permute.xlu0 %210
      %212 = vrot.lane.b32.xlu0 %v209, 126
      %v213 = vpop.permute.xlu0 %212
      %vm214 = vcmask 1043456
      %v217 = vsel %vm214, %v206, %v211
      %220 = vset.pattern.permute.xlu0 0
      %221 = vperm.xlu0 %220, %v205
      %v222 = vpop.permute.xlu0 %221
      %vm224 = vcmask 195584
      %v226 = vsel %vm224, %v204, 0
      %v229 = vsel %vm214, %v213, 0
      %231 = vmatpush.bf16.msra.mxu0 0
      %232 = vmatpush.bf16.msra.mxu0 0
      %233 = vmatpush.bf16.msra.mxu0 0
      %234 = vmatpush.bf16.msra.mxu0 0
      %235 = vmatpush.bf16.msra.mxu0 0
      %236 = vmatpush.bf16.msra.mxu0 0
      %237 = vmatpush.bf16.msra.mxu0 %v229
      %238 = vmatpush.bf16.msra.mxu0 %v217
      %239 = vmatmul.bf16.gmra.mxu0 %v226
      %v240 = vpop.f32.mrf.mxu0
      %v241 = vadd.f32 %v222, %v240
      %v242 = vpop.f32.mrf.mxu0
      %243 = vdwg.mxu0
      %s244 = sadd.s32 %s198, 4294967285
      %v245 = vlaneseq
      %v246 = vand.u32 %v245, 127
      %v247 = vstv %s244
      %v248 = vadd.s32 %v247, %v246
      %vm249 = vcmp.ge.s32.totalorder %v248, 0
      %vm250 = vcmp.lt.s32.totalorder %v248, 16
      %vm251 = vmand %vm249, %vm250
      %v252 = vsel %vm251, 1, 0
      %vm253 = vcmp.eq.s32.totalorder %v252, 1
      %v254 = vsel %vm253, %v241, 0.0
      %vm255 = vcmp.ge.f32.partialorder %v254, 0.0
      %v256 = vmul.f32 %v254, 0.1
      %v257 = vsel %vm255, %v254, %v256
      %s258 = scalar_lea.vmem %s1, 4
      %v259 = vld [vmem:[%s258] sm:$0xf]
      %s260 = scalar_lea.vmem %s2, 8
      %v261 = vld [vmem:[%s260] sm:$0xff]
      %v262 = vpack.c.bf16 %v257, %v257
      %v264 = vunpack.c.l.b16 %v262
      %v265 = vpack.c.b16 %v264, %v264
      %266 = vrot.lane.b32.xlu0 %v265, 127
      %v267 = vpop.permute.xlu0 %266
      %268 = vrot.lane.b32.xlu0 %v265, 126
      %v269 = vpop.permute.xlu0 %268
      %v272 = vsel %vm214, %v262, %v267
      %275 = vset.pattern.permute.xlu0 0
      %276 = vperm.xlu0 %275, %v261
      %v277 = vpop.permute.xlu0 %276
      %v280 = vsel %vm224, %v259, 0
      %v283 = vsel %vm214, %v269, 0
      %285 = vmatpush.bf16.msra.mxu0 0
      %286 = vmatpush.bf16.msra.mxu0 0
      %287 = vmatpush.bf16.msra.mxu0 0
      %288 = vmatpush.bf16.msra.mxu0 0
      %289 = vmatpush.bf16.msra.mxu0 0
      %290 = vmatpush.bf16.msra.mxu0 0
      %291 = vmatpush.bf16.msra.mxu0 %v283
      %292 = vmatpush.bf16.msra.mxu0 %v272
      %293 = vmatmul.bf16.gmra.mxu0 %v280
      %v294 = vpop.f32.mrf.mxu0
      %v295 = vadd.f32 %v277, %v294
      %v296 = vpop.f32.mrf.mxu0
      %297 = vdwg.mxu0
      %299 = vrot.lane.b32.xlu0 %v200, 126
      %v300 = vpop.permute.xlu0 %299
      %v302 = vadd.f32 %v295, %v300
      %s303 = sadd.s32 %s198, 4294967286
      %v304 = vstv %s303
      %v305 = vadd.s32 %v304, %v246
      %vm306 = vcmp.ge.s32.totalorder %v305, 0
      %vm307 = vcmp.lt.s32.totalorder %v305, 16
      %vm308 = vmand %vm306, %vm307
      %v309 = vsel %vm308, 1, 0
      %vm310 = vcmp.eq.s32.totalorder %v309, 1
      %v311 = vsel %vm310, %v302, 0.0
      %vm312 = vcmp.ge.f32.partialorder %v311, 0.0
      %v313 = vmul.f32 %v311, 0.1
      %v314 = vsel %vm312, %v311, %v313
      %s315 = scalar_lea.vmem %s1, 8
      %v316 = vld [vmem:[%s315] sm:$0xf]
      %s317 = scalar_lea.vmem %s2, 16
      %v318 = vld [vmem:[%s317] sm:$0xff]
      %v319 = vpack.c.bf16 %v314, %v314
      %v321 = vunpack.c.l.b16 %v319
      %v322 = vpack.c.b16 %v321, %v321
      %323 = vrot.lane.b32.xlu0 %v322, 125
      %v324 = vpop.permute.xlu0 %323
      %325 = vrot.lane.b32.xlu0 %v322, 122
      %v326 = vpop.permute.xlu0 %325
      %v329 = vsel %vm214, %v319, %v324
      %332 = vset.pattern.permute.xlu0 0
      %333 = vperm.xlu0 %332, %v318
      %v334 = vpop.permute.xlu0 %333
      %v337 = vsel %vm224, %v316, 0
      %v340 = vsel %vm214, %v326, 0
      %342 = vmatpush.bf16.msra.mxu0 0
      %343 = vmatpush.bf16.msra.mxu0 0
      %344 = vmatpush.bf16.msra.mxu0 0
      %345 = vmatpush.bf16.msra.mxu0 0
      %346 = vmatpush.bf16.msra.mxu0 0
      %347 = vmatpush.bf16.msra.mxu0 0
      %348 = vmatpush.bf16.msra.mxu0 %v340
      %349 = vmatpush.bf16.msra.mxu0 %v329
      %350 = vmatmul.bf16.gmra.mxu0 %v337
      %v351 = vpop.f32.mrf.mxu0
      %v352 = vadd.f32 %v334, %v351
      %v353 = vpop.f32.mrf.mxu0
      %354 = vdwg.mxu0
      %s355 = sadd.s32 %s198, 4294967289
      %v356 = vstv %s355
      %v357 = vadd.s32 %v356, %v246
      %vm358 = vcmp.ge.s32.totalorder %v357, 0
      %vm359 = vcmp.lt.s32.totalorder %v357, 16
      %vm360 = vmand %vm358, %vm359
      %v361 = vsel %vm360, 1, 0
      %vm362 = vcmp.eq.s32.totalorder %v361, 1
      %v363 = vsel %vm362, %v352, 0.0
      %vm364 = vcmp.ge.f32.partialorder %v363, 0.0
      %v365 = vmul.f32 %v363, 0.1
      %v366 = vsel %vm364, %v363, %v365
      %s367 = scalar_lea.vmem %s1, 12
      %v368 = vld [vmem:[%s367] sm:$0xf]
      %s369 = scalar_lea.vmem %s2, 24
      %v370 = vld [vmem:[%s369] sm:$0xff]
      %v371 = vpack.c.bf16 %v366, %v366
      %v373 = vunpack.c.l.b16 %v371
      %v374 = vpack.c.b16 %v373, %v373
      %375 = vrot.lane.b32.xlu0 %v374, 127
      %v376 = vpop.permute.xlu0 %375
      %377 = vrot.lane.b32.xlu0 %v374, 126
      %v378 = vpop.permute.xlu0 %377
      %v381 = vsel %vm214, %v371, %v376
      %384 = vset.pattern.permute.xlu0 0
      %385 = vperm.xlu0 %384, %v370
      %v386 = vpop.permute.xlu0 %385
      %v389 = vsel %vm224, %v368, 0
      %v392 = vsel %vm214, %v378, 0
      %394 = vmatpush.bf16.msra.mxu0 0
      %395 = vmatpush.bf16.msra.mxu0 0
      %396 = vmatpush.bf16.msra.mxu0 0
      %397 = vmatpush.bf16.msra.mxu0 0
      %398 = vmatpush.bf16.msra.mxu0 0
      %399 = vmatpush.bf16.msra.mxu0 0
      %400 = vmatpush.bf16.msra.mxu0 %v392
      %401 = vmatpush.bf16.msra.mxu0 %v381
      %402 = vmatmul.bf16.gmra.mxu0 %v389
      %v403 = vpop.f32.mrf.mxu0
      %v404 = vadd.f32 %v386, %v403
      %v405 = vpop.f32.mrf.mxu0
      %406 = vdwg.mxu0
      %408 = vrot.lane.b32.xlu0 %v311, 124
      %v409 = vpop.permute.xlu0 %408
      %v411 = vadd.f32 %v404, %v409
      %s412 = sadd.s32 %s198, 4294967290
      %v413 = vstv %s412
      %v414 = vadd.s32 %v413, %v246
      %vm415 = vcmp.ge.s32.totalorder %v414, 0
      %vm416 = vcmp.lt.s32.totalorder %v414, 16
      %vm417 = vmand %vm415, %vm416
      %v418 = vsel %vm417, 1, 0
      %vm419 = vcmp.eq.s32.totalorder %v418, 1
      %v420 = vsel %vm419, %v411, 0.0
      %vm421 = vcmp.ge.f32.partialorder %v420, 0.0
      %v422 = vmul.f32 %v420, 0.1
      %v423 = vsel %vm421, %v420, %v422
      %s424 = scalar_lea.vmem %s1, 16
      %v425 = vld [vmem:[%s424] sm:$0xf]
      %s426 = scalar_lea.vmem %s2, 32
      %v427 = vld [vmem:[%s426] sm:$0xff]
      %v428 = vpack.c.bf16 %v423, %v423
      %v430 = vunpack.c.l.b16 %v428
      %v431 = vpack.c.b16 %v430, %v430
      %432 = vrot.lane.b32.xlu0 %v431, 123
      %v433 = vpop.permute.xlu0 %432
      %434 = vrot.lane.b32.xlu0 %v431, 118
      %v435 = vpop.permute.xlu0 %434
      %v438 = vsel %vm214, %v428, %v433
      %441 = vset.pattern.permute.xlu0 0
      %442 = vperm.xlu0 %441, %v427
      %v443 = vpop.permute.xlu0 %442
      %v446 = vsel %vm224, %v425, 0
      %v449 = vsel %vm214, %v435, 0
      %451 = vmatpush.bf16.msra.mxu0 0
      %452 = vmatpush.bf16.msra.mxu0 0
      %453 = vmatpush.bf16.msra.mxu0 0
      %454 = vmatpush.bf16.msra.mxu0 0
      %455 = vmatpush.bf16.msra.mxu0 0
      %456 = vmatpush.bf16.msra.mxu0 0
      %457 = vmatpush.bf16.msra.mxu0 %v449
      %458 = vmatpush.bf16.msra.mxu0 %v438
      %459 = vmatmul.bf16.gmra.mxu0 %v446
      %v460 = vpop.f32.mrf.mxu0
      %v461 = vadd.f32 %v443, %v460
      %v462 = vpop.f32.mrf.mxu0
      %463 = vdwg.mxu0
      %s464 = sadd.s32 %s198, 4294967295
      %v465 = vstv %s464
      %v466 = vadd.s32 %v465, %v246
      %vm467 = vcmp.ge.s32.totalorder %v466, 0
      %vm468 = vcmp.lt.s32.totalorder %v466, 16
      %vm469 = vmand %vm467, %vm468
      %v470 = vsel %vm469, 1, 0
      %vm471 = vcmp.eq.s32.totalorder %v470, 1
      %v472 = vsel %vm471, %v461, 0.0
      %vm473 = vcmp.ge.f32.partialorder %v472, 0.0
      %v474 = vmul.f32 %v472, 0.1
      %v475 = vsel %vm473, %v472, %v474
      %s476 = scalar_lea.vmem %s1, 20
      %v477 = vld [vmem:[%s476] sm:$0xf]
      %s478 = scalar_lea.vmem %s2, 40
      %v479 = vld [vmem:[%s478] sm:$0xff]
      %v480 = vpack.c.bf16 %v475, %v475
      %v482 = vunpack.c.l.b16 %v480
      %v483 = vpack.c.b16 %v482, %v482
      %484 = vrot.lane.b32.xlu0 %v483, 127
      %v485 = vpop.permute.xlu0 %484
      %486 = vrot.lane.b32.xlu0 %v483, 126
      %v487 = vpop.permute.xlu0 %486
      %v490 = vsel %vm214, %v480, %v485
      %493 = vset.pattern.permute.xlu0 0
      %494 = vperm.xlu0 %493, %v479
      %v495 = vpop.permute.xlu0 %494
      %v498 = vsel %vm224, %v477, 0
      %v501 = vsel %vm214, %v487, 0
      %503 = vmatpush.bf16.msra.mxu0 0
      %504 = vmatpush.bf16.msra.mxu0 0
      %505 = vmatpush.bf16.msra.mxu0 0
      %506 = vmatpush.bf16.msra.mxu0 0
      %507 = vmatpush.bf16.msra.mxu0 0
      %508 = vmatpush.bf16.msra.mxu0 0
      %509 = vmatpush.bf16.msra.mxu0 %v501
      %510 = vmatpush.bf16.msra.mxu0 %v490
      %511 = vmatmul.bf16.gmra.mxu0 %v498
      %v512 = vpop.f32.mrf.mxu0
      %v513 = vadd.f32 %v495, %v512
      %v514 = vpop.f32.mrf.mxu0
      %515 = vdwg.mxu0
      %517 = vrot.lane.b32.xlu0 %v420, 122
      %v518 = vpop.permute.xlu0 %517
      %v520 = vadd.f32 %v513, %v518
      %v521 = vstv %s198
      %v522 = vadd.s32 %v521, %v246
      %vm523 = vcmp.ge.s32.totalorder %v522, 0
      %vm524 = vcmp.lt.s32.totalorder %v522, 16
      %vm525 = vmand %vm523, %vm524
      %v526 = vsel %vm525, 1, 0
      %vm527 = vcmp.eq.s32.totalorder %v526, 1
      %v528 = vsel %vm527, %v520, 0.0
      %v529 = vpack.c.bf16 %v528, %v528
      %vm530 = vcmask 125952
      %531 = vst.msk [vmem:[%s196] sm:$0xf] %vm530, %v529
      %p532 = scmp.lt.s32.totalorder %s18, 1
      %s533 = scalar_select %p532, %s18, 1
      %p534 = scmp.lt.s32.totalorder %s19, 0
      %s535 = scalar_select %p534, %s19, 0
      %s536 = sadd.s32 %s535, %s533
      %s537 = smul.addr %s536, 4
      %s538 = scalar_lea.vmem %s3, %s537
      // Predicated region
      $region33: #{generator_forward.17} parent=31 // pred_check
        %p539 = pneg %p116
      $region34: #{generator_forward.17} parent=31 // pred_check_branch
        %541 = sbr.rel (%p539) target = $region36
      $region35: #{generator_forward.17} parent=31 // pred_region
        _
      $region36: #{generator_forward.17} parent=31 // pred_fallthru
        _
    $region32: #{generator_forward.17} parent=5 // pred_fallthru
      _
    %p542 = scmp.le.s32.totalorder 2, %s9
    // Predicated region
    $region37: #{generator_forward.17} parent=5 // pred_check
      %p543 = pneg %p542
    $region38: #{generator_forward.17} parent=5 // pred_check_branch
      %545 = sbr.rel (%p543) target = $region40
    $region39: #{generator_forward.17} parent=5 // pred_region
      %s546 = ssub.s32 %s9, 2
      // Predicated region
      $region41: #{generator_forward.17} parent=39 // pred_check
        %p547 = pneg %p122
      $region42: #{generator_forward.17} parent=39 // pred_check_branch
        %549 = sbr.rel (%p547) target = $region44
      $region43: #{generator_forward.17} parent=39 // pred_region
        %p550 = scmp.lt.s32.totalorder %s20, 1
        %s551 = scalar_select %p550, %s20, 1
        %p552 = scmp.lt.s32.totalorder %s21, 0
        %s553 = scalar_select %p552, %s21, 0
        %s554 = sadd.s32 %s553, %s551
        %s555 = smul.addr %s554, 4
        %s556 = scalar_lea.vmem %s3, %s555
      $region44: #{generator_forward.17} parent=39 // pred_fallthru
        _
    $region40: #{generator_forward.17} parent=5 // pred_fallthru
      _
  $region6: #{generator_forward.17} parent=0 // loop_footer
    %s13 = sadd.s32 1, %s9
  $region7: #{generator_forward.17} parent=0 // loop_footer_branch
    %8 = sbr.rel target = $region3
  $region8: #{generator_forward.17} parent=0 // loop_exit
    _

// kernel: generator_forward.20
$region0: #{generator_forward.20}
  #allocation0 [shape = 'u32[]', space=smem, size = 0x4, offset = 0x4, fixed_abs, tag = 'smem constant byte address 0x4 - core index']
  #allocation1 [shape = 'u32[72,128]{1,0:T(1,128)}', space=vmem, size = 0x9000, scoped, tag = 'internal scratch']
  %s0 = inlined_call_operand.vmem [shape: bf16[2,1,32], index: 0, kind: input, shape index: {}]
  %s1 = inlined_call_operand.vmem [shape: bf16[4,1], index: 1, kind: input, shape index: {}]
  %s2 = inlined_call_operand.vmem [shape: f32[4,1], index: 2, kind: input, shape index: {}]
  %s3 = inlined_call_operand.vmem [shape: bf16[2,4,32], index: 3, kind: input, shape index: {}]
  %s4 = inlined_call_operand.vmem [shape: bf16[2,4,32], index: 4, kind: output, shape index: {}]
  %s5 = sld [smem:[#allocation0]]
  $region49: #{generator_forward.20} parent=0
    _
  %s7 = ssub.s32 1, %s5
  %s8 = scalar_select 0, %s7, %s5
  loop: start=0, step=1, limit=4
  $region2: #{generator_forward.20} parent=0 // loop_pre_header
    _
  $region3: #{generator_forward.20} parent=0 // loop_header
    %s10 = sphi 0, %s14
    %p11 = scmp.ge.s32.totalorder %s10, 4
    %s17 = sphi 0, %s29
    %s18 = sphi 0, %s25
    %s19 = sphi 0, %s17
    %s20 = sphi 0, %s18
    %s21 = sphi 0, %s19
    %s22 = sphi 0, %s20
    %s34 = sphi 0, %s36
    %s37 = sphi 0, %s34
    %s38 = sphi 0, %s37
    %s54 = sphi 0, %s38
    %s58 = sphi 0, %s58
    %s60 = sphi 0, %s58
    %s61 = sphi 0, %s60
    %s75 = sphi 0, %s61
    %s79 = sphi 0, %s79
    %s81 = sphi 0, %s79
    %s82 = sphi 0, %s81
    %s96 = sphi 0, %s82
    %s104 = sphi 0, %s106
    %s107 = sphi 0, %s104
    %s108 = sphi 0, %s107
    %s124 = sphi 0, %s108
    %s132 = sphi 0, %s134
    %s135 = sphi 0, %s132
    %s136 = sphi 0, %s135
    %s152 = sphi 0, %s136
  $region4: #{generator_forward.20} parent=0 // loop_header_branch
    %13 = sbr.rel (%p11) target = $region8
  $region5: #{generator_forward.20} parent=0 // loop_body
    %s15 = ssub.s32 %s10, 1
    %s16 = ssub.s32 %s10, 2
    %s23 = sadd.s32 1, %s18
    %p24 = scmp.ge.s32.totalorder %s23, 1
    %s25 = scalar_select %p24, 0, %s23
    %s26 = sadd.s32 1, %s17
    %s27 = scalar_select %p24, %s26, %s17
    %p28 = scmp.ge.s32.totalorder %s27, 2
    %s29 = scalar_select %p28, 0, %s27
    %s30 = ssub.s32 %s17, %s29
    %s31 = ssub.s32 %s18, %s25
    %s32 = sor.u32 %s30, %s31
    %p33 = scmp.eq.s32.totalorder %s32, 0
    %s35 = sadd.s32 %s34, 1
    %s36 = scalar_select %p33, %s34, %s35
    %p39 = pneg %p33
    %p40 = scmp.eq.s32.totalorder %s10, 1
    %p41 = por %p39, %p40
    %p42 = scmp.ne.s32.totalorder %s34, %s37
    %p43 = scmp.eq.s32.totalorder %s10, 0
    %p44 = por %p42, %p43
    %p45 = scmp.ne.s32.totalorder %s34, %s37
    %p46 = scmp.eq.s32.totalorder %s15, 1
    %p47 = por %p45, %p46
    %p48 = scmp.ne.s32.totalorder %s37, %s38
    %p49 = scmp.eq.s32.totalorder %s15, 0
    %p50 = por %p48, %p49
    %p51 = scmp.ne.s32.totalorder %s37, %s38
    %p52 = scmp.eq.s32.totalorder %s16, 1
    %p53 = por %p51, %p52
    %p55 = scmp.ne.s32.totalorder %s38, %s54
    %p56 = scmp.eq.s32.totalorder %s16, 0
    %p57 = por %p55, %p56
    %s59 = sadd.s32 %s58, 1
    %p62 = scmp.eq.s32.totalorder %s10, 1
    %p63 = scmp.ne.s32.totalorder %s58, %s60
    %p64 = scmp.eq.s32.totalorder %s10, 0
    %p65 = por %p63, %p64
    %p66 = scmp.ne.s32.totalorder %s58, %s60
    %p67 = scmp.eq.s32.totalorder %s15, 1
    %p68 = por %p66, %p67
    %p69 = scmp.ne.s32.totalorder %s60, %s61
    %p70 = scmp.eq.s32.totalorder %s15, 0
    %p71 = por %p69, %p70
    %p72 = scmp.ne.s32.totalorder %s60, %s61
    %p73 = scmp.eq.s32.totalorder %s16, 1
    %p74 = por %p72, %p73
    %p76 = scmp.ne.s32.totalorder %s61, %s75
    %p77 = scmp.eq.s32.totalorder %s16, 0
    %p78 = por %p76, %p77
    %s80 = sadd.s32 %s79, 1
    %p83 = scmp.eq.s32.totalorder %s10, 1
    %p84 = scmp.ne.s32.totalorder %s79, %s81
    %p85 = scmp.eq.s32.totalorder %s10, 0
    %p86 = por %p84, %p85
    %p87 = scmp.ne.s32.totalorder %s79, %s81
    %p88 = scmp.eq.s32.totalorder %s15, 1
    %p89 = por %p87, %p88
    %p90 = scmp.ne.s32.totalorder %s81, %s82
    %p91 = scmp.eq.s32.totalorder %s15, 0
    %p92 = por %p90, %p91
    %p93 = scmp.ne.s32.totalorder %s81, %s82
    %p94 = scmp.eq.s32.totalorder %s16, 1
    %p95 = por %p93, %p94
    %p97 = scmp.ne.s32.totalorder %s82, %s96
    %p98 = scmp.eq.s32.totalorder %s16, 0
    %p99 = por %p97, %p98
    %s100 = ssub.s32 %s17, %s29
    %s101 = ssub.s32 %s18, %s25
    %s102 = sor.u32 %s100, %s101
    %p103 = scmp.eq.s32.totalorder %s102, 0
    %s105 = sadd.s32 %s104, 1
    %s106 = scalar_select %p103, %s104, %s105
    %p109 = pneg %p103
    %p110 = scmp.eq.s32.totalorder %s10, 1
    %p111 = por %p109, %p110
    %p112 = scmp.ne.s32.totalorder %s104, %s107
    %p113 = scmp.eq.s32.totalorder %s10, 0
    %p114 = por %p112, %p113
    %p115 = scmp.ne.s32.totalorder %s104, %s107
    %p116 = scmp.eq.s32.totalorder %s15, 1
    %p117 = por %p115, %p116
    %p118 = scmp.ne.s32.totalorder %s107, %s108
    %p119 = scmp.eq.s32.totalorder %s15, 0
    %p120 = por %p118, %p119
    %p121 = scmp.ne.s32.totalorder %s107, %s108
    %p122 = scmp.eq.s32.totalorder %s16, 1
    %p123 = por %p121, %p122
    %p125 = scmp.ne.s32.totalorder %s108, %s124
    %p126 = scmp.eq.s32.totalorder %s16, 0
    %p127 = por %p125, %p126
    %s128 = ssub.s32 %s17, %s29
    %s129 = ssub.s32 %s18, %s25
    %s130 = sor.u32 %s128, %s129
    %p131 = scmp.eq.s32.totalorder %s130, 0
    %s133 = sadd.s32 %s132, 1
    %s134 = scalar_select %p131, %s132, %s133
    %p137 = pneg %p131
    %p138 = scmp.eq.s32.totalorder %s10, 1
    %p139 = por %p137, %p138
    %p140 = scmp.ne.s32.totalorder %s132, %s135
    %p141 = scmp.eq.s32.totalorder %s10, 0
    %p142 = por %p140, %p141
    %p143 = scmp.ne.s32.totalorder %s132, %s135
    %p144 = scmp.eq.s32.totalorder %s15, 1
    %p145 = por %p143, %p144
    %p146 = scmp.ne.s32.totalorder %s135, %s136
    %p147 = scmp.eq.s32.totalorder %s15, 0
    %p148 = por %p146, %p147
    %p149 = scmp.ne.s32.totalorder %s135, %s136
    %p150 = scmp.eq.s32.totalorder %s16, 1
    %p151 = por %p149, %p150
    %p153 = scmp.ne.s32.totalorder %s136, %s152
    %p154 = scmp.eq.s32.totalorder %s16, 0
    %p155 = por %p153, %p154
    %p156 = scmp.le.s32.totalorder 1, %s10
    %p157 = scmp.lt.s32.totalorder %s10, 3
    %p158 = pnand %p156, %p157
    %p159 = pneg %p158
    // Predicated region
    $region9: #{generator_forward.20} parent=5 // pred_check
      _
    $region10: #{generator_forward.20} parent=5 // pred_check_branch
      %161 = sbr.rel (%p158) target = $region12
    $region11: #{generator_forward.20} parent=5 // pred_region
      %s162 = ssub.s32 %s10, 1
      // Predicated region
      $region13: #{generator_forward.20} parent=11 // pred_check
        %p163 = pneg %p71
      $region14: #{generator_forward.20} parent=11 // pred_check_branch
        %165 = sbr.rel (%p163) target = $region16
      $region15: #{generator_forward.20} parent=11 // pred_region
        _
      $region16: #{generator_forward.20} parent=11 // pred_fallthru
        _
      // Predicated region
      $region17: #{generator_forward.20} parent=11 // pred_check
        %p166 = pneg %p92
      $region18: #{generator_forward.20} parent=11 // pred_check_branch
        %168 = sbr.rel (%p166) target = $region20
      $region19: #{generator_forward.20} parent=11 // pred_region
        _
      $region20: #{generator_forward.20} parent=11 // pred_fallthru
        _
    $region12: #{generator_forward.20} parent=5 // pred_fallthru
      _
    %p169 = scmp.lt.s32.totalorder %s10, 2
    // Predicated region
    $region21: #{generator_forward.20} parent=5 // pred_check
      %p170 = pneg %p169
    $region22: #{generator_forward.20} parent=5 // pred_check_branch
      %172 = sbr.rel (%p170) target = $region24
    $region23: #{generator_forward.20} parent=5 // pred_region
      // Predicated region
      $region25: #{generator_forward.20} parent=23 // pred_check
        %p173 = pneg %p44
      $region26: #{generator_forward.20} parent=23 // pred_check_branch
        %175 = sbr.rel (%p173) target = $region28
      $region27: #{generator_forward.20} parent=23 // pred_region
        %p176 = scmp.lt.s32.totalorder %s17, 1
        %s177 = scalar_select %p176, %s17, 1
        %p178 = scmp.lt.s32.totalorder %s18, 0
        %s179 = scalar_select %p178, %s18, 0
        %s180 = sadd.s32 %s179, %s177
        %s181 = scalar_lea.vmem %s0, %s180
      $region28: #{generator_forward.20} parent=23 // pred_fallthru
        _
      // Predicated region
      $region29: #{generator_forward.20} parent=23 // pred_check
        %p182 = pneg %p114
      $region30: #{generator_forward.20} parent=23 // pred_check_branch
        %184 = sbr.rel (%p182) target = $region32
      $region31: #{generator_forward.20} parent=23 // pred_region
        %p185 = scmp.lt.s32.totalorder %s17, 1
        %s186 = scalar_select %p185, %s17, 1
        %p187 = scmp.lt.s32.totalorder %s18, 0
        %s188 = scalar_select %p187, %s18, 0
        %s189 = sadd.s32 %s188, %s186
        %s190 = smul.addr %s189, 2
        %s191 = scalar_lea.vmem %s3, %s190
      $region32: #{generator_forward.20} parent=23 // pred_fallthru
        _
    $region24: #{generator_forward.20} parent=5 // pred_fallthru
      _
    %p192 = scmp.le.s32.totalorder 1, %s10
    %p193 = scmp.lt.s32.totalorder %s10, 3
    %p194 = pnand %p192, %p193
    %p195 = pneg %p194
    // Predicated region
    $region33: #{generator_forward.20} parent=5 // pred_check
      _
    $region34: #{generator_forward.20} parent=5 // pred_check_branch
      %197 = sbr.rel (%p194) target = $region36
    $region35: #{generator_forward.20} parent=5 // pred_region
      %s198 = ssub.s32 %s10, 1
      %p199 = scmp.lt.s32.totalorder %s19, 1
      %s200 = scalar_select %p199, %s19, 1
      %p201 = scmp.lt.s32.totalorder %s20, 0
      %s202 = scalar_select %p201, %s20, 0
      %s203 = sadd.s32 %s202, %s200
      %s204 = scalar_lea.vmem %s0, %s203
      %p205 = pneg %p50
      %p206 = pneg %p47
      %p207 = pneg %p71
      %p208 = pneg %p68
      %p209 = pneg %p92
      %p210 = pneg %p89
      %p211 = scmp.lt.s32.totalorder %s19, 1
      %s212 = scalar_select %p211, %s19, 1
      %p213 = scmp.lt.s32.totalorder %s20, 0
      %s214 = scalar_select %p213, %s20, 0
      %s215 = sadd.s32 %s214, %s212
      %s216 = smul.addr %s215, 2
      %s217 = scalar_lea.vmem %s3, %s216
      %p218 = pneg %p120
      %p219 = pneg %p117
      %p220 = pneg %p148
      %p221 = pneg %p145
      %p222 = scmp.lt.s32.totalorder %s19, 1
      %s223 = scalar_select %p222, %s19, 1
      %p224 = scmp.lt.s32.totalorder %s20, 0
      %s225 = scalar_select %p224, %s20, 0
      %s226 = sadd.s32 %s225, %s223
      %s227 = smul.addr %s226, 2
      %s228 = scalar_lea.vmem %s4, %s227
      %p229 = scmp.lt.s32.totalorder %s19, 1
      %s230 = scalar_select %p229, %s19, 1
      %p231 = scmp.lt.s32.totalorder %s20, 0
      %s232 = scalar_select %p231, %s20, 0
      %s233 = sadd.s32 %s232, %s230
      %s234 = scalar_lea.vmem %s0, %s233
      %p235 = scmp.lt.s32.totalorder %s19, 1
      %s236 = scalar_select %p235, %s19, 1
      %p237 = scmp.lt.s32.totalorder %s20, 0
      %s238 = scalar_select %p237, %s20, 0
      %s239 = sadd.s32 %s238, %s236
      %s240 = smul.addr %s239, 2
      %s241 = scalar_lea.vmem %s3, %s240
      %p242 = scmp.lt.s32.totalorder %s19, 1
      %s243 = scalar_select %p242, %s19, 1
      %p244 = scmp.lt.s32.totalorder %s20, 0
      %s245 = scalar_select %p244, %s20, 0
      %s246 = sadd.s32 %s245, %s243
      %s247 = smul.addr %s246, 2
      %s248 = scalar_lea.vmem %s4, %s247
      %v249 = vld [vmem:[%s234] sm:$0x1]
      %v250 = vunpack.c.l.bf16 %v249
      %v251 = vld [vmem:[%s1] sm:$0x3]
      %v252 = vld [vmem:[%s2] sm:$0xf]
      %v253 = vunpack.c.l.bf16 %v251
      %255 = vset.pattern.permute.xlu0 0
      %256 = vperm.xlu0 %255, %v253
      %v257 = vpop.permute.xlu0 %256
      %v260 = vunpack.c.l.s4 839922192
      %v261 = vunpack.c.0.s8 %v260
      %v262 = vperm.slane %v257, %v261
      %v263 = vperm.slane %v250, 0
      %v264 = vmul.f32 %v262, %v263
      %266 = vset.pattern.permute.xlu0 0
      %267 = vperm.xlu0 %266, %v252
      %v268 = vpop.permute.xlu0 %267
      %v270 = vadd.f32 %v264, %v268
      %v271 = vld [vmem:[%s241] sm:$0x3]
      %v272 = vunpack.c.l.bf16 %v271
      %v273 = vadd.f32 %v270, %v272
      %v274 = vpack.c.bf16 %v273, %v273
      %vm275 = vcmask 254976
      %276 = vst.msk [vmem:[%s248] sm:$0x3] %vm275, %v274
      %p277 = scmp.lt.s32.totalorder %s19, 1
      %s278 = scalar_select %p277, %s19, 1
      %p279 = scmp.lt.s32.totalorder %s20, 0
      %s280 = scalar_select %p279, %s20, 0
      %s281 = sadd.s32 %s280, %s278
      %s282 = smul.addr %s281, 2
      %s283 = scalar_lea.vmem %s4, %s282
      // Predicated region
      $region37: #{generator_forward.20} parent=35 // pred_check
        %p284 = pneg %p145
      $region38: #{generator_forward.20} parent=35 // pred_check_branch
        %286 = sbr.rel (%p284) target = $region40
      $region39: #{generator_forward.20} parent=35 // pred_region
        _
      $region40: #{generator_forward.20} parent=35 // pred_fallthru
        _
    $region36: #{generator_forward.20} parent=5 // pred_fallthru
      _
    %p287 = scmp.le.s32.totalorder 2, %s10
    // Predicated region
    $region41: #{generator_forward.20} parent=5 // pred_check
      %p288 = pneg %p287
    $region42: #{generator_forward.20} parent=5 // pred_check_branch
      %290 = sbr.rel (%p288) target = $region44
    $region43: #{generator_forward.20} parent=5 // pred_region
      %s291 = ssub.s32 %s10, 2
      // Predicated region
      $region45: #{generator_forward.20} parent=43 // pred_check
        %p292 = pneg %p151
      $region46: #{generator_forward.20} parent=43 // pred_check_branch
        %294 = sbr.rel (%p292) target = $region48
      $region47: #{generator_forward.20} parent=43 // pred_region
        %p295 = scmp.lt.s32.totalorder %s21, 1
        %s296 = scalar_select %p295, %s21, 1
        %p297 = scmp.lt.s32.totalorder %s22, 0
        %s298 = scalar_select %p297, %s22, 0
        %s299 = sadd.s32 %s298, %s296
        %s300 = smul.addr %s299, 2
        %s301 = scalar_lea.vmem %s4, %s300
      $region48: #{generator_forward.20} parent=43 // pred_fallthru
        _
    $region44: #{generator_forward.20} parent=5 // pred_fallthru
      _
  $region6: #{generator_forward.20} parent=0 // loop_footer
    %s14 = sadd.s32 1, %s10
  $region7: #{generator_forward.20} parent=0 // loop_footer_branch
    %9 = sbr.rel target = $region3
  $region8: #{generator_forward.20} parent=0 // loop_exit
    _

// kernel: generator_forward.23
$region0: #{generator_forward.23}
  #allocation0 [shape = 'u32[]', space=smem, size = 0x4, offset = 0x4, fixed_abs, tag = 'smem constant byte address 0x4 - core index']
  #allocation1 [shape = 'u32[72,128]{1,0:T(1,128)}', space=vmem, size = 0x9000, scoped, tag = 'internal scratch']
  #allocation2 [shape = 'f32[1,1]{1,0:T(1,128)S(1)}', space=vmem, size = 0x200, scoped, tag = 'scoped memory for generator_forward.23']
  %s0 = inlined_call_operand.vmem [shape: bf16[2,4,38], index: 0, kind: input, shape index: {}]
  %s1 = inlined_call_operand.vmem [shape: bf16[1,28], index: 1, kind: input, shape index: {}]
  %s2 = inlined_call_operand.<no memory space> [shape: f32[1,1], index: 2, kind: input, shape index: {}]
  %s3 = inlined_call_operand.hbm [shape: f32[2,1,32], index: 3, kind: output, shape index: {}]
  %s4 = sld [smem:[#allocation0]]
  $region45: #{generator_forward.23} parent=0
    _
  %s6 = ssub.s32 1, %s4
  %s7 = scalar_select 0, %s6, %s4
  %v8 = vstv %s2
  %9 = vst [vmem:[#allocation2] sm:$0x1] %v8
  $region1: #{generator_forward.23} parent=0
    #allocation3 [shape = 'u8[1024]{0}', space=vmem, size = 0x400, scoped, tag = 'output window, operand 0']
    #allocation4 [shape = 's32[2]{0}', space=sflag, size = 0x8, scoped, tag = 'scoped memory for generator_forward.23']
    %10 = vsyncpa [#allocation4], 0
    %s11 = scalar_lea.sflag [#allocation4], 1
    %12 = vsyncpa %s11, 0
    loop: start=0, step=1, limit=4
    $region2: #{generator_forward.23} parent=1 // loop_pre_header
      _
    $region3: #{generator_forward.23} parent=1 // loop_header
      %s14 = sphi 0, %s18
      %p15 = scmp.ge.s32.totalorder %s14, 4
      %s21 = sphi 0, %s33
      %s22 = sphi 0, %s29
      %s23 = sphi 0, %s21
      %s24 = sphi 0, %s22
      %s25 = sphi 0, %s23
      %s26 = sphi 0, %s24
      %s38 = sphi 0, %s40
      %s41 = sphi 0, %s38
      %s42 = sphi 0, %s41
      %s58 = sphi 0, %s42
      %s62 = sphi 0, %s62
      %s64 = sphi 0, %s62
      %s65 = sphi 0, %s64
      %s79 = sphi 0, %s65
      %s83 = sphi 0, %s83
      %s85 = sphi 0, %s83
      %s86 = sphi 0, %s85
      %s100 = sphi 0, %s86
      %s108 = sphi 0, %s110
      %s111 = sphi 0, %s108
      %s112 = sphi 0, %s111
      %s128 = sphi 0, %s112
    $region4: #{generator_forward.23} parent=1 // loop_header_branch
      %17 = sbr.rel (%p15) target = $region8
    $region5: #{generator_forward.23} parent=1 // loop_body
      %s19 = ssub.s32 %s14, 1
      %s20 = ssub.s32 %s14, 2
      %s27 = sadd.s32 1, %s22
      %p28 = scmp.ge.s32.totalorder %s27, 1
      %s29 = scalar_select %p28, 0, %s27
      %s30 = sadd.s32 1, %s21
      %s31 = scalar_select %p28, %s30, %s21
      %p32 = scmp.ge.s32.totalorder %s31, 2
      %s33 = scalar_select %p32, 0, %s31
      %s34 = ssub.s32 %s21, %s33
      %s35 = ssub.s32 %s22, %s29
      %s36 = sor.u32 %s34, %s35
      %p37 = scmp.eq.s32.totalorder %s36, 0
      %s39 = sadd.s32 %s38, 1
      %s40 = scalar_select %p37, %s38, %s39
      %p43 = pneg %p37
      %p44 = scmp.eq.s32.totalorder %s14, 1
      %p45 = por %p43, %p44
      %p46 = scmp.ne.s32.totalorder %s38, %s41
      %p47 = scmp.eq.s32.totalorder %s14, 0
      %p48 = por %p46, %p47
      %p49 = scmp.ne.s32.totalorder %s38, %s41
      %p50 = scmp.eq.s32.totalorder %s19, 1
      %p51 = por %p49, %p50
      %p52 = scmp.ne.s32.totalorder %s41, %s42
      %p53 = scmp.eq.s32.totalorder %s19, 0
      %p54 = por %p52, %p53
      %p55 = scmp.ne.s32.totalorder %s41, %s42
      %p56 = scmp.eq.s32.totalorder %s20, 1
      %p57 = por %p55, %p56
      %p59 = scmp.ne.s32.totalorder %s42, %s58
      %p60 = scmp.eq.s32.totalorder %s20, 0
      %p61 = por %p59, %p60
      %s63 = sadd.s32 %s62, 1
      %p66 = scmp.eq.s32.totalorder %s14, 1
      %p67 = scmp.ne.s32.totalorder %s62, %s64
      %p68 = scmp.eq.s32.totalorder %s14, 0
      %p69 = por %p67, %p68
      %p70 = scmp.ne.s32.totalorder %s62, %s64
      %p71 = scmp.eq.s32.totalorder %s19, 1
      %p72 = por %p70, %p71
      %p73 = scmp.ne.s32.totalorder %s64, %s65
      %p74 = scmp.eq.s32.totalorder %s19, 0
      %p75 = por %p73, %p74
      %p76 = scmp.ne.s32.totalorder %s64, %s65
      %p77 = scmp.eq.s32.totalorder %s20, 1
      %p78 = por %p76, %p77
      %p80 = scmp.ne.s32.totalorder %s65, %s79
      %p81 = scmp.eq.s32.totalorder %s20, 0
      %p82 = por %p80, %p81
      %s84 = sadd.s32 %s83, 1
      %p87 = scmp.eq.s32.totalorder %s14, 1
      %p88 = scmp.ne.s32.totalorder %s83, %s85
      %p89 = scmp.eq.s32.totalorder %s14, 0
      %p90 = por %p88, %p89
      %p91 = scmp.ne.s32.totalorder %s83, %s85
      %p92 = scmp.eq.s32.totalorder %s19, 1
      %p93 = por %p91, %p92
      %p94 = scmp.ne.s32.totalorder %s85, %s86
      %p95 = scmp.eq.s32.totalorder %s19, 0
      %p96 = por %p94, %p95
      %p97 = scmp.ne.s32.totalorder %s85, %s86
      %p98 = scmp.eq.s32.totalorder %s20, 1
      %p99 = por %p97, %p98
      %p101 = scmp.ne.s32.totalorder %s86, %s100
      %p102 = scmp.eq.s32.totalorder %s20, 0
      %p103 = por %p101, %p102
      %s104 = ssub.s32 %s21, %s33
      %s105 = ssub.s32 %s22, %s29
      %s106 = sor.u32 %s104, %s105
      %p107 = scmp.eq.s32.totalorder %s106, 0
      %s109 = sadd.s32 %s108, 1
      %s110 = scalar_select %p107, %s108, %s109
      %p113 = pneg %p107
      %p114 = scmp.eq.s32.totalorder %s14, 1
      %p115 = por %p113, %p114
      %p116 = scmp.ne.s32.totalorder %s108, %s111
      %p117 = scmp.eq.s32.totalorder %s14, 0
      %p118 = por %p116, %p117
      %p119 = scmp.ne.s32.totalorder %s108, %s111
      %p120 = scmp.eq.s32.totalorder %s19, 1
      %p121 = por %p119, %p120
      %p122 = scmp.ne.s32.totalorder %s111, %s112
      %p123 = scmp.eq.s32.totalorder %s19, 0
      %p124 = por %p122, %p123
      %p125 = scmp.ne.s32.totalorder %s111, %s112
      %p126 = scmp.eq.s32.totalorder %s20, 1
      %p127 = por %p125, %p126
      %p129 = scmp.ne.s32.totalorder %s112, %s128
      %p130 = scmp.eq.s32.totalorder %s20, 0
      %p131 = por %p129, %p130
      %p132 = scmp.le.s32.totalorder 1, %s14
      %p133 = scmp.lt.s32.totalorder %s14, 3
      %p134 = pnand %p132, %p133
      %p135 = pneg %p134
      // Predicated region
      $region9: #{generator_forward.23} parent=5 // pred_check
        _
      $region10: #{generator_forward.23} parent=5 // pred_check_branch
        %137 = sbr.rel (%p134) target = $region12
      $region11: #{generator_forward.23} parent=5 // pred_region
        %s138 = ssub.s32 %s14, 1
        // Predicated region
        $region13: #{generator_forward.23} parent=11 // pred_check
          %p139 = pneg %p75
        $region14: #{generator_forward.23} parent=11 // pred_check_branch
          %141 = sbr.rel (%p139) target = $region16
        $region15: #{generator_forward.23} parent=11 // pred_region
          _
        $region16: #{generator_forward.23} parent=11 // pred_fallthru
          _
        // Predicated region
        $region17: #{generator_forward.23} parent=11 // pred_check
          %p142 = pneg %p96
        $region18: #{generator_forward.23} parent=11 // pred_check_branch
          %144 = sbr.rel (%p142) target = $region20
        $region19: #{generator_forward.23} parent=11 // pred_region
          _
        $region20: #{generator_forward.23} parent=11 // pred_fallthru
          _
      $region12: #{generator_forward.23} parent=5 // pred_fallthru
        _
      %p145 = scmp.lt.s32.totalorder %s14, 2
      // Predicated region
      $region21: #{generator_forward.23} parent=5 // pred_check
        %p146 = pneg %p145
      $region22: #{generator_forward.23} parent=5 // pred_check_branch
        %148 = sbr.rel (%p146) target = $region24
      $region23: #{generator_forward.23} parent=5 // pred_region
        // Predicated region
        $region25: #{generator_forward.23} parent=23 // pred_check
          %p149 = pneg %p48
        $region26: #{generator_forward.23} parent=23 // pred_check_branch
          %151 = sbr.rel (%p149) target = $region28
        $region27: #{generator_forward.23} parent=23 // pred_region
          %p152 = scmp.lt.s32.totalorder %s21, 1
          %s153 = scalar_select %p152, %s21, 1
          %p154 = scmp.lt.s32.totalorder %s22, 0
          %s155 = scalar_select %p154, %s22, 0
          %s156 = sadd.s32 %s155, %s153
          %s157 = smul.addr %s156, 2
          %s158 = scalar_lea.vmem %s0, %s157
        $region28: #{generator_forward.23} parent=23 // pred_fallthru
          _
      $region24: #{generator_forward.23} parent=5 // pred_fallthru
        _
      %p159 = scmp.le.s32.totalorder 1, %s14
      %p160 = scmp.lt.s32.totalorder %s14, 3
      %p161 = pnand %p159, %p160
      %p162 = pneg %p161
      // Predicated region
      $region29: #{generator_forward.23} parent=5 // pred_check
        _
      $region30: #{generator_forward.23} parent=5 // pred_check_branch
        %164 = sbr.rel (%p161) target = $region32
      $region31: #{generator_forward.23} parent=5 // pred_region
        %s165 = ssub.s32 %s14, 1
        %p166 = scmp.lt.s32.totalorder %s23, 1
        %s167 = scalar_select %p166, %s23, 1
        %p168 = scmp.lt.s32.totalorder %s24, 0
        %s169 = scalar_select %p168, %s24, 0
        %s170 = sadd.s32 %s169, %s167
        %s171 = smul.addr %s170, 2
        %s172 = scalar_lea.vmem %s0, %s171
        %p173 = pneg %p54
        %p174 = pneg %p51
        %p175 = pneg %p75
        %p176 = pneg %p72
        %p177 = pneg %p96
        %p178 = pneg %p93
        %p179 = pneg %p124
        %p180 = pneg %p121
        %s181 = sand.u32 %s111, 1
        %s182 = scalar_lea.sflag [#allocation4], %s181
        %s183 = sand.u32 %s111, 1
        %s184 = scalar_lea.vmem [#allocation3], %s183
        %p185 = scmp.lt.s32.totalorder %s23, 1
        %s186 = scalar_select %p185, %s23, 1
        %p187 = scmp.lt.s32.totalorder %s24, 0
        %s188 = scalar_select %p187, %s24, 0
        %s189 = sadd.s32 %s188, %s186
        %s190 = smul.addr %s189, 2
        %s191 = scalar_lea.vmem %s0, %s190
        %v193 = vld [vmem:[%s191] sm:$0x3]
        %v194 = vunpack.c.l.bf16 %v193
        %vm195 = vcmp.ge.f32.partialorder %v194, 0.0
        %v196 = vmul.f32 %v194, 0.01
        %v197 = vsel %vm195, %v194, %v196
        %v198 = vld [vmem:[%s1] sm:$0x1]
        %v199 = vld [vmem:[#allocation2] sm:$0x1]
        %v200 = vpack.c.bf16 %v197, %v197
        %v202 = vunpack.c.l.b16 %v200
        %v203 = vpack.c.b16 %v202, %v202
        %v204 = vrot.slane %v203, 6
        %205 = vrot.lane.b32.xlu0 %v204, 127
        %v206 = vpop.permute.xlu0 %205
        %207 = vrot.lane.b32.xlu0 %v203, 126
        %v208 = vpop.permute.xlu0 %207
        %v209 = vrot.slane %v203, 2
        %210 = vrot.lane.b32.xlu0 %v209, 125
        %v211 = vpop.permute.xlu0 %210
        %212 = vrot.lane.b32.xlu0 %v203, 124
        %v213 = vpop.permute.xlu0 %212
        %214 = vrot.lane.b32.xlu0 %v204, 123
        %v215 = vpop.permute.xlu0 %214
        %216 = vrot.lane.b32.xlu0 %v203, 122
        %v217 = vpop.permute.xlu0 %216
        %vm218 = vcmask 1041408
        %v221 = vsel %vm218, %v200, %v206
        %vm222 = vcmask 1043456
        %v224 = vsel %vm222, %v221, %v208
        %vm225 = vcmask 1045504
        %v227 = vsel %vm225, %v224, %v211
        %v231 = vsel %vm218, %v213, %v215
        %v233 = vsel %vm222, %v231, %v217
        %235 = vset.pattern.permute.xlu0 0
        %236 = vperm.xlu0 %235, %v199
        %v237 = vpop.permute.xlu0 %236
        %v239 = vperm.slane %v237, 0
        %vm240 = vcmask 228352
        %v242 = vsel %vm240, %v198, 0
        %v244 = vsel %vm225, %v233, 0
        %246 = vmatpush.bf16.msra.mxu0 0
        %247 = vmatpush.bf16.msra.mxu0 0
        %248 = vmatpush.bf16.msra.mxu0 0
        %249 = vmatpush.bf16.msra.mxu0 0
        %250 = vmatpush.bf16.msra.mxu0 0
        %251 = vmatpush.bf16.msra.mxu0 0
        %252 = vmatpush.bf16.msra.mxu0 %v244
        %253 = vmatpush.bf16.msra.mxu0 %v227
        %254 = vmatmul.bf16.gmra.mxu0 %v242
        %v255 = vpop.f32.mrf.mxu0
        %v256 = vadd.f32 %v239, %v255
        %v257 = vpop.f32.mrf.mxu0
        %258 = vdwg.mxu0
        %v259 = vtanh.pop %v256
        %vm260 = vcmask 253952
        %261 = vst.msk [vmem:[%s184] sm:$0x1] %vm260, %v259
        %s262 = sand.u32 %s111, 1
        %s263 = scalar_lea.sflag [#allocation4], %s262
        %s264 = sand.u32 %s111, 1
        %s265 = scalar_lea.vmem [#allocation3], %s264
        // Predicated region
        $region33: #{generator_forward.23} parent=31 // pred_check
          %p266 = pneg %p121
        $region34: #{generator_forward.23} parent=31 // pred_check_branch
          %268 = sbr.rel (%p266) target = $region36
        $region35: #{generator_forward.23} parent=31 // pred_region
          %270 = vsyncadd %s263, 0
          %s271 = sadd.s32 %s24, %s23
          %s272 = scalar_lea.hbm %s3, %s271
          %s274 = sshll.u32 %s265, 4
          %s275 = int_to_ptr.vmem [resolvable:$true] %s274
          %s276 = sshll.u32 %s272, 4
          %s277 = int_to_ptr.hbm [resolvable:$true] %s276
          %279 = dma.vmem_to_hbm [thread:$0]  %s275, 16, %s277, %s263
        $region36: #{generator_forward.23} parent=31 // pred_fallthru
          _
      $region32: #{generator_forward.23} parent=5 // pred_fallthru
        _
      %p280 = scmp.le.s32.totalorder 2, %s14
      // Predicated region
      $region37: #{generator_forward.23} parent=5 // pred_check
        %p281 = pneg %p280
      $region38: #{generator_forward.23} parent=5 // pred_check_branch
        %283 = sbr.rel (%p281) target = $region40
      $region39: #{generator_forward.23} parent=5 // pred_region
        %s284 = ssub.s32 %s14, 2
        // Predicated region
        $region41: #{generator_forward.23} parent=39 // pred_check
          %p285 = pneg %p127
        $region42: #{generator_forward.23} parent=39 // pred_check_branch
          %287 = sbr.rel (%p285) target = $region44
        $region43: #{generator_forward.23} parent=39 // pred_region
          %s288 = sand.u32 %s112, 1
          %s289 = scalar_lea.sflag [#allocation4], %s288
          %s290 = sand.u32 %s112, 1
          %s291 = scalar_lea.vmem [#allocation3], %s290
          %293 = dma.done %s289, 16
        $region44: #{generator_forward.23} parent=39 // pred_fallthru
          _
      $region40: #{generator_forward.23} parent=5 // pred_fallthru
        _
    $region6: #{generator_forward.23} parent=1 // loop_footer
      %s18 = sadd.s32 1, %s14
    $region7: #{generator_forward.23} parent=1 // loop_footer_branch
      %13 = sbr.rel target = $region3
    $region8: #{generator_forward.23} parent=1 // loop_exit
      _
    %294 = vsyncpa [#allocation4], 1
    %s295 = scalar_lea.sflag [#allocation4], 1
    %296 = vsyncpa %s295, 1

// kernel: generator_forward.21
$region0: #{generator_forward.21}
  #allocation0 [shape = 'u32[]', space=smem, size = 0x4, offset = 0x4, fixed_abs, tag = 'smem constant byte address 0x4 - core index']
  #allocation1 [shape = 'u32[72,128]{1,0:T(1,128)}', space=vmem, size = 0x9000, scoped, tag = 'internal scratch']
  %s0 = inlined_call_operand.vmem [shape: bf16[2,4,56], index: 0, kind: input, shape index: {}]
  %s1 = inlined_call_operand.vmem [shape: bf16[6,4,12], index: 1, kind: input, shape index: {}]
  %s2 = inlined_call_operand.vmem [shape: f32[6,4,1], index: 2, kind: input, shape index: {}]
  %s3 = inlined_call_operand.vmem [shape: bf16[2,4,32], index: 3, kind: output, shape index: {}]
  %s4 = sld [smem:[#allocation0]]
  $region45: #{generator_forward.21} parent=0
    _
  %s6 = ssub.s32 1, %s4
  %s7 = scalar_select 0, %s6, %s4
  loop: start=0, step=1, limit=4
  $region2: #{generator_forward.21} parent=0 // loop_pre_header
    _
  $region3: #{generator_forward.21} parent=0 // loop_header
    %s9 = sphi 0, %s13
    %p10 = scmp.ge.s32.totalorder %s9, 4
    %s16 = sphi 0, %s28
    %s17 = sphi 0, %s24
    %s18 = sphi 0, %s16
    %s19 = sphi 0, %s17
    %s20 = sphi 0, %s18
    %s21 = sphi 0, %s19
    %s33 = sphi 0, %s35
    %s36 = sphi 0, %s33
    %s37 = sphi 0, %s36
    %s53 = sphi 0, %s37
    %s57 = sphi 0, %s57
    %s59 = sphi 0, %s57
    %s60 = sphi 0, %s59
    %s74 = sphi 0, %s60
    %s78 = sphi 0, %s78
    %s80 = sphi 0, %s78
    %s81 = sphi 0, %s80
    %s95 = sphi 0, %s81
    %s103 = sphi 0, %s105
    %s106 = sphi 0, %s103
    %s107 = sphi 0, %s106
    %s123 = sphi 0, %s107
  $region4: #{generator_forward.21} parent=0 // loop_header_branch
    %12 = sbr.rel (%p10) target = $region8
  $region5: #{generator_forward.21} parent=0 // loop_body
    %s14 = ssub.s32 %s9, 1
    %s15 = ssub.s32 %s9, 2
    %s22 = sadd.s32 1, %s17
    %p23 = scmp.ge.s32.totalorder %s22, 1
    %s24 = scalar_select %p23, 0, %s22
    %s25 = sadd.s32 1, %s16
    %s26 = scalar_select %p23, %s25, %s16
    %p27 = scmp.ge.s32.totalorder %s26, 2
    %s28 = scalar_select %p27, 0, %s26
    %s29 = ssub.s32 %s16, %s28
    %s30 = ssub.s32 %s17, %s24
    %s31 = sor.u32 %s29, %s30
    %p32 = scmp.eq.s32.totalorder %s31, 0
    %s34 = sadd.s32 %s33, 1
    %s35 = scalar_select %p32, %s33, %s34
    %p38 = pneg %p32
    %p39 = scmp.eq.s32.totalorder %s9, 1
    %p40 = por %p38, %p39
    %p41 = scmp.ne.s32.totalorder %s33, %s36
    %p42 = scmp.eq.s32.totalorder %s9, 0
    %p43 = por %p41, %p42
    %p44 = scmp.ne.s32.totalorder %s33, %s36
    %p45 = scmp.eq.s32.totalorder %s14, 1
    %p46 = por %p44, %p45
    %p47 = scmp.ne.s32.totalorder %s36, %s37
    %p48 = scmp.eq.s32.totalorder %s14, 0
    %p49 = por %p47, %p48
    %p50 = scmp.ne.s32.totalorder %s36, %s37
    %p51 = scmp.eq.s32.totalorder %s15, 1
    %p52 = por %p50, %p51
    %p54 = scmp.ne.s32.totalorder %s37, %s53
    %p55 = scmp.eq.s32.totalorder %s15, 0
    %p56 = por %p54, %p55
    %s58 = sadd.s32 %s57, 1
    %p61 = scmp.eq.s32.totalorder %s9, 1
    %p62 = scmp.ne.s32.totalorder %s57, %s59
    %p63 = scmp.eq.s32.totalorder %s9, 0
    %p64 = por %p62, %p63
    %p65 = scmp.ne.s32.totalorder %s57, %s59
    %p66 = scmp.eq.s32.totalorder %s14, 1
    %p67 = por %p65, %p66
    %p68 = scmp.ne.s32.totalorder %s59, %s60
    %p69 = scmp.eq.s32.totalorder %s14, 0
    %p70 = por %p68, %p69
    %p71 = scmp.ne.s32.totalorder %s59, %s60
    %p72 = scmp.eq.s32.totalorder %s15, 1
    %p73 = por %p71, %p72
    %p75 = scmp.ne.s32.totalorder %s60, %s74
    %p76 = scmp.eq.s32.totalorder %s15, 0
    %p77 = por %p75, %p76
    %s79 = sadd.s32 %s78, 1
    %p82 = scmp.eq.s32.totalorder %s9, 1
    %p83 = scmp.ne.s32.totalorder %s78, %s80
    %p84 = scmp.eq.s32.totalorder %s9, 0
    %p85 = por %p83, %p84
    %p86 = scmp.ne.s32.totalorder %s78, %s80
    %p87 = scmp.eq.s32.totalorder %s14, 1
    %p88 = por %p86, %p87
    %p89 = scmp.ne.s32.totalorder %s80, %s81
    %p90 = scmp.eq.s32.totalorder %s14, 0
    %p91 = por %p89, %p90
    %p92 = scmp.ne.s32.totalorder %s80, %s81
    %p93 = scmp.eq.s32.totalorder %s15, 1
    %p94 = por %p92, %p93
    %p96 = scmp.ne.s32.totalorder %s81, %s95
    %p97 = scmp.eq.s32.totalorder %s15, 0
    %p98 = por %p96, %p97
    %s99 = ssub.s32 %s16, %s28
    %s100 = ssub.s32 %s17, %s24
    %s101 = sor.u32 %s99, %s100
    %p102 = scmp.eq.s32.totalorder %s101, 0
    %s104 = sadd.s32 %s103, 1
    %s105 = scalar_select %p102, %s103, %s104
    %p108 = pneg %p102
    %p109 = scmp.eq.s32.totalorder %s9, 1
    %p110 = por %p108, %p109
    %p111 = scmp.ne.s32.totalorder %s103, %s106
    %p112 = scmp.eq.s32.totalorder %s9, 0
    %p113 = por %p111, %p112
    %p114 = scmp.ne.s32.totalorder %s103, %s106
    %p115 = scmp.eq.s32.totalorder %s14, 1
    %p116 = por %p114, %p115
    %p117 = scmp.ne.s32.totalorder %s106, %s107
    %p118 = scmp.eq.s32.totalorder %s14, 0
    %p119 = por %p117, %p118
    %p120 = scmp.ne.s32.totalorder %s106, %s107
    %p121 = scmp.eq.s32.totalorder %s15, 1
    %p122 = por %p120, %p121
    %p124 = scmp.ne.s32.totalorder %s107, %s123
    %p125 = scmp.eq.s32.totalorder %s15, 0
    %p126 = por %p124, %p125
    %p127 = scmp.le.s32.totalorder 1, %s9
    %p128 = scmp.lt.s32.totalorder %s9, 3
    %p129 = pnand %p127, %p128
    %p130 = pneg %p129
    // Predicated region
    $region9: #{generator_forward.21} parent=5 // pred_check
      _
    $region10: #{generator_forward.21} parent=5 // pred_check_branch
      %132 = sbr.rel (%p129) target = $region12
    $region11: #{generator_forward.21} parent=5 // pred_region
      %s133 = ssub.s32 %s9, 1
      // Predicated region
      $region13: #{generator_forward.21} parent=11 // pred_check
        %p134 = pneg %p70
      $region14: #{generator_forward.21} parent=11 // pred_check_branch
        %136 = sbr.rel (%p134) target = $region16
      $region15: #{generator_forward.21} parent=11 // pred_region
        _
      $region16: #{generator_forward.21} parent=11 // pred_fallthru
        _
      // Predicated region
      $region17: #{generator_forward.21} parent=11 // pred_check
        %p137 = pneg %p91
      $region18: #{generator_forward.21} parent=11 // pred_check_branch
        %139 = sbr.rel (%p137) target = $region20
      $region19: #{generator_forward.21} parent=11 // pred_region
        _
      $region20: #{generator_forward.21} parent=11 // pred_fallthru
        _
    $region12: #{generator_forward.21} parent=5 // pred_fallthru
      _
    %p140 = scmp.lt.s32.totalorder %s9, 2
    // Predicated region
    $region21: #{generator_forward.21} parent=5 // pred_check
      %p141 = pneg %p140
    $region22: #{generator_forward.21} parent=5 // pred_check_branch
      %143 = sbr.rel (%p141) target = $region24
    $region23: #{generator_forward.21} parent=5 // pred_region
      // Predicated region
      $region25: #{generator_forward.21} parent=23 // pred_check
        %p144 = pneg %p43
      $region26: #{generator_forward.21} parent=23 // pred_check_branch
        %146 = sbr.rel (%p144) target = $region28
      $region27: #{generator_forward.21} parent=23 // pred_region
        %p147 = scmp.lt.s32.totalorder %s16, 1
        %s148 = scalar_select %p147, %s16, 1
        %p149 = scmp.lt.s32.totalorder %s17, 0
        %s150 = scalar_select %p149, %s17, 0
        %s151 = sadd.s32 %s150, %s148
        %s152 = smul.addr %s151, 2
        %s153 = scalar_lea.vmem %s0, %s152
      $region28: #{generator_forward.21} parent=23 // pred_fallthru
        _
    $region24: #{generator_forward.21} parent=5 // pred_fallthru
      _
    %p154 = scmp.le.s32.totalorder 1, %s9
    %p155 = scmp.lt.s32.totalorder %s9, 3
    %p156 = pnand %p154, %p155
    %p157 = pneg %p156
    // Predicated region
    $region29: #{generator_forward.21} parent=5 // pred_check
      _
    $region30: #{generator_forward.21} parent=5 // pred_check_branch
      %159 = sbr.rel (%p156) target = $region32
    $region31: #{generator_forward.21} parent=5 // pred_region
      %s160 = ssub.s32 %s9, 1
      %p161 = scmp.lt.s32.totalorder %s18, 1
      %s162 = scalar_select %p161, %s18, 1
      %p163 = scmp.lt.s32.totalorder %s19, 0
      %s164 = scalar_select %p163, %s19, 0
      %s165 = sadd.s32 %s164, %s162
      %s166 = smul.addr %s165, 2
      %s167 = scalar_lea.vmem %s0, %s166
      %p168 = pneg %p49
      %p169 = pneg %p46
      %p170 = pneg %p70
      %p171 = pneg %p67
      %p172 = pneg %p91
      %p173 = pneg %p88
      %p174 = pneg %p119
      %p175 = pneg %p116
      %p176 = scmp.lt.s32.totalorder %s18, 1
      %s177 = scalar_select %p176, %s18, 1
      %p178 = scmp.lt.s32.totalorder %s19, 0
      %s179 = scalar_select %p178, %s19, 0
      %s180 = sadd.s32 %s179, %s177
      %s181 = smul.addr %s180, 2
      %s182 = scalar_lea.vmem %s3, %s181
      %p183 = scmp.lt.s32.totalorder %s18, 1
      %s184 = scalar_select %p183, %s18, 1
      %p185 = scmp.lt.s32.totalorder %s19, 0
      %s186 = scalar_select %p185, %s19, 0
      %s187 = sadd.s32 %s186, %s184
      %s188 = smul.addr %s187, 2
      %s189 = scalar_lea.vmem %s0, %s188
      %p190 = scmp.lt.s32.totalorder %s18, 1
      %s191 = scalar_select %p190, %s18, 1
      %p192 = scmp.lt.s32.totalorder %s19, 0
      %s193 = scalar_select %p192, %s19, 0
      %s194 = sadd.s32 %s193, %s191
      %s195 = smul.addr %s194, 2
      %s196 = scalar_lea.vmem %s3, %s195
      %s198 = smul.u32 %s19, 32
      %v199 = vld [vmem:[%s189] sm:$0x3]
      %v200 = vunpack.c.l.bf16 %v199
      %vm201 = vcmp.ge.f32.partialorder %v200, 0.0
      %v202 = vmul.f32 %v200, 0.1
      %v203 = vsel %vm201, %v200, %v202
      %v204 = vld [vmem:[%s1] sm:$0x3]
      %v205 = vld [vmem:[%s2] sm:$0xf]
      %v206 = vpack.c.bf16 %v203, %v203
      %v208 = vunpack.c.l.b16 %v206
      %v209 = vpack.c.b16 %v208, %v208
      %v210 = vrot.slane %v209, 6
      %211 = vrot.lane.b32.xlu0 %v210, 127
      %v212 = vpop.permute.xlu0 %211
      %213 = vrot.lane.b32.xlu0 %v209, 126
      %v214 = vpop.permute.xlu0 %213
      %vm215 = vcmask 1041408
      %v218 = vsel %vm215, %v206, %v212
      %vm219 = vcmask 1043456
      %v221 = vsel %vm219, %v218, %v214
      %223 = vset.pattern.permute.xlu0 0
      %224 = vperm.xlu0 %223, %v205
      %v225 = vpop.permute.xlu0 %224
      %vm227 = vcmask 97280
      %v229 = vsel %vm227, %v204, 0
      %vm231 = vcmask 1045504
      %v232 = vsel %vm231, %v221, 0
      %234 = vmatpush.bf16.msra.mxu0 0
      %235 = vmatpush.bf16.msra.mxu0 0
      %236 = vmatpush.bf16.msra.mxu0 0
      %237 = vmatpush.bf16.msra.mxu0 0
      %238 = vmatpush.bf16.msra.mxu0 0
      %239 = vmatpush.bf16.msra.mxu0 0
      %240 = vmatpush.bf16.msra.mxu0 0
      %241 = vmatpush.bf16.msra.mxu0 %v232
      %242 = vmatmul.bf16.gmra.mxu0 %v229
      %v243 = vpop.f32.mrf.mxu0
      %v244 = vadd.f32 %v225, %v243
      %v245 = vpop.f32.mrf.mxu0
      %246 = vdwg.mxu0
      %s247 = sadd.s32 %s198, 4294967285
      %v248 = vlaneseq
      %v249 = vand.u32 %v248, 127
      %v250 = vstv %s247
      %v251 = vadd.s32 %v250, %v249
      %vm252 = vcmp.ge.s32.totalorder %v251, 0
      %vm253 = vcmp.lt.s32.totalorder %v251, 32
      %vm254 = vmand %vm252, %vm253
      %v255 = vsel %vm254, 1, 0
      %vm256 = vcmp.eq.s32.totalorder %v255, 1
      %v257 = vsel %vm256, %v244, 0.0
      %vm258 = vcmp.ge.f32.partialorder %v257, 0.0
      %v259 = vmul.f32 %v257, 0.1
      %v260 = vsel %vm258, %v257, %v259
      %s261 = scalar_lea.vmem %s1, 2
      %v262 = vld [vmem:[%s261] sm:$0x3]
      %s263 = scalar_lea.vmem %s2, 4
      %v264 = vld [vmem:[%s263] sm:$0xf]
      %v265 = vpack.c.bf16 %v260, %v260
      %v267 = vunpack.c.l.b16 %v265
      %v268 = vpack.c.b16 %v267, %v267
      %v269 = vrot.slane %v268, 6
      %270 = vrot.lane.b32.xlu0 %v269, 127
      %v271 = vpop.permute.xlu0 %270
      %272 = vrot.lane.b32.xlu0 %v268, 126
      %v273 = vpop.permute.xlu0 %272
      %v276 = vsel %vm215, %v265, %v271
      %v278 = vsel %vm219, %v276, %v273
      %280 = vset.pattern.permute.xlu0 0
      %281 = vperm.xlu0 %280, %v264
      %v282 = vpop.permute.xlu0 %281
      %v285 = vsel %vm227, %v262, 0
      %v287 = vsel %vm231, %v278, 0
      %289 = vmatpush.bf16.msra.mxu0 0
      %290 = vmatpush.bf16.msra.mxu0 0
      %291 = vmatpush.bf16.msra.mxu0 0
      %292 = vmatpush.bf16.msra.mxu0 0
      %293 = vmatpush.bf16.msra.mxu0 0
      %294 = vmatpush.bf16.msra.mxu0 0
      %295 = vmatpush.bf16.msra.mxu0 0
      %296 = vmatpush.bf16.msra.mxu0 %v287
      %297 = vmatmul.bf16.gmra.mxu0 %v285
      %v298 = vpop.f32.mrf.mxu0
      %v299 = vadd.f32 %v282, %v298
      %v300 = vpop.f32.mrf.mxu0
      %301 = vdwg.mxu0
      %303 = vst [vmem:[#allocation1] ss:$2 sm:$0xff] %v200
      %v304 = vld.sshfl [vmem:[#allocation1] sm:$0xff pattern:$0x75316420]
      %305 = vrot.lane.b32.xlu0 %v304, 126
      %v306 = vpop.permute.xlu0 %305
      %v308 = vadd.f32 %v299, %v306
      %s309 = sadd.s32 %s198, 4294967286
      %v310 = vstv %s309
      %v311 = vadd.s32 %v310, %v249
      %vm312 = vcmp.ge.s32.totalorder %v311, 0
      %vm313 = vcmp.lt.s32.totalorder %v311, 32
      %vm314 = vmand %vm312, %vm313
      %v315 = vsel %vm314, 1, 0
      %vm316 = vcmp.eq.s32.totalorder %v315, 1
      %v317 = vsel %vm316, %v308, 0.0
      %vm318 = vcmp.ge.f32.partialorder %v317, 0.0
      %v319 = vmul.f32 %v317, 0.1
      %v320 = vsel %vm318, %v317, %v319
      %s321 = scalar_lea.vmem %s1, 4
      %v322 = vld [vmem:[%s321] sm:$0x3]
      %s323 = scalar_lea.vmem %s2, 8
      %v324 = vld [vmem:[%s323] sm:$0xf]
      %v325 = vpack.c.bf16 %v320, %v320
      %v327 = vunpack.c.l.b16 %v325
      %v328 = vpack.c.b16 %v327, %v327
      %v329 = vrot.slane %v328, 6
      %330 = vrot.lane.b32.xlu0 %v329, 125
      %v331 = vpop.permute.xlu0 %330
      %332 = vrot.lane.b32.xlu0 %v328, 122
      %v333 = vpop.permute.xlu0 %332
      %v336 = vsel %vm215, %v325, %v331
      %v338 = vsel %vm219, %v336, %v333
      %340 = vset.pattern.permute.xlu0 0
      %341 = vperm.xlu0 %340, %v324
      %v342 = vpop.permute.xlu0 %341
      %v345 = vsel %vm227, %v322, 0
      %v347 = vsel %vm231, %v338, 0
      %349 = vmatpush.bf16.msra.mxu0 0
      %350 = vmatpush.bf16.msra.mxu0 0
      %351 = vmatpush.bf16.msra.mxu0 0
      %352 = vmatpush.bf16.msra.mxu0 0
      %353 = vmatpush.bf16.msra.mxu0 0
      %354 = vmatpush.bf16.msra.mxu0 0
      %355 = vmatpush.bf16.msra.mxu0 0
      %356 = vmatpush.bf16.msra.mxu0 %v347
      %357 = vmatmul.bf16.gmra.mxu0 %v345
      %v358 = vpop.f32.mrf.mxu0
      %v359 = vadd.f32 %v342, %v358
      %v360 = vpop.f32.mrf.mxu0
      %361 = vdwg.mxu0
      %s362 = sadd.s32 %s198, 4294967289
      %v363 = vstv %s362
      %v364 = vadd.s32 %v363, %v249
      %vm365 = vcmp.ge.s32.totalorder %v364, 0
      %vm366 = vcmp.lt.s32.totalorder %v364, 32
      %vm367 = vmand %vm365, %vm366
      %v368 = vsel %vm367, 1, 0
      %vm369 = vcmp.eq.s32.totalorder %v368, 1
      %v370 = vsel %vm369, %v359, 0.0
      %vm371 = vcmp.ge.f32.partialorder %v370, 0.0
      %v372 = vmul.f32 %v370, 0.1
      %v373 = vsel %vm371, %v370, %v372
      %s374 = scalar_lea.vmem %s1, 6
      %v375 = vld [vmem:[%s374] sm:$0x3]
      %s376 = scalar_lea.vmem %s2, 12
      %v377 = vld [vmem:[%s376] sm:$0xf]
      %v378 = vpack.c.bf16 %v373, %v373
      %v380 = vunpack.c.l.b16 %v378
      %v381 = vpack.c.b16 %v380, %v380
      %v382 = vrot.slane %v381, 6
      %383 = vrot.lane.b32.xlu0 %v382, 127
      %v384 = vpop.permute.xlu0 %383
      %385 = vrot.lane.b32.xlu0 %v381, 126
      %v386 = vpop.permute.xlu0 %385
      %v389 = vsel %vm215, %v378, %v384
      %v391 = vsel %vm219, %v389, %v386
      %393 = vset.pattern.permute.xlu0 0
      %394 = vperm.xlu0 %393, %v377
      %v395 = vpop.permute.xlu0 %394
      %v398 = vsel %vm227, %v375, 0
      %v400 = vsel %vm231, %v391, 0
      %402 = vmatpush.bf16.msra.mxu0 0
      %403 = vmatpush.bf16.msra.mxu0 0
      %404 = vmatpush.bf16.msra.mxu0 0
      %405 = vmatpush.bf16.msra.mxu0 0
      %406 = vmatpush.bf16.msra.mxu0 0
      %407 = vmatpush.bf16.msra.mxu0 0
      %408 = vmatpush.bf16.msra.mxu0 0
      %409 = vmatpush.bf16.msra.mxu0 %v400
      %410 = vmatmul.bf16.gmra.mxu0 %v398
      %v411 = vpop.f32.mrf.mxu0
      %v412 = vadd.f32 %v395, %v411
      %v413 = vpop.f32.mrf.mxu0
      %414 = vdwg.mxu0
      %416 = vrot.lane.b32.xlu0 %v317, 124
      %v417 = vpop.permute.xlu0 %416
      %v419 = vadd.f32 %v412, %v417
      %s420 = sadd.s32 %s198, 4294967290
      %v421 = vstv %s420
      %v422 = vadd.s32 %v421, %v249
      %vm423 = vcmp.ge.s32.totalorder %v422, 0
      %vm424 = vcmp.lt.s32.totalorder %v422, 32
      %vm425 = vmand %vm423, %vm424
      %v426 = vsel %vm425, 1, 0
      %vm427 = vcmp.eq.s32.totalorder %v426, 1
      %v428 = vsel %vm427, %v419, 0.0
      %vm429 = vcmp.ge.f32.partialorder %v428, 0.0
      %v430 = vmul.f32 %v428, 0.1
      %v431 = vsel %vm429, %v428, %v430
      %s432 = scalar_lea.vmem %s1, 8
      %v433 = vld [vmem:[%s432] sm:$0x3]
      %s434 = scalar_lea.vmem %s2, 16
      %v435 = vld [vmem:[%s434] sm:$0xf]
      %v436 = vpack.c.bf16 %v431, %v431
      %v438 = vunpack.c.l.b16 %v436
      %v439 = vpack.c.b16 %v438, %v438
      %v440 = vrot.slane %v439, 6
      %441 = vrot.lane.b32.xlu0 %v440, 123
      %v442 = vpop.permute.xlu0 %441
      %443 = vrot.lane.b32.xlu0 %v439, 118
      %v444 = vpop.permute.xlu0 %443
      %v447 = vsel %vm215, %v436, %v442
      %v449 = vsel %vm219, %v447, %v444
      %451 = vset.pattern.permute.xlu0 0
      %452 = vperm.xlu0 %451, %v435
      %v453 = vpop.permute.xlu0 %452
      %v456 = vsel %vm227, %v433, 0
      %v458 = vsel %vm231, %v449, 0
      %460 = vmatpush.bf16.msra.mxu0 0
      %461 = vmatpush.bf16.msra.mxu0 0
      %462 = vmatpush.bf16.msra.mxu0 0
      %463 = vmatpush.bf16.msra.mxu0 0
      %464 = vmatpush.bf16.msra.mxu0 0
      %465 = vmatpush.bf16.msra.mxu0 0
      %466 = vmatpush.bf16.msra.mxu0 0
      %467 = vmatpush.bf16.msra.mxu0 %v458
      %468 = vmatmul.bf16.gmra.mxu0 %v456
      %v469 = vpop.f32.mrf.mxu0
      %v470 = vadd.f32 %v453, %v469
      %v471 = vpop.f32.mrf.mxu0
      %472 = vdwg.mxu0
      %s473 = sadd.s32 %s198, 4294967295
      %v474 = vstv %s473
      %v475 = vadd.s32 %v474, %v249
      %vm476 = vcmp.ge.s32.totalorder %v475, 0
      %vm477 = vcmp.lt.s32.totalorder %v475, 32
      %vm478 = vmand %vm476, %vm477
      %v479 = vsel %vm478, 1, 0
      %vm480 = vcmp.eq.s32.totalorder %v479, 1
      %v481 = vsel %vm480, %v470, 0.0
      %vm482 = vcmp.ge.f32.partialorder %v481, 0.0
      %v483 = vmul.f32 %v481, 0.1
      %v484 = vsel %vm482, %v481, %v483
      %s485 = scalar_lea.vmem %s1, 10
      %v486 = vld [vmem:[%s485] sm:$0x3]
      %s487 = scalar_lea.vmem %s2, 20
      %v488 = vld [vmem:[%s487] sm:$0xf]
      %v489 = vpack.c.bf16 %v484, %v484
      %v491 = vunpack.c.l.b16 %v489
      %v492 = vpack.c.b16 %v491, %v491
      %v493 = vrot.slane %v492, 6
      %494 = vrot.lane.b32.xlu0 %v493, 127
      %v495 = vpop.permute.xlu0 %494
      %496 = vrot.lane.b32.xlu0 %v492, 126
      %v497 = vpop.permute.xlu0 %496
      %v500 = vsel %vm215, %v489, %v495
      %v502 = vsel %vm219, %v500, %v497
      %504 = vset.pattern.permute.xlu0 0
      %505 = vperm.xlu0 %504, %v488
      %v506 = vpop.permute.xlu0 %505
      %v509 = vsel %vm227, %v486, 0
      %v511 = vsel %vm231, %v502, 0
      %513 = vmatpush.bf16.msra.mxu0 0
      %514 = vmatpush.bf16.msra.mxu0 0
      %515 = vmatpush.bf16.msra.mxu0 0
      %516 = vmatpush.bf16.msra.mxu0 0
      %517 = vmatpush.bf16.msra.mxu0 0
      %518 = vmatpush.bf16.msra.mxu0 0
      %519 = vmatpush.bf16.msra.mxu0 0
      %520 = vmatpush.bf16.msra.mxu0 %v511
      %521 = vmatmul.bf16.gmra.mxu0 %v509
      %v522 = vpop.f32.mrf.mxu0
      %v523 = vadd.f32 %v506, %v522
      %v524 = vpop.f32.mrf.mxu0
      %525 = vdwg.mxu0
      %527 = vrot.lane.b32.xlu0 %v428, 122
      %v528 = vpop.permute.xlu0 %527
      %v530 = vadd.f32 %v523, %v528
      %v531 = vstv %s198
      %v532 = vadd.s32 %v531, %v249
      %vm533 = vcmp.ge.s32.totalorder %v532, 0
      %vm534 = vcmp.lt.s32.totalorder %v532, 32
      %vm535 = vmand %vm533, %vm534
      %v536 = vsel %vm535, 1, 0
      %vm537 = vcmp.eq.s32.totalorder %v536, 1
      %v538 = vsel %vm537, %v530, 0.0
      %v539 = vpack.c.bf16 %v538, %v538
      %vm540 = vcmask 254976
      %541 = vst.msk [vmem:[%s196] sm:$0x3] %vm540, %v539
      %p542 = scmp.lt.s32.totalorder %s18, 1
      %s543 = scalar_select %p542, %s18, 1
      %p544 = scmp.lt.s32.totalorder %s19, 0
      %s545 = scalar_select %p544, %s19, 0
      %s546 = sadd.s32 %s545, %s543
      %s547 = smul.addr %s546, 2
      %s548 = scalar_lea.vmem %s3, %s547
      // Predicated region
      $region33: #{generator_forward.21} parent=31 // pred_check
        %p549 = pneg %p116
      $region34: #{generator_forward.21} parent=31 // pred_check_branch
        %551 = sbr.rel (%p549) target = $region36
      $region35: #{generator_forward.21} parent=31 // pred_region
        _
      $region36: #{generator_forward.21} parent=31 // pred_fallthru
        _
    $region32: #{generator_forward.21} parent=5 // pred_fallthru
      _
    %p552 = scmp.le.s32.totalorder 2, %s9
    // Predicated region
    $region37: #{generator_forward.21} parent=5 // pred_check
      %p553 = pneg %p552
    $region38: #{generator_forward.21} parent=5 // pred_check_branch
      %555 = sbr.rel (%p553) target = $region40
    $region39: #{generator_forward.21} parent=5 // pred_region
      %s556 = ssub.s32 %s9, 2
      // Predicated region
      $region41: #{generator_forward.21} parent=39 // pred_check
        %p557 = pneg %p122
      $region42: #{generator_forward.21} parent=39 // pred_check_branch
        %559 = sbr.rel (%p557) target = $region44
      $region43: #{generator_forward.21} parent=39 // pred_region
        %p560 = scmp.lt.s32.totalorder %s20, 1
        %s561 = scalar_select %p560, %s20, 1
        %p562 = scmp.lt.s32.totalorder %s21, 0
        %s563 = scalar_select %p562, %s21, 0
        %s564 = sadd.s32 %s563, %s561
        %s565 = smul.addr %s564, 2
        %s566 = scalar_lea.vmem %s3, %s565
      $region44: #{generator_forward.21} parent=39 // pred_fallthru
        _
    $region40: #{generator_forward.21} parent=5 // pred_fallthru
      _
  $region6: #{generator_forward.21} parent=0 // loop_footer
    %s13 = sadd.s32 1, %s9
  $region7: #{generator_forward.21} parent=0 // loop_footer_branch
    %8 = sbr.rel target = $region3
  $region8: #{generator_forward.21} parent=0 // loop_exit
    _

// kernel: generator_forward.22
$region0: #{generator_forward.22}
  #allocation0 [shape = 'u32[]', space=smem, size = 0x4, offset = 0x4, fixed_abs, tag = 'smem constant byte address 0x4 - core index']
  #allocation1 [shape = 'u32[72,128]{1,0:T(1,128)}', space=vmem, size = 0x9000, scoped, tag = 'internal scratch']
  %s0 = inlined_call_operand.vmem [shape: bf16[2,4,80], index: 0, kind: input, shape index: {}]
  %s1 = inlined_call_operand.vmem [shape: bf16[6,4,20], index: 1, kind: input, shape index: {}]
  %s2 = inlined_call_operand.vmem [shape: f32[6,4,1], index: 2, kind: input, shape index: {}]
  %s3 = inlined_call_operand.vmem [shape: bf16[2,4,32], index: 3, kind: input, shape index: {}]
  %s4 = inlined_call_operand.vmem [shape: bf16[2,4,32], index: 4, kind: output, shape index: {}]
  %s5 = sld [smem:[#allocation0]]
  $region49: #{generator_forward.22} parent=0
    _
  %s7 = ssub.s32 1, %s5
  %s8 = scalar_select 0, %s7, %s5
  loop: start=0, step=1, limit=4
  $region2: #{generator_forward.22} parent=0 // loop_pre_header
    _
  $region3: #{generator_forward.22} parent=0 // loop_header
    %s10 = sphi 0, %s14
    %p11 = scmp.ge.s32.totalorder %s10, 4
    %s17 = sphi 0, %s29
    %s18 = sphi 0, %s25
    %s19 = sphi 0, %s17
    %s20 = sphi 0, %s18
    %s21 = sphi 0, %s19
    %s22 = sphi 0, %s20
    %s34 = sphi 0, %s36
    %s37 = sphi 0, %s34
    %s38 = sphi 0, %s37
    %s54 = sphi 0, %s38
    %s58 = sphi 0, %s58
    %s60 = sphi 0, %s58
    %s61 = sphi 0, %s60
    %s75 = sphi 0, %s61
    %s79 = sphi 0, %s79
    %s81 = sphi 0, %s79
    %s82 = sphi 0, %s81
    %s96 = sphi 0, %s82
    %s104 = sphi 0, %s106
    %s107 = sphi 0, %s104
    %s108 = sphi 0, %s107
    %s124 = sphi 0, %s108
    %s132 = sphi 0, %s134
    %s135 = sphi 0, %s132
    %s136 = sphi 0, %s135
    %s152 = sphi 0, %s136
  $region4: #{generator_forward.22} parent=0 // loop_header_branch
    %13 = sbr.rel (%p11) target = $region8
  $region5: #{generator_forward.22} parent=0 // loop_body
    %s15 = ssub.s32 %s10, 1
    %s16 = ssub.s32 %s10, 2
    %s23 = sadd.s32 1, %s18
    %p24 = scmp.ge.s32.totalorder %s23, 1
    %s25 = scalar_select %p24, 0, %s23
    %s26 = sadd.s32 1, %s17
    %s27 = scalar_select %p24, %s26, %s17
    %p28 = scmp.ge.s32.totalorder %s27, 2
    %s29 = scalar_select %p28, 0, %s27
    %s30 = ssub.s32 %s17, %s29
    %s31 = ssub.s32 %s18, %s25
    %s32 = sor.u32 %s30, %s31
    %p33 = scmp.eq.s32.totalorder %s32, 0
    %s35 = sadd.s32 %s34, 1
    %s36 = scalar_select %p33, %s34, %s35
    %p39 = pneg %p33
    %p40 = scmp.eq.s32.totalorder %s10, 1
    %p41 = por %p39, %p40
    %p42 = scmp.ne.s32.totalorder %s34, %s37
    %p43 = scmp.eq.s32.totalorder %s10, 0
    %p44 = por %p42, %p43
    %p45 = scmp.ne.s32.totalorder %s34, %s37
    %p46 = scmp.eq.s32.totalorder %s15, 1
    %p47 = por %p45, %p46
    %p48 = scmp.ne.s32.totalorder %s37, %s38
    %p49 = scmp.eq.s32.totalorder %s15, 0
    %p50 = por %p48, %p49
    %p51 = scmp.ne.s32.totalorder %s37, %s38
    %p52 = scmp.eq.s32.totalorder %s16, 1
    %p53 = por %p51, %p52
    %p55 = scmp.ne.s32.totalorder %s38, %s54
    %p56 = scmp.eq.s32.totalorder %s16, 0
    %p57 = por %p55, %p56
    %s59 = sadd.s32 %s58, 1
    %p62 = scmp.eq.s32.totalorder %s10, 1
    %p63 = scmp.ne.s32.totalorder %s58, %s60
    %p64 = scmp.eq.s32.totalorder %s10, 0
    %p65 = por %p63, %p64
    %p66 = scmp.ne.s32.totalorder %s58, %s60
    %p67 = scmp.eq.s32.totalorder %s15, 1
    %p68 = por %p66, %p67
    %p69 = scmp.ne.s32.totalorder %s60, %s61
    %p70 = scmp.eq.s32.totalorder %s15, 0
    %p71 = por %p69, %p70
    %p72 = scmp.ne.s32.totalorder %s60, %s61
    %p73 = scmp.eq.s32.totalorder %s16, 1
    %p74 = por %p72, %p73
    %p76 = scmp.ne.s32.totalorder %s61, %s75
    %p77 = scmp.eq.s32.totalorder %s16, 0
    %p78 = por %p76, %p77
    %s80 = sadd.s32 %s79, 1
    %p83 = scmp.eq.s32.totalorder %s10, 1
    %p84 = scmp.ne.s32.totalorder %s79, %s81
    %p85 = scmp.eq.s32.totalorder %s10, 0
    %p86 = por %p84, %p85
    %p87 = scmp.ne.s32.totalorder %s79, %s81
    %p88 = scmp.eq.s32.totalorder %s15, 1
    %p89 = por %p87, %p88
    %p90 = scmp.ne.s32.totalorder %s81, %s82
    %p91 = scmp.eq.s32.totalorder %s15, 0
    %p92 = por %p90, %p91
    %p93 = scmp.ne.s32.totalorder %s81, %s82
    %p94 = scmp.eq.s32.totalorder %s16, 1
    %p95 = por %p93, %p94
    %p97 = scmp.ne.s32.totalorder %s82, %s96
    %p98 = scmp.eq.s32.totalorder %s16, 0
    %p99 = por %p97, %p98
    %s100 = ssub.s32 %s17, %s29
    %s101 = ssub.s32 %s18, %s25
    %s102 = sor.u32 %s100, %s101
    %p103 = scmp.eq.s32.totalorder %s102, 0
    %s105 = sadd.s32 %s104, 1
    %s106 = scalar_select %p103, %s104, %s105
    %p109 = pneg %p103
    %p110 = scmp.eq.s32.totalorder %s10, 1
    %p111 = por %p109, %p110
    %p112 = scmp.ne.s32.totalorder %s104, %s107
    %p113 = scmp.eq.s32.totalorder %s10, 0
    %p114 = por %p112, %p113
    %p115 = scmp.ne.s32.totalorder %s104, %s107
    %p116 = scmp.eq.s32.totalorder %s15, 1
    %p117 = por %p115, %p116
    %p118 = scmp.ne.s32.totalorder %s107, %s108
    %p119 = scmp.eq.s32.totalorder %s15, 0
    %p120 = por %p118, %p119
    %p121 = scmp.ne.s32.totalorder %s107, %s108
    %p122 = scmp.eq.s32.totalorder %s16, 1
    %p123 = por %p121, %p122
    %p125 = scmp.ne.s32.totalorder %s108, %s124
    %p126 = scmp.eq.s32.totalorder %s16, 0
    %p127 = por %p125, %p126
    %s128 = ssub.s32 %s17, %s29
    %s129 = ssub.s32 %s18, %s25
    %s130 = sor.u32 %s128, %s129
    %p131 = scmp.eq.s32.totalorder %s130, 0
    %s133 = sadd.s32 %s132, 1
    %s134 = scalar_select %p131, %s132, %s133
    %p137 = pneg %p131
    %p138 = scmp.eq.s32.totalorder %s10, 1
    %p139 = por %p137, %p138
    %p140 = scmp.ne.s32.totalorder %s132, %s135
    %p141 = scmp.eq.s32.totalorder %s10, 0
    %p142 = por %p140, %p141
    %p143 = scmp.ne.s32.totalorder %s132, %s135
    %p144 = scmp.eq.s32.totalorder %s15, 1
    %p145 = por %p143, %p144
    %p146 = scmp.ne.s32.totalorder %s135, %s136
    %p147 = scmp.eq.s32.totalorder %s15, 0
    %p148 = por %p146, %p147
    %p149 = scmp.ne.s32.totalorder %s135, %s136
    %p150 = scmp.eq.s32.totalorder %s16, 1
    %p151 = por %p149, %p150
    %p153 = scmp.ne.s32.totalorder %s136, %s152
    %p154 = scmp.eq.s32.totalorder %s16, 0
    %p155 = por %p153, %p154
    %p156 = scmp.le.s32.totalorder 1, %s10
    %p157 = scmp.lt.s32.totalorder %s10, 3
    %p158 = pnand %p156, %p157
    %p159 = pneg %p158
    // Predicated region
    $region9: #{generator_forward.22} parent=5 // pred_check
      _
    $region10: #{generator_forward.22} parent=5 // pred_check_branch
      %161 = sbr.rel (%p158) target = $region12
    $region11: #{generator_forward.22} parent=5 // pred_region
      %s162 = ssub.s32 %s10, 1
      // Predicated region
      $region13: #{generator_forward.22} parent=11 // pred_check
        %p163 = pneg %p71
      $region14: #{generator_forward.22} parent=11 // pred_check_branch
        %165 = sbr.rel (%p163) target = $region16
      $region15: #{generator_forward.22} parent=11 // pred_region
        _
      $region16: #{generator_forward.22} parent=11 // pred_fallthru
        _
      // Predicated region
      $region17: #{generator_forward.22} parent=11 // pred_check
        %p166 = pneg %p92
      $region18: #{generator_forward.22} parent=11 // pred_check_branch
        %168 = sbr.rel (%p166) target = $region20
      $region19: #{generator_forward.22} parent=11 // pred_region
        _
      $region20: #{generator_forward.22} parent=11 // pred_fallthru
        _
    $region12: #{generator_forward.22} parent=5 // pred_fallthru
      _
    %p169 = scmp.lt.s32.totalorder %s10, 2
    // Predicated region
    $region21: #{generator_forward.22} parent=5 // pred_check
      %p170 = pneg %p169
    $region22: #{generator_forward.22} parent=5 // pred_check_branch
      %172 = sbr.rel (%p170) target = $region24
    $region23: #{generator_forward.22} parent=5 // pred_region
      // Predicated region
      $region25: #{generator_forward.22} parent=23 // pred_check
        %p173 = pneg %p44
      $region26: #{generator_forward.22} parent=23 // pred_check_branch
        %175 = sbr.rel (%p173) target = $region28
      $region27: #{generator_forward.22} parent=23 // pred_region
        %p176 = scmp.lt.s32.totalorder %s17, 1
        %s177 = scalar_select %p176, %s17, 1
        %p178 = scmp.lt.s32.totalorder %s18, 0
        %s179 = scalar_select %p178, %s18, 0
        %s180 = sadd.s32 %s179, %s177
        %s181 = smul.addr %s180, 2
        %s182 = scalar_lea.vmem %s0, %s181
      $region28: #{generator_forward.22} parent=23 // pred_fallthru
        _
      // Predicated region
      $region29: #{generator_forward.22} parent=23 // pred_check
        %p183 = pneg %p114
      $region30: #{generator_forward.22} parent=23 // pred_check_branch
        %185 = sbr.rel (%p183) target = $region32
      $region31: #{generator_forward.22} parent=23 // pred_region
        %p186 = scmp.lt.s32.totalorder %s17, 1
        %s187 = scalar_select %p186, %s17, 1
        %p188 = scmp.lt.s32.totalorder %s18, 0
        %s189 = scalar_select %p188, %s18, 0
        %s190 = sadd.s32 %s189, %s187
        %s191 = smul.addr %s190, 2
        %s192 = scalar_lea.vmem %s3, %s191
      $region32: #{generator_forward.22} parent=23 // pred_fallthru
        _
    $region24: #{generator_forward.22} parent=5 // pred_fallthru
      _
    %p193 = scmp.le.s32.totalorder 1, %s10
    %p194 = scmp.lt.s32.totalorder %s10, 3
    %p195 = pnand %p193, %p194
    %p196 = pneg %p195
    // Predicated region
    $region33: #{generator_forward.22} parent=5 // pred_check
      _
    $region34: #{generator_forward.22} parent=5 // pred_check_branch
      %198 = sbr.rel (%p195) target = $region36
    $region35: #{generator_forward.22} parent=5 // pred_region
      %s199 = ssub.s32 %s10, 1
      %p200 = scmp.lt.s32.totalorder %s19, 1
      %s201 = scalar_select %p200, %s19, 1
      %p202 = scmp.lt.s32.totalorder %s20, 0
      %s203 = scalar_select %p202, %s20, 0
      %s204 = sadd.s32 %s203, %s201
      %s205 = smul.addr %s204, 2
      %s206 = scalar_lea.vmem %s0, %s205
      %p207 = pneg %p50
      %p208 = pneg %p47
      %p209 = pneg %p71
      %p210 = pneg %p68
      %p211 = pneg %p92
      %p212 = pneg %p89
      %p213 = scmp.lt.s32.totalorder %s19, 1
      %s214 = scalar_select %p213, %s19, 1
      %p215 = scmp.lt.s32.totalorder %s20, 0
      %s216 = scalar_select %p215, %s20, 0
      %s217 = sadd.s32 %s216, %s214
      %s218 = smul.addr %s217, 2
      %s219 = scalar_lea.vmem %s3, %s218
      %p220 = pneg %p120
      %p221 = pneg %p117
      %p222 = pneg %p148
      %p223 = pneg %p145
      %p224 = scmp.lt.s32.totalorder %s19, 1
      %s225 = scalar_select %p224, %s19, 1
      %p226 = scmp.lt.s32.totalorder %s20, 0
      %s227 = scalar_select %p226, %s20, 0
      %s228 = sadd.s32 %s227, %s225
      %s229 = smul.addr %s228, 2
      %s230 = scalar_lea.vmem %s4, %s229
      %p231 = scmp.lt.s32.totalorder %s19, 1
      %s232 = scalar_select %p231, %s19, 1
      %p233 = scmp.lt.s32.totalorder %s20, 0
      %s234 = scalar_select %p233, %s20, 0
      %s235 = sadd.s32 %s234, %s232
      %s236 = smul.addr %s235, 2
      %s237 = scalar_lea.vmem %s0, %s236
      %p238 = scmp.lt.s32.totalorder %s19, 1
      %s239 = scalar_select %p238, %s19, 1
      %p240 = scmp.lt.s32.totalorder %s20, 0
      %s241 = scalar_select %p240, %s20, 0
      %s242 = sadd.s32 %s241, %s239
      %s243 = smul.addr %s242, 2
      %s244 = scalar_lea.vmem %s3, %s243
      %p245 = scmp.lt.s32.totalorder %s19, 1
      %s246 = scalar_select %p245, %s19, 1
      %p247 = scmp.lt.s32.totalorder %s20, 0
      %s248 = scalar_select %p247, %s20, 0
      %s249 = sadd.s32 %s248, %s246
      %s250 = smul.addr %s249, 2
      %s251 = scalar_lea.vmem %s4, %s250
      %s253 = smul.u32 %s20, 32
      %v254 = vld [vmem:[%s237] sm:$0x3]
      %v255 = vunpack.c.l.bf16 %v254
      %vm256 = vcmp.ge.f32.partialorder %v255, 0.0
      %v257 = vmul.f32 %v255, 0.1
      %v258 = vsel %vm256, %v255, %v257
      %v259 = vld [vmem:[%s1] sm:$0x3]
      %v260 = vld [vmem:[%s2] sm:$0xf]
      %v261 = vpack.c.bf16 %v258, %v258
      %v263 = vunpack.c.l.b16 %v261
      %v264 = vpack.c.b16 %v263, %v263
      %v265 = vrot.slane %v264, 6
      %266 = vrot.lane.b32.xlu0 %v265, 127
      %v267 = vpop.permute.xlu0 %266
      %268 = vrot.lane.b32.xlu0 %v264, 126
      %v269 = vpop.permute.xlu0 %268
      %v270 = vrot.slane %v264, 2
      %271 = vrot.lane.b32.xlu0 %v270, 125
      %v272 = vpop.permute.xlu0 %271
      %273 = vrot.lane.b32.xlu0 %v264, 124
      %v274 = vpop.permute.xlu0 %273
      %vm275 = vcmask 1041408
      %v278 = vsel %vm275, %v261, %v267
      %vm279 = vcmask 1043456
      %v281 = vsel %vm279, %v278, %v269
      %vm282 = vcmask 1045504
      %v284 = vsel %vm282, %v281, %v272
      %287 = vset.pattern.permute.xlu0 0
      %288 = vperm.xlu0 %287, %v260
      %v289 = vpop.permute.xlu0 %288
      %vm291 = vcmask 162816
      %v293 = vsel %vm291, %v259, 0
      %v296 = vsel %vm275, %v274, 0
      %298 = vmatpush.bf16.msra.mxu0 0
      %299 = vmatpush.bf16.msra.mxu0 0
      %300 = vmatpush.bf16.msra.mxu0 0
      %301 = vmatpush.bf16.msra.mxu0 0
      %302 = vmatpush.bf16.msra.mxu0 0
      %303 = vmatpush.bf16.msra.mxu0 0
      %304 = vmatpush.bf16.msra.mxu0 %v296
      %305 = vmatpush.bf16.msra.mxu0 %v284
      %306 = vmatmul.bf16.gmra.mxu0 %v293
      %v307 = vpop.f32.mrf.mxu0
      %v308 = vadd.f32 %v289, %v307
      %v309 = vpop.f32.mrf.mxu0
      %310 = vdwg.mxu0
      %s311 = sadd.s32 %s253, 4294967274
      %v312 = vlaneseq
      %v313 = vand.u32 %v312, 127
      %v314 = vstv %s311
      %v315 = vadd.s32 %v314, %v313
      %vm316 = vcmp.ge.s32.totalorder %v315, 0
      %vm317 = vcmp.lt.s32.totalorder %v315, 32
      %vm318 = vmand %vm316, %vm317
      %v319 = vsel %vm318, 1, 0
      %vm320 = vcmp.eq.s32.totalorder %v319, 1
      %v321 = vsel %vm320, %v308, 0.0
      %vm322 = vcmp.ge.f32.partialorder %v321, 0.0
      %v323 = vmul.f32 %v321, 0.1
      %v324 = vsel %vm322, %v321, %v323
      %s325 = scalar_lea.vmem %s1, 2
      %v326 = vld [vmem:[%s325] sm:$0x3]
      %s327 = scalar_lea.vmem %s2, 4
      %v328 = vld [vmem:[%s327] sm:$0xf]
      %v329 = vpack.c.bf16 %v324, %v324
      %v331 = vunpack.c.l.b16 %v329
      %v332 = vpack.c.b16 %v331, %v331
      %v333 = vrot.slane %v332, 6
      %334 = vrot.lane.b32.xlu0 %v333, 127
      %v335 = vpop.permute.xlu0 %334
      %336 = vrot.lane.b32.xlu0 %v332, 126
      %v337 = vpop.permute.xlu0 %336
      %v338 = vrot.slane %v332, 2
      %339 = vrot.lane.b32.xlu0 %v338, 125
      %v340 = vpop.permute.xlu0 %339
      %341 = vrot.lane.b32.xlu0 %v332, 124
      %v342 = vpop.permute.xlu0 %341
      %v345 = vsel %vm275, %v329, %v335
      %v347 = vsel %vm279, %v345, %v337
      %v349 = vsel %vm282, %v347, %v340
      %352 = vset.pattern.permute.xlu0 0
      %353 = vperm.xlu0 %352, %v328
      %v354 = vpop.permute.xlu0 %353
      %v357 = vsel %vm291, %v326, 0
      %v360 = vsel %vm275, %v342, 0
      %362 = vmatpush.bf16.msra.mxu0 0
      %363 = vmatpush.bf16.msra.mxu0 0
      %364 = vmatpush.bf16.msra.mxu0 0
      %365 = vmatpush.bf16.msra.mxu0 0
      %366 = vmatpush.bf16.msra.mxu0 0
      %367 = vmatpush.bf16.msra.mxu0 0
      %368 = vmatpush.bf16.msra.mxu0 %v360
      %369 = vmatpush.bf16.msra.mxu0 %v349
      %370 = vmatmul.bf16.gmra.mxu0 %v357
      %v371 = vpop.f32.mrf.mxu0
      %v372 = vadd.f32 %v354, %v371
      %v373 = vpop.f32.mrf.mxu0
      %374 = vdwg.mxu0
      %376 = vst [vmem:[#allocation1] ss:$2 sm:$0xff] %v255
      %v377 = vld.sshfl [vmem:[#allocation1] sm:$0xff pattern:$0x75316420]
      %378 = vrot.lane.b32.xlu0 %v377, 124
      %v379 = vpop.permute.xlu0 %378
      %v381 = vadd.f32 %v372, %v379
      %s382 = sadd.s32 %s253, 4294967276
      %v383 = vstv %s382
      %v384 = vadd.s32 %v383, %v313
      %vm385 = vcmp.ge.s32.totalorder %v384, 0
      %vm386 = vcmp.lt.s32.totalorder %v384, 32
      %vm387 = vmand %vm385, %vm386
      %v388 = vsel %vm387, 1, 0
      %vm389 = vcmp.eq.s32.totalorder %v388, 1
      %v390 = vsel %vm389, %v381, 0.0
      %vm391 = vcmp.ge.f32.partialorder %v390, 0.0
      %v392 = vmul.f32 %v390, 0.1
      %v393 = vsel %vm391, %v390, %v392
      %s394 = scalar_lea.vmem %s1, 4
      %v395 = vld [vmem:[%s394] sm:$0x3]
      %s396 = scalar_lea.vmem %s2, 8
      %v397 = vld [vmem:[%s396] sm:$0xf]
      %v398 = vpack.c.bf16 %v393, %v393
      %v400 = vunpack.c.l.b16 %v398
      %v401 = vpack.c.b16 %v400, %v400
      %v402 = vrot.slane %v401, 6
      %403 = vrot.lane.b32.xlu0 %v402, 125
      %v404 = vpop.permute.xlu0 %403
      %405 = vrot.lane.b32.xlu0 %v401, 122
      %v406 = vpop.permute.xlu0 %405
      %v407 = vrot.slane %v401, 2
      %408 = vrot.lane.b32.xlu0 %v407, 119
      %v409 = vpop.permute.xlu0 %408
      %410 = vrot.lane.b32.xlu0 %v401, 116
      %v411 = vpop.permute.xlu0 %410
      %v414 = vsel %vm275, %v398, %v404
      %v416 = vsel %vm279, %v414, %v406
      %v418 = vsel %vm282, %v416, %v409
      %421 = vset.pattern.permute.xlu0 0
      %422 = vperm.xlu0 %421, %v397
      %v423 = vpop.permute.xlu0 %422
      %v426 = vsel %vm291, %v395, 0
      %v429 = vsel %vm275, %v411, 0
      %431 = vmatpush.bf16.msra.mxu0 0
      %432 = vmatpush.bf16.msra.mxu0 0
      %433 = vmatpush.bf16.msra.mxu0 0
      %434 = vmatpush.bf16.msra.mxu0 0
      %435 = vmatpush.bf16.msra.mxu0 0
      %436 = vmatpush.bf16.msra.mxu0 0
      %437 = vmatpush.bf16.msra.mxu0 %v429
      %438 = vmatpush.bf16.msra.mxu0 %v418
      %439 = vmatmul.bf16.gmra.mxu0 %v426
      %v440 = vpop.f32.mrf.mxu0
      %v441 = vadd.f32 %v423, %v440
      %v442 = vpop.f32.mrf.mxu0
      %443 = vdwg.mxu0
      %s444 = sadd.s32 %s253, 4294967282
      %v445 = vstv %s444
      %v446 = vadd.s32 %v445, %v313
      %vm447 = vcmp.ge.s32.totalorder %v446, 0
      %vm448 = vcmp.lt.s32.totalorder %v446, 32
      %vm449 = vmand %vm447, %vm448
      %v450 = vsel %vm449, 1, 0
      %vm451 = vcmp.eq.s32.totalorder %v450, 1
      %v452 = vsel %vm451, %v441, 0.0
      %vm453 = vcmp.ge.f32.partialorder %v452, 0.0
      %v454 = vmul.f32 %v452, 0.1
      %v455 = vsel %vm453, %v452, %v454
      %s456 = scalar_lea.vmem %s1, 6
      %v457 = vld [vmem:[%s456] sm:$0x3]
      %s458 = scalar_lea.vmem %s2, 12
      %v459 = vld [vmem:[%s458] sm:$0xf]
      %v460 = vpack.c.bf16 %v455, %v455
      %v462 = vunpack.c.l.b16 %v460
      %v463 = vpack.c.b16 %v462, %v462
      %v464 = vrot.slane %v463, 6
      %465 = vrot.lane.b32.xlu0 %v464, 127
      %v466 = vpop.permute.xlu0 %465
      %467 = vrot.lane.b32.xlu0 %v463, 126
      %v468 = vpop.permute.xlu0 %467
      %v469 = vrot.slane %v463, 2
      %470 = vrot.lane.b32.xlu0 %v469, 125
      %v471 = vpop.permute.xlu0 %470
      %472 = vrot.lane.b32.xlu0 %v463, 124
      %v473 = vpop.permute.xlu0 %472
      %v476 = vsel %vm275, %v460, %v466
      %v478 = vsel %vm279, %v476, %v468
      %v480 = vsel %vm282, %v478, %v471
      %483 = vset.pattern.permute.xlu0 0
      %484 = vperm.xlu0 %483, %v459
      %v485 = vpop.permute.xlu0 %484
      %v488 = vsel %vm291, %v457, 0
      %v491 = vsel %vm275, %v473, 0
      %493 = vmatpush.bf16.msra.mxu0 0
      %494 = vmatpush.bf16.msra.mxu0 0
      %495 = vmatpush.bf16.msra.mxu0 0
      %496 = vmatpush.bf16.msra.mxu0 0
      %497 = vmatpush.bf16.msra.mxu0 0
      %498 = vmatpush.bf16.msra.mxu0 0
      %499 = vmatpush.bf16.msra.mxu0 %v491
      %500 = vmatpush.bf16.msra.mxu0 %v480
      %501 = vmatmul.bf16.gmra.mxu0 %v488
      %v502 = vpop.f32.mrf.mxu0
      %v503 = vadd.f32 %v485, %v502
      %v504 = vpop.f32.mrf.mxu0
      %505 = vdwg.mxu0
      %507 = vrot.lane.b32.xlu0 %v390, 120
      %v508 = vpop.permute.xlu0 %507
      %v510 = vadd.f32 %v503, %v508
      %s511 = sadd.s32 %s253, 4294967284
      %v512 = vstv %s511
      %v513 = vadd.s32 %v512, %v313
      %vm514 = vcmp.ge.s32.totalorder %v513, 0
      %vm515 = vcmp.lt.s32.totalorder %v513, 32
      %vm516 = vmand %vm514, %vm515
      %v517 = vsel %vm516, 1, 0
      %vm518 = vcmp.eq.s32.totalorder %v517, 1
      %v519 = vsel %vm518, %v510, 0.0
      %vm520 = vcmp.ge.f32.partialorder %v519, 0.0
      %v521 = vmul.f32 %v519, 0.1
      %v522 = vsel %vm520, %v519, %v521
      %s523 = scalar_lea.vmem %s1, 8
      %v524 = vld [vmem:[%s523] sm:$0x3]
      %s525 = scalar_lea.vmem %s2, 16
      %v526 = vld [vmem:[%s525] sm:$0xf]
      %v527 = vpack.c.bf16 %v522, %v522
      %v529 = vunpack.c.l.b16 %v527
      %v530 = vpack.c.b16 %v529, %v529
      %v531 = vrot.slane %v530, 6
      %532 = vrot.lane.b32.xlu0 %v531, 123
      %v533 = vpop.permute.xlu0 %532
      %534 = vrot.lane.b32.xlu0 %v530, 118
      %v535 = vpop.permute.xlu0 %534
      %v536 = vrot.slane %v530, 2
      %537 = vrot.lane.b32.xlu0 %v536, 113
      %v538 = vpop.permute.xlu0 %537
      %539 = vrot.lane.b32.xlu0 %v530, 108
      %v540 = vpop.permute.xlu0 %539
      %v543 = vsel %vm275, %v527, %v533
      %v545 = vsel %vm279, %v543, %v535
      %v547 = vsel %vm282, %v545, %v538
      %550 = vset.pattern.permute.xlu0 0
      %551 = vperm.xlu0 %550, %v526
      %v552 = vpop.permute.xlu0 %551
      %v555 = vsel %vm291, %v524, 0
      %v558 = vsel %vm275, %v540, 0
      %560 = vmatpush.bf16.msra.mxu0 0
      %561 = vmatpush.bf16.msra.mxu0 0
      %562 = vmatpush.bf16.msra.mxu0 0
      %563 = vmatpush.bf16.msra.mxu0 0
      %564 = vmatpush.bf16.msra.mxu0 0
      %565 = vmatpush.bf16.msra.mxu0 0
      %566 = vmatpush.bf16.msra.mxu0 %v558
      %567 = vmatpush.bf16.msra.mxu0 %v547
      %568 = vmatmul.bf16.gmra.mxu0 %v555
      %v569 = vpop.f32.mrf.mxu0
      %v570 = vadd.f32 %v552, %v569
      %v571 = vpop.f32.mrf.mxu0
      %572 = vdwg.mxu0
      %s573 = sadd.s32 %s253, 4294967294
      %v574 = vstv %s573
      %v575 = vadd.s32 %v574, %v313
      %vm576 = vcmp.ge.s32.totalorder %v575, 0
      %vm577 = vcmp.lt.s32.totalorder %v575, 32
      %vm578 = vmand %vm576, %vm577
      %v579 = vsel %vm578, 1, 0
      %vm580 = vcmp.eq.s32.totalorder %v579, 1
      %v581 = vsel %vm580, %v570, 0.0
      %vm582 = vcmp.ge.f32.partialorder %v581, 0.0
      %v583 = vmul.f32 %v581, 0.1
      %v584 = vsel %vm582, %v581, %v583
      %s585 = scalar_lea.vmem %s1, 10
      %v586 = vld [vmem:[%s585] sm:$0x3]
      %s587 = scalar_lea.vmem %s2, 20
      %v588 = vld [vmem:[%s587] sm:$0xf]
      %v589 = vpack.c.bf16 %v584, %v584
      %v591 = vunpack.c.l.b16 %v589
      %v592 = vpack.c.b16 %v591, %v591
      %v593 = vrot.slane %v592, 6
      %594 = vrot.lane.b32.xlu0 %v593, 127
      %v595 = vpop.permute.xlu0 %594
      %596 = vrot.lane.b32.xlu0 %v592, 126
      %v597 = vpop.permute.xlu0 %596
      %v598 = vrot.slane %v592, 2
      %599 = vrot.lane.b32.xlu0 %v598, 125
      %v600 = vpop.permute.xlu0 %599
      %601 = vrot.lane.b32.xlu0 %v592, 124
      %v602 = vpop.permute.xlu0 %601
      %v605 = vsel %vm275, %v589, %v595
      %v607 = vsel %vm279, %v605, %v597
      %v609 = vsel %vm282, %v607, %v600
      %612 = vset.pattern.permute.xlu0 0
      %613 = vperm.xlu0 %612, %v588
      %v614 = vpop.permute.xlu0 %613
      %v617 = vsel %vm291, %v586, 0
      %v620 = vsel %vm275, %v602, 0
      %622 = vmatpush.bf16.msra.mxu0 0
      %623 = vmatpush.bf16.msra.mxu0 0
      %624 = vmatpush.bf16.msra.mxu0 0
      %625 = vmatpush.bf16.msra.mxu0 0
      %626 = vmatpush.bf16.msra.mxu0 0
      %627 = vmatpush.bf16.msra.mxu0 0
      %628 = vmatpush.bf16.msra.mxu0 %v620
      %629 = vmatpush.bf16.msra.mxu0 %v609
      %630 = vmatmul.bf16.gmra.mxu0 %v617
      %v631 = vpop.f32.mrf.mxu0
      %v632 = vadd.f32 %v614, %v631
      %v633 = vpop.f32.mrf.mxu0
      %634 = vdwg.mxu0
      %636 = vrot.lane.b32.xlu0 %v519, 116
      %v637 = vpop.permute.xlu0 %636
      %v639 = vadd.f32 %v632, %v637
      %v640 = vstv %s253
      %v641 = vadd.s32 %v640, %v313
      %vm642 = vcmp.ge.s32.totalorder %v641, 0
      %vm643 = vcmp.lt.s32.totalorder %v641, 32
      %vm644 = vmand %vm642, %vm643
      %v645 = vsel %vm644, 1, 0
      %vm646 = vcmp.eq.s32.totalorder %v645, 1
      %v647 = vsel %vm646, %v639, 0.0
      %v648 = vld [vmem:[%s244] sm:$0x3]
      %v649 = vunpack.c.l.bf16 %v648
      %v650 = vadd.f32 %v647, %v649
      %v651 = vmul.f32 %v650, 0.5
      %v652 = vpack.c.bf16 %v651, %v651
      %vm653 = vcmask 254976
      %654 = vst.msk [vmem:[%s251] sm:$0x3] %vm653, %v652
      %p655 = scmp.lt.s32.totalorder %s19, 1
      %s656 = scalar_select %p655, %s19, 1
      %p657 = scmp.lt.s32.totalorder %s20, 0
      %s658 = scalar_select %p657, %s20, 0
      %s659 = sadd.s32 %s658, %s656
      %s660 = smul.addr %s659, 2
      %s661 = scalar_lea.vmem %s4, %s660
      // Predicated region
      $region37: #{generator_forward.22} parent=35 // pred_check
        %p662 = pneg %p145
      $region38: #{generator_forward.22} parent=35 // pred_check_branch
        %664 = sbr.rel (%p662) target = $region40
      $region39: #{generator_forward.22} parent=35 // pred_region
        _
      $region40: #{generator_forward.22} parent=35 // pred_fallthru
        _
    $region36: #{generator_forward.22} parent=5 // pred_fallthru
      _
    %p665 = scmp.le.s32.totalorder 2, %s10
    // Predicated region
    $region41: #{generator_forward.22} parent=5 // pred_check
      %p666 = pneg %p665
    $region42: #{generator_forward.22} parent=5 // pred_check_branch
      %668 = sbr.rel (%p666) target = $region44
    $region43: #{generator_forward.22} parent=5 // pred_region
      %s669 = ssub.s32 %s10, 2
      // Predicated region
      $region45: #{generator_forward.22} parent=43 // pred_check
        %p670 = pneg %p151
      $region46: #{generator_forward.22} parent=43 // pred_check_branch
        %672 = sbr.rel (%p670) target = $region48
      $region47: #{generator_forward.22} parent=43 // pred_region
        %p673 = scmp.lt.s32.totalorder %s21, 1
        %s674 = scalar_select %p673, %s21, 1
        %p675 = scmp.lt.s32.totalorder %s22, 0
        %s676 = scalar_select %p675, %s22, 0
        %s677 = sadd.s32 %s676, %s674
        %s678 = smul.addr %s677, 2
        %s679 = scalar_lea.vmem %s4, %s678
      $region48: #{generator_forward.22} parent=43 // pred_fallthru
        _
    $region44: #{generator_forward.22} parent=5 // pred_fallthru
      _
  $region6: #{generator_forward.22} parent=0 // loop_footer
    %s14 = sadd.s32 1, %s10
  $region7: #{generator_forward.22} parent=0 // loop_footer_branch
    %9 = sbr.rel target = $region3
  $region8: #{generator_forward.22} parent=0 // loop_exit
    _

</llo_original>
